<compile_context>
chip_gen: v5e
topology: v5e:2x2
jax: 0.10.0
libtpu: 0.0.40
codegen_flags: <defaults>
</compile_context>

<pallas_src>
import functools

import jax
import jax.numpy as jnp
from jax.experimental import pallas as pl
from jax.experimental.pallas import tpu as pltpu


def _deepset_kernel(base_cutoff, outer_cutoff, coeff, E, G, F, bm, bn, mxu_dtype,
                    ef_ref, gi_ref, gj_ref,
                    off_ref, wd_ref, bd_ref, wdt_ref, bdt_ref,
                    wg3_ref, bg_ref, t_ref, we_ref, be_ref,
                    out_ref):
    f32 = jnp.float32
    nb = bm * bn

    # zero the resident output slab at the start of each dst-reduction sweep
    @pl.when(pl.program_id(1) == 0)
    def _():
        out_ref[...] = jnp.zeros_like(out_ref)

    # packed per-edge scalars, lanes = [d, mask, vx, vy, vz]
    ef = ef_ref[...].reshape(nb, 5)
    d = ef[:, 0:1]                                            # (nb, 1)
    mask = ef[:, 1:2]                                         # (nb, 1)

    # --- Gaussian RBF expansion (rbf_type='gauss') ---
    edge_attr = jnp.exp(coeff * (d - off_ref[...]) ** 2)      # (nb, R)

    # --- CosineCutoff(base_cutoff, outer_cutoff) ---
    if base_cutoff > 0.0:
        C = 0.5 * (jnp.cos(jnp.pi * (2.0 * d - outer_cutoff - base_cutoff)
                           / (outer_cutoff - base_cutoff)) + 1.0)
        C = C * jnp.where(d < outer_cutoff, 1.0, 0.0)
        C = C * jnp.where(d > base_cutoff, 1.0, 0.0)
    else:
        C = 0.5 * (jnp.cos(d * (jnp.pi / outer_cutoff)) + 1.0)
        C = C * jnp.where(d < outer_cutoff, 1.0, 0.0)

    # --- per-edge linear chain (bf16 MXU operands, f32 accumulation) ---
    d_proj = (jnp.dot(edge_attr.astype(mxu_dtype), wd_ref[...],
                      preferred_element_type=f32) + bd_ref[...]) * C          # (nb, E)
    d_t = jnp.dot(d_proj.astype(mxu_dtype), wdt_ref[...],
                  preferred_element_type=f32) + bdt_ref[...]                  # (nb, E)

    # gamma_transform(concat([a_i, a_j, d_t])): the a_i/a_j parts are hoisted
    # per atom (gi/gj already contain a_{i,j} @ Wg_{1,2}); only d_t @ Wg3 runs
    # per edge.
    g_d = jnp.dot(d_t.astype(mxu_dtype), wg3_ref[...], preferred_element_type=f32)
    gi_e = jnp.broadcast_to(gi_ref[...][:, None, :], (bm, bn, E)).reshape(nb, E)
    gj_e = jnp.broadcast_to(gj_ref[...][None, :, :], (bm, bn, E)).reshape(nb, E)
    gamma = g_d + gi_e + gj_e + bg_ref[...]                                   # (nb, E)

    # --- all G experts in one lane-dense MXU pass: (nb, E) @ (E, G*F) ---
    experts = jnp.dot(gamma.astype(mxu_dtype), we_ref[...],
                      preferred_element_type=f32) + be_ref[...]               # (nb, G*F)

    # --- distance gating: softmax_g( 1 / clamp(|d - t_g|, 1e-8) ) ---
    inv = 1.0 / jnp.maximum(jnp.abs(d - t_ref[...]), 1e-8)                    # (nb, G)
    mx = jnp.max(inv, axis=1, keepdims=True)
    ex = jnp.exp(inv - mx)
    gate = ex * pl.reciprocal(jnp.sum(ex, axis=1, keepdims=True), approx=True)

    # gate-weighted sum over the G expert blocks (VPU)
    edge_out = experts[:, 0:F] * gate[:, 0:1]
    for g in range(1, G):
        edge_out = edge_out + experts[:, g * F:(g + 1) * F] * gate[:, g:g + 1]
    edge_out = edge_out * mask                                                # (nb, F)

    # normalized edge vectors (self/invalid edges have vec == 0 and mask == 0)
    inv_d = pl.reciprocal(jnp.maximum(d, 1e-9), approx=True)
    vnx = ef[:, 2:3] * inv_d
    vny = ef[:, 3:4] * inv_d
    vnz = ef[:, 4:5] * inv_d

    # lane-dense (nb, 4F) slab: [edge_out | vx*edge_out | vy*edge_out | vz*edge_out]
    rhs = jnp.concatenate(
        [edge_out, edge_out * vnx, edge_out * vny, edge_out * vnz], axis=1)   # (nb, 4F)

    # scatter-add over src == reshape-sum over the dst axis of this block,
    # accumulated across the (arbitrary) dst grid axis.
    out_ref[...] += jnp.sum(rhs.reshape(bm, bn, 4 * F), axis=1)


def init_params(key, E, R, G, F, base_cutoff, outer_cutoff):
    ks = jax.random.split(key, 9)

    def lin(k, fin, fout):
        kw, kb = jax.random.split(k)
        lim = 1.0 / float(jnp.sqrt(fin))
        W = jax.random.uniform(kw, (fin, fout), jnp.float32, -lim, lim)
        b = jax.random.uniform(kb, (1, fout), jnp.float32, -lim, lim)
        return W, b

    emb = jax.random.normal(ks[0], (100, E), jnp.float32)
    wd, bd = lin(ks[1], R, E)
    wdt, bdt = lin(ks[2], E, E)
    wai, bai = lin(ks[3], E, E)
    waj, baj = lin(ks[4], E, E)
    wg, bg = lin(ks[5], 3 * E, E)
    t = jax.random.normal(ks[6], (1, G), jnp.float32) * 0.01
    we = jax.random.normal(ks[7], (G, E, F), jnp.float32) * (1.0 / float(jnp.sqrt(E)))
    be = jax.random.normal(ks[8], (G, 1, F), jnp.float32) * 0.01
    offsets = jnp.linspace(base_cutoff, outer_cutoff, R).reshape(1, R).astype(jnp.float32)
    coeff = float(-0.5 / float(offsets[0, 1] - offsets[0, 0]) ** 2)
    return dict(embedding=emb, wd=wd, bd=bd, wdt=wdt, bdt=bdt, wai=wai, bai=bai,
                waj=waj, baj=baj, wg=wg, bg=bg, t=t, we=we, be=be,
                offsets=offsets, coeff=coeff)


def deepset_forward(params, z, pos, batch, *, base_cutoff, outer_cutoff,
                    block_m=8, block_n=None, mxu_dtype=jnp.bfloat16):
    emb = params['embedding']
    E = emb.shape[1]
    G = params['t'].shape[1]
    F = params['be'].shape[-1]
    R = params['offsets'].shape[1]
    na = z.shape[0]

    # ---- pad atoms so the grid tiles evenly (bm multiple of 8) ----
    bm = max(8, int(block_m))
    na_pad = -(-na // bm) * bm
    pad = na_pad - na
    z_p = jnp.pad(z.astype(jnp.int32), (0, pad))
    pos_p = jnp.pad(pos, ((0, pad), (0, 0)))
    batch_p = jnp.pad(batch.astype(jnp.int32), (0, pad), constant_values=-1)
    real = jnp.arange(na_pad) < na

    # dst (reduction) block size: full row unless na_pad is a multiple of 128
    bn = block_n
    if bn is None:
        bn = 128 if (na_pad % 128 == 0 and na_pad > 128) else na_pad
    assert na_pad % bn == 0 and (bn == na_pad or bn % 128 == 0)
    ns, nd = na_pad // bm, na_pad // bn
    nb = bm * bn

    # ---- glue replacing OptimizedDistance ----
    # TODO(synk): OptimizedDistance (sparse neighbor search with a dynamic edge
    # count) is approximated by a dense all-pairs edge set with a validity mask.
    diff = pos_p[:, None, :] - pos_p[None, :, :]                  # (na_pad, na_pad, 3) src - dst
    d = jnp.sqrt(jnp.sum(diff * diff, axis=-1))                   # (na_pad, na_pad)
    same_mol = batch_p[:, None] == batch_p[None, :]
    not_self = ~jnp.eye(na_pad, dtype=bool)
    real_pair = real[:, None] & real[None, :]
    if base_cutoff > 0.0:
        lower_ok = d > base_cutoff                                # matches CosineCutoff's lower gate
    else:
        lower_ok = jnp.ones_like(same_mol)
    mask = ((d < outer_cutoff) & lower_ok & same_mol & not_self & real_pair).astype(jnp.float32)

    # ---- per-atom hoisting: x -> a_i/a_j -> their gamma_transform pieces ----
    x = emb[z_p]                                                  # (na_pad, E)
    wg = params['wg']
    g_i = (x @ params['wai'] + params['bai']) @ wg[0:E]           # (na_pad, E)
    g_j = (x @ params['waj'] + params['baj']) @ wg[E:2 * E]       # (na_pad, E)

    # ---- pack & pre-block the per-edge scalar streams for the 2-D grid ----
    def blockify(a):  # (na_pad, na_pad) -> (ns, nd, bm*bn), dst fastest within a block
        return a.reshape(ns, bm, nd, bn).transpose(0, 2, 1, 3).reshape(ns, nd, nb)

    edge_cols = jnp.stack([blockify(d), blockify(mask),
                           blockify(diff[..., 0]), blockify(diff[..., 1]),
                           blockify(diff[..., 2])], axis=-1)      # (ns, nd, nb, 5)

    # ---- weights: fused expert matrix + bf16 MXU operands ----
    we = params['we']                                             # (G, E, F)
    we_flat = jnp.transpose(we, (1, 0, 2)).reshape(E, G * F)
    be_flat = params['be'].reshape(1, G * F)
    wd_c = params['wd'].astype(mxu_dtype)
    wdt_c = params['wdt'].astype(mxu_dtype)
    wg3_c = wg[2 * E:3 * E].astype(mxu_dtype)
    we_c = we_flat.astype(mxu_dtype)

    kernel = functools.partial(_deepset_kernel, float(base_cutoff), float(outer_cutoff),
                               float(params['coeff']), E, G, F, bm, bn, mxu_dtype)

    const2 = lambda shape: pl.BlockSpec(shape, lambda i, k: (0, 0))
    in_specs = [
        pl.BlockSpec((1, 1, nb, 5), lambda i, k: (i, k, 0, 0)),   # packed per-edge stream
        pl.BlockSpec((bm, E), lambda i, k: (i, 0)),               # g_i (src block)
        pl.BlockSpec((bn, E), lambda i, k: (k, 0)),               # g_j (dst block)
        const2((1, R)),                                           # offsets
        const2((R, E)), const2((1, E)),                           # wd, bd
        const2((E, E)), const2((1, E)),                           # wdt, bdt
        const2((E, E)), const2((1, E)),                           # wg3, bg
        const2((1, G)),                                           # t
        const2((E, G * F)), const2((1, G * F)),                   # we_flat, be_flat
    ]
    out_specs = pl.BlockSpec((bm, 4 * F), lambda i, k: (i, 0))

    slab = pl.pallas_call(
        kernel,
        grid=(ns, nd),
        in_specs=in_specs,
        out_specs=out_specs,
        out_shape=jax.ShapeDtypeStruct((na_pad, 4 * F), jnp.float32),
        compiler_params=pltpu.CompilerParams(
            dimension_semantics=("parallel", "arbitrary"),
            vmem_limit_bytes=32 * 1024 * 1024),
    )(edge_cols, g_i, g_j, params['offsets'],
      wd_c, params['bd'], wdt_c, params['bdt'],
      wg3_c, params['bg'], params['t'], we_c, be_flat)

    atom_out = slab[:na, 0:F]
    vec = jnp.stack([slab[:na, F:2 * F], slab[:na, 2 * F:3 * F], slab[:na, 3 * F:4 * F]],
                    axis=1)                                       # (na, 3, F)
    return atom_out, vec, z, pos, batch


def _ref_forward(params, z, pos, batch, *, base_cutoff, outer_cutoff):
    """Pure-JAX f32 reference following the original module structure."""
    emb = params['embedding']
    E = emb.shape[1]
    G = params['t'].shape[1]
    na = z.shape[0]
    x = emb[z]
    ii, jj = jnp.meshgrid(jnp.arange(na), jnp.arange(na), indexing='ij')
    keep = jnp.nonzero((ii != jj).reshape(-1), size=na * (na - 1))[0]
    src = ii.reshape(-1)[keep]
    dst = jj.reshape(-1)[keep]
    edge_vec = pos[src] - pos[dst]
    d = jnp.linalg.norm(edge_vec, axis=1, keepdims=True)
    if base_cutoff > 0.0:
        lower_ok = d[:, 0] > base_cutoff
    else:
        lower_ok = jnp.ones_like(d[:, 0], dtype=bool)
    valid = ((d[:, 0] < outer_cutoff) & lower_ok
             & (batch[src] == batch[dst])).astype(jnp.float32)[:, None]
    edge_attr = jnp.exp(params['coeff'] * (d - params['offsets']) ** 2)
    if base_cutoff > 0.0:
        C = 0.5 * (jnp.cos(jnp.pi * (2.0 * d - outer_cutoff - base_cutoff)
                           / (outer_cutoff - base_cutoff)) + 1.0)
        C = C * (d < outer_cutoff) * (d > base_cutoff)
    else:
        C = 0.5 * (jnp.cos(d * jnp.pi / outer_cutoff) + 1.0) * (d < outer_cutoff)
    d_proj = (edge_attr @ params['wd'] + params['bd']) * C
    d_t = d_proj @ params['wdt'] + params['bdt']
    a_i = x[src] @ params['wai'] + params['bai']
    a_j = x[dst] @ params['waj'] + params['baj']
    gamma = jnp.concatenate([a_i, a_j, d_t], axis=1) @ params['wg'] + params['bg']
    inv = 1.0 / jnp.maximum(jnp.abs(d - params['t']), 1e-8)
    gate = jax.nn.softmax(inv, axis=1)
    edge_out = sum((gamma @ params['we'][g] + params['be'][g]) * gate[:, g:g + 1]
                   for g in range(G))
    edge_out = edge_out * valid
    atom_out = jax.ops.segment_sum(edge_out, src, num_segments=na)
    vec_n = edge_vec / d
    vec = jnp.stack([jax.ops.segment_sum(vec_n[:, dim:dim + 1] * edge_out, src,
                                         num_segments=na) for dim in range(3)], axis=1)
    return atom_out, vec


if __name__ == "__main__":
    key = jax.random.PRNGKey(0)
    kz, kp, kparams = jax.random.split(key, 3)

    na, E, R, G, F = 20, 32, 16, 8, 32
    base_cutoff, outer_cutoff = 0.0, 10.0

    params = init_params(kparams, E, R, G, F, base_cutoff, outer_cutoff)
    z = jax.random.randint(kz, (na,), 1, 100)
    pos = jax.random.uniform(kp, (na, 3), jnp.float32, 0.0, 2.0)
    batch = jnp.concatenate([jnp.zeros((na // 2,), jnp.int32),
                             jnp.ones((na - na // 2,), jnp.int32)])

    atom_out, vec, z_o, pos_o, batch_o = deepset_forward(
        params, z, pos, batch, base_cutoff=base_cutoff, outer_cutoff=outer_cutoff)
    jax.block_until_ready((atom_out, vec))

    ref_atom, ref_vec = _ref_forward(params, z, pos, batch,
                                     base_cutoff=base_cutoff, outer_cutoff=outer_cutoff)
    assert atom_out.shape == (na, F) and vec.shape == (na, 3, F)
    # kernel runs its MXU contractions with bf16 operands (f32 accumulation),
    # the reference is pure f32 -> compare at bf16-level tolerance.
    assert jnp.allclose(atom_out, ref_atom, atol=2e-2, rtol=2e-2)
    assert jnp.allclose(vec, ref_vec, atol=2e-2, rtol=2e-2)

    print("KERNEL_OK")
</pallas_src>

<mosaic_0001>
module attributes {stable_mosaic.version = 11 : i64} {
  func.func @_deepset_kernel(%arg0: i32, %arg1: i32, %arg2: memref<1x1x192x5xf32, #tpu.memory_space<vmem>>, %arg3: memref<8x32xf32, #tpu.memory_space<vmem>>, %arg4: memref<24x32xf32, #tpu.memory_space<vmem>>, %arg5: memref<1x16xf32, #tpu.memory_space<vmem>>, %arg6: memref<16x32xbf16, #tpu.memory_space<vmem>>, %arg7: memref<1x32xf32, #tpu.memory_space<vmem>>, %arg8: memref<32x32xbf16, #tpu.memory_space<vmem>>, %arg9: memref<1x32xf32, #tpu.memory_space<vmem>>, %arg10: memref<32x32xbf16, #tpu.memory_space<vmem>>, %arg11: memref<1x32xf32, #tpu.memory_space<vmem>>, %arg12: memref<1x8xf32, #tpu.memory_space<vmem>>, %arg13: memref<32x256xbf16, #tpu.memory_space<vmem>>, %arg14: memref<1x256xf32, #tpu.memory_space<vmem>>, %arg15: memref<8x128xf32, #tpu.memory_space<vmem>>) attributes {dimension_semantics = [#tpu.dimension_semantics<parallel>, #tpu.dimension_semantics<arbitrary>], iteration_bounds = array<i64: 3, 1>, scalar_prefetch = 0 : i64, scratch_operands = 0 : i64, tpu.core_type = #tpu.core_type<tc>, window_params = [{transform_indices = @transform_0, window_bounds = array<i64: 1, 1, 192, 5>}, {transform_indices = @transform_1, window_bounds = array<i64: 8, 32>}, {transform_indices = @transform_2, window_bounds = array<i64: 24, 32>}, {pipeline_mode = #tpu.pipeline_mode<synchronous>, transform_indices = @transform_3, window_bounds = array<i64: 1, 16>}, {pipeline_mode = #tpu.pipeline_mode<synchronous>, transform_indices = @transform_4, window_bounds = array<i64: 16, 32>}, {pipeline_mode = #tpu.pipeline_mode<synchronous>, transform_indices = @transform_5, window_bounds = array<i64: 1, 32>}, {pipeline_mode = #tpu.pipeline_mode<synchronous>, transform_indices = @transform_6, window_bounds = array<i64: 32, 32>}, {pipeline_mode = #tpu.pipeline_mode<synchronous>, transform_indices = @transform_7, window_bounds = array<i64: 1, 32>}, {pipeline_mode = #tpu.pipeline_mode<synchronous>, transform_indices = @transform_8, window_bounds = array<i64: 32, 32>}, {pipeline_mode = #tpu.pipeline_mode<synchronous>, transform_indices = @transform_9, window_bounds = array<i64: 1, 32>}, {pipeline_mode = #tpu.pipeline_mode<synchronous>, transform_indices = @transform_10, window_bounds = array<i64: 1, 8>}, {pipeline_mode = #tpu.pipeline_mode<synchronous>, transform_indices = @transform_11, window_bounds = array<i64: 32, 256>}, {pipeline_mode = #tpu.pipeline_mode<synchronous>, transform_indices = @transform_12, window_bounds = array<i64: 1, 256>}, {transform_indices = @transform_13, window_bounds = array<i64: 8, 128>}]} {
    %c0_i32 = arith.constant 0 : i32
    %0 = arith.cmpi eq, %arg1, %c0_i32 : i32
    %1 = arith.extui %0 : i1 to i32
    %c0_i32_0 = arith.constant 0 : i32
    %2 = arith.cmpi ne, %1, %c0_i32_0 : i32
    scf.if %2 {
      %cst_48 = arith.constant 0.000000e+00 : f32
      %147 = vector.broadcast %cst_48 : f32 to vector<8x128xf32>
      %c0_49 = arith.constant 0 : index
      %c0_50 = arith.constant 0 : index
      %148 = vector.load %arg15[%c0_49, %c0_50] : memref<8x128xf32, #tpu.memory_space<vmem>>, vector<8x128xf32>
      tpu.vector_store %arg15[%c0_49, %c0_50], %147 {strides = array<i32>} : memref<8x128xf32, #tpu.memory_space<vmem>>, vector<8x128xf32>,
    } else {
    }
    %c0 = arith.constant 0 : index
    %c0_1 = arith.constant 0 : index
    %c0_2 = arith.constant 0 : index
    %c0_3 = arith.constant 0 : index
    %3 = vector.load %arg2[%c0, %c0_1, %c0_2, %c0_3] : memref<1x1x192x5xf32, #tpu.memory_space<vmem>>, vector<1x1x192x5xf32>
    %4 = vector.shape_cast %3 : vector<1x1x192x5xf32> to vector<192x5xf32>
    %5 = vector.extract_strided_slice %4 {offsets = [0, 0], sizes = [192, 1], strides = [1, 1]} : vector<192x5xf32> to vector<192x1xf32>
    %6 = vector.extract_strided_slice %4 {offsets = [0, 1], sizes = [192, 1], strides = [1, 1]} : vector<192x5xf32> to vector<192x1xf32>
    %c0_4 = arith.constant 0 : index
    %c0_5 = arith.constant 0 : index
    %7 = vector.load %arg5[%c0_4, %c0_5] : memref<1x16xf32, #tpu.memory_space<vmem>>, vector<1x16xf32>
    %8 = vector.broadcast %5 : vector<192x1xf32> to vector<192x16xf32>
    %9 = vector.broadcast %7 : vector<1x16xf32> to vector<192x16xf32>
    %10 = arith.subf %8, %9 : vector<192x16xf32>
    %11 = arith.mulf %10, %10 : vector<192x16xf32>
    %cst = arith.constant -1.12499988 : f32
    %12 = vector.broadcast %cst : f32 to vector<192x16xf32>
    %13 = arith.mulf %12, %11 : vector<192x16xf32>
    %14 = math.exp %13 : vector<192x16xf32>
    %cst_6 = arith.constant 0.314159274 : f32
    %15 = vector.broadcast %cst_6 : f32 to vector<192x1xf32>
    %16 = arith.mulf %5, %15 : vector<192x1xf32>
    %17 = math.cos %16 : vector<192x1xf32>
    %cst_7 = arith.constant 1.000000e+00 : f32
    %18 = vector.broadcast %cst_7 : f32 to vector<192x1xf32>
    %19 = arith.addf %17, %18 : vector<192x1xf32>
    %cst_8 = arith.constant 5.000000e-01 : f32
    %20 = vector.broadcast %cst_8 : f32 to vector<192x1xf32>
    %21 = arith.mulf %20, %19 : vector<192x1xf32>
    %cst_9 = arith.constant 1.000000e+01 : f32
    %22 = vector.broadcast %cst_9 : f32 to vector<192x1xf32>
    %23 = arith.cmpf olt, %5, %22 : vector<192x1xf32>
    %cst_10 = arith.constant 1.000000e+00 : f32
    %cst_11 = arith.constant 0.000000e+00 : f32
    %24 = vector.broadcast %cst_10 : f32 to vector<192x1xf32>
    %25 = vector.broadcast %cst_11 : f32 to vector<192x1xf32>
    %26 = arith.select %23, %24, %25 : vector<192x1xi1>, vector<192x1xf32>
    %27 = arith.mulf %21, %26 : vector<192x1xf32>
    %28 = arith.truncf %14 : vector<192x16xf32> to vector<192x16xbf16>
    %c0_12 = arith.constant 0 : index
    %c0_13 = arith.constant 0 : index
    %29 = vector.load %arg6[%c0_12, %c0_13] : memref<16x32xbf16, #tpu.memory_space<vmem>>, vector<16x32xbf16>
    %cst_14 = arith.constant dense<0.000000e+00> : vector<192x32xf32>
    %30 = tpu.matmul %28, %29, %cst_14 {dimension_numbers = #tpu.dot_dimension_numbers<[1], [0], [0], [1], [0, 0, 1, 1], [], []>} : vector<192x16xbf16>, vector<16x32xbf16>, vector<192x32xf32> -> vector<192x32xf32>
    %c0_15 = arith.constant 0 : index
    %c0_16 = arith.constant 0 : index
    %31 = vector.load %arg7[%c0_15, %c0_16] : memref<1x32xf32, #tpu.memory_space<vmem>>, vector<1x32xf32>
    %32 = vector.broadcast %31 : vector<1x32xf32> to vector<192x32xf32>
    %33 = arith.addf %30, %32 : vector<192x32xf32>
    %34 = vector.broadcast %27 : vector<192x1xf32> to vector<192x32xf32>
    %35 = arith.mulf %33, %34 : vector<192x32xf32>
    %36 = arith.truncf %35 : vector<192x32xf32> to vector<192x32xbf16>
    %c0_17 = arith.constant 0 : index
    %c0_18 = arith.constant 0 : index
    %37 = vector.load %arg8[%c0_17, %c0_18] : memref<32x32xbf16, #tpu.memory_space<vmem>>, vector<32x32xbf16>
    %cst_19 = arith.constant dense<0.000000e+00> : vector<192x32xf32>
    %38 = tpu.matmul %36, %37, %cst_19 {dimension_numbers = #tpu.dot_dimension_numbers<[1], [0], [0], [1], [0, 0, 1, 1], [], []>} : vector<192x32xbf16>, vector<32x32xbf16>, vector<192x32xf32> -> vector<192x32xf32>
    %c0_20 = arith.constant 0 : index
    %c0_21 = arith.constant 0 : index
    %39 = vector.load %arg9[%c0_20, %c0_21] : memref<1x32xf32, #tpu.memory_space<vmem>>, vector<1x32xf32>
    %40 = vector.broadcast %39 : vector<1x32xf32> to vector<192x32xf32>
    %41 = arith.addf %38, %40 : vector<192x32xf32>
    %42 = arith.truncf %41 : vector<192x32xf32> to vector<192x32xbf16>
    %c0_22 = arith.constant 0 : index
    %c0_23 = arith.constant 0 : index
    %43 = vector.load %arg10[%c0_22, %c0_23] : memref<32x32xbf16, #tpu.memory_space<vmem>>, vector<32x32xbf16>
    %cst_24 = arith.constant dense<0.000000e+00> : vector<192x32xf32>
    %44 = tpu.matmul %42, %43, %cst_24 {dimension_numbers = #tpu.dot_dimension_numbers<[1], [0], [0], [1], [0, 0, 1, 1], [], []>} : vector<192x32xbf16>, vector<32x32xbf16>, vector<192x32xf32> -> vector<192x32xf32>
    %c0_25 = arith.constant 0 : index
    %c0_26 = arith.constant 0 : index
    %45 = vector.load %arg3[%c0_25, %c0_26] : memref<8x32xf32, #tpu.memory_space<vmem>>, vector<8x32xf32>
    %46 = vector.shape_cast %45 : vector<8x32xf32> to vector<8x1x32xf32>
    %47 = vector.shape_cast %46 : vector<8x1x32xf32> to vector<8x1x32xf32>
    %48 = vector.broadcast %47 : vector<8x1x32xf32> to vector<8x24x32xf32>
    %49 = vector.shape_cast %48 : vector<8x24x32xf32> to vector<192x32xf32>
    %c0_27 = arith.constant 0 : index
    %c0_28 = arith.constant 0 : index
    %50 = vector.load %arg4[%c0_27, %c0_28] : memref<24x32xf32, #tpu.memory_space<vmem>>, vector<24x32xf32>
    %51 = vector.shape_cast %50 : vector<24x32xf32> to vector<1x24x32xf32>
    %52 = vector.shape_cast %51 : vector<1x24x32xf32> to vector<1x24x32xf32>
    %53 = vector.broadcast %52 : vector<1x24x32xf32> to vector<8x24x32xf32>
    %54 = vector.shape_cast %53 : vector<8x24x32xf32> to vector<192x32xf32>
    %55 = arith.addf %44, %49 : vector<192x32xf32>
    %56 = arith.addf %55, %54 : vector<192x32xf32>
    %c0_29 = arith.constant 0 : index
    %c0_30 = arith.constant 0 : index
    %57 = vector.load %arg11[%c0_29, %c0_30] : memref<1x32xf32, #tpu.memory_space<vmem>>, vector<1x32xf32>
    %58 = vector.broadcast %57 : vector<1x32xf32> to vector<192x32xf32>
    %59 = arith.addf %56, %58 : vector<192x32xf32>
    %60 = arith.truncf %59 : vector<192x32xf32> to vector<192x32xbf16>
    %c0_31 = arith.constant 0 : index
    %c0_32 = arith.constant 0 : index
    %61 = vector.load %arg13[%c0_31, %c0_32] : memref<32x256xbf16, #tpu.memory_space<vmem>>, vector<32x256xbf16>
    %cst_33 = arith.constant dense<0.000000e+00> : vector<192x256xf32>
    %62 = tpu.matmul %60, %61, %cst_33 {dimension_numbers = #tpu.dot_dimension_numbers<[1], [0], [0], [1], [0, 0, 1, 1], [], []>} : vector<192x32xbf16>, vector<32x256xbf16>, vector<192x256xf32> -> vector<192x256xf32>
    %c0_34 = arith.constant 0 : index
    %c0_35 = arith.constant 0 : index
    %63 = vector.load %arg14[%c0_34, %c0_35] : memref<1x256xf32, #tpu.memory_space<vmem>>, vector<1x256xf32>
    %64 = vector.broadcast %63 : vector<1x256xf32> to vector<192x256xf32>
    %65 = arith.addf %62, %64 : vector<192x256xf32>
    %c0_36 = arith.constant 0 : index
    %c0_37 = arith.constant 0 : index
    %66 = vector.load %arg12[%c0_36, %c0_37] : memref<1x8xf32, #tpu.memory_space<vmem>>, vector<1x8xf32>
    %67 = vector.broadcast %5 : vector<192x1xf32> to vector<192x8xf32>
    %68 = vector.broadcast %66 : vector<1x8xf32> to vector<192x8xf32>
    %69 = arith.subf %67, %68 : vector<192x8xf32>
    %70 = math.absf %69 : vector<192x8xf32>
    %cst_38 = arith.constant 9.99999993E-9 : f32
    %71 = vector.broadcast %cst_38 : f32 to vector<192x8xf32>
    %72 = arith.maximumf %70, %71 : vector<192x8xf32>
    %cst_39 = arith.constant 1.000000e+00 : f32
    %73 = vector.broadcast %cst_39 : f32 to vector<192x8xf32>
    %74 = arith.divf %73, %72 : vector<192x8xf32>
    %cst_40 = arith.constant dense<0xFF800000> : vector<192xf32>
    %75 = vector.multi_reduction <maximumf>, %74, %cst_40 [1] : vector<192x8xf32> to vector<192xf32>
    %76 = vector.shape_cast %75 : vector<192xf32> to vector<192x1xf32>
    %77 = vector.broadcast %76 : vector<192x1xf32> to vector<192x8xf32>
    %78 = arith.subf %74, %77 : vector<192x8xf32>
    %79 = math.exp %78 : vector<192x8xf32>
    %cst_41 = arith.constant dense<0.000000e+00> : vector<192xf32>
    %80 = vector.multi_reduction <add>, %79, %cst_41 [1] : vector<192x8xf32> to vector<192xf32>
    %81 = vector.shape_cast %80 : vector<192xf32> to vector<192x1xf32>
    %82 = tpu.reciprocal %81 {approx = true} : vector<192x1xf32> -> vector<192x1xf32>
    %83 = vector.broadcast %82 : vector<192x1xf32> to vector<192x8xf32>
    %84 = arith.mulf %79, %83 : vector<192x8xf32>
    %85 = vector.extract_strided_slice %65 {offsets = [0, 0], sizes = [192, 32], strides = [1, 1]} : vector<192x256xf32> to vector<192x32xf32>
    %86 = vector.extract_strided_slice %84 {offsets = [0, 0], sizes = [192, 1], strides = [1, 1]} : vector<192x8xf32> to vector<192x1xf32>
    %87 = vector.broadcast %86 : vector<192x1xf32> to vector<192x32xf32>
    %88 = arith.mulf %85, %87 : vector<192x32xf32>
    %89 = vector.extract_strided_slice %65 {offsets = [0, 32], sizes = [192, 32], strides = [1, 1]} : vector<192x256xf32> to vector<192x32xf32>
    %90 = vector.extract_strided_slice %84 {offsets = [0, 1], sizes = [192, 1], strides = [1, 1]} : vector<192x8xf32> to vector<192x1xf32>
    %91 = vector.broadcast %90 : vector<192x1xf32> to vector<192x32xf32>
    %92 = arith.mulf %89, %91 : vector<192x32xf32>
    %93 = arith.addf %88, %92 : vector<192x32xf32>
    %94 = vector.extract_strided_slice %65 {offsets = [0, 64], sizes = [192, 32], strides = [1, 1]} : vector<192x256xf32> to vector<192x32xf32>
    %95 = vector.extract_strided_slice %84 {offsets = [0, 2], sizes = [192, 1], strides = [1, 1]} : vector<192x8xf32> to vector<192x1xf32>
    %96 = vector.broadcast %95 : vector<192x1xf32> to vector<192x32xf32>
    %97 = arith.mulf %94, %96 : vector<192x32xf32>
    %98 = arith.addf %93, %97 : vector<192x32xf32>
    %99 = vector.extract_strided_slice %65 {offsets = [0, 96], sizes = [192, 32], strides = [1, 1]} : vector<192x256xf32> to vector<192x32xf32>
    %100 = vector.extract_strided_slice %84 {offsets = [0, 3], sizes = [192, 1], strides = [1, 1]} : vector<192x8xf32> to vector<192x1xf32>
    %101 = vector.broadcast %100 : vector<192x1xf32> to vector<192x32xf32>
    %102 = arith.mulf %99, %101 : vector<192x32xf32>
    %103 = arith.addf %98, %102 : vector<192x32xf32>
    %104 = vector.extract_strided_slice %65 {offsets = [0, 128], sizes = [192, 32], strides = [1, 1]} : vector<192x256xf32> to vector<192x32xf32>
    %105 = vector.extract_strided_slice %84 {offsets = [0, 4], sizes = [192, 1], strides = [1, 1]} : vector<192x8xf32> to vector<192x1xf32>
    %106 = vector.broadcast %105 : vector<192x1xf32> to vector<192x32xf32>
    %107 = arith.mulf %104, %106 : vector<192x32xf32>
    %108 = arith.addf %103, %107 : vector<192x32xf32>
    %109 = vector.extract_strided_slice %65 {offsets = [0, 160], sizes = [192, 32], strides = [1, 1]} : vector<192x256xf32> to vector<192x32xf32>
    %110 = vector.extract_strided_slice %84 {offsets = [0, 5], sizes = [192, 1], strides = [1, 1]} : vector<192x8xf32> to vector<192x1xf32>
    %111 = vector.broadcast %110 : vector<192x1xf32> to vector<192x32xf32>
    %112 = arith.mulf %109, %111 : vector<192x32xf32>
    %113 = arith.addf %108, %112 : vector<192x32xf32>
    %114 = vector.extract_strided_slice %65 {offsets = [0, 192], sizes = [192, 32], strides = [1, 1]} : vector<192x256xf32> to vector<192x32xf32>
    %115 = vector.extract_strided_slice %84 {offsets = [0, 6], sizes = [192, 1], strides = [1, 1]} : vector<192x8xf32> to vector<192x1xf32>
    %116 = vector.broadcast %115 : vector<192x1xf32> to vector<192x32xf32>
    %117 = arith.mulf %114, %116 : vector<192x32xf32>
    %118 = arith.addf %113, %117 : vector<192x32xf32>
    %119 = vector.extract_strided_slice %65 {offsets = [0, 224], sizes = [192, 32], strides = [1, 1]} : vector<192x256xf32> to vector<192x32xf32>
    %120 = vector.extract_strided_slice %84 {offsets = [0, 7], sizes = [192, 1], strides = [1, 1]} : vector<192x8xf32> to vector<192x1xf32>
    %121 = vector.broadcast %120 : vector<192x1xf32> to vector<192x32xf32>
    %122 = arith.mulf %119, %121 : vector<192x32xf32>
    %123 = arith.addf %118, %122 : vector<192x32xf32>
    %124 = vector.broadcast %6 : vector<192x1xf32> to vector<192x32xf32>
    %125 = arith.mulf %123, %124 : vector<192x32xf32>
    %cst_42 = arith.constant 9.99999971E-10 : f32
    %126 = vector.broadcast %cst_42 : f32 to vector<192x1xf32>
    %127 = arith.maximumf %5, %126 : vector<192x1xf32>
    %128 = tpu.reciprocal %127 {approx = true} : vector<192x1xf32> -> vector<192x1xf32>
    %129 = vector.extract_strided_slice %4 {offsets = [0, 2], sizes = [192, 1], strides = [1, 1]} : vector<192x5xf32> to vector<192x1xf32>
    %130 = arith.mulf %129, %128 : vector<192x1xf32>
    %131 = vector.extract_strided_slice %4 {offsets = [0, 3], sizes = [192, 1], strides = [1, 1]} : vector<192x5xf32> to vector<192x1xf32>
    %132 = arith.mulf %131, %128 : vector<192x1xf32>
    %133 = vector.extract_strided_slice %4 {offsets = [0, 4], sizes = [192, 1], strides = [1, 1]} : vector<192x5xf32> to vector<192x1xf32>
    %134 = arith.mulf %133, %128 : vector<192x1xf32>
    %135 = vector.broadcast %130 : vector<192x1xf32> to vector<192x32xf32>
    %136 = arith.mulf %125, %135 : vector<192x32xf32>
    %137 = vector.broadcast %132 : vector<192x1xf32> to vector<192x32xf32>
    %138 = arith.mulf %125, %137 : vector<192x32xf32>
    %139 = vector.broadcast %134 : vector<192x1xf32> to vector<192x32xf32>
    %140 = arith.mulf %125, %139 : vector<192x32xf32>
    %141 = tpu.concatenate %125, %136, %138, %140 in 1 : vector<192x32xf32>, vector<192x32xf32>, vector<192x32xf32>, vector<192x32xf32> -> vector<192x128xf32>
    %c0_43 = arith.constant 0 : index
    %c0_44 = arith.constant 0 : index
    %142 = vector.load %arg15[%c0_43, %c0_44] : memref<8x128xf32, #tpu.memory_space<vmem>>, vector<8x128xf32>
    %143 = vector.shape_cast %141 : vector<192x128xf32> to vector<8x24x128xf32>
    %cst_45 = arith.constant dense<0.000000e+00> : vector<8x128xf32>
    %144 = vector.multi_reduction <add>, %143, %cst_45 [1] : vector<8x24x128xf32> to vector<8x128xf32>
    %145 = arith.addf %142, %144 : vector<8x128xf32>
    %c0_46 = arith.constant 0 : index
    %c0_47 = arith.constant 0 : index
    %146 = vector.load %arg15[%c0_46, %c0_47] : memref<8x128xf32, #tpu.memory_space<vmem>>, vector<8x128xf32>
    tpu.vector_store %arg15[%c0_46, %c0_47], %145 {strides = array<i32>} : memref<8x128xf32, #tpu.memory_space<vmem>>, vector<8x128xf32>,
    return
  }
  func.func @transform_0(%arg0: i32, %arg1: i32) -> (i32, i32, i32, i32) {
    %c0_i32 = arith.constant 0 : i32
    %c0_i32_0 = arith.constant 0 : i32
    %c0_i32_1 = arith.constant 0 : i32
    return %arg0, %arg1, %c0_i32, %c0_i32_0 : i32, i32, i32, i32
  }
  func.func @transform_1(%arg0: i32, %arg1: i32) -> (i32, i32) {
    %c0_i32 = arith.constant 0 : i32
    %c0_i32_0 = arith.constant 0 : i32
    return %arg0, %c0_i32 : i32, i32
  }
  func.func @transform_2(%arg0: i32, %arg1: i32) -> (i32, i32) {
    %c0_i32 = arith.constant 0 : i32
    %c0_i32_0 = arith.constant 0 : i32
    return %arg1, %c0_i32 : i32, i32
  }
  func.func @transform_3(%arg0: i32, %arg1: i32) -> (i32, i32) {
    %c0_i32 = arith.constant 0 : i32
    %c0_i32_0 = arith.constant 0 : i32
    %c0_i32_1 = arith.constant 0 : i32
    return %c0_i32, %c0_i32_0 : i32, i32
  }
  func.func @transform_4(%arg0: i32, %arg1: i32) -> (i32, i32) {
    %c0_i32 = arith.constant 0 : i32
    %c0_i32_0 = arith.constant 0 : i32
    %c0_i32_1 = arith.constant 0 : i32
    return %c0_i32, %c0_i32_0 : i32, i32
  }
  func.func @transform_5(%arg0: i32, %arg1: i32) -> (i32, i32) {
    %c0_i32 = arith.constant 0 : i32
    %c0_i32_0 = arith.constant 0 : i32
    %c0_i32_1 = arith.constant 0 : i32
    return %c0_i32, %c0_i32_0 : i32, i32
  }
  func.func @transform_6(%arg0: i32, %arg1: i32) -> (i32, i32) {
    %c0_i32 = arith.constant 0 : i32
    %c0_i32_0 = arith.constant 0 : i32
    %c0_i32_1 = arith.constant 0 : i32
    return %c0_i32, %c0_i32_0 : i32, i32
  }
  func.func @transform_7(%arg0: i32, %arg1: i32) -> (i32, i32) {
    %c0_i32 = arith.constant 0 : i32
    %c0_i32_0 = arith.constant 0 : i32
    %c0_i32_1 = arith.constant 0 : i32
    return %c0_i32, %c0_i32_0 : i32, i32
  }
  func.func @transform_8(%arg0: i32, %arg1: i32) -> (i32, i32) {
    %c0_i32 = arith.constant 0 : i32
    %c0_i32_0 = arith.constant 0 : i32
    %c0_i32_1 = arith.constant 0 : i32
    return %c0_i32, %c0_i32_0 : i32, i32
  }
  func.func @transform_9(%arg0: i32, %arg1: i32) -> (i32, i32) {
    %c0_i32 = arith.constant 0 : i32
    %c0_i32_0 = arith.constant 0 : i32
    %c0_i32_1 = arith.constant 0 : i32
    return %c0_i32, %c0_i32_0 : i32, i32
  }
  func.func @transform_10(%arg0: i32, %arg1: i32) -> (i32, i32) {
    %c0_i32 = arith.constant 0 : i32
    %c0_i32_0 = arith.constant 0 : i32
    %c0_i32_1 = arith.constant 0 : i32
    return %c0_i32, %c0_i32_0 : i32, i32
  }
  func.func @transform_11(%arg0: i32, %arg1: i32) -> (i32, i32) {
    %c0_i32 = arith.constant 0 : i32
    %c0_i32_0 = arith.constant 0 : i32
    %c0_i32_1 = arith.constant 0 : i32
    return %c0_i32, %c0_i32_0 : i32, i32
  }
  func.func @transform_12(%arg0: i32, %arg1: i32) -> (i32, i32) {
    %c0_i32 = arith.constant 0 : i32
    %c0_i32_0 = arith.constant 0 : i32
    %c0_i32_1 = arith.constant 0 : i32
    return %c0_i32, %c0_i32_0 : i32, i32
  }
  func.func @transform_13(%arg0: i32, %arg1: i32) -> (i32, i32) {
    %c0_i32 = arith.constant 0 : i32
    %c0_i32_0 = arith.constant 0 : i32
    return %arg0, %c0_i32 : i32, i32
  }
}

</mosaic_0001>

<llo_original>
// kernel: tpu_custom_call.1
$region0: #{tpu_custom_call.1}
  #allocation0 [shape = 'u32[]', space=smem, size = 0x4, offset = 0x4, fixed_abs, tag = 'smem constant byte address 0x4 - core index']
  #allocation1 [shape = 'u32[72,128]{1,0:T(1,128)}', space=vmem, size = 0x9000, scoped, tag = 'internal scratch']
  %s0 = inlined_call_operand.vmem [shape: f32[3,1,192,5], index: 0, kind: input, shape index: {}]
  %s1 = inlined_call_operand.vmem [shape: f32[24,32], index: 1, kind: input, shape index: {}]
  %s2 = inlined_call_operand.vmem [shape: f32[24,32], index: 2, kind: input, shape index: {}]
  %s3 = inlined_call_operand.vmem [shape: f32[1,16], index: 3, kind: input, shape index: {}]
  %s4 = inlined_call_operand.vmem [shape: bf16[16,32], index: 4, kind: input, shape index: {}]
  %s5 = inlined_call_operand.vmem [shape: f32[1,32], index: 5, kind: input, shape index: {}]
  %s6 = inlined_call_operand.vmem [shape: bf16[32,32], index: 6, kind: input, shape index: {}]
  %s7 = inlined_call_operand.vmem [shape: f32[1,32], index: 7, kind: input, shape index: {}]
  %s8 = inlined_call_operand.vmem [shape: bf16[32,32], index: 8, kind: input, shape index: {}]
  %s9 = inlined_call_operand.vmem [shape: f32[1,32], index: 9, kind: input, shape index: {}]
  %s10 = inlined_call_operand.vmem [shape: f32[1,8], index: 10, kind: input, shape index: {}]
  %s11 = inlined_call_operand.vmem [shape: bf16[32,256], index: 11, kind: input, shape index: {}]
  %s12 = inlined_call_operand.vmem [shape: f32[1,256], index: 12, kind: input, shape index: {}]
  %s13 = inlined_call_operand.hbm [shape: f32[24,128], index: 13, kind: output, shape index: {}]
  %s14 = sld [smem:[#allocation0]]
  $region89: #{tpu_custom_call.1} parent=0
    _
  %s16 = ssub.s32 1, %s14
  %s17 = scalar_select 0, %s16, %s14
  $region1: #{tpu_custom_call.1} parent=0
    #allocation2 [shape = 'u8[8192]{0}', space=vmem, size = 0x2000, scoped, tag = 'output window, operand 0']
    #allocation3 [shape = 's32[2]{0}', space=sflag, size = 0x8, scoped, tag = 'scoped memory for tpu_custom_call.1']
    %18 = vsyncpa [#allocation3], 0
    %s19 = scalar_lea.sflag [#allocation3], 1
    %20 = vsyncpa %s19, 0
    loop: start=0, step=1, limit=5
    $region2: #{tpu_custom_call.1} parent=1 // loop_pre_header
      _
    $region3: #{tpu_custom_call.1} parent=1 // loop_header
      %s22 = sphi 0, %s26
      %p23 = scmp.ge.s32.totalorder %s22, 5
      %s29 = sphi 0, %s41
      %s30 = sphi 0, %s37
      %s31 = sphi 0, %s29
      %s32 = sphi 0, %s30
      %s33 = sphi 0, %s31
      %s34 = sphi 0, %s32
      %s46 = sphi 0, %s48
      %s49 = sphi 0, %s46
      %s50 = sphi 0, %s49
      %s66 = sphi 0, %s50
      %s72 = sphi 0, %s74
      %s75 = sphi 0, %s72
      %s76 = sphi 0, %s75
      %s92 = sphi 0, %s76
      %s98 = sphi 0, %s100
      %s101 = sphi 0, %s98
      %s102 = sphi 0, %s101
      %s118 = sphi 0, %s102
      %s122 = sphi 0, %s122
      %s124 = sphi 0, %s122
      %s125 = sphi 0, %s124
      %s139 = sphi 0, %s125
      %s143 = sphi 0, %s143
      %s145 = sphi 0, %s143
      %s146 = sphi 0, %s145
      %s160 = sphi 0, %s146
      %s164 = sphi 0, %s164
      %s166 = sphi 0, %s164
      %s167 = sphi 0, %s166
      %s181 = sphi 0, %s167
      %s185 = sphi 0, %s185
      %s187 = sphi 0, %s185
      %s188 = sphi 0, %s187
      %s202 = sphi 0, %s188
      %s206 = sphi 0, %s206
      %s208 = sphi 0, %s206
      %s209 = sphi 0, %s208
      %s223 = sphi 0, %s209
      %s227 = sphi 0, %s227
      %s229 = sphi 0, %s227
      %s230 = sphi 0, %s229
      %s244 = sphi 0, %s230
      %s248 = sphi 0, %s248
      %s250 = sphi 0, %s248
      %s251 = sphi 0, %s250
      %s265 = sphi 0, %s251
      %s269 = sphi 0, %s269
      %s271 = sphi 0, %s269
      %s272 = sphi 0, %s271
      %s286 = sphi 0, %s272
      %s290 = sphi 0, %s290
      %s292 = sphi 0, %s290
      %s293 = sphi 0, %s292
      %s307 = sphi 0, %s293
      %s311 = sphi 0, %s311
      %s313 = sphi 0, %s311
      %s314 = sphi 0, %s313
      %s328 = sphi 0, %s314
      %s334 = sphi 0, %s336
      %s337 = sphi 0, %s334
      %s338 = sphi 0, %s337
      %s354 = sphi 0, %s338
    $region4: #{tpu_custom_call.1} parent=1 // loop_header_branch
      %25 = sbr.rel (%p23) target = $region8
    $region5: #{tpu_custom_call.1} parent=1 // loop_body
      %s27 = ssub.s32 %s22, 1
      %s28 = ssub.s32 %s22, 2
      %s35 = sadd.s32 1, %s30
      %p36 = scmp.ge.s32.totalorder %s35, 1
      %s37 = scalar_select %p36, 0, %s35
      %s38 = sadd.s32 1, %s29
      %s39 = scalar_select %p36, %s38, %s29
      %p40 = scmp.ge.s32.totalorder %s39, 3
      %s41 = scalar_select %p40, 0, %s39
      %s42 = ssub.s32 %s29, %s41
      %s43 = ssub.s32 %s30, %s37
      %s44 = sor.u32 %s42, %s43
      %p45 = scmp.eq.s32.totalorder %s44, 0
      %s47 = sadd.s32 %s46, 1
      %s48 = scalar_select %p45, %s46, %s47
      %p51 = pneg %p45
      %p52 = scmp.eq.s32.totalorder %s22, 2
      %p53 = por %p51, %p52
      %p54 = scmp.ne.s32.totalorder %s46, %s49
      %p55 = scmp.eq.s32.totalorder %s22, 0
      %p56 = por %p54, %p55
      %p57 = scmp.ne.s32.totalorder %s46, %s49
      %p58 = scmp.eq.s32.totalorder %s27, 2
      %p59 = por %p57, %p58
      %p60 = scmp.ne.s32.totalorder %s49, %s50
      %p61 = scmp.eq.s32.totalorder %s27, 0
      %p62 = por %p60, %p61
      %p63 = scmp.ne.s32.totalorder %s49, %s50
      %p64 = scmp.eq.s32.totalorder %s28, 2
      %p65 = por %p63, %p64
      %p67 = scmp.ne.s32.totalorder %s50, %s66
      %p68 = scmp.eq.s32.totalorder %s28, 0
      %p69 = por %p67, %p68
      %s70 = ssub.s32 %s29, %s41
      %p71 = scmp.eq.s32.totalorder %s70, 0
      %s73 = sadd.s32 %s72, 1
      %s74 = scalar_select %p71, %s72, %s73
      %p77 = pneg %p71
      %p78 = scmp.eq.s32.totalorder %s22, 2
      %p79 = por %p77, %p78
      %p80 = scmp.ne.s32.totalorder %s72, %s75
      %p81 = scmp.eq.s32.totalorder %s22, 0
      %p82 = por %p80, %p81
      %p83 = scmp.ne.s32.totalorder %s72, %s75
      %p84 = scmp.eq.s32.totalorder %s27, 2
      %p85 = por %p83, %p84
      %p86 = scmp.ne.s32.totalorder %s75, %s76
      %p87 = scmp.eq.s32.totalorder %s27, 0
      %p88 = por %p86, %p87
      %p89 = scmp.ne.s32.totalorder %s75, %s76
      %p90 = scmp.eq.s32.totalorder %s28, 2
      %p91 = por %p89, %p90
      %p93 = scmp.ne.s32.totalorder %s76, %s92
      %p94 = scmp.eq.s32.totalorder %s28, 0
      %p95 = por %p93, %p94
      %s96 = ssub.s32 %s30, %s37
      %p97 = scmp.eq.s32.totalorder %s96, 0
      %s99 = sadd.s32 %s98, 1
      %s100 = scalar_select %p97, %s98, %s99
      %p103 = pneg %p97
      %p104 = scmp.eq.s32.totalorder %s22, 2
      %p105 = por %p103, %p104
      %p106 = scmp.ne.s32.totalorder %s98, %s101
      %p107 = scmp.eq.s32.totalorder %s22, 0
      %p108 = por %p106, %p107
      %p109 = scmp.ne.s32.totalorder %s98, %s101
      %p110 = scmp.eq.s32.totalorder %s27, 2
      %p111 = por %p109, %p110
      %p112 = scmp.ne.s32.totalorder %s101, %s102
      %p113 = scmp.eq.s32.totalorder %s27, 0
      %p114 = por %p112, %p113
      %p115 = scmp.ne.s32.totalorder %s101, %s102
      %p116 = scmp.eq.s32.totalorder %s28, 2
      %p117 = por %p115, %p116
      %p119 = scmp.ne.s32.totalorder %s102, %s118
      %p120 = scmp.eq.s32.totalorder %s28, 0
      %p121 = por %p119, %p120
      %s123 = sadd.s32 %s122, 1
      %p126 = scmp.eq.s32.totalorder %s22, 2
      %p127 = scmp.ne.s32.totalorder %s122, %s124
      %p128 = scmp.eq.s32.totalorder %s22, 0
      %p129 = por %p127, %p128
      %p130 = scmp.ne.s32.totalorder %s122, %s124
      %p131 = scmp.eq.s32.totalorder %s27, 2
      %p132 = por %p130, %p131
      %p133 = scmp.ne.s32.totalorder %s124, %s125
      %p134 = scmp.eq.s32.totalorder %s27, 0
      %p135 = por %p133, %p134
      %p136 = scmp.ne.s32.totalorder %s124, %s125
      %p137 = scmp.eq.s32.totalorder %s28, 2
      %p138 = por %p136, %p137
      %p140 = scmp.ne.s32.totalorder %s125, %s139
      %p141 = scmp.eq.s32.totalorder %s28, 0
      %p142 = por %p140, %p141
      %s144 = sadd.s32 %s143, 1
      %p147 = scmp.eq.s32.totalorder %s22, 2
      %p148 = scmp.ne.s32.totalorder %s143, %s145
      %p149 = scmp.eq.s32.totalorder %s22, 0
      %p150 = por %p148, %p149
      %p151 = scmp.ne.s32.totalorder %s143, %s145
      %p152 = scmp.eq.s32.totalorder %s27, 2
      %p153 = por %p151, %p152
      %p154 = scmp.ne.s32.totalorder %s145, %s146
      %p155 = scmp.eq.s32.totalorder %s27, 0
      %p156 = por %p154, %p155
      %p157 = scmp.ne.s32.totalorder %s145, %s146
      %p158 = scmp.eq.s32.totalorder %s28, 2
      %p159 = por %p157, %p158
      %p161 = scmp.ne.s32.totalorder %s146, %s160
      %p162 = scmp.eq.s32.totalorder %s28, 0
      %p163 = por %p161, %p162
      %s165 = sadd.s32 %s164, 1
      %p168 = scmp.eq.s32.totalorder %s22, 2
      %p169 = scmp.ne.s32.totalorder %s164, %s166
      %p170 = scmp.eq.s32.totalorder %s22, 0
      %p171 = por %p169, %p170
      %p172 = scmp.ne.s32.totalorder %s164, %s166
      %p173 = scmp.eq.s32.totalorder %s27, 2
      %p174 = por %p172, %p173
      %p175 = scmp.ne.s32.totalorder %s166, %s167
      %p176 = scmp.eq.s32.totalorder %s27, 0
      %p177 = por %p175, %p176
      %p178 = scmp.ne.s32.totalorder %s166, %s167
      %p179 = scmp.eq.s32.totalorder %s28, 2
      %p180 = por %p178, %p179
      %p182 = scmp.ne.s32.totalorder %s167, %s181
      %p183 = scmp.eq.s32.totalorder %s28, 0
      %p184 = por %p182, %p183
      %s186 = sadd.s32 %s185, 1
      %p189 = scmp.eq.s32.totalorder %s22, 2
      %p190 = scmp.ne.s32.totalorder %s185, %s187
      %p191 = scmp.eq.s32.totalorder %s22, 0
      %p192 = por %p190, %p191
      %p193 = scmp.ne.s32.totalorder %s185, %s187
      %p194 = scmp.eq.s32.totalorder %s27, 2
      %p195 = por %p193, %p194
      %p196 = scmp.ne.s32.totalorder %s187, %s188
      %p197 = scmp.eq.s32.totalorder %s27, 0
      %p198 = por %p196, %p197
      %p199 = scmp.ne.s32.totalorder %s187, %s188
      %p200 = scmp.eq.s32.totalorder %s28, 2
      %p201 = por %p199, %p200
      %p203 = scmp.ne.s32.totalorder %s188, %s202
      %p204 = scmp.eq.s32.totalorder %s28, 0
      %p205 = por %p203, %p204
      %s207 = sadd.s32 %s206, 1
      %p210 = scmp.eq.s32.totalorder %s22, 2
      %p211 = scmp.ne.s32.totalorder %s206, %s208
      %p212 = scmp.eq.s32.totalorder %s22, 0
      %p213 = por %p211, %p212
      %p214 = scmp.ne.s32.totalorder %s206, %s208
      %p215 = scmp.eq.s32.totalorder %s27, 2
      %p216 = por %p214, %p215
      %p217 = scmp.ne.s32.totalorder %s208, %s209
      %p218 = scmp.eq.s32.totalorder %s27, 0
      %p219 = por %p217, %p218
      %p220 = scmp.ne.s32.totalorder %s208, %s209
      %p221 = scmp.eq.s32.totalorder %s28, 2
      %p222 = por %p220, %p221
      %p224 = scmp.ne.s32.totalorder %s209, %s223
      %p225 = scmp.eq.s32.totalorder %s28, 0
      %p226 = por %p224, %p225
      %s228 = sadd.s32 %s227, 1
      %p231 = scmp.eq.s32.totalorder %s22, 2
      %p232 = scmp.ne.s32.totalorder %s227, %s229
      %p233 = scmp.eq.s32.totalorder %s22, 0
      %p234 = por %p232, %p233
      %p235 = scmp.ne.s32.totalorder %s227, %s229
      %p236 = scmp.eq.s32.totalorder %s27, 2
      %p237 = por %p235, %p236
      %p238 = scmp.ne.s32.totalorder %s229, %s230
      %p239 = scmp.eq.s32.totalorder %s27, 0
      %p240 = por %p238, %p239
      %p241 = scmp.ne.s32.totalorder %s229, %s230
      %p242 = scmp.eq.s32.totalorder %s28, 2
      %p243 = por %p241, %p242
      %p245 = scmp.ne.s32.totalorder %s230, %s244
      %p246 = scmp.eq.s32.totalorder %s28, 0
      %p247 = por %p245, %p246
      %s249 = sadd.s32 %s248, 1
      %p252 = scmp.eq.s32.totalorder %s22, 2
      %p253 = scmp.ne.s32.totalorder %s248, %s250
      %p254 = scmp.eq.s32.totalorder %s22, 0
      %p255 = por %p253, %p254
      %p256 = scmp.ne.s32.totalorder %s248, %s250
      %p257 = scmp.eq.s32.totalorder %s27, 2
      %p258 = por %p256, %p257
      %p259 = scmp.ne.s32.totalorder %s250, %s251
      %p260 = scmp.eq.s32.totalorder %s27, 0
      %p261 = por %p259, %p260
      %p262 = scmp.ne.s32.totalorder %s250, %s251
      %p263 = scmp.eq.s32.totalorder %s28, 2
      %p264 = por %p262, %p263
      %p266 = scmp.ne.s32.totalorder %s251, %s265
      %p267 = scmp.eq.s32.totalorder %s28, 0
      %p268 = por %p266, %p267
      %s270 = sadd.s32 %s269, 1
      %p273 = scmp.eq.s32.totalorder %s22, 2
      %p274 = scmp.ne.s32.totalorder %s269, %s271
      %p275 = scmp.eq.s32.totalorder %s22, 0
      %p276 = por %p274, %p275
      %p277 = scmp.ne.s32.totalorder %s269, %s271
      %p278 = scmp.eq.s32.totalorder %s27, 2
      %p279 = por %p277, %p278
      %p280 = scmp.ne.s32.totalorder %s271, %s272
      %p281 = scmp.eq.s32.totalorder %s27, 0
      %p282 = por %p280, %p281
      %p283 = scmp.ne.s32.totalorder %s271, %s272
      %p284 = scmp.eq.s32.totalorder %s28, 2
      %p285 = por %p283, %p284
      %p287 = scmp.ne.s32.totalorder %s272, %s286
      %p288 = scmp.eq.s32.totalorder %s28, 0
      %p289 = por %p287, %p288
      %s291 = sadd.s32 %s290, 1
      %p294 = scmp.eq.s32.totalorder %s22, 2
      %p295 = scmp.ne.s32.totalorder %s290, %s292
      %p296 = scmp.eq.s32.totalorder %s22, 0
      %p297 = por %p295, %p296
      %p298 = scmp.ne.s32.totalorder %s290, %s292
      %p299 = scmp.eq.s32.totalorder %s27, 2
      %p300 = por %p298, %p299
      %p301 = scmp.ne.s32.totalorder %s292, %s293
      %p302 = scmp.eq.s32.totalorder %s27, 0
      %p303 = por %p301, %p302
      %p304 = scmp.ne.s32.totalorder %s292, %s293
      %p305 = scmp.eq.s32.totalorder %s28, 2
      %p306 = por %p304, %p305
      %p308 = scmp.ne.s32.totalorder %s293, %s307
      %p309 = scmp.eq.s32.totalorder %s28, 0
      %p310 = por %p308, %p309
      %s312 = sadd.s32 %s311, 1
      %p315 = scmp.eq.s32.totalorder %s22, 2
      %p316 = scmp.ne.s32.totalorder %s311, %s313
      %p317 = scmp.eq.s32.totalorder %s22, 0
      %p318 = por %p316, %p317
      %p319 = scmp.ne.s32.totalorder %s311, %s313
      %p320 = scmp.eq.s32.totalorder %s27, 2
      %p321 = por %p319, %p320
      %p322 = scmp.ne.s32.totalorder %s313, %s314
      %p323 = scmp.eq.s32.totalorder %s27, 0
      %p324 = por %p322, %p323
      %p325 = scmp.ne.s32.totalorder %s313, %s314
      %p326 = scmp.eq.s32.totalorder %s28, 2
      %p327 = por %p325, %p326
      %p329 = scmp.ne.s32.totalorder %s314, %s328
      %p330 = scmp.eq.s32.totalorder %s28, 0
      %p331 = por %p329, %p330
      %s332 = ssub.s32 %s29, %s41
      %p333 = scmp.eq.s32.totalorder %s332, 0
      %s335 = sadd.s32 %s334, 1
      %s336 = scalar_select %p333, %s334, %s335
      %p339 = pneg %p333
      %p340 = scmp.eq.s32.totalorder %s22, 2
      %p341 = por %p339, %p340
      %p342 = scmp.ne.s32.totalorder %s334, %s337
      %p343 = scmp.eq.s32.totalorder %s22, 0
      %p344 = por %p342, %p343
      %p345 = scmp.ne.s32.totalorder %s334, %s337
      %p346 = scmp.eq.s32.totalorder %s27, 2
      %p347 = por %p345, %p346
      %p348 = scmp.ne.s32.totalorder %s337, %s338
      %p349 = scmp.eq.s32.totalorder %s27, 0
      %p350 = por %p348, %p349
      %p351 = scmp.ne.s32.totalorder %s337, %s338
      %p352 = scmp.eq.s32.totalorder %s28, 2
      %p353 = por %p351, %p352
      %p355 = scmp.ne.s32.totalorder %s338, %s354
      %p356 = scmp.eq.s32.totalorder %s28, 0
      %p357 = por %p355, %p356
      %p358 = scmp.le.s32.totalorder 1, %s22
      %p359 = scmp.lt.s32.totalorder %s22, 4
      %p360 = pnand %p358, %p359
      %p361 = pneg %p360
      // Predicated region
      $region9: #{tpu_custom_call.1} parent=5 // pred_check
        _
      $region10: #{tpu_custom_call.1} parent=5 // pred_check_branch
        %363 = sbr.rel (%p360) target = $region12
      $region11: #{tpu_custom_call.1} parent=5 // pred_region
        %s364 = ssub.s32 %s22, 1
        // Predicated region
        $region13: #{tpu_custom_call.1} parent=11 // pred_check
          %p365 = pneg %p114
        $region14: #{tpu_custom_call.1} parent=11 // pred_check_branch
          %367 = sbr.rel (%p365) target = $region16
        $region15: #{tpu_custom_call.1} parent=11 // pred_region
          %s368 = smul.u32 3, %s32
          %p369 = scmp.lt.s32.totalorder %s368, 2
          %s370 = scalar_select %p369, %s368, 2
          %s371 = smul.addr %s370, 8
          %s372 = scalar_lea.vmem %s2, %s371
          %s373 = smul.u32 3, %s32
        $region16: #{tpu_custom_call.1} parent=11 // pred_fallthru
          _
        // Predicated region
        $region17: #{tpu_custom_call.1} parent=11 // pred_check
          %p374 = pneg %p135
        $region18: #{tpu_custom_call.1} parent=11 // pred_check_branch
          %376 = sbr.rel (%p374) target = $region20
        $region19: #{tpu_custom_call.1} parent=11 // pred_region
          _
        $region20: #{tpu_custom_call.1} parent=11 // pred_fallthru
          _
        // Predicated region
        $region21: #{tpu_custom_call.1} parent=11 // pred_check
          %p377 = pneg %p156
        $region22: #{tpu_custom_call.1} parent=11 // pred_check_branch
          %379 = sbr.rel (%p377) target = $region24
        $region23: #{tpu_custom_call.1} parent=11 // pred_region
          _
        $region24: #{tpu_custom_call.1} parent=11 // pred_fallthru
          _
        // Predicated region
        $region25: #{tpu_custom_call.1} parent=11 // pred_check
          %p380 = pneg %p177
        $region26: #{tpu_custom_call.1} parent=11 // pred_check_branch
          %382 = sbr.rel (%p380) target = $region28
        $region27: #{tpu_custom_call.1} parent=11 // pred_region
          _
        $region28: #{tpu_custom_call.1} parent=11 // pred_fallthru
          _
        // Predicated region
        $region29: #{tpu_custom_call.1} parent=11 // pred_check
          %p383 = pneg %p198
        $region30: #{tpu_custom_call.1} parent=11 // pred_check_branch
          %385 = sbr.rel (%p383) target = $region32
        $region31: #{tpu_custom_call.1} parent=11 // pred_region
          _
        $region32: #{tpu_custom_call.1} parent=11 // pred_fallthru
          _
        // Predicated region
        $region33: #{tpu_custom_call.1} parent=11 // pred_check
          %p386 = pneg %p219
        $region34: #{tpu_custom_call.1} parent=11 // pred_check_branch
          %388 = sbr.rel (%p386) target = $region36
        $region35: #{tpu_custom_call.1} parent=11 // pred_region
          _
        $region36: #{tpu_custom_call.1} parent=11 // pred_fallthru
          _
        // Predicated region
        $region37: #{tpu_custom_call.1} parent=11 // pred_check
          %p389 = pneg %p240
        $region38: #{tpu_custom_call.1} parent=11 // pred_check_branch
          %391 = sbr.rel (%p389) target = $region40
        $region39: #{tpu_custom_call.1} parent=11 // pred_region
          _
        $region40: #{tpu_custom_call.1} parent=11 // pred_fallthru
          _
        // Predicated region
        $region41: #{tpu_custom_call.1} parent=11 // pred_check
          %p392 = pneg %p261
        $region42: #{tpu_custom_call.1} parent=11 // pred_check_branch
          %394 = sbr.rel (%p392) target = $region44
        $region43: #{tpu_custom_call.1} parent=11 // pred_region
          _
        $region44: #{tpu_custom_call.1} parent=11 // pred_fallthru
          _
        // Predicated region
        $region45: #{tpu_custom_call.1} parent=11 // pred_check
          %p395 = pneg %p282
        $region46: #{tpu_custom_call.1} parent=11 // pred_check_branch
          %397 = sbr.rel (%p395) target = $region48
        $region47: #{tpu_custom_call.1} parent=11 // pred_region
          _
        $region48: #{tpu_custom_call.1} parent=11 // pred_fallthru
          _
        // Predicated region
        $region49: #{tpu_custom_call.1} parent=11 // pred_check
          %p398 = pneg %p303
        $region50: #{tpu_custom_call.1} parent=11 // pred_check_branch
          %400 = sbr.rel (%p398) target = $region52
        $region51: #{tpu_custom_call.1} parent=11 // pred_region
          _
        $region52: #{tpu_custom_call.1} parent=11 // pred_fallthru
          _
        // Predicated region
        $region53: #{tpu_custom_call.1} parent=11 // pred_check
          %p401 = pneg %p324
        $region54: #{tpu_custom_call.1} parent=11 // pred_check_branch
          %403 = sbr.rel (%p401) target = $region56
        $region55: #{tpu_custom_call.1} parent=11 // pred_region
          _
        $region56: #{tpu_custom_call.1} parent=11 // pred_fallthru
          _
      $region12: #{tpu_custom_call.1} parent=5 // pred_fallthru
        _
      %p404 = scmp.lt.s32.totalorder %s22, 3
      // Predicated region
      $region57: #{tpu_custom_call.1} parent=5 // pred_check
        %p405 = pneg %p404
      $region58: #{tpu_custom_call.1} parent=5 // pred_check_branch
        %407 = sbr.rel (%p405) target = $region60
      $region59: #{tpu_custom_call.1} parent=5 // pred_region
        // Predicated region
        $region61: #{tpu_custom_call.1} parent=59 // pred_check
          %p408 = pneg %p56
        $region62: #{tpu_custom_call.1} parent=59 // pred_check_branch
          %410 = sbr.rel (%p408) target = $region64
        $region63: #{tpu_custom_call.1} parent=59 // pred_region
          %p411 = scmp.lt.s32.totalorder %s29, 2
          %s412 = scalar_select %p411, %s29, 2
          %p413 = scmp.lt.s32.totalorder %s30, 0
          %s414 = scalar_select %p413, %s30, 0
          %s415 = smul.addr %s414, 24
          %s416 = smul.addr %s412, 24
          %s417 = sadd.s32 %s415, %s416
          %s418 = smul.addr %s417, 8
          %s419 = scalar_lea.vmem %s0, %s418
        $region64: #{tpu_custom_call.1} parent=59 // pred_fallthru
          _
        // Predicated region
        $region65: #{tpu_custom_call.1} parent=59 // pred_check
          %p420 = pneg %p82
        $region66: #{tpu_custom_call.1} parent=59 // pred_check_branch
          %422 = sbr.rel (%p420) target = $region68
        $region67: #{tpu_custom_call.1} parent=59 // pred_region
          %p423 = scmp.lt.s32.totalorder %s29, 2
          %s424 = scalar_select %p423, %s29, 2
          %s425 = smul.addr %s424, 8
          %s426 = scalar_lea.vmem %s1, %s425
        $region68: #{tpu_custom_call.1} parent=59 // pred_fallthru
          _
      $region60: #{tpu_custom_call.1} parent=5 // pred_fallthru
        _
      %p427 = scmp.le.s32.totalorder 1, %s22
      %p428 = scmp.lt.s32.totalorder %s22, 4
      %p429 = pnand %p427, %p428
      %p430 = pneg %p429
      // Predicated region
      $region69: #{tpu_custom_call.1} parent=5 // pred_check
        _
      $region70: #{tpu_custom_call.1} parent=5 // pred_check_branch
        %432 = sbr.rel (%p429) target = $region72
      $region71: #{tpu_custom_call.1} parent=5 // pred_region
        %s433 = ssub.s32 %s22, 1
        %p434 = scmp.lt.s32.totalorder %s31, 2
        %s435 = scalar_select %p434, %s31, 2
        %p436 = scmp.lt.s32.totalorder %s32, 0
        %s437 = scalar_select %p436, %s32, 0
        %s438 = smul.addr %s437, 24
        %s439 = smul.addr %s435, 24
        %s440 = sadd.s32 %s438, %s439
        %s441 = smul.addr %s440, 8
        %s442 = scalar_lea.vmem %s0, %s441
        %p443 = pneg %p62
        %p444 = pneg %p59
        %p445 = scmp.lt.s32.totalorder %s31, 2
        %s446 = scalar_select %p445, %s31, 2
        %s447 = smul.addr %s446, 8
        %s448 = scalar_lea.vmem %s1, %s447
        %p449 = pneg %p88
        %p450 = pneg %p85
        %s451 = smul.u32 3, %s32
        %p452 = scmp.lt.s32.totalorder %s451, 2
        %s453 = scalar_select %p452, %s451, 2
        %s454 = smul.addr %s453, 8
        %s455 = scalar_lea.vmem %s2, %s454
        %p456 = pneg %p114
        %p457 = pneg %p111
        %p458 = pneg %p135
        %p459 = pneg %p132
        %p460 = pneg %p156
        %p461 = pneg %p153
        %p462 = pneg %p177
        %p463 = pneg %p174
        %p464 = pneg %p198
        %p465 = pneg %p195
        %p466 = pneg %p219
        %p467 = pneg %p216
        %p468 = pneg %p240
        %p469 = pneg %p237
        %p470 = pneg %p261
        %p471 = pneg %p258
        %p472 = pneg %p282
        %p473 = pneg %p279
        %p474 = pneg %p303
        %p475 = pneg %p300
        %p476 = pneg %p324
        %p477 = pneg %p321
        %p478 = pneg %p350
        %p479 = pneg %p347
        %s480 = sand.u32 %s337, 1
        %s481 = scalar_lea.sflag [#allocation3], %s480
        %s482 = sand.u32 %s337, 1
        %s483 = smul.addr %s482, 8
        %s484 = scalar_lea.vmem [#allocation2], %s483
        %p485 = scmp.lt.s32.totalorder %s31, 2
        %s486 = scalar_select %p485, %s31, 2
        %p487 = scmp.lt.s32.totalorder %s32, 0
        %s488 = scalar_select %p487, %s32, 0
        %s489 = smul.addr %s488, 24
        %s490 = smul.addr %s486, 24
        %s491 = sadd.s32 %s489, %s490
        %s492 = smul.addr %s491, 8
        %s493 = scalar_lea.vmem %s0, %s492
        %p494 = scmp.lt.s32.totalorder %s31, 2
        %s495 = scalar_select %p494, %s31, 2
        %s496 = smul.addr %s495, 8
        %s497 = scalar_lea.vmem %s1, %s496
        %s498 = smul.u32 3, %s32
        %p499 = scmp.lt.s32.totalorder %s498, 2
        %s500 = scalar_select %p499, %s498, 2
        %s501 = smul.addr %s500, 8
        %s502 = scalar_lea.vmem %s2, %s501
        %s503 = smul.u32 3, %s32
        %p505 = scmp.eq.s32.totalorder %s32, 0
        // Predicated region
        $region73: #{tpu_custom_call.1} parent=71 // pred_check
          %p506 = pneg %p505
        $region74: #{tpu_custom_call.1} parent=71 // pred_check_branch
          %508 = sbr.rel (%p506) target = $region76
        $region75: #{tpu_custom_call.1} parent=71 // pred_region
          %509 = vst [vmem:[%s484] sm:$0xff] 0.0
        $region76: #{tpu_custom_call.1} parent=71 // pred_fallthru
          _
        %v510 = vld [vmem:[%s493] sm:$0xff]
        %v511 = vld [vmem:[%s493 + $0x8] sm:$0xff]
        %v512 = vld [vmem:[%s493 + $0x10] sm:$0xff]
        %v513 = vld [vmem:[%s493 + $0x18] sm:$0xff]
        %v514 = vld [vmem:[%s493 + $0x20] sm:$0xff]
        %v515 = vld [vmem:[%s493 + $0x28] sm:$0xff]
        %v516 = vld [vmem:[%s493 + $0x30] sm:$0xff]
        %v517 = vld [vmem:[%s493 + $0x38] sm:$0xff]
        %v518 = vld [vmem:[%s493 + $0x40] sm:$0xff]
        %v519 = vld [vmem:[%s493 + $0x48] sm:$0xff]
        %v520 = vld [vmem:[%s493 + $0x50] sm:$0xff]
        %v521 = vld [vmem:[%s493 + $0x58] sm:$0xff]
        %v522 = vld [vmem:[%s493 + $0x60] sm:$0xff]
        %v523 = vld [vmem:[%s493 + $0x68] sm:$0xff]
        %v524 = vld [vmem:[%s493 + $0x70] sm:$0xff]
        %v525 = vld [vmem:[%s493 + $0x78] sm:$0xff]
        %v526 = vld [vmem:[%s493 + $0x80] sm:$0xff]
        %v527 = vld [vmem:[%s493 + $0x88] sm:$0xff]
        %v528 = vld [vmem:[%s493 + $0x90] sm:$0xff]
        %v529 = vld [vmem:[%s493 + $0x98] sm:$0xff]
        %v530 = vld [vmem:[%s493 + $0xa0] sm:$0xff]
        %v531 = vld [vmem:[%s493 + $0xa8] sm:$0xff]
        %v532 = vld [vmem:[%s493 + $0xb0] sm:$0xff]
        %v533 = vld [vmem:[%s493 + $0xb8] sm:$0xff]
        %v534 = vld [vmem:[%s3] sm:$0x1]
        %536 = vset.pattern.permute.xlu0 0
        %537 = vperm.xlu0 %536, %v510
        %v538 = vpop.permute.xlu0 %537
        %541 = vset.pattern.permute.xlu0 0
        %542 = vperm.xlu0 %541, %v511
        %v543 = vpop.permute.xlu0 %542
        %546 = vset.pattern.permute.xlu0 0
        %547 = vperm.xlu0 %546, %v512
        %v548 = vpop.permute.xlu0 %547
        %551 = vset.pattern.permute.xlu0 0
        %552 = vperm.xlu0 %551, %v513
        %v553 = vpop.permute.xlu0 %552
        %556 = vset.pattern.permute.xlu0 0
        %557 = vperm.xlu0 %556, %v514
        %v558 = vpop.permute.xlu0 %557
        %561 = vset.pattern.permute.xlu0 0
        %562 = vperm.xlu0 %561, %v515
        %v563 = vpop.permute.xlu0 %562
        %566 = vset.pattern.permute.xlu0 0
        %567 = vperm.xlu0 %566, %v516
        %v568 = vpop.permute.xlu0 %567
        %571 = vset.pattern.permute.xlu0 0
        %572 = vperm.xlu0 %571, %v517
        %v573 = vpop.permute.xlu0 %572
        %576 = vset.pattern.permute.xlu0 0
        %577 = vperm.xlu0 %576, %v518
        %v578 = vpop.permute.xlu0 %577
        %581 = vset.pattern.permute.xlu0 0
        %582 = vperm.xlu0 %581, %v519
        %v583 = vpop.permute.xlu0 %582
        %586 = vset.pattern.permute.xlu0 0
        %587 = vperm.xlu0 %586, %v520
        %v588 = vpop.permute.xlu0 %587
        %591 = vset.pattern.permute.xlu0 0
        %592 = vperm.xlu0 %591, %v521
        %v593 = vpop.permute.xlu0 %592
        %596 = vset.pattern.permute.xlu0 0
        %597 = vperm.xlu0 %596, %v522
        %v598 = vpop.permute.xlu0 %597
        %601 = vset.pattern.permute.xlu0 0
        %602 = vperm.xlu0 %601, %v523
        %v603 = vpop.permute.xlu0 %602
        %606 = vset.pattern.permute.xlu0 0
        %607 = vperm.xlu0 %606, %v524
        %v608 = vpop.permute.xlu0 %607
        %611 = vset.pattern.permute.xlu0 0
        %612 = vperm.xlu0 %611, %v525
        %v613 = vpop.permute.xlu0 %612
        %616 = vset.pattern.permute.xlu0 0
        %617 = vperm.xlu0 %616, %v526
        %v618 = vpop.permute.xlu0 %617
        %621 = vset.pattern.permute.xlu0 0
        %622 = vperm.xlu0 %621, %v527
        %v623 = vpop.permute.xlu0 %622
        %626 = vset.pattern.permute.xlu0 0
        %627 = vperm.xlu0 %626, %v528
        %v628 = vpop.permute.xlu0 %627
        %631 = vset.pattern.permute.xlu0 0
        %632 = vperm.xlu0 %631, %v529
        %v633 = vpop.permute.xlu0 %632
        %636 = vset.pattern.permute.xlu0 0
        %637 = vperm.xlu0 %636, %v530
        %v638 = vpop.permute.xlu0 %637
        %641 = vset.pattern.permute.xlu0 0
        %642 = vperm.xlu0 %641, %v531
        %v643 = vpop.permute.xlu0 %642
        %646 = vset.pattern.permute.xlu0 0
        %647 = vperm.xlu0 %646, %v532
        %v648 = vpop.permute.xlu0 %647
        %651 = vset.pattern.permute.xlu0 0
        %652 = vperm.xlu0 %651, %v533
        %v653 = vpop.permute.xlu0 %652
        %v656 = vperm.slane %v534, 0
        %v658 = vsub.f32 %v538, %v656
        %v659 = vsub.f32 %v543, %v656
        %v660 = vsub.f32 %v548, %v656
        %v661 = vsub.f32 %v553, %v656
        %v662 = vsub.f32 %v558, %v656
        %v663 = vsub.f32 %v563, %v656
        %v664 = vsub.f32 %v568, %v656
        %v665 = vsub.f32 %v573, %v656
        %v666 = vsub.f32 %v578, %v656
        %v667 = vsub.f32 %v583, %v656
        %v668 = vsub.f32 %v588, %v656
        %v669 = vsub.f32 %v593, %v656
        %v670 = vsub.f32 %v598, %v656
        %v671 = vsub.f32 %v603, %v656
        %v672 = vsub.f32 %v608, %v656
        %v673 = vsub.f32 %v613, %v656
        %v674 = vsub.f32 %v618, %v656
        %v675 = vsub.f32 %v623, %v656
        %v676 = vsub.f32 %v628, %v656
        %v677 = vsub.f32 %v633, %v656
        %v678 = vsub.f32 %v638, %v656
        %v679 = vsub.f32 %v643, %v656
        %v680 = vsub.f32 %v648, %v656
        %v681 = vsub.f32 %v653, %v656
        %v682 = vmul.f32 %v658, %v658
        %v683 = vmul.f32 %v659, %v659
        %v684 = vmul.f32 %v660, %v660
        %v685 = vmul.f32 %v661, %v661
        %v686 = vmul.f32 %v662, %v662
        %v687 = vmul.f32 %v663, %v663
        %v688 = vmul.f32 %v664, %v664
        %v689 = vmul.f32 %v665, %v665
        %v690 = vmul.f32 %v666, %v666
        %v691 = vmul.f32 %v667, %v667
        %v692 = vmul.f32 %v668, %v668
        %v693 = vmul.f32 %v669, %v669
        %v694 = vmul.f32 %v670, %v670
        %v695 = vmul.f32 %v671, %v671
        %v696 = vmul.f32 %v672, %v672
        %v697 = vmul.f32 %v673, %v673
        %v698 = vmul.f32 %v674, %v674
        %v699 = vmul.f32 %v675, %v675
        %v700 = vmul.f32 %v676, %v676
        %v701 = vmul.f32 %v677, %v677
        %v702 = vmul.f32 %v678, %v678
        %v703 = vmul.f32 %v679, %v679
        %v704 = vmul.f32 %v680, %v680
        %v705 = vmul.f32 %v681, %v681
        %v706 = vmul.f32 %v682, -1.1249999
        %v707 = vmul.f32 %v683, -1.1249999
        %v708 = vmul.f32 %v684, -1.1249999
        %v709 = vmul.f32 %v685, -1.1249999
        %v710 = vmul.f32 %v686, -1.1249999
        %v711 = vmul.f32 %v687, -1.1249999
        %v712 = vmul.f32 %v688, -1.1249999
        %v713 = vmul.f32 %v689, -1.1249999
        %v714 = vmul.f32 %v690, -1.1249999
        %v715 = vmul.f32 %v691, -1.1249999
        %v716 = vmul.f32 %v692, -1.1249999
        %v717 = vmul.f32 %v693, -1.1249999
        %v718 = vmul.f32 %v694, -1.1249999
        %v719 = vmul.f32 %v695, -1.1249999
        %v720 = vmul.f32 %v696, -1.1249999
        %v721 = vmul.f32 %v697, -1.1249999
        %v722 = vmul.f32 %v698, -1.1249999
        %v723 = vmul.f32 %v699, -1.1249999
        %v724 = vmul.f32 %v700, -1.1249999
        %v725 = vmul.f32 %v701, -1.1249999
        %v726 = vmul.f32 %v702, -1.1249999
        %v727 = vmul.f32 %v703, -1.1249999
        %v728 = vmul.f32 %v704, -1.1249999
        %v729 = vmul.f32 %v705, -1.1249999
        %v730 = vmul.f32 %v706, 1.442695
        %v731 = vpow.pop %v730
        %v732 = vmul.f32 %v707, 1.442695
        %v733 = vpow.pop %v732
        %v734 = vmul.f32 %v708, 1.442695
        %v735 = vpow.pop %v734
        %v736 = vmul.f32 %v709, 1.442695
        %v737 = vpow.pop %v736
        %v738 = vmul.f32 %v710, 1.442695
        %v739 = vpow.pop %v738
        %v740 = vmul.f32 %v711, 1.442695
        %v741 = vpow.pop %v740
        %v742 = vmul.f32 %v712, 1.442695
        %v743 = vpow.pop %v742
        %v744 = vmul.f32 %v713, 1.442695
        %v745 = vpow.pop %v744
        %v746 = vmul.f32 %v714, 1.442695
        %v747 = vpow.pop %v746
        %v748 = vmul.f32 %v715, 1.442695
        %v749 = vpow.pop %v748
        %v750 = vmul.f32 %v716, 1.442695
        %v751 = vpow.pop %v750
        %v752 = vmul.f32 %v717, 1.442695
        %v753 = vpow.pop %v752
        %v754 = vmul.f32 %v718, 1.442695
        %v755 = vpow.pop %v754
        %v756 = vmul.f32 %v719, 1.442695
        %v757 = vpow.pop %v756
        %v758 = vmul.f32 %v720, 1.442695
        %v759 = vpow.pop %v758
        %v760 = vmul.f32 %v721, 1.442695
        %v761 = vpow.pop %v760
        %v762 = vmul.f32 %v722, 1.442695
        %v763 = vpow.pop %v762
        %v764 = vmul.f32 %v723, 1.442695
        %v765 = vpow.pop %v764
        %v766 = vmul.f32 %v724, 1.442695
        %v767 = vpow.pop %v766
        %v768 = vmul.f32 %v725, 1.442695
        %v769 = vpow.pop %v768
        %v770 = vmul.f32 %v726, 1.442695
        %v771 = vpow.pop %v770
        %v772 = vmul.f32 %v727, 1.442695
        %v773 = vpow.pop %v772
        %v774 = vmul.f32 %v728, 1.442695
        %v775 = vpow.pop %v774
        %v776 = vmul.f32 %v729, 1.442695
        %v777 = vpow.pop %v776
        %v778 = vmul.f32 %v510, 0.31415927
        %v779 = vmul.f32 %v511, 0.31415927
        %v780 = vmul.f32 %v512, 0.31415927
        %v781 = vmul.f32 %v513, 0.31415927
        %v782 = vmul.f32 %v514, 0.31415927
        %v783 = vmul.f32 %v515, 0.31415927
        %v784 = vmul.f32 %v516, 0.31415927
        %v785 = vmul.f32 %v517, 0.31415927
        %v786 = vmul.f32 %v518, 0.31415927
        %v787 = vmul.f32 %v519, 0.31415927
        %v788 = vmul.f32 %v520, 0.31415927
        %v789 = vmul.f32 %v521, 0.31415927
        %v790 = vmul.f32 %v522, 0.31415927
        %v791 = vmul.f32 %v523, 0.31415927
        %v792 = vmul.f32 %v524, 0.31415927
        %v793 = vmul.f32 %v525, 0.31415927
        %v794 = vmul.f32 %v526, 0.31415927
        %v795 = vmul.f32 %v527, 0.31415927
        %v796 = vmul.f32 %v528, 0.31415927
        %v797 = vmul.f32 %v529, 0.31415927
        %v798 = vmul.f32 %v530, 0.31415927
        %v799 = vmul.f32 %v531, 0.31415927
        %v800 = vmul.f32 %v532, 0.31415927
        %v801 = vmul.f32 %v533, 0.31415927
        %v802 = vand.u32 2147483647, %v778
        %vm803 = vcmp.le.f32.partialorder %v802, 0.7853982
        %vm804 = vcmp.lt.s32.totalorder %v778, 0
        %v805 = vand.u32 %v778, 2139095040
        %v806 = vshrl.u32 %v805, 23
        %v807 = vsub.s32 %v806, 127
        %v808 = vand.u32 2147483647, %v778
        %v809 = vand.u32 %v808, 8388607
        %v810 = vor.u32 %v809, 8388608
        %v811 = vsub.s32 0, %v810
        %v812 = vadd.s32 %v807, 1
        %vm813 = vcmp.gt.s32.totalorder %v812, 0
        %v814 = vsel %vm813, %v812, 0
        %v815 = vshrl.u32 %v814, 5
        %v816 = vand.u32 %v814, 31
        %v817 = vsub.s32 32, %v816
        %v818 = vshrl.u32 683565275, %v817
        %v819 = vshll.u32 683565275, %v816
        %v820 = vshrl.u32 2475754826, %v817
        %v821 = vor.u32 %v819, %v820
        %v822 = vshll.u32 2475754826, %v816
        %v823 = vshrl.u32 2131351028, %v817
        %v824 = vor.u32 %v822, %v823
        %v825 = vshll.u32 2131351028, %v816
        %v826 = vshrl.u32 2102212464, %v817
        %v827 = vor.u32 %v825, %v826
        %v828 = vshll.u32 2102212464, %v816
        %v829 = vshrl.u32 920167782, %v817
        %v830 = vor.u32 %v828, %v829
        %v831 = vshll.u32 920167782, %v816
        %v832 = vshrl.u32 1326507024, %v817
        %v833 = vor.u32 %v831, %v832
        %vm834 = vcmp.lt.s32.totalorder %v815, 1
        %vm835 = vcmp.lt.s32.totalorder %v815, 2
        %vm836 = vcmp.lt.s32.totalorder %v815, 3
        %vm837 = vcmp.lt.s32.totalorder %v815, 4
        %v838 = vsel %vm834, %v818, %v821
        %v839 = vsel %vm837, %v827, 2102212464
        %v840 = vsel %vm836, %v824, %v839
        %v841 = vsel %vm835, %v838, %v840
        %v842 = vsel %vm834, %v821, %v824
        %v843 = vsel %vm837, %v830, 920167782
        %v844 = vsel %vm836, %v827, %v843
        %v845 = vsel %vm835, %v842, %v844
        %v846 = vsel %vm834, %v824, %v827
        %v847 = vsel %vm837, %v833, 1326507024
        %v848 = vsel %vm836, %v830, %v847
        %v849 = vsel %vm835, %v846, %v848
        %v850 = vshll.u32 %v810, 8
        %v851 = vand.u32 %v850, 65535
        %v852 = vshrl.u32 %v850, 16
        %v853 = vand.u32 %v849, 65535
        %v854 = vshrl.u32 %v849, 16
        %v855 = vmul.u32 %v851, %v853
        %v856 = vmul.u32 %v851, %v854
        %v857 = vmul.u32 %v852, %v853
        %v858 = vmul.u32 %v852, %v854
        %v859 = vshll.u32 %v856, 16
        %v860 = vshrl.u32 %v856, 16
        %v861 = vshll.u32 %v857, 16
        %v862 = vshrl.u32 %v857, 16
        %vm863 = vc.u32 %v855, %v859
        %v864 = vsel %vm863, 1, 0
        %v865 = vadd.s32 %v855, %v859
        %v866 = vadd.s32 %v858, %v864
        %vm867 = vc.u32 %v865, %v861
        %v868 = vsel %vm867, 1, 0
        %v869 = vadd.s32 %v865, %v861
        %v870 = vadd.s32 %v866, %v868
        %v871 = vadd.s32 %v870, %v860
        %v872 = vadd.s32 %v871, %v862
        %v873 = vand.u32 %v850, 65535
        %v874 = vshrl.u32 %v850, 16
        %v875 = vand.u32 %v845, 65535
        %v876 = vshrl.u32 %v845, 16
        %v877 = vmul.u32 %v873, %v875
        %v878 = vmul.u32 %v873, %v876
        %v879 = vmul.u32 %v874, %v875
        %v880 = vmul.u32 %v874, %v876
        %v881 = vshll.u32 %v878, 16
        %v882 = vshrl.u32 %v878, 16
        %v883 = vshll.u32 %v879, 16
        %v884 = vshrl.u32 %v879, 16
        %vm885 = vc.u32 %v877, %v881
        %v886 = vsel %vm885, 1, 0
        %v887 = vadd.s32 %v877, %v881
        %v888 = vadd.s32 %v880, %v886
        %vm889 = vc.u32 %v887, %v883
        %v890 = vsel %vm889, 1, 0
        %v891 = vadd.s32 %v887, %v883
        %v892 = vadd.s32 %v888, %v890
        %v893 = vadd.s32 %v892, %v882
        %v894 = vadd.s32 %v893, %v884
        %v895 = vmul.u32 %v850, %v841
        %v896 = vadd.s32 %v872, %v891
        %vm897 = vc.u32 %v872, %v891
        %v898 = vadd.s32 %v894, 1
        %v899 = vsel %vm897, %v898, %v894
        %v900 = vadd.s32 %v895, %v899
        %v901 = vadd.s32 %v900, 536870912
        %v902 = vshrl.u32 %v901, 30
        %v903 = vshll.u32 %v902, 30
        %v904 = vsub.s32 %v900, %v903
        %vm905 = vcmp.lt.s32.totalorder %v904, 0
        %v906 = vsub.s32 0, %v904
        %v907 = vsel %vm905, %v906, %v904
        %v908 = vclz %v907
        %v909 = vsub.s32 %v908, 2
        %vm910 = vcmp.gt.s32.totalorder 0, %v909
        %v911 = vsel %vm910, 0, %v909
        %v912 = vsub.s32 32, %v911
        %v913 = vshll.u32 %v904, %v911
        %v914 = vshrl.u32 %v896, %v912
        %v915 = vor.u32 %v913, %v914
        %v916 = vsub.s32 4294967266, %v911
        %v917 = vadd.s32 %v916, 127
        %v918 = vshll.u32 %v917, 23
        %v919 = vor.u32 4788187, %v918
        %v920 = vand.u32 2147483647, %v919
        %v922 = vcvt.s32.f32 %v915
        %v923 = vmul.f32 %v922, %v920
        %v924 = vxor.u32 %v923, 2147483648
        %v925 = vsel %vm804, %v924, %v923
        %v926 = vsub.s32 4, %v902
        %v927 = vsel %vm804, %v926, %v902
        %v928 = vsel %vm803, %v778, %v925
        %v929 = vsel %vm803, 0, %v927
        %v930 = vmul.f32 %v928, %v928
        %v931 = vmul.f32 %v930, -0.001358992
        %v932 = vadd.f32 %v931, 0.041655596
        %v933 = vmul.f32 %v930, %v932
        %v934 = vadd.f32 %v933, -0.4999988
        %v935 = vmul.f32 %v930, %v934
        %v936 = vadd.f32 1.0, %v935
        %v937 = vmul.f32 %v928, %v928
        %v938 = vmul.f32 %v937, -0.00019511016
        %v939 = vadd.f32 %v938, 0.008332121
        %v940 = vmul.f32 %v937, %v939
        %v941 = vadd.f32 %v940, -0.16666654
        %v942 = vmul.f32 %v937, %v941
        %v943 = vadd.f32 %v942, 1.0
        %v944 = vmul.f32 %v943, %v928
        %vm945 = vweird.f32 %v778
        %v946 = vand.u32 %v929, 3
        %vm947 = vcmp.lt.s32.totalorder %v946, 2
        %vm948 = vcmp.eq.s32.totalorder %v946, 0
        %v949 = vxor.u32 %v944, 2147483648
        %v950 = vsel %vm948, %v936, %v949
        %vm951 = vcmp.eq.s32.totalorder %v946, 2
        %v952 = vxor.u32 %v936, 2147483648
        %v953 = vsel %vm951, %v952, %v944
        %v954 = vsel %vm947, %v950, %v953
        %v955 = vsel %vm945, nan, %v954
        %v956 = vand.u32 2147483647, %v779
        %vm957 = vcmp.le.f32.partialorder %v956, 0.7853982
        %vm958 = vcmp.lt.s32.totalorder %v779, 0
        %v959 = vand.u32 %v779, 2139095040
        %v960 = vshrl.u32 %v959, 23
        %v961 = vsub.s32 %v960, 127
        %v962 = vand.u32 2147483647, %v779
        %v963 = vand.u32 %v962, 8388607
        %v964 = vor.u32 %v963, 8388608
        %v965 = vsub.s32 0, %v964
        %v966 = vadd.s32 %v961, 1
        %vm967 = vcmp.gt.s32.totalorder %v966, 0
        %v968 = vsel %vm967, %v966, 0
        %v969 = vshrl.u32 %v968, 5
        %v970 = vand.u32 %v968, 31
        %v971 = vsub.s32 32, %v970
        %v972 = vshrl.u32 683565275, %v971
        %v973 = vshll.u32 683565275, %v970
        %v974 = vshrl.u32 2475754826, %v971
        %v975 = vor.u32 %v973, %v974
        %v976 = vshll.u32 2475754826, %v970
        %v977 = vshrl.u32 2131351028, %v971
        %v978 = vor.u32 %v976, %v977
        %v979 = vshll.u32 2131351028, %v970
        %v980 = vshrl.u32 2102212464, %v971
        %v981 = vor.u32 %v979, %v980
        %v982 = vshll.u32 2102212464, %v970
        %v983 = vshrl.u32 920167782, %v971
        %v984 = vor.u32 %v982, %v983
        %v985 = vshll.u32 920167782, %v970
        %v986 = vshrl.u32 1326507024, %v971
        %v987 = vor.u32 %v985, %v986
        %vm988 = vcmp.lt.s32.totalorder %v969, 1
        %vm989 = vcmp.lt.s32.totalorder %v969, 2
        %vm990 = vcmp.lt.s32.totalorder %v969, 3
        %vm991 = vcmp.lt.s32.totalorder %v969, 4
        %v992 = vsel %vm988, %v972, %v975
        %v993 = vsel %vm991, %v981, 2102212464
        %v994 = vsel %vm990, %v978, %v993
        %v995 = vsel %vm989, %v992, %v994
        %v996 = vsel %vm988, %v975, %v978
        %v997 = vsel %vm991, %v984, 920167782
        %v998 = vsel %vm990, %v981, %v997
        %v999 = vsel %vm989, %v996, %v998
        %v1000 = vsel %vm988, %v978, %v981
        %v1001 = vsel %vm991, %v987, 1326507024
        %v1002 = vsel %vm990, %v984, %v1001
        %v1003 = vsel %vm989, %v1000, %v1002
        %v1004 = vshll.u32 %v964, 8
        %v1005 = vand.u32 %v1004, 65535
        %v1006 = vshrl.u32 %v1004, 16
        %v1007 = vand.u32 %v1003, 65535
        %v1008 = vshrl.u32 %v1003, 16
        %v1009 = vmul.u32 %v1005, %v1007
        %v1010 = vmul.u32 %v1005, %v1008
        %v1011 = vmul.u32 %v1006, %v1007
        %v1012 = vmul.u32 %v1006, %v1008
        %v1013 = vshll.u32 %v1010, 16
        %v1014 = vshrl.u32 %v1010, 16
        %v1015 = vshll.u32 %v1011, 16
        %v1016 = vshrl.u32 %v1011, 16
        %vm1017 = vc.u32 %v1009, %v1013
        %v1018 = vsel %vm1017, 1, 0
        %v1019 = vadd.s32 %v1009, %v1013
        %v1020 = vadd.s32 %v1012, %v1018
        %vm1021 = vc.u32 %v1019, %v1015
        %v1022 = vsel %vm1021, 1, 0
        %v1023 = vadd.s32 %v1019, %v1015
        %v1024 = vadd.s32 %v1020, %v1022
        %v1025 = vadd.s32 %v1024, %v1014
        %v1026 = vadd.s32 %v1025, %v1016
        %v1027 = vand.u32 %v1004, 65535
        %v1028 = vshrl.u32 %v1004, 16
        %v1029 = vand.u32 %v999, 65535
        %v1030 = vshrl.u32 %v999, 16
        %v1031 = vmul.u32 %v1027, %v1029
        %v1032 = vmul.u32 %v1027, %v1030
        %v1033 = vmul.u32 %v1028, %v1029
        %v1034 = vmul.u32 %v1028, %v1030
        %v1035 = vshll.u32 %v1032, 16
        %v1036 = vshrl.u32 %v1032, 16
        %v1037 = vshll.u32 %v1033, 16
        %v1038 = vshrl.u32 %v1033, 16
        %vm1039 = vc.u32 %v1031, %v1035
        %v1040 = vsel %vm1039, 1, 0
        %v1041 = vadd.s32 %v1031, %v1035
        %v1042 = vadd.s32 %v1034, %v1040
        %vm1043 = vc.u32 %v1041, %v1037
        %v1044 = vsel %vm1043, 1, 0
        %v1045 = vadd.s32 %v1041, %v1037
        %v1046 = vadd.s32 %v1042, %v1044
        %v1047 = vadd.s32 %v1046, %v1036
        %v1048 = vadd.s32 %v1047, %v1038
        %v1049 = vmul.u32 %v1004, %v995
        %v1050 = vadd.s32 %v1026, %v1045
        %vm1051 = vc.u32 %v1026, %v1045
        %v1052 = vadd.s32 %v1048, 1
        %v1053 = vsel %vm1051, %v1052, %v1048
        %v1054 = vadd.s32 %v1049, %v1053
        %v1055 = vadd.s32 %v1054, 536870912
        %v1056 = vshrl.u32 %v1055, 30
        %v1057 = vshll.u32 %v1056, 30
        %v1058 = vsub.s32 %v1054, %v1057
        %vm1059 = vcmp.lt.s32.totalorder %v1058, 0
        %v1060 = vsub.s32 0, %v1058
        %v1061 = vsel %vm1059, %v1060, %v1058
        %v1062 = vclz %v1061
        %v1063 = vsub.s32 %v1062, 2
        %vm1064 = vcmp.gt.s32.totalorder 0, %v1063
        %v1065 = vsel %vm1064, 0, %v1063
        %v1066 = vsub.s32 32, %v1065
        %v1067 = vshll.u32 %v1058, %v1065
        %v1068 = vshrl.u32 %v1050, %v1066
        %v1069 = vor.u32 %v1067, %v1068
        %v1070 = vsub.s32 4294967266, %v1065
        %v1071 = vadd.s32 %v1070, 127
        %v1072 = vshll.u32 %v1071, 23
        %v1073 = vor.u32 4788187, %v1072
        %v1074 = vand.u32 2147483647, %v1073
        %v1076 = vcvt.s32.f32 %v1069
        %v1077 = vmul.f32 %v1076, %v1074
        %v1078 = vxor.u32 %v1077, 2147483648
        %v1079 = vsel %vm958, %v1078, %v1077
        %v1080 = vsub.s32 4, %v1056
        %v1081 = vsel %vm958, %v1080, %v1056
        %v1082 = vsel %vm957, %v779, %v1079
        %v1083 = vsel %vm957, 0, %v1081
        %v1084 = vmul.f32 %v1082, %v1082
        %v1085 = vmul.f32 %v1084, -0.001358992
        %v1086 = vadd.f32 %v1085, 0.041655596
        %v1087 = vmul.f32 %v1084, %v1086
        %v1088 = vadd.f32 %v1087, -0.4999988
        %v1089 = vmul.f32 %v1084, %v1088
        %v1090 = vadd.f32 1.0, %v1089
        %v1091 = vmul.f32 %v1082, %v1082
        %v1092 = vmul.f32 %v1091, -0.00019511016
        %v1093 = vadd.f32 %v1092, 0.008332121
        %v1094 = vmul.f32 %v1091, %v1093
        %v1095 = vadd.f32 %v1094, -0.16666654
        %v1096 = vmul.f32 %v1091, %v1095
        %v1097 = vadd.f32 %v1096, 1.0
        %v1098 = vmul.f32 %v1097, %v1082
        %vm1099 = vweird.f32 %v779
        %v1100 = vand.u32 %v1083, 3
        %vm1101 = vcmp.lt.s32.totalorder %v1100, 2
        %vm1102 = vcmp.eq.s32.totalorder %v1100, 0
        %v1103 = vxor.u32 %v1098, 2147483648
        %v1104 = vsel %vm1102, %v1090, %v1103
        %vm1105 = vcmp.eq.s32.totalorder %v1100, 2
        %v1106 = vxor.u32 %v1090, 2147483648
        %v1107 = vsel %vm1105, %v1106, %v1098
        %v1108 = vsel %vm1101, %v1104, %v1107
        %v1109 = vsel %vm1099, nan, %v1108
        %v1110 = vand.u32 2147483647, %v780
        %vm1111 = vcmp.le.f32.partialorder %v1110, 0.7853982
        %vm1112 = vcmp.lt.s32.totalorder %v780, 0
        %v1113 = vand.u32 %v780, 2139095040
        %v1114 = vshrl.u32 %v1113, 23
        %v1115 = vsub.s32 %v1114, 127
        %v1116 = vand.u32 2147483647, %v780
        %v1117 = vand.u32 %v1116, 8388607
        %v1118 = vor.u32 %v1117, 8388608
        %v1119 = vsub.s32 0, %v1118
        %v1120 = vadd.s32 %v1115, 1
        %vm1121 = vcmp.gt.s32.totalorder %v1120, 0
        %v1122 = vsel %vm1121, %v1120, 0
        %v1123 = vshrl.u32 %v1122, 5
        %v1124 = vand.u32 %v1122, 31
        %v1125 = vsub.s32 32, %v1124
        %v1126 = vshrl.u32 683565275, %v1125
        %v1127 = vshll.u32 683565275, %v1124
        %v1128 = vshrl.u32 2475754826, %v1125
        %v1129 = vor.u32 %v1127, %v1128
        %v1130 = vshll.u32 2475754826, %v1124
        %v1131 = vshrl.u32 2131351028, %v1125
        %v1132 = vor.u32 %v1130, %v1131
        %v1133 = vshll.u32 2131351028, %v1124
        %v1134 = vshrl.u32 2102212464, %v1125
        %v1135 = vor.u32 %v1133, %v1134
        %v1136 = vshll.u32 2102212464, %v1124
        %v1137 = vshrl.u32 920167782, %v1125
        %v1138 = vor.u32 %v1136, %v1137
        %v1139 = vshll.u32 920167782, %v1124
        %v1140 = vshrl.u32 1326507024, %v1125
        %v1141 = vor.u32 %v1139, %v1140
        %vm1142 = vcmp.lt.s32.totalorder %v1123, 1
        %vm1143 = vcmp.lt.s32.totalorder %v1123, 2
        %vm1144 = vcmp.lt.s32.totalorder %v1123, 3
        %vm1145 = vcmp.lt.s32.totalorder %v1123, 4
        %v1146 = vsel %vm1142, %v1126, %v1129
        %v1147 = vsel %vm1145, %v1135, 2102212464
        %v1148 = vsel %vm1144, %v1132, %v1147
        %v1149 = vsel %vm1143, %v1146, %v1148
        %v1150 = vsel %vm1142, %v1129, %v1132
        %v1151 = vsel %vm1145, %v1138, 920167782
        %v1152 = vsel %vm1144, %v1135, %v1151
        %v1153 = vsel %vm1143, %v1150, %v1152
        %v1154 = vsel %vm1142, %v1132, %v1135
        %v1155 = vsel %vm1145, %v1141, 1326507024
        %v1156 = vsel %vm1144, %v1138, %v1155
        %v1157 = vsel %vm1143, %v1154, %v1156
        %v1158 = vshll.u32 %v1118, 8
        %v1159 = vand.u32 %v1158, 65535
        %v1160 = vshrl.u32 %v1158, 16
        %v1161 = vand.u32 %v1157, 65535
        %v1162 = vshrl.u32 %v1157, 16
        %v1163 = vmul.u32 %v1159, %v1161
        %v1164 = vmul.u32 %v1159, %v1162
        %v1165 = vmul.u32 %v1160, %v1161
        %v1166 = vmul.u32 %v1160, %v1162
        %v1167 = vshll.u32 %v1164, 16
        %v1168 = vshrl.u32 %v1164, 16
        %v1169 = vshll.u32 %v1165, 16
        %v1170 = vshrl.u32 %v1165, 16
        %vm1171 = vc.u32 %v1163, %v1167
        %v1172 = vsel %vm1171, 1, 0
        %v1173 = vadd.s32 %v1163, %v1167
        %v1174 = vadd.s32 %v1166, %v1172
        %vm1175 = vc.u32 %v1173, %v1169
        %v1176 = vsel %vm1175, 1, 0
        %v1177 = vadd.s32 %v1173, %v1169
        %v1178 = vadd.s32 %v1174, %v1176
        %v1179 = vadd.s32 %v1178, %v1168
        %v1180 = vadd.s32 %v1179, %v1170
        %v1181 = vand.u32 %v1158, 65535
        %v1182 = vshrl.u32 %v1158, 16
        %v1183 = vand.u32 %v1153, 65535
        %v1184 = vshrl.u32 %v1153, 16
        %v1185 = vmul.u32 %v1181, %v1183
        %v1186 = vmul.u32 %v1181, %v1184
        %v1187 = vmul.u32 %v1182, %v1183
        %v1188 = vmul.u32 %v1182, %v1184
        %v1189 = vshll.u32 %v1186, 16
        %v1190 = vshrl.u32 %v1186, 16
        %v1191 = vshll.u32 %v1187, 16
        %v1192 = vshrl.u32 %v1187, 16
        %vm1193 = vc.u32 %v1185, %v1189
        %v1194 = vsel %vm1193, 1, 0
        %v1195 = vadd.s32 %v1185, %v1189
        %v1196 = vadd.s32 %v1188, %v1194
        %vm1197 = vc.u32 %v1195, %v1191
        %v1198 = vsel %vm1197, 1, 0
        %v1199 = vadd.s32 %v1195, %v1191
        %v1200 = vadd.s32 %v1196, %v1198
        %v1201 = vadd.s32 %v1200, %v1190
        %v1202 = vadd.s32 %v1201, %v1192
        %v1203 = vmul.u32 %v1158, %v1149
        %v1204 = vadd.s32 %v1180, %v1199
        %vm1205 = vc.u32 %v1180, %v1199
        %v1206 = vadd.s32 %v1202, 1
        %v1207 = vsel %vm1205, %v1206, %v1202
        %v1208 = vadd.s32 %v1203, %v1207
        %v1209 = vadd.s32 %v1208, 536870912
        %v1210 = vshrl.u32 %v1209, 30
        %v1211 = vshll.u32 %v1210, 30
        %v1212 = vsub.s32 %v1208, %v1211
        %vm1213 = vcmp.lt.s32.totalorder %v1212, 0
        %v1214 = vsub.s32 0, %v1212
        %v1215 = vsel %vm1213, %v1214, %v1212
        %v1216 = vclz %v1215
        %v1217 = vsub.s32 %v1216, 2
        %vm1218 = vcmp.gt.s32.totalorder 0, %v1217
        %v1219 = vsel %vm1218, 0, %v1217
        %v1220 = vsub.s32 32, %v1219
        %v1221 = vshll.u32 %v1212, %v1219
        %v1222 = vshrl.u32 %v1204, %v1220
        %v1223 = vor.u32 %v1221, %v1222
        %v1224 = vsub.s32 4294967266, %v1219
        %v1225 = vadd.s32 %v1224, 127
        %v1226 = vshll.u32 %v1225, 23
        %v1227 = vor.u32 4788187, %v1226
        %v1228 = vand.u32 2147483647, %v1227
        %v1230 = vcvt.s32.f32 %v1223
        %v1231 = vmul.f32 %v1230, %v1228
        %v1232 = vxor.u32 %v1231, 2147483648
        %v1233 = vsel %vm1112, %v1232, %v1231
        %v1234 = vsub.s32 4, %v1210
        %v1235 = vsel %vm1112, %v1234, %v1210
        %v1236 = vsel %vm1111, %v780, %v1233
        %v1237 = vsel %vm1111, 0, %v1235
        %v1238 = vmul.f32 %v1236, %v1236
        %v1239 = vmul.f32 %v1238, -0.001358992
        %v1240 = vadd.f32 %v1239, 0.041655596
        %v1241 = vmul.f32 %v1238, %v1240
        %v1242 = vadd.f32 %v1241, -0.4999988
        %v1243 = vmul.f32 %v1238, %v1242
        %v1244 = vadd.f32 1.0, %v1243
        %v1245 = vmul.f32 %v1236, %v1236
        %v1246 = vmul.f32 %v1245, -0.00019511016
        %v1247 = vadd.f32 %v1246, 0.008332121
        %v1248 = vmul.f32 %v1245, %v1247
        %v1249 = vadd.f32 %v1248, -0.16666654
        %v1250 = vmul.f32 %v1245, %v1249
        %v1251 = vadd.f32 %v1250, 1.0
        %v1252 = vmul.f32 %v1251, %v1236
        %vm1253 = vweird.f32 %v780
        %v1254 = vand.u32 %v1237, 3
        %vm1255 = vcmp.lt.s32.totalorder %v1254, 2
        %vm1256 = vcmp.eq.s32.totalorder %v1254, 0
        %v1257 = vxor.u32 %v1252, 2147483648
        %v1258 = vsel %vm1256, %v1244, %v1257
        %vm1259 = vcmp.eq.s32.totalorder %v1254, 2
        %v1260 = vxor.u32 %v1244, 2147483648
        %v1261 = vsel %vm1259, %v1260, %v1252
        %v1262 = vsel %vm1255, %v1258, %v1261
        %v1263 = vsel %vm1253, nan, %v1262
        %v1264 = vand.u32 2147483647, %v781
        %vm1265 = vcmp.le.f32.partialorder %v1264, 0.7853982
        %vm1266 = vcmp.lt.s32.totalorder %v781, 0
        %v1267 = vand.u32 %v781, 2139095040
        %v1268 = vshrl.u32 %v1267, 23
        %v1269 = vsub.s32 %v1268, 127
        %v1270 = vand.u32 2147483647, %v781
        %v1271 = vand.u32 %v1270, 8388607
        %v1272 = vor.u32 %v1271, 8388608
        %v1273 = vsub.s32 0, %v1272
        %v1274 = vadd.s32 %v1269, 1
        %vm1275 = vcmp.gt.s32.totalorder %v1274, 0
        %v1276 = vsel %vm1275, %v1274, 0
        %v1277 = vshrl.u32 %v1276, 5
        %v1278 = vand.u32 %v1276, 31
        %v1279 = vsub.s32 32, %v1278
        %v1280 = vshrl.u32 683565275, %v1279
        %v1281 = vshll.u32 683565275, %v1278
        %v1282 = vshrl.u32 2475754826, %v1279
        %v1283 = vor.u32 %v1281, %v1282
        %v1284 = vshll.u32 2475754826, %v1278
        %v1285 = vshrl.u32 2131351028, %v1279
        %v1286 = vor.u32 %v1284, %v1285
        %v1287 = vshll.u32 2131351028, %v1278
        %v1288 = vshrl.u32 2102212464, %v1279
        %v1289 = vor.u32 %v1287, %v1288
        %v1290 = vshll.u32 2102212464, %v1278
        %v1291 = vshrl.u32 920167782, %v1279
        %v1292 = vor.u32 %v1290, %v1291
        %v1293 = vshll.u32 920167782, %v1278
        %v1294 = vshrl.u32 1326507024, %v1279
        %v1295 = vor.u32 %v1293, %v1294
        %vm1296 = vcmp.lt.s32.totalorder %v1277, 1
        %vm1297 = vcmp.lt.s32.totalorder %v1277, 2
        %vm1298 = vcmp.lt.s32.totalorder %v1277, 3
        %vm1299 = vcmp.lt.s32.totalorder %v1277, 4
        %v1300 = vsel %vm1296, %v1280, %v1283
        %v1301 = vsel %vm1299, %v1289, 2102212464
        %v1302 = vsel %vm1298, %v1286, %v1301
        %v1303 = vsel %vm1297, %v1300, %v1302
        %v1304 = vsel %vm1296, %v1283, %v1286
        %v1305 = vsel %vm1299, %v1292, 920167782
        %v1306 = vsel %vm1298, %v1289, %v1305
        %v1307 = vsel %vm1297, %v1304, %v1306
        %v1308 = vsel %vm1296, %v1286, %v1289
        %v1309 = vsel %vm1299, %v1295, 1326507024
        %v1310 = vsel %vm1298, %v1292, %v1309
        %v1311 = vsel %vm1297, %v1308, %v1310
        %v1312 = vshll.u32 %v1272, 8
        %v1313 = vand.u32 %v1312, 65535
        %v1314 = vshrl.u32 %v1312, 16
        %v1315 = vand.u32 %v1311, 65535
        %v1316 = vshrl.u32 %v1311, 16
        %v1317 = vmul.u32 %v1313, %v1315
        %v1318 = vmul.u32 %v1313, %v1316
        %v1319 = vmul.u32 %v1314, %v1315
        %v1320 = vmul.u32 %v1314, %v1316
        %v1321 = vshll.u32 %v1318, 16
        %v1322 = vshrl.u32 %v1318, 16
        %v1323 = vshll.u32 %v1319, 16
        %v1324 = vshrl.u32 %v1319, 16
        %vm1325 = vc.u32 %v1317, %v1321
        %v1326 = vsel %vm1325, 1, 0
        %v1327 = vadd.s32 %v1317, %v1321
        %v1328 = vadd.s32 %v1320, %v1326
        %vm1329 = vc.u32 %v1327, %v1323
        %v1330 = vsel %vm1329, 1, 0
        %v1331 = vadd.s32 %v1327, %v1323
        %v1332 = vadd.s32 %v1328, %v1330
        %v1333 = vadd.s32 %v1332, %v1322
        %v1334 = vadd.s32 %v1333, %v1324
        %v1335 = vand.u32 %v1312, 65535
        %v1336 = vshrl.u32 %v1312, 16
        %v1337 = vand.u32 %v1307, 65535
        %v1338 = vshrl.u32 %v1307, 16
        %v1339 = vmul.u32 %v1335, %v1337
        %v1340 = vmul.u32 %v1335, %v1338
        %v1341 = vmul.u32 %v1336, %v1337
        %v1342 = vmul.u32 %v1336, %v1338
        %v1343 = vshll.u32 %v1340, 16
        %v1344 = vshrl.u32 %v1340, 16
        %v1345 = vshll.u32 %v1341, 16
        %v1346 = vshrl.u32 %v1341, 16
        %vm1347 = vc.u32 %v1339, %v1343
        %v1348 = vsel %vm1347, 1, 0
        %v1349 = vadd.s32 %v1339, %v1343
        %v1350 = vadd.s32 %v1342, %v1348
        %vm1351 = vc.u32 %v1349, %v1345
        %v1352 = vsel %vm1351, 1, 0
        %v1353 = vadd.s32 %v1349, %v1345
        %v1354 = vadd.s32 %v1350, %v1352
        %v1355 = vadd.s32 %v1354, %v1344
        %v1356 = vadd.s32 %v1355, %v1346
        %v1357 = vmul.u32 %v1312, %v1303
        %v1358 = vadd.s32 %v1334, %v1353
        %vm1359 = vc.u32 %v1334, %v1353
        %v1360 = vadd.s32 %v1356, 1
        %v1361 = vsel %vm1359, %v1360, %v1356
        %v1362 = vadd.s32 %v1357, %v1361
        %v1363 = vadd.s32 %v1362, 536870912
        %v1364 = vshrl.u32 %v1363, 30
        %v1365 = vshll.u32 %v1364, 30
        %v1366 = vsub.s32 %v1362, %v1365
        %vm1367 = vcmp.lt.s32.totalorder %v1366, 0
        %v1368 = vsub.s32 0, %v1366
        %v1369 = vsel %vm1367, %v1368, %v1366
        %v1370 = vclz %v1369
        %v1371 = vsub.s32 %v1370, 2
        %vm1372 = vcmp.gt.s32.totalorder 0, %v1371
        %v1373 = vsel %vm1372, 0, %v1371
        %v1374 = vsub.s32 32, %v1373
        %v1375 = vshll.u32 %v1366, %v1373
        %v1376 = vshrl.u32 %v1358, %v1374
        %v1377 = vor.u32 %v1375, %v1376
        %v1378 = vsub.s32 4294967266, %v1373
        %v1379 = vadd.s32 %v1378, 127
        %v1380 = vshll.u32 %v1379, 23
        %v1381 = vor.u32 4788187, %v1380
        %v1382 = vand.u32 2147483647, %v1381
        %v1384 = vcvt.s32.f32 %v1377
        %v1385 = vmul.f32 %v1384, %v1382
        %v1386 = vxor.u32 %v1385, 2147483648
        %v1387 = vsel %vm1266, %v1386, %v1385
        %v1388 = vsub.s32 4, %v1364
        %v1389 = vsel %vm1266, %v1388, %v1364
        %v1390 = vsel %vm1265, %v781, %v1387
        %v1391 = vsel %vm1265, 0, %v1389
        %v1392 = vmul.f32 %v1390, %v1390
        %v1393 = vmul.f32 %v1392, -0.001358992
        %v1394 = vadd.f32 %v1393, 0.041655596
        %v1395 = vmul.f32 %v1392, %v1394
        %v1396 = vadd.f32 %v1395, -0.4999988
        %v1397 = vmul.f32 %v1392, %v1396
        %v1398 = vadd.f32 1.0, %v1397
        %v1399 = vmul.f32 %v1390, %v1390
        %v1400 = vmul.f32 %v1399, -0.00019511016
        %v1401 = vadd.f32 %v1400, 0.008332121
        %v1402 = vmul.f32 %v1399, %v1401
        %v1403 = vadd.f32 %v1402, -0.16666654
        %v1404 = vmul.f32 %v1399, %v1403
        %v1405 = vadd.f32 %v1404, 1.0
        %v1406 = vmul.f32 %v1405, %v1390
        %vm1407 = vweird.f32 %v781
        %v1408 = vand.u32 %v1391, 3
        %vm1409 = vcmp.lt.s32.totalorder %v1408, 2
        %vm1410 = vcmp.eq.s32.totalorder %v1408, 0
        %v1411 = vxor.u32 %v1406, 2147483648
        %v1412 = vsel %vm1410, %v1398, %v1411
        %vm1413 = vcmp.eq.s32.totalorder %v1408, 2
        %v1414 = vxor.u32 %v1398, 2147483648
        %v1415 = vsel %vm1413, %v1414, %v1406
        %v1416 = vsel %vm1409, %v1412, %v1415
        %v1417 = vsel %vm1407, nan, %v1416
        %v1418 = vand.u32 2147483647, %v782
        %vm1419 = vcmp.le.f32.partialorder %v1418, 0.7853982
        %vm1420 = vcmp.lt.s32.totalorder %v782, 0
        %v1421 = vand.u32 %v782, 2139095040
        %v1422 = vshrl.u32 %v1421, 23
        %v1423 = vsub.s32 %v1422, 127
        %v1424 = vand.u32 2147483647, %v782
        %v1425 = vand.u32 %v1424, 8388607
        %v1426 = vor.u32 %v1425, 8388608
        %v1427 = vsub.s32 0, %v1426
        %v1428 = vadd.s32 %v1423, 1
        %vm1429 = vcmp.gt.s32.totalorder %v1428, 0
        %v1430 = vsel %vm1429, %v1428, 0
        %v1431 = vshrl.u32 %v1430, 5
        %v1432 = vand.u32 %v1430, 31
        %v1433 = vsub.s32 32, %v1432
        %v1434 = vshrl.u32 683565275, %v1433
        %v1435 = vshll.u32 683565275, %v1432
        %v1436 = vshrl.u32 2475754826, %v1433
        %v1437 = vor.u32 %v1435, %v1436
        %v1438 = vshll.u32 2475754826, %v1432
        %v1439 = vshrl.u32 2131351028, %v1433
        %v1440 = vor.u32 %v1438, %v1439
        %v1441 = vshll.u32 2131351028, %v1432
        %v1442 = vshrl.u32 2102212464, %v1433
        %v1443 = vor.u32 %v1441, %v1442
        %v1444 = vshll.u32 2102212464, %v1432
        %v1445 = vshrl.u32 920167782, %v1433
        %v1446 = vor.u32 %v1444, %v1445
        %v1447 = vshll.u32 920167782, %v1432
        %v1448 = vshrl.u32 1326507024, %v1433
        %v1449 = vor.u32 %v1447, %v1448
        %vm1450 = vcmp.lt.s32.totalorder %v1431, 1
        %vm1451 = vcmp.lt.s32.totalorder %v1431, 2
        %vm1452 = vcmp.lt.s32.totalorder %v1431, 3
        %vm1453 = vcmp.lt.s32.totalorder %v1431, 4
        %v1454 = vsel %vm1450, %v1434, %v1437
        %v1455 = vsel %vm1453, %v1443, 2102212464
        %v1456 = vsel %vm1452, %v1440, %v1455
        %v1457 = vsel %vm1451, %v1454, %v1456
        %v1458 = vsel %vm1450, %v1437, %v1440
        %v1459 = vsel %vm1453, %v1446, 920167782
        %v1460 = vsel %vm1452, %v1443, %v1459
        %v1461 = vsel %vm1451, %v1458, %v1460
        %v1462 = vsel %vm1450, %v1440, %v1443
        %v1463 = vsel %vm1453, %v1449, 1326507024
        %v1464 = vsel %vm1452, %v1446, %v1463
        %v1465 = vsel %vm1451, %v1462, %v1464
        %v1466 = vshll.u32 %v1426, 8
        %v1467 = vand.u32 %v1466, 65535
        %v1468 = vshrl.u32 %v1466, 16
        %v1469 = vand.u32 %v1465, 65535
        %v1470 = vshrl.u32 %v1465, 16
        %v1471 = vmul.u32 %v1467, %v1469
        %v1472 = vmul.u32 %v1467, %v1470
        %v1473 = vmul.u32 %v1468, %v1469
        %v1474 = vmul.u32 %v1468, %v1470
        %v1475 = vshll.u32 %v1472, 16
        %v1476 = vshrl.u32 %v1472, 16
        %v1477 = vshll.u32 %v1473, 16
        %v1478 = vshrl.u32 %v1473, 16
        %vm1479 = vc.u32 %v1471, %v1475
        %v1480 = vsel %vm1479, 1, 0
        %v1481 = vadd.s32 %v1471, %v1475
        %v1482 = vadd.s32 %v1474, %v1480
        %vm1483 = vc.u32 %v1481, %v1477
        %v1484 = vsel %vm1483, 1, 0
        %v1485 = vadd.s32 %v1481, %v1477
        %v1486 = vadd.s32 %v1482, %v1484
        %v1487 = vadd.s32 %v1486, %v1476
        %v1488 = vadd.s32 %v1487, %v1478
        %v1489 = vand.u32 %v1466, 65535
        %v1490 = vshrl.u32 %v1466, 16
        %v1491 = vand.u32 %v1461, 65535
        %v1492 = vshrl.u32 %v1461, 16
        %v1493 = vmul.u32 %v1489, %v1491
        %v1494 = vmul.u32 %v1489, %v1492
        %v1495 = vmul.u32 %v1490, %v1491
        %v1496 = vmul.u32 %v1490, %v1492
        %v1497 = vshll.u32 %v1494, 16
        %v1498 = vshrl.u32 %v1494, 16
        %v1499 = vshll.u32 %v1495, 16
        %v1500 = vshrl.u32 %v1495, 16
        %vm1501 = vc.u32 %v1493, %v1497
        %v1502 = vsel %vm1501, 1, 0
        %v1503 = vadd.s32 %v1493, %v1497
        %v1504 = vadd.s32 %v1496, %v1502
        %vm1505 = vc.u32 %v1503, %v1499
        %v1506 = vsel %vm1505, 1, 0
        %v1507 = vadd.s32 %v1503, %v1499
        %v1508 = vadd.s32 %v1504, %v1506
        %v1509 = vadd.s32 %v1508, %v1498
        %v1510 = vadd.s32 %v1509, %v1500
        %v1511 = vmul.u32 %v1466, %v1457
        %v1512 = vadd.s32 %v1488, %v1507
        %vm1513 = vc.u32 %v1488, %v1507
        %v1514 = vadd.s32 %v1510, 1
        %v1515 = vsel %vm1513, %v1514, %v1510
        %v1516 = vadd.s32 %v1511, %v1515
        %v1517 = vadd.s32 %v1516, 536870912
        %v1518 = vshrl.u32 %v1517, 30
        %v1519 = vshll.u32 %v1518, 30
        %v1520 = vsub.s32 %v1516, %v1519
        %vm1521 = vcmp.lt.s32.totalorder %v1520, 0
        %v1522 = vsub.s32 0, %v1520
        %v1523 = vsel %vm1521, %v1522, %v1520
        %v1524 = vclz %v1523
        %v1525 = vsub.s32 %v1524, 2
        %vm1526 = vcmp.gt.s32.totalorder 0, %v1525
        %v1527 = vsel %vm1526, 0, %v1525
        %v1528 = vsub.s32 32, %v1527
        %v1529 = vshll.u32 %v1520, %v1527
        %v1530 = vshrl.u32 %v1512, %v1528
        %v1531 = vor.u32 %v1529, %v1530
        %v1532 = vsub.s32 4294967266, %v1527
        %v1533 = vadd.s32 %v1532, 127
        %v1534 = vshll.u32 %v1533, 23
        %v1535 = vor.u32 4788187, %v1534
        %v1536 = vand.u32 2147483647, %v1535
        %v1538 = vcvt.s32.f32 %v1531
        %v1539 = vmul.f32 %v1538, %v1536
        %v1540 = vxor.u32 %v1539, 2147483648
        %v1541 = vsel %vm1420, %v1540, %v1539
        %v1542 = vsub.s32 4, %v1518
        %v1543 = vsel %vm1420, %v1542, %v1518
        %v1544 = vsel %vm1419, %v782, %v1541
        %v1545 = vsel %vm1419, 0, %v1543
        %v1546 = vmul.f32 %v1544, %v1544
        %v1547 = vmul.f32 %v1546, -0.001358992
        %v1548 = vadd.f32 %v1547, 0.041655596
        %v1549 = vmul.f32 %v1546, %v1548
        %v1550 = vadd.f32 %v1549, -0.4999988
        %v1551 = vmul.f32 %v1546, %v1550
        %v1552 = vadd.f32 1.0, %v1551
        %v1553 = vmul.f32 %v1544, %v1544
        %v1554 = vmul.f32 %v1553, -0.00019511016
        %v1555 = vadd.f32 %v1554, 0.008332121
        %v1556 = vmul.f32 %v1553, %v1555
        %v1557 = vadd.f32 %v1556, -0.16666654
        %v1558 = vmul.f32 %v1553, %v1557
        %v1559 = vadd.f32 %v1558, 1.0
        %v1560 = vmul.f32 %v1559, %v1544
        %vm1561 = vweird.f32 %v782
        %v1562 = vand.u32 %v1545, 3
        %vm1563 = vcmp.lt.s32.totalorder %v1562, 2
        %vm1564 = vcmp.eq.s32.totalorder %v1562, 0
        %v1565 = vxor.u32 %v1560, 2147483648
        %v1566 = vsel %vm1564, %v1552, %v1565
        %vm1567 = vcmp.eq.s32.totalorder %v1562, 2
        %v1568 = vxor.u32 %v1552, 2147483648
        %v1569 = vsel %vm1567, %v1568, %v1560
        %v1570 = vsel %vm1563, %v1566, %v1569
        %v1571 = vsel %vm1561, nan, %v1570
        %v1572 = vand.u32 2147483647, %v783
        %vm1573 = vcmp.le.f32.partialorder %v1572, 0.7853982
        %vm1574 = vcmp.lt.s32.totalorder %v783, 0
        %v1575 = vand.u32 %v783, 2139095040
        %v1576 = vshrl.u32 %v1575, 23
        %v1577 = vsub.s32 %v1576, 127
        %v1578 = vand.u32 2147483647, %v783
        %v1579 = vand.u32 %v1578, 8388607
        %v1580 = vor.u32 %v1579, 8388608
        %v1581 = vsub.s32 0, %v1580
        %v1582 = vadd.s32 %v1577, 1
        %vm1583 = vcmp.gt.s32.totalorder %v1582, 0
        %v1584 = vsel %vm1583, %v1582, 0
        %v1585 = vshrl.u32 %v1584, 5
        %v1586 = vand.u32 %v1584, 31
        %v1587 = vsub.s32 32, %v1586
        %v1588 = vshrl.u32 683565275, %v1587
        %v1589 = vshll.u32 683565275, %v1586
        %v1590 = vshrl.u32 2475754826, %v1587
        %v1591 = vor.u32 %v1589, %v1590
        %v1592 = vshll.u32 2475754826, %v1586
        %v1593 = vshrl.u32 2131351028, %v1587
        %v1594 = vor.u32 %v1592, %v1593
        %v1595 = vshll.u32 2131351028, %v1586
        %v1596 = vshrl.u32 2102212464, %v1587
        %v1597 = vor.u32 %v1595, %v1596
        %v1598 = vshll.u32 2102212464, %v1586
        %v1599 = vshrl.u32 920167782, %v1587
        %v1600 = vor.u32 %v1598, %v1599
        %v1601 = vshll.u32 920167782, %v1586
        %v1602 = vshrl.u32 1326507024, %v1587
        %v1603 = vor.u32 %v1601, %v1602
        %vm1604 = vcmp.lt.s32.totalorder %v1585, 1
        %vm1605 = vcmp.lt.s32.totalorder %v1585, 2
        %vm1606 = vcmp.lt.s32.totalorder %v1585, 3
        %vm1607 = vcmp.lt.s32.totalorder %v1585, 4
        %v1608 = vsel %vm1604, %v1588, %v1591
        %v1609 = vsel %vm1607, %v1597, 2102212464
        %v1610 = vsel %vm1606, %v1594, %v1609
        %v1611 = vsel %vm1605, %v1608, %v1610
        %v1612 = vsel %vm1604, %v1591, %v1594
        %v1613 = vsel %vm1607, %v1600, 920167782
        %v1614 = vsel %vm1606, %v1597, %v1613
        %v1615 = vsel %vm1605, %v1612, %v1614
        %v1616 = vsel %vm1604, %v1594, %v1597
        %v1617 = vsel %vm1607, %v1603, 1326507024
        %v1618 = vsel %vm1606, %v1600, %v1617
        %v1619 = vsel %vm1605, %v1616, %v1618
        %v1620 = vshll.u32 %v1580, 8
        %v1621 = vand.u32 %v1620, 65535
        %v1622 = vshrl.u32 %v1620, 16
        %v1623 = vand.u32 %v1619, 65535
        %v1624 = vshrl.u32 %v1619, 16
        %v1625 = vmul.u32 %v1621, %v1623
        %v1626 = vmul.u32 %v1621, %v1624
        %v1627 = vmul.u32 %v1622, %v1623
        %v1628 = vmul.u32 %v1622, %v1624
        %v1629 = vshll.u32 %v1626, 16
        %v1630 = vshrl.u32 %v1626, 16
        %v1631 = vshll.u32 %v1627, 16
        %v1632 = vshrl.u32 %v1627, 16
        %vm1633 = vc.u32 %v1625, %v1629
        %v1634 = vsel %vm1633, 1, 0
        %v1635 = vadd.s32 %v1625, %v1629
        %v1636 = vadd.s32 %v1628, %v1634
        %vm1637 = vc.u32 %v1635, %v1631
        %v1638 = vsel %vm1637, 1, 0
        %v1639 = vadd.s32 %v1635, %v1631
        %v1640 = vadd.s32 %v1636, %v1638
        %v1641 = vadd.s32 %v1640, %v1630
        %v1642 = vadd.s32 %v1641, %v1632
        %v1643 = vand.u32 %v1620, 65535
        %v1644 = vshrl.u32 %v1620, 16
        %v1645 = vand.u32 %v1615, 65535
        %v1646 = vshrl.u32 %v1615, 16
        %v1647 = vmul.u32 %v1643, %v1645
        %v1648 = vmul.u32 %v1643, %v1646
        %v1649 = vmul.u32 %v1644, %v1645
        %v1650 = vmul.u32 %v1644, %v1646
        %v1651 = vshll.u32 %v1648, 16
        %v1652 = vshrl.u32 %v1648, 16
        %v1653 = vshll.u32 %v1649, 16
        %v1654 = vshrl.u32 %v1649, 16
        %vm1655 = vc.u32 %v1647, %v1651
        %v1656 = vsel %vm1655, 1, 0
        %v1657 = vadd.s32 %v1647, %v1651
        %v1658 = vadd.s32 %v1650, %v1656
        %vm1659 = vc.u32 %v1657, %v1653
        %v1660 = vsel %vm1659, 1, 0
        %v1661 = vadd.s32 %v1657, %v1653
        %v1662 = vadd.s32 %v1658, %v1660
        %v1663 = vadd.s32 %v1662, %v1652
        %v1664 = vadd.s32 %v1663, %v1654
        %v1665 = vmul.u32 %v1620, %v1611
        %v1666 = vadd.s32 %v1642, %v1661
        %vm1667 = vc.u32 %v1642, %v1661
        %v1668 = vadd.s32 %v1664, 1
        %v1669 = vsel %vm1667, %v1668, %v1664
        %v1670 = vadd.s32 %v1665, %v1669
        %v1671 = vadd.s32 %v1670, 536870912
        %v1672 = vshrl.u32 %v1671, 30
        %v1673 = vshll.u32 %v1672, 30
        %v1674 = vsub.s32 %v1670, %v1673
        %vm1675 = vcmp.lt.s32.totalorder %v1674, 0
        %v1676 = vsub.s32 0, %v1674
        %v1677 = vsel %vm1675, %v1676, %v1674
        %v1678 = vclz %v1677
        %v1679 = vsub.s32 %v1678, 2
        %vm1680 = vcmp.gt.s32.totalorder 0, %v1679
        %v1681 = vsel %vm1680, 0, %v1679
        %v1682 = vsub.s32 32, %v1681
        %v1683 = vshll.u32 %v1674, %v1681
        %v1684 = vshrl.u32 %v1666, %v1682
        %v1685 = vor.u32 %v1683, %v1684
        %v1686 = vsub.s32 4294967266, %v1681
        %v1687 = vadd.s32 %v1686, 127
        %v1688 = vshll.u32 %v1687, 23
        %v1689 = vor.u32 4788187, %v1688
        %v1690 = vand.u32 2147483647, %v1689
        %v1692 = vcvt.s32.f32 %v1685
        %v1693 = vmul.f32 %v1692, %v1690
        %v1694 = vxor.u32 %v1693, 2147483648
        %v1695 = vsel %vm1574, %v1694, %v1693
        %v1696 = vsub.s32 4, %v1672
        %v1697 = vsel %vm1574, %v1696, %v1672
        %v1698 = vsel %vm1573, %v783, %v1695
        %v1699 = vsel %vm1573, 0, %v1697
        %v1700 = vmul.f32 %v1698, %v1698
        %v1701 = vmul.f32 %v1700, -0.001358992
        %v1702 = vadd.f32 %v1701, 0.041655596
        %v1703 = vmul.f32 %v1700, %v1702
        %v1704 = vadd.f32 %v1703, -0.4999988
        %v1705 = vmul.f32 %v1700, %v1704
        %v1706 = vadd.f32 1.0, %v1705
        %v1707 = vmul.f32 %v1698, %v1698
        %v1708 = vmul.f32 %v1707, -0.00019511016
        %v1709 = vadd.f32 %v1708, 0.008332121
        %v1710 = vmul.f32 %v1707, %v1709
        %v1711 = vadd.f32 %v1710, -0.16666654
        %v1712 = vmul.f32 %v1707, %v1711
        %v1713 = vadd.f32 %v1712, 1.0
        %v1714 = vmul.f32 %v1713, %v1698
        %vm1715 = vweird.f32 %v783
        %v1716 = vand.u32 %v1699, 3
        %vm1717 = vcmp.lt.s32.totalorder %v1716, 2
        %vm1718 = vcmp.eq.s32.totalorder %v1716, 0
        %v1719 = vxor.u32 %v1714, 2147483648
        %v1720 = vsel %vm1718, %v1706, %v1719
        %vm1721 = vcmp.eq.s32.totalorder %v1716, 2
        %v1722 = vxor.u32 %v1706, 2147483648
        %v1723 = vsel %vm1721, %v1722, %v1714
        %v1724 = vsel %vm1717, %v1720, %v1723
        %v1725 = vsel %vm1715, nan, %v1724
        %v1726 = vand.u32 2147483647, %v784
        %vm1727 = vcmp.le.f32.partialorder %v1726, 0.7853982
        %vm1728 = vcmp.lt.s32.totalorder %v784, 0
        %v1729 = vand.u32 %v784, 2139095040
        %v1730 = vshrl.u32 %v1729, 23
        %v1731 = vsub.s32 %v1730, 127
        %v1732 = vand.u32 2147483647, %v784
        %v1733 = vand.u32 %v1732, 8388607
        %v1734 = vor.u32 %v1733, 8388608
        %v1735 = vsub.s32 0, %v1734
        %v1736 = vadd.s32 %v1731, 1
        %vm1737 = vcmp.gt.s32.totalorder %v1736, 0
        %v1738 = vsel %vm1737, %v1736, 0
        %v1739 = vshrl.u32 %v1738, 5
        %v1740 = vand.u32 %v1738, 31
        %v1741 = vsub.s32 32, %v1740
        %v1742 = vshrl.u32 683565275, %v1741
        %v1743 = vshll.u32 683565275, %v1740
        %v1744 = vshrl.u32 2475754826, %v1741
        %v1745 = vor.u32 %v1743, %v1744
        %v1746 = vshll.u32 2475754826, %v1740
        %v1747 = vshrl.u32 2131351028, %v1741
        %v1748 = vor.u32 %v1746, %v1747
        %v1749 = vshll.u32 2131351028, %v1740
        %v1750 = vshrl.u32 2102212464, %v1741
        %v1751 = vor.u32 %v1749, %v1750
        %v1752 = vshll.u32 2102212464, %v1740
        %v1753 = vshrl.u32 920167782, %v1741
        %v1754 = vor.u32 %v1752, %v1753
        %v1755 = vshll.u32 920167782, %v1740
        %v1756 = vshrl.u32 1326507024, %v1741
        %v1757 = vor.u32 %v1755, %v1756
        %vm1758 = vcmp.lt.s32.totalorder %v1739, 1
        %vm1759 = vcmp.lt.s32.totalorder %v1739, 2
        %vm1760 = vcmp.lt.s32.totalorder %v1739, 3
        %vm1761 = vcmp.lt.s32.totalorder %v1739, 4
        %v1762 = vsel %vm1758, %v1742, %v1745
        %v1763 = vsel %vm1761, %v1751, 2102212464
        %v1764 = vsel %vm1760, %v1748, %v1763
        %v1765 = vsel %vm1759, %v1762, %v1764
        %v1766 = vsel %vm1758, %v1745, %v1748
        %v1767 = vsel %vm1761, %v1754, 920167782
        %v1768 = vsel %vm1760, %v1751, %v1767
        %v1769 = vsel %vm1759, %v1766, %v1768
        %v1770 = vsel %vm1758, %v1748, %v1751
        %v1771 = vsel %vm1761, %v1757, 1326507024
        %v1772 = vsel %vm1760, %v1754, %v1771
        %v1773 = vsel %vm1759, %v1770, %v1772
        %v1774 = vshll.u32 %v1734, 8
        %v1775 = vand.u32 %v1774, 65535
        %v1776 = vshrl.u32 %v1774, 16
        %v1777 = vand.u32 %v1773, 65535
        %v1778 = vshrl.u32 %v1773, 16
        %v1779 = vmul.u32 %v1775, %v1777
        %v1780 = vmul.u32 %v1775, %v1778
        %v1781 = vmul.u32 %v1776, %v1777
        %v1782 = vmul.u32 %v1776, %v1778
        %v1783 = vshll.u32 %v1780, 16
        %v1784 = vshrl.u32 %v1780, 16
        %v1785 = vshll.u32 %v1781, 16
        %v1786 = vshrl.u32 %v1781, 16
        %vm1787 = vc.u32 %v1779, %v1783
        %v1788 = vsel %vm1787, 1, 0
        %v1789 = vadd.s32 %v1779, %v1783
        %v1790 = vadd.s32 %v1782, %v1788
        %vm1791 = vc.u32 %v1789, %v1785
        %v1792 = vsel %vm1791, 1, 0
        %v1793 = vadd.s32 %v1789, %v1785
        %v1794 = vadd.s32 %v1790, %v1792
        %v1795 = vadd.s32 %v1794, %v1784
        %v1796 = vadd.s32 %v1795, %v1786
        %v1797 = vand.u32 %v1774, 65535
        %v1798 = vshrl.u32 %v1774, 16
        %v1799 = vand.u32 %v1769, 65535
        %v1800 = vshrl.u32 %v1769, 16
        %v1801 = vmul.u32 %v1797, %v1799
        %v1802 = vmul.u32 %v1797, %v1800
        %v1803 = vmul.u32 %v1798, %v1799
        %v1804 = vmul.u32 %v1798, %v1800
        %v1805 = vshll.u32 %v1802, 16
        %v1806 = vshrl.u32 %v1802, 16
        %v1807 = vshll.u32 %v1803, 16
        %v1808 = vshrl.u32 %v1803, 16
        %vm1809 = vc.u32 %v1801, %v1805
        %v1810 = vsel %vm1809, 1, 0
        %v1811 = vadd.s32 %v1801, %v1805
        %v1812 = vadd.s32 %v1804, %v1810
        %vm1813 = vc.u32 %v1811, %v1807
        %v1814 = vsel %vm1813, 1, 0
        %v1815 = vadd.s32 %v1811, %v1807
        %v1816 = vadd.s32 %v1812, %v1814
        %v1817 = vadd.s32 %v1816, %v1806
        %v1818 = vadd.s32 %v1817, %v1808
        %v1819 = vmul.u32 %v1774, %v1765
        %v1820 = vadd.s32 %v1796, %v1815
        %vm1821 = vc.u32 %v1796, %v1815
        %v1822 = vadd.s32 %v1818, 1
        %v1823 = vsel %vm1821, %v1822, %v1818
        %v1824 = vadd.s32 %v1819, %v1823
        %v1825 = vadd.s32 %v1824, 536870912
        %v1826 = vshrl.u32 %v1825, 30
        %v1827 = vshll.u32 %v1826, 30
        %v1828 = vsub.s32 %v1824, %v1827
        %vm1829 = vcmp.lt.s32.totalorder %v1828, 0
        %v1830 = vsub.s32 0, %v1828
        %v1831 = vsel %vm1829, %v1830, %v1828
        %v1832 = vclz %v1831
        %v1833 = vsub.s32 %v1832, 2
        %vm1834 = vcmp.gt.s32.totalorder 0, %v1833
        %v1835 = vsel %vm1834, 0, %v1833
        %v1836 = vsub.s32 32, %v1835
        %v1837 = vshll.u32 %v1828, %v1835
        %v1838 = vshrl.u32 %v1820, %v1836
        %v1839 = vor.u32 %v1837, %v1838
        %v1840 = vsub.s32 4294967266, %v1835
        %v1841 = vadd.s32 %v1840, 127
        %v1842 = vshll.u32 %v1841, 23
        %v1843 = vor.u32 4788187, %v1842
        %v1844 = vand.u32 2147483647, %v1843
        %v1846 = vcvt.s32.f32 %v1839
        %v1847 = vmul.f32 %v1846, %v1844
        %v1848 = vxor.u32 %v1847, 2147483648
        %v1849 = vsel %vm1728, %v1848, %v1847
        %v1850 = vsub.s32 4, %v1826
        %v1851 = vsel %vm1728, %v1850, %v1826
        %v1852 = vsel %vm1727, %v784, %v1849
        %v1853 = vsel %vm1727, 0, %v1851
        %v1854 = vmul.f32 %v1852, %v1852
        %v1855 = vmul.f32 %v1854, -0.001358992
        %v1856 = vadd.f32 %v1855, 0.041655596
        %v1857 = vmul.f32 %v1854, %v1856
        %v1858 = vadd.f32 %v1857, -0.4999988
        %v1859 = vmul.f32 %v1854, %v1858
        %v1860 = vadd.f32 1.0, %v1859
        %v1861 = vmul.f32 %v1852, %v1852
        %v1862 = vmul.f32 %v1861, -0.00019511016
        %v1863 = vadd.f32 %v1862, 0.008332121
        %v1864 = vmul.f32 %v1861, %v1863
        %v1865 = vadd.f32 %v1864, -0.16666654
        %v1866 = vmul.f32 %v1861, %v1865
        %v1867 = vadd.f32 %v1866, 1.0
        %v1868 = vmul.f32 %v1867, %v1852
        %vm1869 = vweird.f32 %v784
        %v1870 = vand.u32 %v1853, 3
        %vm1871 = vcmp.lt.s32.totalorder %v1870, 2
        %vm1872 = vcmp.eq.s32.totalorder %v1870, 0
        %v1873 = vxor.u32 %v1868, 2147483648
        %v1874 = vsel %vm1872, %v1860, %v1873
        %vm1875 = vcmp.eq.s32.totalorder %v1870, 2
        %v1876 = vxor.u32 %v1860, 2147483648
        %v1877 = vsel %vm1875, %v1876, %v1868
        %v1878 = vsel %vm1871, %v1874, %v1877
        %v1879 = vsel %vm1869, nan, %v1878
        %v1880 = vand.u32 2147483647, %v785
        %vm1881 = vcmp.le.f32.partialorder %v1880, 0.7853982
        %vm1882 = vcmp.lt.s32.totalorder %v785, 0
        %v1883 = vand.u32 %v785, 2139095040
        %v1884 = vshrl.u32 %v1883, 23
        %v1885 = vsub.s32 %v1884, 127
        %v1886 = vand.u32 2147483647, %v785
        %v1887 = vand.u32 %v1886, 8388607
        %v1888 = vor.u32 %v1887, 8388608
        %v1889 = vsub.s32 0, %v1888
        %v1890 = vadd.s32 %v1885, 1
        %vm1891 = vcmp.gt.s32.totalorder %v1890, 0
        %v1892 = vsel %vm1891, %v1890, 0
        %v1893 = vshrl.u32 %v1892, 5
        %v1894 = vand.u32 %v1892, 31
        %v1895 = vsub.s32 32, %v1894
        %v1896 = vshrl.u32 683565275, %v1895
        %v1897 = vshll.u32 683565275, %v1894
        %v1898 = vshrl.u32 2475754826, %v1895
        %v1899 = vor.u32 %v1897, %v1898
        %v1900 = vshll.u32 2475754826, %v1894
        %v1901 = vshrl.u32 2131351028, %v1895
        %v1902 = vor.u32 %v1900, %v1901
        %v1903 = vshll.u32 2131351028, %v1894
        %v1904 = vshrl.u32 2102212464, %v1895
        %v1905 = vor.u32 %v1903, %v1904
        %v1906 = vshll.u32 2102212464, %v1894
        %v1907 = vshrl.u32 920167782, %v1895
        %v1908 = vor.u32 %v1906, %v1907
        %v1909 = vshll.u32 920167782, %v1894
        %v1910 = vshrl.u32 1326507024, %v1895
        %v1911 = vor.u32 %v1909, %v1910
        %vm1912 = vcmp.lt.s32.totalorder %v1893, 1
        %vm1913 = vcmp.lt.s32.totalorder %v1893, 2
        %vm1914 = vcmp.lt.s32.totalorder %v1893, 3
        %vm1915 = vcmp.lt.s32.totalorder %v1893, 4
        %v1916 = vsel %vm1912, %v1896, %v1899
        %v1917 = vsel %vm1915, %v1905, 2102212464
        %v1918 = vsel %vm1914, %v1902, %v1917
        %v1919 = vsel %vm1913, %v1916, %v1918
        %v1920 = vsel %vm1912, %v1899, %v1902
        %v1921 = vsel %vm1915, %v1908, 920167782
        %v1922 = vsel %vm1914, %v1905, %v1921
        %v1923 = vsel %vm1913, %v1920, %v1922
        %v1924 = vsel %vm1912, %v1902, %v1905
        %v1925 = vsel %vm1915, %v1911, 1326507024
        %v1926 = vsel %vm1914, %v1908, %v1925
        %v1927 = vsel %vm1913, %v1924, %v1926
        %v1928 = vshll.u32 %v1888, 8
        %v1929 = vand.u32 %v1928, 65535
        %v1930 = vshrl.u32 %v1928, 16
        %v1931 = vand.u32 %v1927, 65535
        %v1932 = vshrl.u32 %v1927, 16
        %v1933 = vmul.u32 %v1929, %v1931
        %v1934 = vmul.u32 %v1929, %v1932
        %v1935 = vmul.u32 %v1930, %v1931
        %v1936 = vmul.u32 %v1930, %v1932
        %v1937 = vshll.u32 %v1934, 16
        %v1938 = vshrl.u32 %v1934, 16
        %v1939 = vshll.u32 %v1935, 16
        %v1940 = vshrl.u32 %v1935, 16
        %vm1941 = vc.u32 %v1933, %v1937
        %v1942 = vsel %vm1941, 1, 0
        %v1943 = vadd.s32 %v1933, %v1937
        %v1944 = vadd.s32 %v1936, %v1942
        %vm1945 = vc.u32 %v1943, %v1939
        %v1946 = vsel %vm1945, 1, 0
        %v1947 = vadd.s32 %v1943, %v1939
        %v1948 = vadd.s32 %v1944, %v1946
        %v1949 = vadd.s32 %v1948, %v1938
        %v1950 = vadd.s32 %v1949, %v1940
        %v1951 = vand.u32 %v1928, 65535
        %v1952 = vshrl.u32 %v1928, 16
        %v1953 = vand.u32 %v1923, 65535
        %v1954 = vshrl.u32 %v1923, 16
        %v1955 = vmul.u32 %v1951, %v1953
        %v1956 = vmul.u32 %v1951, %v1954
        %v1957 = vmul.u32 %v1952, %v1953
        %v1958 = vmul.u32 %v1952, %v1954
        %v1959 = vshll.u32 %v1956, 16
        %v1960 = vshrl.u32 %v1956, 16
        %v1961 = vshll.u32 %v1957, 16
        %v1962 = vshrl.u32 %v1957, 16
        %vm1963 = vc.u32 %v1955, %v1959
        %v1964 = vsel %vm1963, 1, 0
        %v1965 = vadd.s32 %v1955, %v1959
        %v1966 = vadd.s32 %v1958, %v1964
        %vm1967 = vc.u32 %v1965, %v1961
        %v1968 = vsel %vm1967, 1, 0
        %v1969 = vadd.s32 %v1965, %v1961
        %v1970 = vadd.s32 %v1966, %v1968
        %v1971 = vadd.s32 %v1970, %v1960
        %v1972 = vadd.s32 %v1971, %v1962
        %v1973 = vmul.u32 %v1928, %v1919
        %v1974 = vadd.s32 %v1950, %v1969
        %vm1975 = vc.u32 %v1950, %v1969
        %v1976 = vadd.s32 %v1972, 1
        %v1977 = vsel %vm1975, %v1976, %v1972
        %v1978 = vadd.s32 %v1973, %v1977
        %v1979 = vadd.s32 %v1978, 536870912
        %v1980 = vshrl.u32 %v1979, 30
        %v1981 = vshll.u32 %v1980, 30
        %v1982 = vsub.s32 %v1978, %v1981
        %vm1983 = vcmp.lt.s32.totalorder %v1982, 0
        %v1984 = vsub.s32 0, %v1982
        %v1985 = vsel %vm1983, %v1984, %v1982
        %v1986 = vclz %v1985
        %v1987 = vsub.s32 %v1986, 2
        %vm1988 = vcmp.gt.s32.totalorder 0, %v1987
        %v1989 = vsel %vm1988, 0, %v1987
        %v1990 = vsub.s32 32, %v1989
        %v1991 = vshll.u32 %v1982, %v1989
        %v1992 = vshrl.u32 %v1974, %v1990
        %v1993 = vor.u32 %v1991, %v1992
        %v1994 = vsub.s32 4294967266, %v1989
        %v1995 = vadd.s32 %v1994, 127
        %v1996 = vshll.u32 %v1995, 23
        %v1997 = vor.u32 4788187, %v1996
        %v1998 = vand.u32 2147483647, %v1997
        %v2000 = vcvt.s32.f32 %v1993
        %v2001 = vmul.f32 %v2000, %v1998
        %v2002 = vxor.u32 %v2001, 2147483648
        %v2003 = vsel %vm1882, %v2002, %v2001
        %v2004 = vsub.s32 4, %v1980
        %v2005 = vsel %vm1882, %v2004, %v1980
        %v2006 = vsel %vm1881, %v785, %v2003
        %v2007 = vsel %vm1881, 0, %v2005
        %v2008 = vmul.f32 %v2006, %v2006
        %v2009 = vmul.f32 %v2008, -0.001358992
        %v2010 = vadd.f32 %v2009, 0.041655596
        %v2011 = vmul.f32 %v2008, %v2010
        %v2012 = vadd.f32 %v2011, -0.4999988
        %v2013 = vmul.f32 %v2008, %v2012
        %v2014 = vadd.f32 1.0, %v2013
        %v2015 = vmul.f32 %v2006, %v2006
        %v2016 = vmul.f32 %v2015, -0.00019511016
        %v2017 = vadd.f32 %v2016, 0.008332121
        %v2018 = vmul.f32 %v2015, %v2017
        %v2019 = vadd.f32 %v2018, -0.16666654
        %v2020 = vmul.f32 %v2015, %v2019
        %v2021 = vadd.f32 %v2020, 1.0
        %v2022 = vmul.f32 %v2021, %v2006
        %vm2023 = vweird.f32 %v785
        %v2024 = vand.u32 %v2007, 3
        %vm2025 = vcmp.lt.s32.totalorder %v2024, 2
        %vm2026 = vcmp.eq.s32.totalorder %v2024, 0
        %v2027 = vxor.u32 %v2022, 2147483648
        %v2028 = vsel %vm2026, %v2014, %v2027
        %vm2029 = vcmp.eq.s32.totalorder %v2024, 2
        %v2030 = vxor.u32 %v2014, 2147483648
        %v2031 = vsel %vm2029, %v2030, %v2022
        %v2032 = vsel %vm2025, %v2028, %v2031
        %v2033 = vsel %vm2023, nan, %v2032
        %v2034 = vand.u32 2147483647, %v786
        %vm2035 = vcmp.le.f32.partialorder %v2034, 0.7853982
        %vm2036 = vcmp.lt.s32.totalorder %v786, 0
        %v2037 = vand.u32 %v786, 2139095040
        %v2038 = vshrl.u32 %v2037, 23
        %v2039 = vsub.s32 %v2038, 127
        %v2040 = vand.u32 2147483647, %v786
        %v2041 = vand.u32 %v2040, 8388607
        %v2042 = vor.u32 %v2041, 8388608
        %v2043 = vsub.s32 0, %v2042
        %v2044 = vadd.s32 %v2039, 1
        %vm2045 = vcmp.gt.s32.totalorder %v2044, 0
        %v2046 = vsel %vm2045, %v2044, 0
        %v2047 = vshrl.u32 %v2046, 5
        %v2048 = vand.u32 %v2046, 31
        %v2049 = vsub.s32 32, %v2048
        %v2050 = vshrl.u32 683565275, %v2049
        %v2051 = vshll.u32 683565275, %v2048
        %v2052 = vshrl.u32 2475754826, %v2049
        %v2053 = vor.u32 %v2051, %v2052
        %v2054 = vshll.u32 2475754826, %v2048
        %v2055 = vshrl.u32 2131351028, %v2049
        %v2056 = vor.u32 %v2054, %v2055
        %v2057 = vshll.u32 2131351028, %v2048
        %v2058 = vshrl.u32 2102212464, %v2049
        %v2059 = vor.u32 %v2057, %v2058
        %v2060 = vshll.u32 2102212464, %v2048
        %v2061 = vshrl.u32 920167782, %v2049
        %v2062 = vor.u32 %v2060, %v2061
        %v2063 = vshll.u32 920167782, %v2048
        %v2064 = vshrl.u32 1326507024, %v2049
        %v2065 = vor.u32 %v2063, %v2064
        %vm2066 = vcmp.lt.s32.totalorder %v2047, 1
        %vm2067 = vcmp.lt.s32.totalorder %v2047, 2
        %vm2068 = vcmp.lt.s32.totalorder %v2047, 3
        %vm2069 = vcmp.lt.s32.totalorder %v2047, 4
        %v2070 = vsel %vm2066, %v2050, %v2053
        %v2071 = vsel %vm2069, %v2059, 2102212464
        %v2072 = vsel %vm2068, %v2056, %v2071
        %v2073 = vsel %vm2067, %v2070, %v2072
        %v2074 = vsel %vm2066, %v2053, %v2056
        %v2075 = vsel %vm2069, %v2062, 920167782
        %v2076 = vsel %vm2068, %v2059, %v2075
        %v2077 = vsel %vm2067, %v2074, %v2076
        %v2078 = vsel %vm2066, %v2056, %v2059
        %v2079 = vsel %vm2069, %v2065, 1326507024
        %v2080 = vsel %vm2068, %v2062, %v2079
        %v2081 = vsel %vm2067, %v2078, %v2080
        %v2082 = vshll.u32 %v2042, 8
        %v2083 = vand.u32 %v2082, 65535
        %v2084 = vshrl.u32 %v2082, 16
        %v2085 = vand.u32 %v2081, 65535
        %v2086 = vshrl.u32 %v2081, 16
        %v2087 = vmul.u32 %v2083, %v2085
        %v2088 = vmul.u32 %v2083, %v2086
        %v2089 = vmul.u32 %v2084, %v2085
        %v2090 = vmul.u32 %v2084, %v2086
        %v2091 = vshll.u32 %v2088, 16
        %v2092 = vshrl.u32 %v2088, 16
        %v2093 = vshll.u32 %v2089, 16
        %v2094 = vshrl.u32 %v2089, 16
        %vm2095 = vc.u32 %v2087, %v2091
        %v2096 = vsel %vm2095, 1, 0
        %v2097 = vadd.s32 %v2087, %v2091
        %v2098 = vadd.s32 %v2090, %v2096
        %vm2099 = vc.u32 %v2097, %v2093
        %v2100 = vsel %vm2099, 1, 0
        %v2101 = vadd.s32 %v2097, %v2093
        %v2102 = vadd.s32 %v2098, %v2100
        %v2103 = vadd.s32 %v2102, %v2092
        %v2104 = vadd.s32 %v2103, %v2094
        %v2105 = vand.u32 %v2082, 65535
        %v2106 = vshrl.u32 %v2082, 16
        %v2107 = vand.u32 %v2077, 65535
        %v2108 = vshrl.u32 %v2077, 16
        %v2109 = vmul.u32 %v2105, %v2107
        %v2110 = vmul.u32 %v2105, %v2108
        %v2111 = vmul.u32 %v2106, %v2107
        %v2112 = vmul.u32 %v2106, %v2108
        %v2113 = vshll.u32 %v2110, 16
        %v2114 = vshrl.u32 %v2110, 16
        %v2115 = vshll.u32 %v2111, 16
        %v2116 = vshrl.u32 %v2111, 16
        %vm2117 = vc.u32 %v2109, %v2113
        %v2118 = vsel %vm2117, 1, 0
        %v2119 = vadd.s32 %v2109, %v2113
        %v2120 = vadd.s32 %v2112, %v2118
        %vm2121 = vc.u32 %v2119, %v2115
        %v2122 = vsel %vm2121, 1, 0
        %v2123 = vadd.s32 %v2119, %v2115
        %v2124 = vadd.s32 %v2120, %v2122
        %v2125 = vadd.s32 %v2124, %v2114
        %v2126 = vadd.s32 %v2125, %v2116
        %v2127 = vmul.u32 %v2082, %v2073
        %v2128 = vadd.s32 %v2104, %v2123
        %vm2129 = vc.u32 %v2104, %v2123
        %v2130 = vadd.s32 %v2126, 1
        %v2131 = vsel %vm2129, %v2130, %v2126
        %v2132 = vadd.s32 %v2127, %v2131
        %v2133 = vadd.s32 %v2132, 536870912
        %v2134 = vshrl.u32 %v2133, 30
        %v2135 = vshll.u32 %v2134, 30
        %v2136 = vsub.s32 %v2132, %v2135
        %vm2137 = vcmp.lt.s32.totalorder %v2136, 0
        %v2138 = vsub.s32 0, %v2136
        %v2139 = vsel %vm2137, %v2138, %v2136
        %v2140 = vclz %v2139
        %v2141 = vsub.s32 %v2140, 2
        %vm2142 = vcmp.gt.s32.totalorder 0, %v2141
        %v2143 = vsel %vm2142, 0, %v2141
        %v2144 = vsub.s32 32, %v2143
        %v2145 = vshll.u32 %v2136, %v2143
        %v2146 = vshrl.u32 %v2128, %v2144
        %v2147 = vor.u32 %v2145, %v2146
        %v2148 = vsub.s32 4294967266, %v2143
        %v2149 = vadd.s32 %v2148, 127
        %v2150 = vshll.u32 %v2149, 23
        %v2151 = vor.u32 4788187, %v2150
        %v2152 = vand.u32 2147483647, %v2151
        %v2154 = vcvt.s32.f32 %v2147
        %v2155 = vmul.f32 %v2154, %v2152
        %v2156 = vxor.u32 %v2155, 2147483648
        %v2157 = vsel %vm2036, %v2156, %v2155
        %v2158 = vsub.s32 4, %v2134
        %v2159 = vsel %vm2036, %v2158, %v2134
        %v2160 = vsel %vm2035, %v786, %v2157
        %v2161 = vsel %vm2035, 0, %v2159
        %v2162 = vmul.f32 %v2160, %v2160
        %v2163 = vmul.f32 %v2162, -0.001358992
        %v2164 = vadd.f32 %v2163, 0.041655596
        %v2165 = vmul.f32 %v2162, %v2164
        %v2166 = vadd.f32 %v2165, -0.4999988
        %v2167 = vmul.f32 %v2162, %v2166
        %v2168 = vadd.f32 1.0, %v2167
        %v2169 = vmul.f32 %v2160, %v2160
        %v2170 = vmul.f32 %v2169, -0.00019511016
        %v2171 = vadd.f32 %v2170, 0.008332121
        %v2172 = vmul.f32 %v2169, %v2171
        %v2173 = vadd.f32 %v2172, -0.16666654
        %v2174 = vmul.f32 %v2169, %v2173
        %v2175 = vadd.f32 %v2174, 1.0
        %v2176 = vmul.f32 %v2175, %v2160
        %vm2177 = vweird.f32 %v786
        %v2178 = vand.u32 %v2161, 3
        %vm2179 = vcmp.lt.s32.totalorder %v2178, 2
        %vm2180 = vcmp.eq.s32.totalorder %v2178, 0
        %v2181 = vxor.u32 %v2176, 2147483648
        %v2182 = vsel %vm2180, %v2168, %v2181
        %vm2183 = vcmp.eq.s32.totalorder %v2178, 2
        %v2184 = vxor.u32 %v2168, 2147483648
        %v2185 = vsel %vm2183, %v2184, %v2176
        %v2186 = vsel %vm2179, %v2182, %v2185
        %v2187 = vsel %vm2177, nan, %v2186
        %v2188 = vand.u32 2147483647, %v787
        %vm2189 = vcmp.le.f32.partialorder %v2188, 0.7853982
        %vm2190 = vcmp.lt.s32.totalorder %v787, 0
        %v2191 = vand.u32 %v787, 2139095040
        %v2192 = vshrl.u32 %v2191, 23
        %v2193 = vsub.s32 %v2192, 127
        %v2194 = vand.u32 2147483647, %v787
        %v2195 = vand.u32 %v2194, 8388607
        %v2196 = vor.u32 %v2195, 8388608
        %v2197 = vsub.s32 0, %v2196
        %v2198 = vadd.s32 %v2193, 1
        %vm2199 = vcmp.gt.s32.totalorder %v2198, 0
        %v2200 = vsel %vm2199, %v2198, 0
        %v2201 = vshrl.u32 %v2200, 5
        %v2202 = vand.u32 %v2200, 31
        %v2203 = vsub.s32 32, %v2202
        %v2204 = vshrl.u32 683565275, %v2203
        %v2205 = vshll.u32 683565275, %v2202
        %v2206 = vshrl.u32 2475754826, %v2203
        %v2207 = vor.u32 %v2205, %v2206
        %v2208 = vshll.u32 2475754826, %v2202
        %v2209 = vshrl.u32 2131351028, %v2203
        %v2210 = vor.u32 %v2208, %v2209
        %v2211 = vshll.u32 2131351028, %v2202
        %v2212 = vshrl.u32 2102212464, %v2203
        %v2213 = vor.u32 %v2211, %v2212
        %v2214 = vshll.u32 2102212464, %v2202
        %v2215 = vshrl.u32 920167782, %v2203
        %v2216 = vor.u32 %v2214, %v2215
        %v2217 = vshll.u32 920167782, %v2202
        %v2218 = vshrl.u32 1326507024, %v2203
        %v2219 = vor.u32 %v2217, %v2218
        %vm2220 = vcmp.lt.s32.totalorder %v2201, 1
        %vm2221 = vcmp.lt.s32.totalorder %v2201, 2
        %vm2222 = vcmp.lt.s32.totalorder %v2201, 3
        %vm2223 = vcmp.lt.s32.totalorder %v2201, 4
        %v2224 = vsel %vm2220, %v2204, %v2207
        %v2225 = vsel %vm2223, %v2213, 2102212464
        %v2226 = vsel %vm2222, %v2210, %v2225
        %v2227 = vsel %vm2221, %v2224, %v2226
        %v2228 = vsel %vm2220, %v2207, %v2210
        %v2229 = vsel %vm2223, %v2216, 920167782
        %v2230 = vsel %vm2222, %v2213, %v2229
        %v2231 = vsel %vm2221, %v2228, %v2230
        %v2232 = vsel %vm2220, %v2210, %v2213
        %v2233 = vsel %vm2223, %v2219, 1326507024
        %v2234 = vsel %vm2222, %v2216, %v2233
        %v2235 = vsel %vm2221, %v2232, %v2234
        %v2236 = vshll.u32 %v2196, 8
        %v2237 = vand.u32 %v2236, 65535
        %v2238 = vshrl.u32 %v2236, 16
        %v2239 = vand.u32 %v2235, 65535
        %v2240 = vshrl.u32 %v2235, 16
        %v2241 = vmul.u32 %v2237, %v2239
        %v2242 = vmul.u32 %v2237, %v2240
        %v2243 = vmul.u32 %v2238, %v2239
        %v2244 = vmul.u32 %v2238, %v2240
        %v2245 = vshll.u32 %v2242, 16
        %v2246 = vshrl.u32 %v2242, 16
        %v2247 = vshll.u32 %v2243, 16
        %v2248 = vshrl.u32 %v2243, 16
        %vm2249 = vc.u32 %v2241, %v2245
        %v2250 = vsel %vm2249, 1, 0
        %v2251 = vadd.s32 %v2241, %v2245
        %v2252 = vadd.s32 %v2244, %v2250
        %vm2253 = vc.u32 %v2251, %v2247
        %v2254 = vsel %vm2253, 1, 0
        %v2255 = vadd.s32 %v2251, %v2247
        %v2256 = vadd.s32 %v2252, %v2254
        %v2257 = vadd.s32 %v2256, %v2246
        %v2258 = vadd.s32 %v2257, %v2248
        %v2259 = vand.u32 %v2236, 65535
        %v2260 = vshrl.u32 %v2236, 16
        %v2261 = vand.u32 %v2231, 65535
        %v2262 = vshrl.u32 %v2231, 16
        %v2263 = vmul.u32 %v2259, %v2261
        %v2264 = vmul.u32 %v2259, %v2262
        %v2265 = vmul.u32 %v2260, %v2261
        %v2266 = vmul.u32 %v2260, %v2262
        %v2267 = vshll.u32 %v2264, 16
        %v2268 = vshrl.u32 %v2264, 16
        %v2269 = vshll.u32 %v2265, 16
        %v2270 = vshrl.u32 %v2265, 16
        %vm2271 = vc.u32 %v2263, %v2267
        %v2272 = vsel %vm2271, 1, 0
        %v2273 = vadd.s32 %v2263, %v2267
        %v2274 = vadd.s32 %v2266, %v2272
        %vm2275 = vc.u32 %v2273, %v2269
        %v2276 = vsel %vm2275, 1, 0
        %v2277 = vadd.s32 %v2273, %v2269
        %v2278 = vadd.s32 %v2274, %v2276
        %v2279 = vadd.s32 %v2278, %v2268
        %v2280 = vadd.s32 %v2279, %v2270
        %v2281 = vmul.u32 %v2236, %v2227
        %v2282 = vadd.s32 %v2258, %v2277
        %vm2283 = vc.u32 %v2258, %v2277
        %v2284 = vadd.s32 %v2280, 1
        %v2285 = vsel %vm2283, %v2284, %v2280
        %v2286 = vadd.s32 %v2281, %v2285
        %v2287 = vadd.s32 %v2286, 536870912
        %v2288 = vshrl.u32 %v2287, 30
        %v2289 = vshll.u32 %v2288, 30
        %v2290 = vsub.s32 %v2286, %v2289
        %vm2291 = vcmp.lt.s32.totalorder %v2290, 0
        %v2292 = vsub.s32 0, %v2290
        %v2293 = vsel %vm2291, %v2292, %v2290
        %v2294 = vclz %v2293
        %v2295 = vsub.s32 %v2294, 2
        %vm2296 = vcmp.gt.s32.totalorder 0, %v2295
        %v2297 = vsel %vm2296, 0, %v2295
        %v2298 = vsub.s32 32, %v2297
        %v2299 = vshll.u32 %v2290, %v2297
        %v2300 = vshrl.u32 %v2282, %v2298
        %v2301 = vor.u32 %v2299, %v2300
        %v2302 = vsub.s32 4294967266, %v2297
        %v2303 = vadd.s32 %v2302, 127
        %v2304 = vshll.u32 %v2303, 23
        %v2305 = vor.u32 4788187, %v2304
        %v2306 = vand.u32 2147483647, %v2305
        %v2308 = vcvt.s32.f32 %v2301
        %v2309 = vmul.f32 %v2308, %v2306
        %v2310 = vxor.u32 %v2309, 2147483648
        %v2311 = vsel %vm2190, %v2310, %v2309
        %v2312 = vsub.s32 4, %v2288
        %v2313 = vsel %vm2190, %v2312, %v2288
        %v2314 = vsel %vm2189, %v787, %v2311
        %v2315 = vsel %vm2189, 0, %v2313
        %v2316 = vmul.f32 %v2314, %v2314
        %v2317 = vmul.f32 %v2316, -0.001358992
        %v2318 = vadd.f32 %v2317, 0.041655596
        %v2319 = vmul.f32 %v2316, %v2318
        %v2320 = vadd.f32 %v2319, -0.4999988
        %v2321 = vmul.f32 %v2316, %v2320
        %v2322 = vadd.f32 1.0, %v2321
        %v2323 = vmul.f32 %v2314, %v2314
        %v2324 = vmul.f32 %v2323, -0.00019511016
        %v2325 = vadd.f32 %v2324, 0.008332121
        %v2326 = vmul.f32 %v2323, %v2325
        %v2327 = vadd.f32 %v2326, -0.16666654
        %v2328 = vmul.f32 %v2323, %v2327
        %v2329 = vadd.f32 %v2328, 1.0
        %v2330 = vmul.f32 %v2329, %v2314
        %vm2331 = vweird.f32 %v787
        %v2332 = vand.u32 %v2315, 3
        %vm2333 = vcmp.lt.s32.totalorder %v2332, 2
        %vm2334 = vcmp.eq.s32.totalorder %v2332, 0
        %v2335 = vxor.u32 %v2330, 2147483648
        %v2336 = vsel %vm2334, %v2322, %v2335
        %vm2337 = vcmp.eq.s32.totalorder %v2332, 2
        %v2338 = vxor.u32 %v2322, 2147483648
        %v2339 = vsel %vm2337, %v2338, %v2330
        %v2340 = vsel %vm2333, %v2336, %v2339
        %v2341 = vsel %vm2331, nan, %v2340
        %v2342 = vand.u32 2147483647, %v788
        %vm2343 = vcmp.le.f32.partialorder %v2342, 0.7853982
        %vm2344 = vcmp.lt.s32.totalorder %v788, 0
        %v2345 = vand.u32 %v788, 2139095040
        %v2346 = vshrl.u32 %v2345, 23
        %v2347 = vsub.s32 %v2346, 127
        %v2348 = vand.u32 2147483647, %v788
        %v2349 = vand.u32 %v2348, 8388607
        %v2350 = vor.u32 %v2349, 8388608
        %v2351 = vsub.s32 0, %v2350
        %v2352 = vadd.s32 %v2347, 1
        %vm2353 = vcmp.gt.s32.totalorder %v2352, 0
        %v2354 = vsel %vm2353, %v2352, 0
        %v2355 = vshrl.u32 %v2354, 5
        %v2356 = vand.u32 %v2354, 31
        %v2357 = vsub.s32 32, %v2356
        %v2358 = vshrl.u32 683565275, %v2357
        %v2359 = vshll.u32 683565275, %v2356
        %v2360 = vshrl.u32 2475754826, %v2357
        %v2361 = vor.u32 %v2359, %v2360
        %v2362 = vshll.u32 2475754826, %v2356
        %v2363 = vshrl.u32 2131351028, %v2357
        %v2364 = vor.u32 %v2362, %v2363
        %v2365 = vshll.u32 2131351028, %v2356
        %v2366 = vshrl.u32 2102212464, %v2357
        %v2367 = vor.u32 %v2365, %v2366
        %v2368 = vshll.u32 2102212464, %v2356
        %v2369 = vshrl.u32 920167782, %v2357
        %v2370 = vor.u32 %v2368, %v2369
        %v2371 = vshll.u32 920167782, %v2356
        %v2372 = vshrl.u32 1326507024, %v2357
        %v2373 = vor.u32 %v2371, %v2372
        %vm2374 = vcmp.lt.s32.totalorder %v2355, 1
        %vm2375 = vcmp.lt.s32.totalorder %v2355, 2
        %vm2376 = vcmp.lt.s32.totalorder %v2355, 3
        %vm2377 = vcmp.lt.s32.totalorder %v2355, 4
        %v2378 = vsel %vm2374, %v2358, %v2361
        %v2379 = vsel %vm2377, %v2367, 2102212464
        %v2380 = vsel %vm2376, %v2364, %v2379
        %v2381 = vsel %vm2375, %v2378, %v2380
        %v2382 = vsel %vm2374, %v2361, %v2364
        %v2383 = vsel %vm2377, %v2370, 920167782
        %v2384 = vsel %vm2376, %v2367, %v2383
        %v2385 = vsel %vm2375, %v2382, %v2384
        %v2386 = vsel %vm2374, %v2364, %v2367
        %v2387 = vsel %vm2377, %v2373, 1326507024
        %v2388 = vsel %vm2376, %v2370, %v2387
        %v2389 = vsel %vm2375, %v2386, %v2388
        %v2390 = vshll.u32 %v2350, 8
        %v2391 = vand.u32 %v2390, 65535
        %v2392 = vshrl.u32 %v2390, 16
        %v2393 = vand.u32 %v2389, 65535
        %v2394 = vshrl.u32 %v2389, 16
        %v2395 = vmul.u32 %v2391, %v2393
        %v2396 = vmul.u32 %v2391, %v2394
        %v2397 = vmul.u32 %v2392, %v2393
        %v2398 = vmul.u32 %v2392, %v2394
        %v2399 = vshll.u32 %v2396, 16
        %v2400 = vshrl.u32 %v2396, 16
        %v2401 = vshll.u32 %v2397, 16
        %v2402 = vshrl.u32 %v2397, 16
        %vm2403 = vc.u32 %v2395, %v2399
        %v2404 = vsel %vm2403, 1, 0
        %v2405 = vadd.s32 %v2395, %v2399
        %v2406 = vadd.s32 %v2398, %v2404
        %vm2407 = vc.u32 %v2405, %v2401
        %v2408 = vsel %vm2407, 1, 0
        %v2409 = vadd.s32 %v2405, %v2401
        %v2410 = vadd.s32 %v2406, %v2408
        %v2411 = vadd.s32 %v2410, %v2400
        %v2412 = vadd.s32 %v2411, %v2402
        %v2413 = vand.u32 %v2390, 65535
        %v2414 = vshrl.u32 %v2390, 16
        %v2415 = vand.u32 %v2385, 65535
        %v2416 = vshrl.u32 %v2385, 16
        %v2417 = vmul.u32 %v2413, %v2415
        %v2418 = vmul.u32 %v2413, %v2416
        %v2419 = vmul.u32 %v2414, %v2415
        %v2420 = vmul.u32 %v2414, %v2416
        %v2421 = vshll.u32 %v2418, 16
        %v2422 = vshrl.u32 %v2418, 16
        %v2423 = vshll.u32 %v2419, 16
        %v2424 = vshrl.u32 %v2419, 16
        %vm2425 = vc.u32 %v2417, %v2421
        %v2426 = vsel %vm2425, 1, 0
        %v2427 = vadd.s32 %v2417, %v2421
        %v2428 = vadd.s32 %v2420, %v2426
        %vm2429 = vc.u32 %v2427, %v2423
        %v2430 = vsel %vm2429, 1, 0
        %v2431 = vadd.s32 %v2427, %v2423
        %v2432 = vadd.s32 %v2428, %v2430
        %v2433 = vadd.s32 %v2432, %v2422
        %v2434 = vadd.s32 %v2433, %v2424
        %v2435 = vmul.u32 %v2390, %v2381
        %v2436 = vadd.s32 %v2412, %v2431
        %vm2437 = vc.u32 %v2412, %v2431
        %v2438 = vadd.s32 %v2434, 1
        %v2439 = vsel %vm2437, %v2438, %v2434
        %v2440 = vadd.s32 %v2435, %v2439
        %v2441 = vadd.s32 %v2440, 536870912
        %v2442 = vshrl.u32 %v2441, 30
        %v2443 = vshll.u32 %v2442, 30
        %v2444 = vsub.s32 %v2440, %v2443
        %vm2445 = vcmp.lt.s32.totalorder %v2444, 0
        %v2446 = vsub.s32 0, %v2444
        %v2447 = vsel %vm2445, %v2446, %v2444
        %v2448 = vclz %v2447
        %v2449 = vsub.s32 %v2448, 2
        %vm2450 = vcmp.gt.s32.totalorder 0, %v2449
        %v2451 = vsel %vm2450, 0, %v2449
        %v2452 = vsub.s32 32, %v2451
        %v2453 = vshll.u32 %v2444, %v2451
        %v2454 = vshrl.u32 %v2436, %v2452
        %v2455 = vor.u32 %v2453, %v2454
        %v2456 = vsub.s32 4294967266, %v2451
        %v2457 = vadd.s32 %v2456, 127
        %v2458 = vshll.u32 %v2457, 23
        %v2459 = vor.u32 4788187, %v2458
        %v2460 = vand.u32 2147483647, %v2459
        %v2462 = vcvt.s32.f32 %v2455
        %v2463 = vmul.f32 %v2462, %v2460
        %v2464 = vxor.u32 %v2463, 2147483648
        %v2465 = vsel %vm2344, %v2464, %v2463
        %v2466 = vsub.s32 4, %v2442
        %v2467 = vsel %vm2344, %v2466, %v2442
        %v2468 = vsel %vm2343, %v788, %v2465
        %v2469 = vsel %vm2343, 0, %v2467
        %v2470 = vmul.f32 %v2468, %v2468
        %v2471 = vmul.f32 %v2470, -0.001358992
        %v2472 = vadd.f32 %v2471, 0.041655596
        %v2473 = vmul.f32 %v2470, %v2472
        %v2474 = vadd.f32 %v2473, -0.4999988
        %v2475 = vmul.f32 %v2470, %v2474
        %v2476 = vadd.f32 1.0, %v2475
        %v2477 = vmul.f32 %v2468, %v2468
        %v2478 = vmul.f32 %v2477, -0.00019511016
        %v2479 = vadd.f32 %v2478, 0.008332121
        %v2480 = vmul.f32 %v2477, %v2479
        %v2481 = vadd.f32 %v2480, -0.16666654
        %v2482 = vmul.f32 %v2477, %v2481
        %v2483 = vadd.f32 %v2482, 1.0
        %v2484 = vmul.f32 %v2483, %v2468
        %vm2485 = vweird.f32 %v788
        %v2486 = vand.u32 %v2469, 3
        %vm2487 = vcmp.lt.s32.totalorder %v2486, 2
        %vm2488 = vcmp.eq.s32.totalorder %v2486, 0
        %v2489 = vxor.u32 %v2484, 2147483648
        %v2490 = vsel %vm2488, %v2476, %v2489
        %vm2491 = vcmp.eq.s32.totalorder %v2486, 2
        %v2492 = vxor.u32 %v2476, 2147483648
        %v2493 = vsel %vm2491, %v2492, %v2484
        %v2494 = vsel %vm2487, %v2490, %v2493
        %v2495 = vsel %vm2485, nan, %v2494
        %v2496 = vand.u32 2147483647, %v789
        %vm2497 = vcmp.le.f32.partialorder %v2496, 0.7853982
        %vm2498 = vcmp.lt.s32.totalorder %v789, 0
        %v2499 = vand.u32 %v789, 2139095040
        %v2500 = vshrl.u32 %v2499, 23
        %v2501 = vsub.s32 %v2500, 127
        %v2502 = vand.u32 2147483647, %v789
        %v2503 = vand.u32 %v2502, 8388607
        %v2504 = vor.u32 %v2503, 8388608
        %v2505 = vsub.s32 0, %v2504
        %v2506 = vadd.s32 %v2501, 1
        %vm2507 = vcmp.gt.s32.totalorder %v2506, 0
        %v2508 = vsel %vm2507, %v2506, 0
        %v2509 = vshrl.u32 %v2508, 5
        %v2510 = vand.u32 %v2508, 31
        %v2511 = vsub.s32 32, %v2510
        %v2512 = vshrl.u32 683565275, %v2511
        %v2513 = vshll.u32 683565275, %v2510
        %v2514 = vshrl.u32 2475754826, %v2511
        %v2515 = vor.u32 %v2513, %v2514
        %v2516 = vshll.u32 2475754826, %v2510
        %v2517 = vshrl.u32 2131351028, %v2511
        %v2518 = vor.u32 %v2516, %v2517
        %v2519 = vshll.u32 2131351028, %v2510
        %v2520 = vshrl.u32 2102212464, %v2511
        %v2521 = vor.u32 %v2519, %v2520
        %v2522 = vshll.u32 2102212464, %v2510
        %v2523 = vshrl.u32 920167782, %v2511
        %v2524 = vor.u32 %v2522, %v2523
        %v2525 = vshll.u32 920167782, %v2510
        %v2526 = vshrl.u32 1326507024, %v2511
        %v2527 = vor.u32 %v2525, %v2526
        %vm2528 = vcmp.lt.s32.totalorder %v2509, 1
        %vm2529 = vcmp.lt.s32.totalorder %v2509, 2
        %vm2530 = vcmp.lt.s32.totalorder %v2509, 3
        %vm2531 = vcmp.lt.s32.totalorder %v2509, 4
        %v2532 = vsel %vm2528, %v2512, %v2515
        %v2533 = vsel %vm2531, %v2521, 2102212464
        %v2534 = vsel %vm2530, %v2518, %v2533
        %v2535 = vsel %vm2529, %v2532, %v2534
        %v2536 = vsel %vm2528, %v2515, %v2518
        %v2537 = vsel %vm2531, %v2524, 920167782
        %v2538 = vsel %vm2530, %v2521, %v2537
        %v2539 = vsel %vm2529, %v2536, %v2538
        %v2540 = vsel %vm2528, %v2518, %v2521
        %v2541 = vsel %vm2531, %v2527, 1326507024
        %v2542 = vsel %vm2530, %v2524, %v2541
        %v2543 = vsel %vm2529, %v2540, %v2542
        %v2544 = vshll.u32 %v2504, 8
        %v2545 = vand.u32 %v2544, 65535
        %v2546 = vshrl.u32 %v2544, 16
        %v2547 = vand.u32 %v2543, 65535
        %v2548 = vshrl.u32 %v2543, 16
        %v2549 = vmul.u32 %v2545, %v2547
        %v2550 = vmul.u32 %v2545, %v2548
        %v2551 = vmul.u32 %v2546, %v2547
        %v2552 = vmul.u32 %v2546, %v2548
        %v2553 = vshll.u32 %v2550, 16
        %v2554 = vshrl.u32 %v2550, 16
        %v2555 = vshll.u32 %v2551, 16
        %v2556 = vshrl.u32 %v2551, 16
        %vm2557 = vc.u32 %v2549, %v2553
        %v2558 = vsel %vm2557, 1, 0
        %v2559 = vadd.s32 %v2549, %v2553
        %v2560 = vadd.s32 %v2552, %v2558
        %vm2561 = vc.u32 %v2559, %v2555
        %v2562 = vsel %vm2561, 1, 0
        %v2563 = vadd.s32 %v2559, %v2555
        %v2564 = vadd.s32 %v2560, %v2562
        %v2565 = vadd.s32 %v2564, %v2554
        %v2566 = vadd.s32 %v2565, %v2556
        %v2567 = vand.u32 %v2544, 65535
        %v2568 = vshrl.u32 %v2544, 16
        %v2569 = vand.u32 %v2539, 65535
        %v2570 = vshrl.u32 %v2539, 16
        %v2571 = vmul.u32 %v2567, %v2569
        %v2572 = vmul.u32 %v2567, %v2570
        %v2573 = vmul.u32 %v2568, %v2569
        %v2574 = vmul.u32 %v2568, %v2570
        %v2575 = vshll.u32 %v2572, 16
        %v2576 = vshrl.u32 %v2572, 16
        %v2577 = vshll.u32 %v2573, 16
        %v2578 = vshrl.u32 %v2573, 16
        %vm2579 = vc.u32 %v2571, %v2575
        %v2580 = vsel %vm2579, 1, 0
        %v2581 = vadd.s32 %v2571, %v2575
        %v2582 = vadd.s32 %v2574, %v2580
        %vm2583 = vc.u32 %v2581, %v2577
        %v2584 = vsel %vm2583, 1, 0
        %v2585 = vadd.s32 %v2581, %v2577
        %v2586 = vadd.s32 %v2582, %v2584
        %v2587 = vadd.s32 %v2586, %v2576
        %v2588 = vadd.s32 %v2587, %v2578
        %v2589 = vmul.u32 %v2544, %v2535
        %v2590 = vadd.s32 %v2566, %v2585
        %vm2591 = vc.u32 %v2566, %v2585
        %v2592 = vadd.s32 %v2588, 1
        %v2593 = vsel %vm2591, %v2592, %v2588
        %v2594 = vadd.s32 %v2589, %v2593
        %v2595 = vadd.s32 %v2594, 536870912
        %v2596 = vshrl.u32 %v2595, 30
        %v2597 = vshll.u32 %v2596, 30
        %v2598 = vsub.s32 %v2594, %v2597
        %vm2599 = vcmp.lt.s32.totalorder %v2598, 0
        %v2600 = vsub.s32 0, %v2598
        %v2601 = vsel %vm2599, %v2600, %v2598
        %v2602 = vclz %v2601
        %v2603 = vsub.s32 %v2602, 2
        %vm2604 = vcmp.gt.s32.totalorder 0, %v2603
        %v2605 = vsel %vm2604, 0, %v2603
        %v2606 = vsub.s32 32, %v2605
        %v2607 = vshll.u32 %v2598, %v2605
        %v2608 = vshrl.u32 %v2590, %v2606
        %v2609 = vor.u32 %v2607, %v2608
        %v2610 = vsub.s32 4294967266, %v2605
        %v2611 = vadd.s32 %v2610, 127
        %v2612 = vshll.u32 %v2611, 23
        %v2613 = vor.u32 4788187, %v2612
        %v2614 = vand.u32 2147483647, %v2613
        %v2616 = vcvt.s32.f32 %v2609
        %v2617 = vmul.f32 %v2616, %v2614
        %v2618 = vxor.u32 %v2617, 2147483648
        %v2619 = vsel %vm2498, %v2618, %v2617
        %v2620 = vsub.s32 4, %v2596
        %v2621 = vsel %vm2498, %v2620, %v2596
        %v2622 = vsel %vm2497, %v789, %v2619
        %v2623 = vsel %vm2497, 0, %v2621
        %v2624 = vmul.f32 %v2622, %v2622
        %v2625 = vmul.f32 %v2624, -0.001358992
        %v2626 = vadd.f32 %v2625, 0.041655596
        %v2627 = vmul.f32 %v2624, %v2626
        %v2628 = vadd.f32 %v2627, -0.4999988
        %v2629 = vmul.f32 %v2624, %v2628
        %v2630 = vadd.f32 1.0, %v2629
        %v2631 = vmul.f32 %v2622, %v2622
        %v2632 = vmul.f32 %v2631, -0.00019511016
        %v2633 = vadd.f32 %v2632, 0.008332121
        %v2634 = vmul.f32 %v2631, %v2633
        %v2635 = vadd.f32 %v2634, -0.16666654
        %v2636 = vmul.f32 %v2631, %v2635
        %v2637 = vadd.f32 %v2636, 1.0
        %v2638 = vmul.f32 %v2637, %v2622
        %vm2639 = vweird.f32 %v789
        %v2640 = vand.u32 %v2623, 3
        %vm2641 = vcmp.lt.s32.totalorder %v2640, 2
        %vm2642 = vcmp.eq.s32.totalorder %v2640, 0
        %v2643 = vxor.u32 %v2638, 2147483648
        %v2644 = vsel %vm2642, %v2630, %v2643
        %vm2645 = vcmp.eq.s32.totalorder %v2640, 2
        %v2646 = vxor.u32 %v2630, 2147483648
        %v2647 = vsel %vm2645, %v2646, %v2638
        %v2648 = vsel %vm2641, %v2644, %v2647
        %v2649 = vsel %vm2639, nan, %v2648
        %v2650 = vand.u32 2147483647, %v790
        %vm2651 = vcmp.le.f32.partialorder %v2650, 0.7853982
        %vm2652 = vcmp.lt.s32.totalorder %v790, 0
        %v2653 = vand.u32 %v790, 2139095040
        %v2654 = vshrl.u32 %v2653, 23
        %v2655 = vsub.s32 %v2654, 127
        %v2656 = vand.u32 2147483647, %v790
        %v2657 = vand.u32 %v2656, 8388607
        %v2658 = vor.u32 %v2657, 8388608
        %v2659 = vsub.s32 0, %v2658
        %v2660 = vadd.s32 %v2655, 1
        %vm2661 = vcmp.gt.s32.totalorder %v2660, 0
        %v2662 = vsel %vm2661, %v2660, 0
        %v2663 = vshrl.u32 %v2662, 5
        %v2664 = vand.u32 %v2662, 31
        %v2665 = vsub.s32 32, %v2664
        %v2666 = vshrl.u32 683565275, %v2665
        %v2667 = vshll.u32 683565275, %v2664
        %v2668 = vshrl.u32 2475754826, %v2665
        %v2669 = vor.u32 %v2667, %v2668
        %v2670 = vshll.u32 2475754826, %v2664
        %v2671 = vshrl.u32 2131351028, %v2665
        %v2672 = vor.u32 %v2670, %v2671
        %v2673 = vshll.u32 2131351028, %v2664
        %v2674 = vshrl.u32 2102212464, %v2665
        %v2675 = vor.u32 %v2673, %v2674
        %v2676 = vshll.u32 2102212464, %v2664
        %v2677 = vshrl.u32 920167782, %v2665
        %v2678 = vor.u32 %v2676, %v2677
        %v2679 = vshll.u32 920167782, %v2664
        %v2680 = vshrl.u32 1326507024, %v2665
        %v2681 = vor.u32 %v2679, %v2680
        %vm2682 = vcmp.lt.s32.totalorder %v2663, 1
        %vm2683 = vcmp.lt.s32.totalorder %v2663, 2
        %vm2684 = vcmp.lt.s32.totalorder %v2663, 3
        %vm2685 = vcmp.lt.s32.totalorder %v2663, 4
        %v2686 = vsel %vm2682, %v2666, %v2669
        %v2687 = vsel %vm2685, %v2675, 2102212464
        %v2688 = vsel %vm2684, %v2672, %v2687
        %v2689 = vsel %vm2683, %v2686, %v2688
        %v2690 = vsel %vm2682, %v2669, %v2672
        %v2691 = vsel %vm2685, %v2678, 920167782
        %v2692 = vsel %vm2684, %v2675, %v2691
        %v2693 = vsel %vm2683, %v2690, %v2692
        %v2694 = vsel %vm2682, %v2672, %v2675
        %v2695 = vsel %vm2685, %v2681, 1326507024
        %v2696 = vsel %vm2684, %v2678, %v2695
        %v2697 = vsel %vm2683, %v2694, %v2696
        %v2698 = vshll.u32 %v2658, 8
        %v2699 = vand.u32 %v2698, 65535
        %v2700 = vshrl.u32 %v2698, 16
        %v2701 = vand.u32 %v2697, 65535
        %v2702 = vshrl.u32 %v2697, 16
        %v2703 = vmul.u32 %v2699, %v2701
        %v2704 = vmul.u32 %v2699, %v2702
        %v2705 = vmul.u32 %v2700, %v2701
        %v2706 = vmul.u32 %v2700, %v2702
        %v2707 = vshll.u32 %v2704, 16
        %v2708 = vshrl.u32 %v2704, 16
        %v2709 = vshll.u32 %v2705, 16
        %v2710 = vshrl.u32 %v2705, 16
        %vm2711 = vc.u32 %v2703, %v2707
        %v2712 = vsel %vm2711, 1, 0
        %v2713 = vadd.s32 %v2703, %v2707
        %v2714 = vadd.s32 %v2706, %v2712
        %vm2715 = vc.u32 %v2713, %v2709
        %v2716 = vsel %vm2715, 1, 0
        %v2717 = vadd.s32 %v2713, %v2709
        %v2718 = vadd.s32 %v2714, %v2716
        %v2719 = vadd.s32 %v2718, %v2708
        %v2720 = vadd.s32 %v2719, %v2710
        %v2721 = vand.u32 %v2698, 65535
        %v2722 = vshrl.u32 %v2698, 16
        %v2723 = vand.u32 %v2693, 65535
        %v2724 = vshrl.u32 %v2693, 16
        %v2725 = vmul.u32 %v2721, %v2723
        %v2726 = vmul.u32 %v2721, %v2724
        %v2727 = vmul.u32 %v2722, %v2723
        %v2728 = vmul.u32 %v2722, %v2724
        %v2729 = vshll.u32 %v2726, 16
        %v2730 = vshrl.u32 %v2726, 16
        %v2731 = vshll.u32 %v2727, 16
        %v2732 = vshrl.u32 %v2727, 16
        %vm2733 = vc.u32 %v2725, %v2729
        %v2734 = vsel %vm2733, 1, 0
        %v2735 = vadd.s32 %v2725, %v2729
        %v2736 = vadd.s32 %v2728, %v2734
        %vm2737 = vc.u32 %v2735, %v2731
        %v2738 = vsel %vm2737, 1, 0
        %v2739 = vadd.s32 %v2735, %v2731
        %v2740 = vadd.s32 %v2736, %v2738
        %v2741 = vadd.s32 %v2740, %v2730
        %v2742 = vadd.s32 %v2741, %v2732
        %v2743 = vmul.u32 %v2698, %v2689
        %v2744 = vadd.s32 %v2720, %v2739
        %vm2745 = vc.u32 %v2720, %v2739
        %v2746 = vadd.s32 %v2742, 1
        %v2747 = vsel %vm2745, %v2746, %v2742
        %v2748 = vadd.s32 %v2743, %v2747
        %v2749 = vadd.s32 %v2748, 536870912
        %v2750 = vshrl.u32 %v2749, 30
        %v2751 = vshll.u32 %v2750, 30
        %v2752 = vsub.s32 %v2748, %v2751
        %vm2753 = vcmp.lt.s32.totalorder %v2752, 0
        %v2754 = vsub.s32 0, %v2752
        %v2755 = vsel %vm2753, %v2754, %v2752
        %v2756 = vclz %v2755
        %v2757 = vsub.s32 %v2756, 2
        %vm2758 = vcmp.gt.s32.totalorder 0, %v2757
        %v2759 = vsel %vm2758, 0, %v2757
        %v2760 = vsub.s32 32, %v2759
        %v2761 = vshll.u32 %v2752, %v2759
        %v2762 = vshrl.u32 %v2744, %v2760
        %v2763 = vor.u32 %v2761, %v2762
        %v2764 = vsub.s32 4294967266, %v2759
        %v2765 = vadd.s32 %v2764, 127
        %v2766 = vshll.u32 %v2765, 23
        %v2767 = vor.u32 4788187, %v2766
        %v2768 = vand.u32 2147483647, %v2767
        %v2770 = vcvt.s32.f32 %v2763
        %v2771 = vmul.f32 %v2770, %v2768
        %v2772 = vxor.u32 %v2771, 2147483648
        %v2773 = vsel %vm2652, %v2772, %v2771
        %v2774 = vsub.s32 4, %v2750
        %v2775 = vsel %vm2652, %v2774, %v2750
        %v2776 = vsel %vm2651, %v790, %v2773
        %v2777 = vsel %vm2651, 0, %v2775
        %v2778 = vmul.f32 %v2776, %v2776
        %v2779 = vmul.f32 %v2778, -0.001358992
        %v2780 = vadd.f32 %v2779, 0.041655596
        %v2781 = vmul.f32 %v2778, %v2780
        %v2782 = vadd.f32 %v2781, -0.4999988
        %v2783 = vmul.f32 %v2778, %v2782
        %v2784 = vadd.f32 1.0, %v2783
        %v2785 = vmul.f32 %v2776, %v2776
        %v2786 = vmul.f32 %v2785, -0.00019511016
        %v2787 = vadd.f32 %v2786, 0.008332121
        %v2788 = vmul.f32 %v2785, %v2787
        %v2789 = vadd.f32 %v2788, -0.16666654
        %v2790 = vmul.f32 %v2785, %v2789
        %v2791 = vadd.f32 %v2790, 1.0
        %v2792 = vmul.f32 %v2791, %v2776
        %vm2793 = vweird.f32 %v790
        %v2794 = vand.u32 %v2777, 3
        %vm2795 = vcmp.lt.s32.totalorder %v2794, 2
        %vm2796 = vcmp.eq.s32.totalorder %v2794, 0
        %v2797 = vxor.u32 %v2792, 2147483648
        %v2798 = vsel %vm2796, %v2784, %v2797
        %vm2799 = vcmp.eq.s32.totalorder %v2794, 2
        %v2800 = vxor.u32 %v2784, 2147483648
        %v2801 = vsel %vm2799, %v2800, %v2792
        %v2802 = vsel %vm2795, %v2798, %v2801
        %v2803 = vsel %vm2793, nan, %v2802
        %v2804 = vand.u32 2147483647, %v791
        %vm2805 = vcmp.le.f32.partialorder %v2804, 0.7853982
        %vm2806 = vcmp.lt.s32.totalorder %v791, 0
        %v2807 = vand.u32 %v791, 2139095040
        %v2808 = vshrl.u32 %v2807, 23
        %v2809 = vsub.s32 %v2808, 127
        %v2810 = vand.u32 2147483647, %v791
        %v2811 = vand.u32 %v2810, 8388607
        %v2812 = vor.u32 %v2811, 8388608
        %v2813 = vsub.s32 0, %v2812
        %v2814 = vadd.s32 %v2809, 1
        %vm2815 = vcmp.gt.s32.totalorder %v2814, 0
        %v2816 = vsel %vm2815, %v2814, 0
        %v2817 = vshrl.u32 %v2816, 5
        %v2818 = vand.u32 %v2816, 31
        %v2819 = vsub.s32 32, %v2818
        %v2820 = vshrl.u32 683565275, %v2819
        %v2821 = vshll.u32 683565275, %v2818
        %v2822 = vshrl.u32 2475754826, %v2819
        %v2823 = vor.u32 %v2821, %v2822
        %v2824 = vshll.u32 2475754826, %v2818
        %v2825 = vshrl.u32 2131351028, %v2819
        %v2826 = vor.u32 %v2824, %v2825
        %v2827 = vshll.u32 2131351028, %v2818
        %v2828 = vshrl.u32 2102212464, %v2819
        %v2829 = vor.u32 %v2827, %v2828
        %v2830 = vshll.u32 2102212464, %v2818
        %v2831 = vshrl.u32 920167782, %v2819
        %v2832 = vor.u32 %v2830, %v2831
        %v2833 = vshll.u32 920167782, %v2818
        %v2834 = vshrl.u32 1326507024, %v2819
        %v2835 = vor.u32 %v2833, %v2834
        %vm2836 = vcmp.lt.s32.totalorder %v2817, 1
        %vm2837 = vcmp.lt.s32.totalorder %v2817, 2
        %vm2838 = vcmp.lt.s32.totalorder %v2817, 3
        %vm2839 = vcmp.lt.s32.totalorder %v2817, 4
        %v2840 = vsel %vm2836, %v2820, %v2823
        %v2841 = vsel %vm2839, %v2829, 2102212464
        %v2842 = vsel %vm2838, %v2826, %v2841
        %v2843 = vsel %vm2837, %v2840, %v2842
        %v2844 = vsel %vm2836, %v2823, %v2826
        %v2845 = vsel %vm2839, %v2832, 920167782
        %v2846 = vsel %vm2838, %v2829, %v2845
        %v2847 = vsel %vm2837, %v2844, %v2846
        %v2848 = vsel %vm2836, %v2826, %v2829
        %v2849 = vsel %vm2839, %v2835, 1326507024
        %v2850 = vsel %vm2838, %v2832, %v2849
        %v2851 = vsel %vm2837, %v2848, %v2850
        %v2852 = vshll.u32 %v2812, 8
        %v2853 = vand.u32 %v2852, 65535
        %v2854 = vshrl.u32 %v2852, 16
        %v2855 = vand.u32 %v2851, 65535
        %v2856 = vshrl.u32 %v2851, 16
        %v2857 = vmul.u32 %v2853, %v2855
        %v2858 = vmul.u32 %v2853, %v2856
        %v2859 = vmul.u32 %v2854, %v2855
        %v2860 = vmul.u32 %v2854, %v2856
        %v2861 = vshll.u32 %v2858, 16
        %v2862 = vshrl.u32 %v2858, 16
        %v2863 = vshll.u32 %v2859, 16
        %v2864 = vshrl.u32 %v2859, 16
        %vm2865 = vc.u32 %v2857, %v2861
        %v2866 = vsel %vm2865, 1, 0
        %v2867 = vadd.s32 %v2857, %v2861
        %v2868 = vadd.s32 %v2860, %v2866
        %vm2869 = vc.u32 %v2867, %v2863
        %v2870 = vsel %vm2869, 1, 0
        %v2871 = vadd.s32 %v2867, %v2863
        %v2872 = vadd.s32 %v2868, %v2870
        %v2873 = vadd.s32 %v2872, %v2862
        %v2874 = vadd.s32 %v2873, %v2864
        %v2875 = vand.u32 %v2852, 65535
        %v2876 = vshrl.u32 %v2852, 16
        %v2877 = vand.u32 %v2847, 65535
        %v2878 = vshrl.u32 %v2847, 16
        %v2879 = vmul.u32 %v2875, %v2877
        %v2880 = vmul.u32 %v2875, %v2878
        %v2881 = vmul.u32 %v2876, %v2877
        %v2882 = vmul.u32 %v2876, %v2878
        %v2883 = vshll.u32 %v2880, 16
        %v2884 = vshrl.u32 %v2880, 16
        %v2885 = vshll.u32 %v2881, 16
        %v2886 = vshrl.u32 %v2881, 16
        %vm2887 = vc.u32 %v2879, %v2883
        %v2888 = vsel %vm2887, 1, 0
        %v2889 = vadd.s32 %v2879, %v2883
        %v2890 = vadd.s32 %v2882, %v2888
        %vm2891 = vc.u32 %v2889, %v2885
        %v2892 = vsel %vm2891, 1, 0
        %v2893 = vadd.s32 %v2889, %v2885
        %v2894 = vadd.s32 %v2890, %v2892
        %v2895 = vadd.s32 %v2894, %v2884
        %v2896 = vadd.s32 %v2895, %v2886
        %v2897 = vmul.u32 %v2852, %v2843
        %v2898 = vadd.s32 %v2874, %v2893
        %vm2899 = vc.u32 %v2874, %v2893
        %v2900 = vadd.s32 %v2896, 1
        %v2901 = vsel %vm2899, %v2900, %v2896
        %v2902 = vadd.s32 %v2897, %v2901
        %v2903 = vadd.s32 %v2902, 536870912
        %v2904 = vshrl.u32 %v2903, 30
        %v2905 = vshll.u32 %v2904, 30
        %v2906 = vsub.s32 %v2902, %v2905
        %vm2907 = vcmp.lt.s32.totalorder %v2906, 0
        %v2908 = vsub.s32 0, %v2906
        %v2909 = vsel %vm2907, %v2908, %v2906
        %v2910 = vclz %v2909
        %v2911 = vsub.s32 %v2910, 2
        %vm2912 = vcmp.gt.s32.totalorder 0, %v2911
        %v2913 = vsel %vm2912, 0, %v2911
        %v2914 = vsub.s32 32, %v2913
        %v2915 = vshll.u32 %v2906, %v2913
        %v2916 = vshrl.u32 %v2898, %v2914
        %v2917 = vor.u32 %v2915, %v2916
        %v2918 = vsub.s32 4294967266, %v2913
        %v2919 = vadd.s32 %v2918, 127
        %v2920 = vshll.u32 %v2919, 23
        %v2921 = vor.u32 4788187, %v2920
        %v2922 = vand.u32 2147483647, %v2921
        %v2924 = vcvt.s32.f32 %v2917
        %v2925 = vmul.f32 %v2924, %v2922
        %v2926 = vxor.u32 %v2925, 2147483648
        %v2927 = vsel %vm2806, %v2926, %v2925
        %v2928 = vsub.s32 4, %v2904
        %v2929 = vsel %vm2806, %v2928, %v2904
        %v2930 = vsel %vm2805, %v791, %v2927
        %v2931 = vsel %vm2805, 0, %v2929
        %v2932 = vmul.f32 %v2930, %v2930
        %v2933 = vmul.f32 %v2932, -0.001358992
        %v2934 = vadd.f32 %v2933, 0.041655596
        %v2935 = vmul.f32 %v2932, %v2934
        %v2936 = vadd.f32 %v2935, -0.4999988
        %v2937 = vmul.f32 %v2932, %v2936
        %v2938 = vadd.f32 1.0, %v2937
        %v2939 = vmul.f32 %v2930, %v2930
        %v2940 = vmul.f32 %v2939, -0.00019511016
        %v2941 = vadd.f32 %v2940, 0.008332121
        %v2942 = vmul.f32 %v2939, %v2941
        %v2943 = vadd.f32 %v2942, -0.16666654
        %v2944 = vmul.f32 %v2939, %v2943
        %v2945 = vadd.f32 %v2944, 1.0
        %v2946 = vmul.f32 %v2945, %v2930
        %vm2947 = vweird.f32 %v791
        %v2948 = vand.u32 %v2931, 3
        %vm2949 = vcmp.lt.s32.totalorder %v2948, 2
        %vm2950 = vcmp.eq.s32.totalorder %v2948, 0
        %v2951 = vxor.u32 %v2946, 2147483648
        %v2952 = vsel %vm2950, %v2938, %v2951
        %vm2953 = vcmp.eq.s32.totalorder %v2948, 2
        %v2954 = vxor.u32 %v2938, 2147483648
        %v2955 = vsel %vm2953, %v2954, %v2946
        %v2956 = vsel %vm2949, %v2952, %v2955
        %v2957 = vsel %vm2947, nan, %v2956
        %v2958 = vand.u32 2147483647, %v792
        %vm2959 = vcmp.le.f32.partialorder %v2958, 0.7853982
        %vm2960 = vcmp.lt.s32.totalorder %v792, 0
        %v2961 = vand.u32 %v792, 2139095040
        %v2962 = vshrl.u32 %v2961, 23
        %v2963 = vsub.s32 %v2962, 127
        %v2964 = vand.u32 2147483647, %v792
        %v2965 = vand.u32 %v2964, 8388607
        %v2966 = vor.u32 %v2965, 8388608
        %v2967 = vsub.s32 0, %v2966
        %v2968 = vadd.s32 %v2963, 1
        %vm2969 = vcmp.gt.s32.totalorder %v2968, 0
        %v2970 = vsel %vm2969, %v2968, 0
        %v2971 = vshrl.u32 %v2970, 5
        %v2972 = vand.u32 %v2970, 31
        %v2973 = vsub.s32 32, %v2972
        %v2974 = vshrl.u32 683565275, %v2973
        %v2975 = vshll.u32 683565275, %v2972
        %v2976 = vshrl.u32 2475754826, %v2973
        %v2977 = vor.u32 %v2975, %v2976
        %v2978 = vshll.u32 2475754826, %v2972
        %v2979 = vshrl.u32 2131351028, %v2973
        %v2980 = vor.u32 %v2978, %v2979
        %v2981 = vshll.u32 2131351028, %v2972
        %v2982 = vshrl.u32 2102212464, %v2973
        %v2983 = vor.u32 %v2981, %v2982
        %v2984 = vshll.u32 2102212464, %v2972
        %v2985 = vshrl.u32 920167782, %v2973
        %v2986 = vor.u32 %v2984, %v2985
        %v2987 = vshll.u32 920167782, %v2972
        %v2988 = vshrl.u32 1326507024, %v2973
        %v2989 = vor.u32 %v2987, %v2988
        %vm2990 = vcmp.lt.s32.totalorder %v2971, 1
        %vm2991 = vcmp.lt.s32.totalorder %v2971, 2
        %vm2992 = vcmp.lt.s32.totalorder %v2971, 3
        %vm2993 = vcmp.lt.s32.totalorder %v2971, 4
        %v2994 = vsel %vm2990, %v2974, %v2977
        %v2995 = vsel %vm2993, %v2983, 2102212464
        %v2996 = vsel %vm2992, %v2980, %v2995
        %v2997 = vsel %vm2991, %v2994, %v2996
        %v2998 = vsel %vm2990, %v2977, %v2980
        %v2999 = vsel %vm2993, %v2986, 920167782
        %v3000 = vsel %vm2992, %v2983, %v2999
        %v3001 = vsel %vm2991, %v2998, %v3000
        %v3002 = vsel %vm2990, %v2980, %v2983
        %v3003 = vsel %vm2993, %v2989, 1326507024
        %v3004 = vsel %vm2992, %v2986, %v3003
        %v3005 = vsel %vm2991, %v3002, %v3004
        %v3006 = vshll.u32 %v2966, 8
        %v3007 = vand.u32 %v3006, 65535
        %v3008 = vshrl.u32 %v3006, 16
        %v3009 = vand.u32 %v3005, 65535
        %v3010 = vshrl.u32 %v3005, 16
        %v3011 = vmul.u32 %v3007, %v3009
        %v3012 = vmul.u32 %v3007, %v3010
        %v3013 = vmul.u32 %v3008, %v3009
        %v3014 = vmul.u32 %v3008, %v3010
        %v3015 = vshll.u32 %v3012, 16
        %v3016 = vshrl.u32 %v3012, 16
        %v3017 = vshll.u32 %v3013, 16
        %v3018 = vshrl.u32 %v3013, 16
        %vm3019 = vc.u32 %v3011, %v3015
        %v3020 = vsel %vm3019, 1, 0
        %v3021 = vadd.s32 %v3011, %v3015
        %v3022 = vadd.s32 %v3014, %v3020
        %vm3023 = vc.u32 %v3021, %v3017
        %v3024 = vsel %vm3023, 1, 0
        %v3025 = vadd.s32 %v3021, %v3017
        %v3026 = vadd.s32 %v3022, %v3024
        %v3027 = vadd.s32 %v3026, %v3016
        %v3028 = vadd.s32 %v3027, %v3018
        %v3029 = vand.u32 %v3006, 65535
        %v3030 = vshrl.u32 %v3006, 16
        %v3031 = vand.u32 %v3001, 65535
        %v3032 = vshrl.u32 %v3001, 16
        %v3033 = vmul.u32 %v3029, %v3031
        %v3034 = vmul.u32 %v3029, %v3032
        %v3035 = vmul.u32 %v3030, %v3031
        %v3036 = vmul.u32 %v3030, %v3032
        %v3037 = vshll.u32 %v3034, 16
        %v3038 = vshrl.u32 %v3034, 16
        %v3039 = vshll.u32 %v3035, 16
        %v3040 = vshrl.u32 %v3035, 16
        %vm3041 = vc.u32 %v3033, %v3037
        %v3042 = vsel %vm3041, 1, 0
        %v3043 = vadd.s32 %v3033, %v3037
        %v3044 = vadd.s32 %v3036, %v3042
        %vm3045 = vc.u32 %v3043, %v3039
        %v3046 = vsel %vm3045, 1, 0
        %v3047 = vadd.s32 %v3043, %v3039
        %v3048 = vadd.s32 %v3044, %v3046
        %v3049 = vadd.s32 %v3048, %v3038
        %v3050 = vadd.s32 %v3049, %v3040
        %v3051 = vmul.u32 %v3006, %v2997
        %v3052 = vadd.s32 %v3028, %v3047
        %vm3053 = vc.u32 %v3028, %v3047
        %v3054 = vadd.s32 %v3050, 1
        %v3055 = vsel %vm3053, %v3054, %v3050
        %v3056 = vadd.s32 %v3051, %v3055
        %v3057 = vadd.s32 %v3056, 536870912
        %v3058 = vshrl.u32 %v3057, 30
        %v3059 = vshll.u32 %v3058, 30
        %v3060 = vsub.s32 %v3056, %v3059
        %vm3061 = vcmp.lt.s32.totalorder %v3060, 0
        %v3062 = vsub.s32 0, %v3060
        %v3063 = vsel %vm3061, %v3062, %v3060
        %v3064 = vclz %v3063
        %v3065 = vsub.s32 %v3064, 2
        %vm3066 = vcmp.gt.s32.totalorder 0, %v3065
        %v3067 = vsel %vm3066, 0, %v3065
        %v3068 = vsub.s32 32, %v3067
        %v3069 = vshll.u32 %v3060, %v3067
        %v3070 = vshrl.u32 %v3052, %v3068
        %v3071 = vor.u32 %v3069, %v3070
        %v3072 = vsub.s32 4294967266, %v3067
        %v3073 = vadd.s32 %v3072, 127
        %v3074 = vshll.u32 %v3073, 23
        %v3075 = vor.u32 4788187, %v3074
        %v3076 = vand.u32 2147483647, %v3075
        %v3078 = vcvt.s32.f32 %v3071
        %v3079 = vmul.f32 %v3078, %v3076
        %v3080 = vxor.u32 %v3079, 2147483648
        %v3081 = vsel %vm2960, %v3080, %v3079
        %v3082 = vsub.s32 4, %v3058
        %v3083 = vsel %vm2960, %v3082, %v3058
        %v3084 = vsel %vm2959, %v792, %v3081
        %v3085 = vsel %vm2959, 0, %v3083
        %v3086 = vmul.f32 %v3084, %v3084
        %v3087 = vmul.f32 %v3086, -0.001358992
        %v3088 = vadd.f32 %v3087, 0.041655596
        %v3089 = vmul.f32 %v3086, %v3088
        %v3090 = vadd.f32 %v3089, -0.4999988
        %v3091 = vmul.f32 %v3086, %v3090
        %v3092 = vadd.f32 1.0, %v3091
        %v3093 = vmul.f32 %v3084, %v3084
        %v3094 = vmul.f32 %v3093, -0.00019511016
        %v3095 = vadd.f32 %v3094, 0.008332121
        %v3096 = vmul.f32 %v3093, %v3095
        %v3097 = vadd.f32 %v3096, -0.16666654
        %v3098 = vmul.f32 %v3093, %v3097
        %v3099 = vadd.f32 %v3098, 1.0
        %v3100 = vmul.f32 %v3099, %v3084
        %vm3101 = vweird.f32 %v792
        %v3102 = vand.u32 %v3085, 3
        %vm3103 = vcmp.lt.s32.totalorder %v3102, 2
        %vm3104 = vcmp.eq.s32.totalorder %v3102, 0
        %v3105 = vxor.u32 %v3100, 2147483648
        %v3106 = vsel %vm3104, %v3092, %v3105
        %vm3107 = vcmp.eq.s32.totalorder %v3102, 2
        %v3108 = vxor.u32 %v3092, 2147483648
        %v3109 = vsel %vm3107, %v3108, %v3100
        %v3110 = vsel %vm3103, %v3106, %v3109
        %v3111 = vsel %vm3101, nan, %v3110
        %v3112 = vand.u32 2147483647, %v793
        %vm3113 = vcmp.le.f32.partialorder %v3112, 0.7853982
        %vm3114 = vcmp.lt.s32.totalorder %v793, 0
        %v3115 = vand.u32 %v793, 2139095040
        %v3116 = vshrl.u32 %v3115, 23
        %v3117 = vsub.s32 %v3116, 127
        %v3118 = vand.u32 2147483647, %v793
        %v3119 = vand.u32 %v3118, 8388607
        %v3120 = vor.u32 %v3119, 8388608
        %v3121 = vsub.s32 0, %v3120
        %v3122 = vadd.s32 %v3117, 1
        %vm3123 = vcmp.gt.s32.totalorder %v3122, 0
        %v3124 = vsel %vm3123, %v3122, 0
        %v3125 = vshrl.u32 %v3124, 5
        %v3126 = vand.u32 %v3124, 31
        %v3127 = vsub.s32 32, %v3126
        %v3128 = vshrl.u32 683565275, %v3127
        %v3129 = vshll.u32 683565275, %v3126
        %v3130 = vshrl.u32 2475754826, %v3127
        %v3131 = vor.u32 %v3129, %v3130
        %v3132 = vshll.u32 2475754826, %v3126
        %v3133 = vshrl.u32 2131351028, %v3127
        %v3134 = vor.u32 %v3132, %v3133
        %v3135 = vshll.u32 2131351028, %v3126
        %v3136 = vshrl.u32 2102212464, %v3127
        %v3137 = vor.u32 %v3135, %v3136
        %v3138 = vshll.u32 2102212464, %v3126
        %v3139 = vshrl.u32 920167782, %v3127
        %v3140 = vor.u32 %v3138, %v3139
        %v3141 = vshll.u32 920167782, %v3126
        %v3142 = vshrl.u32 1326507024, %v3127
        %v3143 = vor.u32 %v3141, %v3142
        %vm3144 = vcmp.lt.s32.totalorder %v3125, 1
        %vm3145 = vcmp.lt.s32.totalorder %v3125, 2
        %vm3146 = vcmp.lt.s32.totalorder %v3125, 3
        %vm3147 = vcmp.lt.s32.totalorder %v3125, 4
        %v3148 = vsel %vm3144, %v3128, %v3131
        %v3149 = vsel %vm3147, %v3137, 2102212464
        %v3150 = vsel %vm3146, %v3134, %v3149
        %v3151 = vsel %vm3145, %v3148, %v3150
        %v3152 = vsel %vm3144, %v3131, %v3134
        %v3153 = vsel %vm3147, %v3140, 920167782
        %v3154 = vsel %vm3146, %v3137, %v3153
        %v3155 = vsel %vm3145, %v3152, %v3154
        %v3156 = vsel %vm3144, %v3134, %v3137
        %v3157 = vsel %vm3147, %v3143, 1326507024
        %v3158 = vsel %vm3146, %v3140, %v3157
        %v3159 = vsel %vm3145, %v3156, %v3158
        %v3160 = vshll.u32 %v3120, 8
        %v3161 = vand.u32 %v3160, 65535
        %v3162 = vshrl.u32 %v3160, 16
        %v3163 = vand.u32 %v3159, 65535
        %v3164 = vshrl.u32 %v3159, 16
        %v3165 = vmul.u32 %v3161, %v3163
        %v3166 = vmul.u32 %v3161, %v3164
        %v3167 = vmul.u32 %v3162, %v3163
        %v3168 = vmul.u32 %v3162, %v3164
        %v3169 = vshll.u32 %v3166, 16
        %v3170 = vshrl.u32 %v3166, 16
        %v3171 = vshll.u32 %v3167, 16
        %v3172 = vshrl.u32 %v3167, 16
        %vm3173 = vc.u32 %v3165, %v3169
        %v3174 = vsel %vm3173, 1, 0
        %v3175 = vadd.s32 %v3165, %v3169
        %v3176 = vadd.s32 %v3168, %v3174
        %vm3177 = vc.u32 %v3175, %v3171
        %v3178 = vsel %vm3177, 1, 0
        %v3179 = vadd.s32 %v3175, %v3171
        %v3180 = vadd.s32 %v3176, %v3178
        %v3181 = vadd.s32 %v3180, %v3170
        %v3182 = vadd.s32 %v3181, %v3172
        %v3183 = vand.u32 %v3160, 65535
        %v3184 = vshrl.u32 %v3160, 16
        %v3185 = vand.u32 %v3155, 65535
        %v3186 = vshrl.u32 %v3155, 16
        %v3187 = vmul.u32 %v3183, %v3185
        %v3188 = vmul.u32 %v3183, %v3186
        %v3189 = vmul.u32 %v3184, %v3185
        %v3190 = vmul.u32 %v3184, %v3186
        %v3191 = vshll.u32 %v3188, 16
        %v3192 = vshrl.u32 %v3188, 16
        %v3193 = vshll.u32 %v3189, 16
        %v3194 = vshrl.u32 %v3189, 16
        %vm3195 = vc.u32 %v3187, %v3191
        %v3196 = vsel %vm3195, 1, 0
        %v3197 = vadd.s32 %v3187, %v3191
        %v3198 = vadd.s32 %v3190, %v3196
        %vm3199 = vc.u32 %v3197, %v3193
        %v3200 = vsel %vm3199, 1, 0
        %v3201 = vadd.s32 %v3197, %v3193
        %v3202 = vadd.s32 %v3198, %v3200
        %v3203 = vadd.s32 %v3202, %v3192
        %v3204 = vadd.s32 %v3203, %v3194
        %v3205 = vmul.u32 %v3160, %v3151
        %v3206 = vadd.s32 %v3182, %v3201
        %vm3207 = vc.u32 %v3182, %v3201
        %v3208 = vadd.s32 %v3204, 1
        %v3209 = vsel %vm3207, %v3208, %v3204
        %v3210 = vadd.s32 %v3205, %v3209
        %v3211 = vadd.s32 %v3210, 536870912
        %v3212 = vshrl.u32 %v3211, 30
        %v3213 = vshll.u32 %v3212, 30
        %v3214 = vsub.s32 %v3210, %v3213
        %vm3215 = vcmp.lt.s32.totalorder %v3214, 0
        %v3216 = vsub.s32 0, %v3214
        %v3217 = vsel %vm3215, %v3216, %v3214
        %v3218 = vclz %v3217
        %v3219 = vsub.s32 %v3218, 2
        %vm3220 = vcmp.gt.s32.totalorder 0, %v3219
        %v3221 = vsel %vm3220, 0, %v3219
        %v3222 = vsub.s32 32, %v3221
        %v3223 = vshll.u32 %v3214, %v3221
        %v3224 = vshrl.u32 %v3206, %v3222
        %v3225 = vor.u32 %v3223, %v3224
        %v3226 = vsub.s32 4294967266, %v3221
        %v3227 = vadd.s32 %v3226, 127
        %v3228 = vshll.u32 %v3227, 23
        %v3229 = vor.u32 4788187, %v3228
        %v3230 = vand.u32 2147483647, %v3229
        %v3232 = vcvt.s32.f32 %v3225
        %v3233 = vmul.f32 %v3232, %v3230
        %v3234 = vxor.u32 %v3233, 2147483648
        %v3235 = vsel %vm3114, %v3234, %v3233
        %v3236 = vsub.s32 4, %v3212
        %v3237 = vsel %vm3114, %v3236, %v3212
        %v3238 = vsel %vm3113, %v793, %v3235
        %v3239 = vsel %vm3113, 0, %v3237
        %v3240 = vmul.f32 %v3238, %v3238
        %v3241 = vmul.f32 %v3240, -0.001358992
        %v3242 = vadd.f32 %v3241, 0.041655596
        %v3243 = vmul.f32 %v3240, %v3242
        %v3244 = vadd.f32 %v3243, -0.4999988
        %v3245 = vmul.f32 %v3240, %v3244
        %v3246 = vadd.f32 1.0, %v3245
        %v3247 = vmul.f32 %v3238, %v3238
        %v3248 = vmul.f32 %v3247, -0.00019511016
        %v3249 = vadd.f32 %v3248, 0.008332121
        %v3250 = vmul.f32 %v3247, %v3249
        %v3251 = vadd.f32 %v3250, -0.16666654
        %v3252 = vmul.f32 %v3247, %v3251
        %v3253 = vadd.f32 %v3252, 1.0
        %v3254 = vmul.f32 %v3253, %v3238
        %vm3255 = vweird.f32 %v793
        %v3256 = vand.u32 %v3239, 3
        %vm3257 = vcmp.lt.s32.totalorder %v3256, 2
        %vm3258 = vcmp.eq.s32.totalorder %v3256, 0
        %v3259 = vxor.u32 %v3254, 2147483648
        %v3260 = vsel %vm3258, %v3246, %v3259
        %vm3261 = vcmp.eq.s32.totalorder %v3256, 2
        %v3262 = vxor.u32 %v3246, 2147483648
        %v3263 = vsel %vm3261, %v3262, %v3254
        %v3264 = vsel %vm3257, %v3260, %v3263
        %v3265 = vsel %vm3255, nan, %v3264
        %v3266 = vand.u32 2147483647, %v794
        %vm3267 = vcmp.le.f32.partialorder %v3266, 0.7853982
        %vm3268 = vcmp.lt.s32.totalorder %v794, 0
        %v3269 = vand.u32 %v794, 2139095040
        %v3270 = vshrl.u32 %v3269, 23
        %v3271 = vsub.s32 %v3270, 127
        %v3272 = vand.u32 2147483647, %v794
        %v3273 = vand.u32 %v3272, 8388607
        %v3274 = vor.u32 %v3273, 8388608
        %v3275 = vsub.s32 0, %v3274
        %v3276 = vadd.s32 %v3271, 1
        %vm3277 = vcmp.gt.s32.totalorder %v3276, 0
        %v3278 = vsel %vm3277, %v3276, 0
        %v3279 = vshrl.u32 %v3278, 5
        %v3280 = vand.u32 %v3278, 31
        %v3281 = vsub.s32 32, %v3280
        %v3282 = vshrl.u32 683565275, %v3281
        %v3283 = vshll.u32 683565275, %v3280
        %v3284 = vshrl.u32 2475754826, %v3281
        %v3285 = vor.u32 %v3283, %v3284
        %v3286 = vshll.u32 2475754826, %v3280
        %v3287 = vshrl.u32 2131351028, %v3281
        %v3288 = vor.u32 %v3286, %v3287
        %v3289 = vshll.u32 2131351028, %v3280
        %v3290 = vshrl.u32 2102212464, %v3281
        %v3291 = vor.u32 %v3289, %v3290
        %v3292 = vshll.u32 2102212464, %v3280
        %v3293 = vshrl.u32 920167782, %v3281
        %v3294 = vor.u32 %v3292, %v3293
        %v3295 = vshll.u32 920167782, %v3280
        %v3296 = vshrl.u32 1326507024, %v3281
        %v3297 = vor.u32 %v3295, %v3296
        %vm3298 = vcmp.lt.s32.totalorder %v3279, 1
        %vm3299 = vcmp.lt.s32.totalorder %v3279, 2
        %vm3300 = vcmp.lt.s32.totalorder %v3279, 3
        %vm3301 = vcmp.lt.s32.totalorder %v3279, 4
        %v3302 = vsel %vm3298, %v3282, %v3285
        %v3303 = vsel %vm3301, %v3291, 2102212464
        %v3304 = vsel %vm3300, %v3288, %v3303
        %v3305 = vsel %vm3299, %v3302, %v3304
        %v3306 = vsel %vm3298, %v3285, %v3288
        %v3307 = vsel %vm3301, %v3294, 920167782
        %v3308 = vsel %vm3300, %v3291, %v3307
        %v3309 = vsel %vm3299, %v3306, %v3308
        %v3310 = vsel %vm3298, %v3288, %v3291
        %v3311 = vsel %vm3301, %v3297, 1326507024
        %v3312 = vsel %vm3300, %v3294, %v3311
        %v3313 = vsel %vm3299, %v3310, %v3312
        %v3314 = vshll.u32 %v3274, 8
        %v3315 = vand.u32 %v3314, 65535
        %v3316 = vshrl.u32 %v3314, 16
        %v3317 = vand.u32 %v3313, 65535
        %v3318 = vshrl.u32 %v3313, 16
        %v3319 = vmul.u32 %v3315, %v3317
        %v3320 = vmul.u32 %v3315, %v3318
        %v3321 = vmul.u32 %v3316, %v3317
        %v3322 = vmul.u32 %v3316, %v3318
        %v3323 = vshll.u32 %v3320, 16
        %v3324 = vshrl.u32 %v3320, 16
        %v3325 = vshll.u32 %v3321, 16
        %v3326 = vshrl.u32 %v3321, 16
        %vm3327 = vc.u32 %v3319, %v3323
        %v3328 = vsel %vm3327, 1, 0
        %v3329 = vadd.s32 %v3319, %v3323
        %v3330 = vadd.s32 %v3322, %v3328
        %vm3331 = vc.u32 %v3329, %v3325
        %v3332 = vsel %vm3331, 1, 0
        %v3333 = vadd.s32 %v3329, %v3325
        %v3334 = vadd.s32 %v3330, %v3332
        %v3335 = vadd.s32 %v3334, %v3324
        %v3336 = vadd.s32 %v3335, %v3326
        %v3337 = vand.u32 %v3314, 65535
        %v3338 = vshrl.u32 %v3314, 16
        %v3339 = vand.u32 %v3309, 65535
        %v3340 = vshrl.u32 %v3309, 16
        %v3341 = vmul.u32 %v3337, %v3339
        %v3342 = vmul.u32 %v3337, %v3340
        %v3343 = vmul.u32 %v3338, %v3339
        %v3344 = vmul.u32 %v3338, %v3340
        %v3345 = vshll.u32 %v3342, 16
        %v3346 = vshrl.u32 %v3342, 16
        %v3347 = vshll.u32 %v3343, 16
        %v3348 = vshrl.u32 %v3343, 16
        %vm3349 = vc.u32 %v3341, %v3345
        %v3350 = vsel %vm3349, 1, 0
        %v3351 = vadd.s32 %v3341, %v3345
        %v3352 = vadd.s32 %v3344, %v3350
        %vm3353 = vc.u32 %v3351, %v3347
        %v3354 = vsel %vm3353, 1, 0
        %v3355 = vadd.s32 %v3351, %v3347
        %v3356 = vadd.s32 %v3352, %v3354
        %v3357 = vadd.s32 %v3356, %v3346
        %v3358 = vadd.s32 %v3357, %v3348
        %v3359 = vmul.u32 %v3314, %v3305
        %v3360 = vadd.s32 %v3336, %v3355
        %vm3361 = vc.u32 %v3336, %v3355
        %v3362 = vadd.s32 %v3358, 1
        %v3363 = vsel %vm3361, %v3362, %v3358
        %v3364 = vadd.s32 %v3359, %v3363
        %v3365 = vadd.s32 %v3364, 536870912
        %v3366 = vshrl.u32 %v3365, 30
        %v3367 = vshll.u32 %v3366, 30
        %v3368 = vsub.s32 %v3364, %v3367
        %vm3369 = vcmp.lt.s32.totalorder %v3368, 0
        %v3370 = vsub.s32 0, %v3368
        %v3371 = vsel %vm3369, %v3370, %v3368
        %v3372 = vclz %v3371
        %v3373 = vsub.s32 %v3372, 2
        %vm3374 = vcmp.gt.s32.totalorder 0, %v3373
        %v3375 = vsel %vm3374, 0, %v3373
        %v3376 = vsub.s32 32, %v3375
        %v3377 = vshll.u32 %v3368, %v3375
        %v3378 = vshrl.u32 %v3360, %v3376
        %v3379 = vor.u32 %v3377, %v3378
        %v3380 = vsub.s32 4294967266, %v3375
        %v3381 = vadd.s32 %v3380, 127
        %v3382 = vshll.u32 %v3381, 23
        %v3383 = vor.u32 4788187, %v3382
        %v3384 = vand.u32 2147483647, %v3383
        %v3386 = vcvt.s32.f32 %v3379
        %v3387 = vmul.f32 %v3386, %v3384
        %v3388 = vxor.u32 %v3387, 2147483648
        %v3389 = vsel %vm3268, %v3388, %v3387
        %v3390 = vsub.s32 4, %v3366
        %v3391 = vsel %vm3268, %v3390, %v3366
        %v3392 = vsel %vm3267, %v794, %v3389
        %v3393 = vsel %vm3267, 0, %v3391
        %v3394 = vmul.f32 %v3392, %v3392
        %v3395 = vmul.f32 %v3394, -0.001358992
        %v3396 = vadd.f32 %v3395, 0.041655596
        %v3397 = vmul.f32 %v3394, %v3396
        %v3398 = vadd.f32 %v3397, -0.4999988
        %v3399 = vmul.f32 %v3394, %v3398
        %v3400 = vadd.f32 1.0, %v3399
        %v3401 = vmul.f32 %v3392, %v3392
        %v3402 = vmul.f32 %v3401, -0.00019511016
        %v3403 = vadd.f32 %v3402, 0.008332121
        %v3404 = vmul.f32 %v3401, %v3403
        %v3405 = vadd.f32 %v3404, -0.16666654
        %v3406 = vmul.f32 %v3401, %v3405
        %v3407 = vadd.f32 %v3406, 1.0
        %v3408 = vmul.f32 %v3407, %v3392
        %vm3409 = vweird.f32 %v794
        %v3410 = vand.u32 %v3393, 3
        %vm3411 = vcmp.lt.s32.totalorder %v3410, 2
        %vm3412 = vcmp.eq.s32.totalorder %v3410, 0
        %v3413 = vxor.u32 %v3408, 2147483648
        %v3414 = vsel %vm3412, %v3400, %v3413
        %vm3415 = vcmp.eq.s32.totalorder %v3410, 2
        %v3416 = vxor.u32 %v3400, 2147483648
        %v3417 = vsel %vm3415, %v3416, %v3408
        %v3418 = vsel %vm3411, %v3414, %v3417
        %v3419 = vsel %vm3409, nan, %v3418
        %v3420 = vand.u32 2147483647, %v795
        %vm3421 = vcmp.le.f32.partialorder %v3420, 0.7853982
        %vm3422 = vcmp.lt.s32.totalorder %v795, 0
        %v3423 = vand.u32 %v795, 2139095040
        %v3424 = vshrl.u32 %v3423, 23
        %v3425 = vsub.s32 %v3424, 127
        %v3426 = vand.u32 2147483647, %v795
        %v3427 = vand.u32 %v3426, 8388607
        %v3428 = vor.u32 %v3427, 8388608
        %v3429 = vsub.s32 0, %v3428
        %v3430 = vadd.s32 %v3425, 1
        %vm3431 = vcmp.gt.s32.totalorder %v3430, 0
        %v3432 = vsel %vm3431, %v3430, 0
        %v3433 = vshrl.u32 %v3432, 5
        %v3434 = vand.u32 %v3432, 31
        %v3435 = vsub.s32 32, %v3434
        %v3436 = vshrl.u32 683565275, %v3435
        %v3437 = vshll.u32 683565275, %v3434
        %v3438 = vshrl.u32 2475754826, %v3435
        %v3439 = vor.u32 %v3437, %v3438
        %v3440 = vshll.u32 2475754826, %v3434
        %v3441 = vshrl.u32 2131351028, %v3435
        %v3442 = vor.u32 %v3440, %v3441
        %v3443 = vshll.u32 2131351028, %v3434
        %v3444 = vshrl.u32 2102212464, %v3435
        %v3445 = vor.u32 %v3443, %v3444
        %v3446 = vshll.u32 2102212464, %v3434
        %v3447 = vshrl.u32 920167782, %v3435
        %v3448 = vor.u32 %v3446, %v3447
        %v3449 = vshll.u32 920167782, %v3434
        %v3450 = vshrl.u32 1326507024, %v3435
        %v3451 = vor.u32 %v3449, %v3450
        %vm3452 = vcmp.lt.s32.totalorder %v3433, 1
        %vm3453 = vcmp.lt.s32.totalorder %v3433, 2
        %vm3454 = vcmp.lt.s32.totalorder %v3433, 3
        %vm3455 = vcmp.lt.s32.totalorder %v3433, 4
        %v3456 = vsel %vm3452, %v3436, %v3439
        %v3457 = vsel %vm3455, %v3445, 2102212464
        %v3458 = vsel %vm3454, %v3442, %v3457
        %v3459 = vsel %vm3453, %v3456, %v3458
        %v3460 = vsel %vm3452, %v3439, %v3442
        %v3461 = vsel %vm3455, %v3448, 920167782
        %v3462 = vsel %vm3454, %v3445, %v3461
        %v3463 = vsel %vm3453, %v3460, %v3462
        %v3464 = vsel %vm3452, %v3442, %v3445
        %v3465 = vsel %vm3455, %v3451, 1326507024
        %v3466 = vsel %vm3454, %v3448, %v3465
        %v3467 = vsel %vm3453, %v3464, %v3466
        %v3468 = vshll.u32 %v3428, 8
        %v3469 = vand.u32 %v3468, 65535
        %v3470 = vshrl.u32 %v3468, 16
        %v3471 = vand.u32 %v3467, 65535
        %v3472 = vshrl.u32 %v3467, 16
        %v3473 = vmul.u32 %v3469, %v3471
        %v3474 = vmul.u32 %v3469, %v3472
        %v3475 = vmul.u32 %v3470, %v3471
        %v3476 = vmul.u32 %v3470, %v3472
        %v3477 = vshll.u32 %v3474, 16
        %v3478 = vshrl.u32 %v3474, 16
        %v3479 = vshll.u32 %v3475, 16
        %v3480 = vshrl.u32 %v3475, 16
        %vm3481 = vc.u32 %v3473, %v3477
        %v3482 = vsel %vm3481, 1, 0
        %v3483 = vadd.s32 %v3473, %v3477
        %v3484 = vadd.s32 %v3476, %v3482
        %vm3485 = vc.u32 %v3483, %v3479
        %v3486 = vsel %vm3485, 1, 0
        %v3487 = vadd.s32 %v3483, %v3479
        %v3488 = vadd.s32 %v3484, %v3486
        %v3489 = vadd.s32 %v3488, %v3478
        %v3490 = vadd.s32 %v3489, %v3480
        %v3491 = vand.u32 %v3468, 65535
        %v3492 = vshrl.u32 %v3468, 16
        %v3493 = vand.u32 %v3463, 65535
        %v3494 = vshrl.u32 %v3463, 16
        %v3495 = vmul.u32 %v3491, %v3493
        %v3496 = vmul.u32 %v3491, %v3494
        %v3497 = vmul.u32 %v3492, %v3493
        %v3498 = vmul.u32 %v3492, %v3494
        %v3499 = vshll.u32 %v3496, 16
        %v3500 = vshrl.u32 %v3496, 16
        %v3501 = vshll.u32 %v3497, 16
        %v3502 = vshrl.u32 %v3497, 16
        %vm3503 = vc.u32 %v3495, %v3499
        %v3504 = vsel %vm3503, 1, 0
        %v3505 = vadd.s32 %v3495, %v3499
        %v3506 = vadd.s32 %v3498, %v3504
        %vm3507 = vc.u32 %v3505, %v3501
        %v3508 = vsel %vm3507, 1, 0
        %v3509 = vadd.s32 %v3505, %v3501
        %v3510 = vadd.s32 %v3506, %v3508
        %v3511 = vadd.s32 %v3510, %v3500
        %v3512 = vadd.s32 %v3511, %v3502
        %v3513 = vmul.u32 %v3468, %v3459
        %v3514 = vadd.s32 %v3490, %v3509
        %vm3515 = vc.u32 %v3490, %v3509
        %v3516 = vadd.s32 %v3512, 1
        %v3517 = vsel %vm3515, %v3516, %v3512
        %v3518 = vadd.s32 %v3513, %v3517
        %v3519 = vadd.s32 %v3518, 536870912
        %v3520 = vshrl.u32 %v3519, 30
        %v3521 = vshll.u32 %v3520, 30
        %v3522 = vsub.s32 %v3518, %v3521
        %vm3523 = vcmp.lt.s32.totalorder %v3522, 0
        %v3524 = vsub.s32 0, %v3522
        %v3525 = vsel %vm3523, %v3524, %v3522
        %v3526 = vclz %v3525
        %v3527 = vsub.s32 %v3526, 2
        %vm3528 = vcmp.gt.s32.totalorder 0, %v3527
        %v3529 = vsel %vm3528, 0, %v3527
        %v3530 = vsub.s32 32, %v3529
        %v3531 = vshll.u32 %v3522, %v3529
        %v3532 = vshrl.u32 %v3514, %v3530
        %v3533 = vor.u32 %v3531, %v3532
        %v3534 = vsub.s32 4294967266, %v3529
        %v3535 = vadd.s32 %v3534, 127
        %v3536 = vshll.u32 %v3535, 23
        %v3537 = vor.u32 4788187, %v3536
        %v3538 = vand.u32 2147483647, %v3537
        %v3540 = vcvt.s32.f32 %v3533
        %v3541 = vmul.f32 %v3540, %v3538
        %v3542 = vxor.u32 %v3541, 2147483648
        %v3543 = vsel %vm3422, %v3542, %v3541
        %v3544 = vsub.s32 4, %v3520
        %v3545 = vsel %vm3422, %v3544, %v3520
        %v3546 = vsel %vm3421, %v795, %v3543
        %v3547 = vsel %vm3421, 0, %v3545
        %v3548 = vmul.f32 %v3546, %v3546
        %v3549 = vmul.f32 %v3548, -0.001358992
        %v3550 = vadd.f32 %v3549, 0.041655596
        %v3551 = vmul.f32 %v3548, %v3550
        %v3552 = vadd.f32 %v3551, -0.4999988
        %v3553 = vmul.f32 %v3548, %v3552
        %v3554 = vadd.f32 1.0, %v3553
        %v3555 = vmul.f32 %v3546, %v3546
        %v3556 = vmul.f32 %v3555, -0.00019511016
        %v3557 = vadd.f32 %v3556, 0.008332121
        %v3558 = vmul.f32 %v3555, %v3557
        %v3559 = vadd.f32 %v3558, -0.16666654
        %v3560 = vmul.f32 %v3555, %v3559
        %v3561 = vadd.f32 %v3560, 1.0
        %v3562 = vmul.f32 %v3561, %v3546
        %vm3563 = vweird.f32 %v795
        %v3564 = vand.u32 %v3547, 3
        %vm3565 = vcmp.lt.s32.totalorder %v3564, 2
        %vm3566 = vcmp.eq.s32.totalorder %v3564, 0
        %v3567 = vxor.u32 %v3562, 2147483648
        %v3568 = vsel %vm3566, %v3554, %v3567
        %vm3569 = vcmp.eq.s32.totalorder %v3564, 2
        %v3570 = vxor.u32 %v3554, 2147483648
        %v3571 = vsel %vm3569, %v3570, %v3562
        %v3572 = vsel %vm3565, %v3568, %v3571
        %v3573 = vsel %vm3563, nan, %v3572
        %v3574 = vand.u32 2147483647, %v796
        %vm3575 = vcmp.le.f32.partialorder %v3574, 0.7853982
        %vm3576 = vcmp.lt.s32.totalorder %v796, 0
        %v3577 = vand.u32 %v796, 2139095040
        %v3578 = vshrl.u32 %v3577, 23
        %v3579 = vsub.s32 %v3578, 127
        %v3580 = vand.u32 2147483647, %v796
        %v3581 = vand.u32 %v3580, 8388607
        %v3582 = vor.u32 %v3581, 8388608
        %v3583 = vsub.s32 0, %v3582
        %v3584 = vadd.s32 %v3579, 1
        %vm3585 = vcmp.gt.s32.totalorder %v3584, 0
        %v3586 = vsel %vm3585, %v3584, 0
        %v3587 = vshrl.u32 %v3586, 5
        %v3588 = vand.u32 %v3586, 31
        %v3589 = vsub.s32 32, %v3588
        %v3590 = vshrl.u32 683565275, %v3589
        %v3591 = vshll.u32 683565275, %v3588
        %v3592 = vshrl.u32 2475754826, %v3589
        %v3593 = vor.u32 %v3591, %v3592
        %v3594 = vshll.u32 2475754826, %v3588
        %v3595 = vshrl.u32 2131351028, %v3589
        %v3596 = vor.u32 %v3594, %v3595
        %v3597 = vshll.u32 2131351028, %v3588
        %v3598 = vshrl.u32 2102212464, %v3589
        %v3599 = vor.u32 %v3597, %v3598
        %v3600 = vshll.u32 2102212464, %v3588
        %v3601 = vshrl.u32 920167782, %v3589
        %v3602 = vor.u32 %v3600, %v3601
        %v3603 = vshll.u32 920167782, %v3588
        %v3604 = vshrl.u32 1326507024, %v3589
        %v3605 = vor.u32 %v3603, %v3604
        %vm3606 = vcmp.lt.s32.totalorder %v3587, 1
        %vm3607 = vcmp.lt.s32.totalorder %v3587, 2
        %vm3608 = vcmp.lt.s32.totalorder %v3587, 3
        %vm3609 = vcmp.lt.s32.totalorder %v3587, 4
        %v3610 = vsel %vm3606, %v3590, %v3593
        %v3611 = vsel %vm3609, %v3599, 2102212464
        %v3612 = vsel %vm3608, %v3596, %v3611
        %v3613 = vsel %vm3607, %v3610, %v3612
        %v3614 = vsel %vm3606, %v3593, %v3596
        %v3615 = vsel %vm3609, %v3602, 920167782
        %v3616 = vsel %vm3608, %v3599, %v3615
        %v3617 = vsel %vm3607, %v3614, %v3616
        %v3618 = vsel %vm3606, %v3596, %v3599
        %v3619 = vsel %vm3609, %v3605, 1326507024
        %v3620 = vsel %vm3608, %v3602, %v3619
        %v3621 = vsel %vm3607, %v3618, %v3620
        %v3622 = vshll.u32 %v3582, 8
        %v3623 = vand.u32 %v3622, 65535
        %v3624 = vshrl.u32 %v3622, 16
        %v3625 = vand.u32 %v3621, 65535
        %v3626 = vshrl.u32 %v3621, 16
        %v3627 = vmul.u32 %v3623, %v3625
        %v3628 = vmul.u32 %v3623, %v3626
        %v3629 = vmul.u32 %v3624, %v3625
        %v3630 = vmul.u32 %v3624, %v3626
        %v3631 = vshll.u32 %v3628, 16
        %v3632 = vshrl.u32 %v3628, 16
        %v3633 = vshll.u32 %v3629, 16
        %v3634 = vshrl.u32 %v3629, 16
        %vm3635 = vc.u32 %v3627, %v3631
        %v3636 = vsel %vm3635, 1, 0
        %v3637 = vadd.s32 %v3627, %v3631
        %v3638 = vadd.s32 %v3630, %v3636
        %vm3639 = vc.u32 %v3637, %v3633
        %v3640 = vsel %vm3639, 1, 0
        %v3641 = vadd.s32 %v3637, %v3633
        %v3642 = vadd.s32 %v3638, %v3640
        %v3643 = vadd.s32 %v3642, %v3632
        %v3644 = vadd.s32 %v3643, %v3634
        %v3645 = vand.u32 %v3622, 65535
        %v3646 = vshrl.u32 %v3622, 16
        %v3647 = vand.u32 %v3617, 65535
        %v3648 = vshrl.u32 %v3617, 16
        %v3649 = vmul.u32 %v3645, %v3647
        %v3650 = vmul.u32 %v3645, %v3648
        %v3651 = vmul.u32 %v3646, %v3647
        %v3652 = vmul.u32 %v3646, %v3648
        %v3653 = vshll.u32 %v3650, 16
        %v3654 = vshrl.u32 %v3650, 16
        %v3655 = vshll.u32 %v3651, 16
        %v3656 = vshrl.u32 %v3651, 16
        %vm3657 = vc.u32 %v3649, %v3653
        %v3658 = vsel %vm3657, 1, 0
        %v3659 = vadd.s32 %v3649, %v3653
        %v3660 = vadd.s32 %v3652, %v3658
        %vm3661 = vc.u32 %v3659, %v3655
        %v3662 = vsel %vm3661, 1, 0
        %v3663 = vadd.s32 %v3659, %v3655
        %v3664 = vadd.s32 %v3660, %v3662
        %v3665 = vadd.s32 %v3664, %v3654
        %v3666 = vadd.s32 %v3665, %v3656
        %v3667 = vmul.u32 %v3622, %v3613
        %v3668 = vadd.s32 %v3644, %v3663
        %vm3669 = vc.u32 %v3644, %v3663
        %v3670 = vadd.s32 %v3666, 1
        %v3671 = vsel %vm3669, %v3670, %v3666
        %v3672 = vadd.s32 %v3667, %v3671
        %v3673 = vadd.s32 %v3672, 536870912
        %v3674 = vshrl.u32 %v3673, 30
        %v3675 = vshll.u32 %v3674, 30
        %v3676 = vsub.s32 %v3672, %v3675
        %vm3677 = vcmp.lt.s32.totalorder %v3676, 0
        %v3678 = vsub.s32 0, %v3676
        %v3679 = vsel %vm3677, %v3678, %v3676
        %v3680 = vclz %v3679
        %v3681 = vsub.s32 %v3680, 2
        %vm3682 = vcmp.gt.s32.totalorder 0, %v3681
        %v3683 = vsel %vm3682, 0, %v3681
        %v3684 = vsub.s32 32, %v3683
        %v3685 = vshll.u32 %v3676, %v3683
        %v3686 = vshrl.u32 %v3668, %v3684
        %v3687 = vor.u32 %v3685, %v3686
        %v3688 = vsub.s32 4294967266, %v3683
        %v3689 = vadd.s32 %v3688, 127
        %v3690 = vshll.u32 %v3689, 23
        %v3691 = vor.u32 4788187, %v3690
        %v3692 = vand.u32 2147483647, %v3691
        %v3694 = vcvt.s32.f32 %v3687
        %v3695 = vmul.f32 %v3694, %v3692
        %v3696 = vxor.u32 %v3695, 2147483648
        %v3697 = vsel %vm3576, %v3696, %v3695
        %v3698 = vsub.s32 4, %v3674
        %v3699 = vsel %vm3576, %v3698, %v3674
        %v3700 = vsel %vm3575, %v796, %v3697
        %v3701 = vsel %vm3575, 0, %v3699
        %v3702 = vmul.f32 %v3700, %v3700
        %v3703 = vmul.f32 %v3702, -0.001358992
        %v3704 = vadd.f32 %v3703, 0.041655596
        %v3705 = vmul.f32 %v3702, %v3704
        %v3706 = vadd.f32 %v3705, -0.4999988
        %v3707 = vmul.f32 %v3702, %v3706
        %v3708 = vadd.f32 1.0, %v3707
        %v3709 = vmul.f32 %v3700, %v3700
        %v3710 = vmul.f32 %v3709, -0.00019511016
        %v3711 = vadd.f32 %v3710, 0.008332121
        %v3712 = vmul.f32 %v3709, %v3711
        %v3713 = vadd.f32 %v3712, -0.16666654
        %v3714 = vmul.f32 %v3709, %v3713
        %v3715 = vadd.f32 %v3714, 1.0
        %v3716 = vmul.f32 %v3715, %v3700
        %vm3717 = vweird.f32 %v796
        %v3718 = vand.u32 %v3701, 3
        %vm3719 = vcmp.lt.s32.totalorder %v3718, 2
        %vm3720 = vcmp.eq.s32.totalorder %v3718, 0
        %v3721 = vxor.u32 %v3716, 2147483648
        %v3722 = vsel %vm3720, %v3708, %v3721
        %vm3723 = vcmp.eq.s32.totalorder %v3718, 2
        %v3724 = vxor.u32 %v3708, 2147483648
        %v3725 = vsel %vm3723, %v3724, %v3716
        %v3726 = vsel %vm3719, %v3722, %v3725
        %v3727 = vsel %vm3717, nan, %v3726
        %v3728 = vand.u32 2147483647, %v797
        %vm3729 = vcmp.le.f32.partialorder %v3728, 0.7853982
        %vm3730 = vcmp.lt.s32.totalorder %v797, 0
        %v3731 = vand.u32 %v797, 2139095040
        %v3732 = vshrl.u32 %v3731, 23
        %v3733 = vsub.s32 %v3732, 127
        %v3734 = vand.u32 2147483647, %v797
        %v3735 = vand.u32 %v3734, 8388607
        %v3736 = vor.u32 %v3735, 8388608
        %v3737 = vsub.s32 0, %v3736
        %v3738 = vadd.s32 %v3733, 1
        %vm3739 = vcmp.gt.s32.totalorder %v3738, 0
        %v3740 = vsel %vm3739, %v3738, 0
        %v3741 = vshrl.u32 %v3740, 5
        %v3742 = vand.u32 %v3740, 31
        %v3743 = vsub.s32 32, %v3742
        %v3744 = vshrl.u32 683565275, %v3743
        %v3745 = vshll.u32 683565275, %v3742
        %v3746 = vshrl.u32 2475754826, %v3743
        %v3747 = vor.u32 %v3745, %v3746
        %v3748 = vshll.u32 2475754826, %v3742
        %v3749 = vshrl.u32 2131351028, %v3743
        %v3750 = vor.u32 %v3748, %v3749
        %v3751 = vshll.u32 2131351028, %v3742
        %v3752 = vshrl.u32 2102212464, %v3743
        %v3753 = vor.u32 %v3751, %v3752
        %v3754 = vshll.u32 2102212464, %v3742
        %v3755 = vshrl.u32 920167782, %v3743
        %v3756 = vor.u32 %v3754, %v3755
        %v3757 = vshll.u32 920167782, %v3742
        %v3758 = vshrl.u32 1326507024, %v3743
        %v3759 = vor.u32 %v3757, %v3758
        %vm3760 = vcmp.lt.s32.totalorder %v3741, 1
        %vm3761 = vcmp.lt.s32.totalorder %v3741, 2
        %vm3762 = vcmp.lt.s32.totalorder %v3741, 3
        %vm3763 = vcmp.lt.s32.totalorder %v3741, 4
        %v3764 = vsel %vm3760, %v3744, %v3747
        %v3765 = vsel %vm3763, %v3753, 2102212464
        %v3766 = vsel %vm3762, %v3750, %v3765
        %v3767 = vsel %vm3761, %v3764, %v3766
        %v3768 = vsel %vm3760, %v3747, %v3750
        %v3769 = vsel %vm3763, %v3756, 920167782
        %v3770 = vsel %vm3762, %v3753, %v3769
        %v3771 = vsel %vm3761, %v3768, %v3770
        %v3772 = vsel %vm3760, %v3750, %v3753
        %v3773 = vsel %vm3763, %v3759, 1326507024
        %v3774 = vsel %vm3762, %v3756, %v3773
        %v3775 = vsel %vm3761, %v3772, %v3774
        %v3776 = vshll.u32 %v3736, 8
        %v3777 = vand.u32 %v3776, 65535
        %v3778 = vshrl.u32 %v3776, 16
        %v3779 = vand.u32 %v3775, 65535
        %v3780 = vshrl.u32 %v3775, 16
        %v3781 = vmul.u32 %v3777, %v3779
        %v3782 = vmul.u32 %v3777, %v3780
        %v3783 = vmul.u32 %v3778, %v3779
        %v3784 = vmul.u32 %v3778, %v3780
        %v3785 = vshll.u32 %v3782, 16
        %v3786 = vshrl.u32 %v3782, 16
        %v3787 = vshll.u32 %v3783, 16
        %v3788 = vshrl.u32 %v3783, 16
        %vm3789 = vc.u32 %v3781, %v3785
        %v3790 = vsel %vm3789, 1, 0
        %v3791 = vadd.s32 %v3781, %v3785
        %v3792 = vadd.s32 %v3784, %v3790
        %vm3793 = vc.u32 %v3791, %v3787
        %v3794 = vsel %vm3793, 1, 0
        %v3795 = vadd.s32 %v3791, %v3787
        %v3796 = vadd.s32 %v3792, %v3794
        %v3797 = vadd.s32 %v3796, %v3786
        %v3798 = vadd.s32 %v3797, %v3788
        %v3799 = vand.u32 %v3776, 65535
        %v3800 = vshrl.u32 %v3776, 16
        %v3801 = vand.u32 %v3771, 65535
        %v3802 = vshrl.u32 %v3771, 16
        %v3803 = vmul.u32 %v3799, %v3801
        %v3804 = vmul.u32 %v3799, %v3802
        %v3805 = vmul.u32 %v3800, %v3801
        %v3806 = vmul.u32 %v3800, %v3802
        %v3807 = vshll.u32 %v3804, 16
        %v3808 = vshrl.u32 %v3804, 16
        %v3809 = vshll.u32 %v3805, 16
        %v3810 = vshrl.u32 %v3805, 16
        %vm3811 = vc.u32 %v3803, %v3807
        %v3812 = vsel %vm3811, 1, 0
        %v3813 = vadd.s32 %v3803, %v3807
        %v3814 = vadd.s32 %v3806, %v3812
        %vm3815 = vc.u32 %v3813, %v3809
        %v3816 = vsel %vm3815, 1, 0
        %v3817 = vadd.s32 %v3813, %v3809
        %v3818 = vadd.s32 %v3814, %v3816
        %v3819 = vadd.s32 %v3818, %v3808
        %v3820 = vadd.s32 %v3819, %v3810
        %v3821 = vmul.u32 %v3776, %v3767
        %v3822 = vadd.s32 %v3798, %v3817
        %vm3823 = vc.u32 %v3798, %v3817
        %v3824 = vadd.s32 %v3820, 1
        %v3825 = vsel %vm3823, %v3824, %v3820
        %v3826 = vadd.s32 %v3821, %v3825
        %v3827 = vadd.s32 %v3826, 536870912
        %v3828 = vshrl.u32 %v3827, 30
        %v3829 = vshll.u32 %v3828, 30
        %v3830 = vsub.s32 %v3826, %v3829
        %vm3831 = vcmp.lt.s32.totalorder %v3830, 0
        %v3832 = vsub.s32 0, %v3830
        %v3833 = vsel %vm3831, %v3832, %v3830
        %v3834 = vclz %v3833
        %v3835 = vsub.s32 %v3834, 2
        %vm3836 = vcmp.gt.s32.totalorder 0, %v3835
        %v3837 = vsel %vm3836, 0, %v3835
        %v3838 = vsub.s32 32, %v3837
        %v3839 = vshll.u32 %v3830, %v3837
        %v3840 = vshrl.u32 %v3822, %v3838
        %v3841 = vor.u32 %v3839, %v3840
        %v3842 = vsub.s32 4294967266, %v3837
        %v3843 = vadd.s32 %v3842, 127
        %v3844 = vshll.u32 %v3843, 23
        %v3845 = vor.u32 4788187, %v3844
        %v3846 = vand.u32 2147483647, %v3845
        %v3848 = vcvt.s32.f32 %v3841
        %v3849 = vmul.f32 %v3848, %v3846
        %v3850 = vxor.u32 %v3849, 2147483648
        %v3851 = vsel %vm3730, %v3850, %v3849
        %v3852 = vsub.s32 4, %v3828
        %v3853 = vsel %vm3730, %v3852, %v3828
        %v3854 = vsel %vm3729, %v797, %v3851
        %v3855 = vsel %vm3729, 0, %v3853
        %v3856 = vmul.f32 %v3854, %v3854
        %v3857 = vmul.f32 %v3856, -0.001358992
        %v3858 = vadd.f32 %v3857, 0.041655596
        %v3859 = vmul.f32 %v3856, %v3858
        %v3860 = vadd.f32 %v3859, -0.4999988
        %v3861 = vmul.f32 %v3856, %v3860
        %v3862 = vadd.f32 1.0, %v3861
        %v3863 = vmul.f32 %v3854, %v3854
        %v3864 = vmul.f32 %v3863, -0.00019511016
        %v3865 = vadd.f32 %v3864, 0.008332121
        %v3866 = vmul.f32 %v3863, %v3865
        %v3867 = vadd.f32 %v3866, -0.16666654
        %v3868 = vmul.f32 %v3863, %v3867
        %v3869 = vadd.f32 %v3868, 1.0
        %v3870 = vmul.f32 %v3869, %v3854
        %vm3871 = vweird.f32 %v797
        %v3872 = vand.u32 %v3855, 3
        %vm3873 = vcmp.lt.s32.totalorder %v3872, 2
        %vm3874 = vcmp.eq.s32.totalorder %v3872, 0
        %v3875 = vxor.u32 %v3870, 2147483648
        %v3876 = vsel %vm3874, %v3862, %v3875
        %vm3877 = vcmp.eq.s32.totalorder %v3872, 2
        %v3878 = vxor.u32 %v3862, 2147483648
        %v3879 = vsel %vm3877, %v3878, %v3870
        %v3880 = vsel %vm3873, %v3876, %v3879
        %v3881 = vsel %vm3871, nan, %v3880
        %v3882 = vand.u32 2147483647, %v798
        %vm3883 = vcmp.le.f32.partialorder %v3882, 0.7853982
        %vm3884 = vcmp.lt.s32.totalorder %v798, 0
        %v3885 = vand.u32 %v798, 2139095040
        %v3886 = vshrl.u32 %v3885, 23
        %v3887 = vsub.s32 %v3886, 127
        %v3888 = vand.u32 2147483647, %v798
        %v3889 = vand.u32 %v3888, 8388607
        %v3890 = vor.u32 %v3889, 8388608
        %v3891 = vsub.s32 0, %v3890
        %v3892 = vadd.s32 %v3887, 1
        %vm3893 = vcmp.gt.s32.totalorder %v3892, 0
        %v3894 = vsel %vm3893, %v3892, 0
        %v3895 = vshrl.u32 %v3894, 5
        %v3896 = vand.u32 %v3894, 31
        %v3897 = vsub.s32 32, %v3896
        %v3898 = vshrl.u32 683565275, %v3897
        %v3899 = vshll.u32 683565275, %v3896
        %v3900 = vshrl.u32 2475754826, %v3897
        %v3901 = vor.u32 %v3899, %v3900
        %v3902 = vshll.u32 2475754826, %v3896
        %v3903 = vshrl.u32 2131351028, %v3897
        %v3904 = vor.u32 %v3902, %v3903
        %v3905 = vshll.u32 2131351028, %v3896
        %v3906 = vshrl.u32 2102212464, %v3897
        %v3907 = vor.u32 %v3905, %v3906
        %v3908 = vshll.u32 2102212464, %v3896
        %v3909 = vshrl.u32 920167782, %v3897
        %v3910 = vor.u32 %v3908, %v3909
        %v3911 = vshll.u32 920167782, %v3896
        %v3912 = vshrl.u32 1326507024, %v3897
        %v3913 = vor.u32 %v3911, %v3912
        %vm3914 = vcmp.lt.s32.totalorder %v3895, 1
        %vm3915 = vcmp.lt.s32.totalorder %v3895, 2
        %vm3916 = vcmp.lt.s32.totalorder %v3895, 3
        %vm3917 = vcmp.lt.s32.totalorder %v3895, 4
        %v3918 = vsel %vm3914, %v3898, %v3901
        %v3919 = vsel %vm3917, %v3907, 2102212464
        %v3920 = vsel %vm3916, %v3904, %v3919
        %v3921 = vsel %vm3915, %v3918, %v3920
        %v3922 = vsel %vm3914, %v3901, %v3904
        %v3923 = vsel %vm3917, %v3910, 920167782
        %v3924 = vsel %vm3916, %v3907, %v3923
        %v3925 = vsel %vm3915, %v3922, %v3924
        %v3926 = vsel %vm3914, %v3904, %v3907
        %v3927 = vsel %vm3917, %v3913, 1326507024
        %v3928 = vsel %vm3916, %v3910, %v3927
        %v3929 = vsel %vm3915, %v3926, %v3928
        %v3930 = vshll.u32 %v3890, 8
        %v3931 = vand.u32 %v3930, 65535
        %v3932 = vshrl.u32 %v3930, 16
        %v3933 = vand.u32 %v3929, 65535
        %v3934 = vshrl.u32 %v3929, 16
        %v3935 = vmul.u32 %v3931, %v3933
        %v3936 = vmul.u32 %v3931, %v3934
        %v3937 = vmul.u32 %v3932, %v3933
        %v3938 = vmul.u32 %v3932, %v3934
        %v3939 = vshll.u32 %v3936, 16
        %v3940 = vshrl.u32 %v3936, 16
        %v3941 = vshll.u32 %v3937, 16
        %v3942 = vshrl.u32 %v3937, 16
        %vm3943 = vc.u32 %v3935, %v3939
        %v3944 = vsel %vm3943, 1, 0
        %v3945 = vadd.s32 %v3935, %v3939
        %v3946 = vadd.s32 %v3938, %v3944
        %vm3947 = vc.u32 %v3945, %v3941
        %v3948 = vsel %vm3947, 1, 0
        %v3949 = vadd.s32 %v3945, %v3941
        %v3950 = vadd.s32 %v3946, %v3948
        %v3951 = vadd.s32 %v3950, %v3940
        %v3952 = vadd.s32 %v3951, %v3942
        %v3953 = vand.u32 %v3930, 65535
        %v3954 = vshrl.u32 %v3930, 16
        %v3955 = vand.u32 %v3925, 65535
        %v3956 = vshrl.u32 %v3925, 16
        %v3957 = vmul.u32 %v3953, %v3955
        %v3958 = vmul.u32 %v3953, %v3956
        %v3959 = vmul.u32 %v3954, %v3955
        %v3960 = vmul.u32 %v3954, %v3956
        %v3961 = vshll.u32 %v3958, 16
        %v3962 = vshrl.u32 %v3958, 16
        %v3963 = vshll.u32 %v3959, 16
        %v3964 = vshrl.u32 %v3959, 16
        %vm3965 = vc.u32 %v3957, %v3961
        %v3966 = vsel %vm3965, 1, 0
        %v3967 = vadd.s32 %v3957, %v3961
        %v3968 = vadd.s32 %v3960, %v3966
        %vm3969 = vc.u32 %v3967, %v3963
        %v3970 = vsel %vm3969, 1, 0
        %v3971 = vadd.s32 %v3967, %v3963
        %v3972 = vadd.s32 %v3968, %v3970
        %v3973 = vadd.s32 %v3972, %v3962
        %v3974 = vadd.s32 %v3973, %v3964
        %v3975 = vmul.u32 %v3930, %v3921
        %v3976 = vadd.s32 %v3952, %v3971
        %vm3977 = vc.u32 %v3952, %v3971
        %v3978 = vadd.s32 %v3974, 1
        %v3979 = vsel %vm3977, %v3978, %v3974
        %v3980 = vadd.s32 %v3975, %v3979
        %v3981 = vadd.s32 %v3980, 536870912
        %v3982 = vshrl.u32 %v3981, 30
        %v3983 = vshll.u32 %v3982, 30
        %v3984 = vsub.s32 %v3980, %v3983
        %vm3985 = vcmp.lt.s32.totalorder %v3984, 0
        %v3986 = vsub.s32 0, %v3984
        %v3987 = vsel %vm3985, %v3986, %v3984
        %v3988 = vclz %v3987
        %v3989 = vsub.s32 %v3988, 2
        %vm3990 = vcmp.gt.s32.totalorder 0, %v3989
        %v3991 = vsel %vm3990, 0, %v3989
        %v3992 = vsub.s32 32, %v3991
        %v3993 = vshll.u32 %v3984, %v3991
        %v3994 = vshrl.u32 %v3976, %v3992
        %v3995 = vor.u32 %v3993, %v3994
        %v3996 = vsub.s32 4294967266, %v3991
        %v3997 = vadd.s32 %v3996, 127
        %v3998 = vshll.u32 %v3997, 23
        %v3999 = vor.u32 4788187, %v3998
        %v4000 = vand.u32 2147483647, %v3999
        %v4002 = vcvt.s32.f32 %v3995
        %v4003 = vmul.f32 %v4002, %v4000
        %v4004 = vxor.u32 %v4003, 2147483648
        %v4005 = vsel %vm3884, %v4004, %v4003
        %v4006 = vsub.s32 4, %v3982
        %v4007 = vsel %vm3884, %v4006, %v3982
        %v4008 = vsel %vm3883, %v798, %v4005
        %v4009 = vsel %vm3883, 0, %v4007
        %v4010 = vmul.f32 %v4008, %v4008
        %v4011 = vmul.f32 %v4010, -0.001358992
        %v4012 = vadd.f32 %v4011, 0.041655596
        %v4013 = vmul.f32 %v4010, %v4012
        %v4014 = vadd.f32 %v4013, -0.4999988
        %v4015 = vmul.f32 %v4010, %v4014
        %v4016 = vadd.f32 1.0, %v4015
        %v4017 = vmul.f32 %v4008, %v4008
        %v4018 = vmul.f32 %v4017, -0.00019511016
        %v4019 = vadd.f32 %v4018, 0.008332121
        %v4020 = vmul.f32 %v4017, %v4019
        %v4021 = vadd.f32 %v4020, -0.16666654
        %v4022 = vmul.f32 %v4017, %v4021
        %v4023 = vadd.f32 %v4022, 1.0
        %v4024 = vmul.f32 %v4023, %v4008
        %vm4025 = vweird.f32 %v798
        %v4026 = vand.u32 %v4009, 3
        %vm4027 = vcmp.lt.s32.totalorder %v4026, 2
        %vm4028 = vcmp.eq.s32.totalorder %v4026, 0
        %v4029 = vxor.u32 %v4024, 2147483648
        %v4030 = vsel %vm4028, %v4016, %v4029
        %vm4031 = vcmp.eq.s32.totalorder %v4026, 2
        %v4032 = vxor.u32 %v4016, 2147483648
        %v4033 = vsel %vm4031, %v4032, %v4024
        %v4034 = vsel %vm4027, %v4030, %v4033
        %v4035 = vsel %vm4025, nan, %v4034
        %v4036 = vand.u32 2147483647, %v799
        %vm4037 = vcmp.le.f32.partialorder %v4036, 0.7853982
        %vm4038 = vcmp.lt.s32.totalorder %v799, 0
        %v4039 = vand.u32 %v799, 2139095040
        %v4040 = vshrl.u32 %v4039, 23
        %v4041 = vsub.s32 %v4040, 127
        %v4042 = vand.u32 2147483647, %v799
        %v4043 = vand.u32 %v4042, 8388607
        %v4044 = vor.u32 %v4043, 8388608
        %v4045 = vsub.s32 0, %v4044
        %v4046 = vadd.s32 %v4041, 1
        %vm4047 = vcmp.gt.s32.totalorder %v4046, 0
        %v4048 = vsel %vm4047, %v4046, 0
        %v4049 = vshrl.u32 %v4048, 5
        %v4050 = vand.u32 %v4048, 31
        %v4051 = vsub.s32 32, %v4050
        %v4052 = vshrl.u32 683565275, %v4051
        %v4053 = vshll.u32 683565275, %v4050
        %v4054 = vshrl.u32 2475754826, %v4051
        %v4055 = vor.u32 %v4053, %v4054
        %v4056 = vshll.u32 2475754826, %v4050
        %v4057 = vshrl.u32 2131351028, %v4051
        %v4058 = vor.u32 %v4056, %v4057
        %v4059 = vshll.u32 2131351028, %v4050
        %v4060 = vshrl.u32 2102212464, %v4051
        %v4061 = vor.u32 %v4059, %v4060
        %v4062 = vshll.u32 2102212464, %v4050
        %v4063 = vshrl.u32 920167782, %v4051
        %v4064 = vor.u32 %v4062, %v4063
        %v4065 = vshll.u32 920167782, %v4050
        %v4066 = vshrl.u32 1326507024, %v4051
        %v4067 = vor.u32 %v4065, %v4066
        %vm4068 = vcmp.lt.s32.totalorder %v4049, 1
        %vm4069 = vcmp.lt.s32.totalorder %v4049, 2
        %vm4070 = vcmp.lt.s32.totalorder %v4049, 3
        %vm4071 = vcmp.lt.s32.totalorder %v4049, 4
        %v4072 = vsel %vm4068, %v4052, %v4055
        %v4073 = vsel %vm4071, %v4061, 2102212464
        %v4074 = vsel %vm4070, %v4058, %v4073
        %v4075 = vsel %vm4069, %v4072, %v4074
        %v4076 = vsel %vm4068, %v4055, %v4058
        %v4077 = vsel %vm4071, %v4064, 920167782
        %v4078 = vsel %vm4070, %v4061, %v4077
        %v4079 = vsel %vm4069, %v4076, %v4078
        %v4080 = vsel %vm4068, %v4058, %v4061
        %v4081 = vsel %vm4071, %v4067, 1326507024
        %v4082 = vsel %vm4070, %v4064, %v4081
        %v4083 = vsel %vm4069, %v4080, %v4082
        %v4084 = vshll.u32 %v4044, 8
        %v4085 = vand.u32 %v4084, 65535
        %v4086 = vshrl.u32 %v4084, 16
        %v4087 = vand.u32 %v4083, 65535
        %v4088 = vshrl.u32 %v4083, 16
        %v4089 = vmul.u32 %v4085, %v4087
        %v4090 = vmul.u32 %v4085, %v4088
        %v4091 = vmul.u32 %v4086, %v4087
        %v4092 = vmul.u32 %v4086, %v4088
        %v4093 = vshll.u32 %v4090, 16
        %v4094 = vshrl.u32 %v4090, 16
        %v4095 = vshll.u32 %v4091, 16
        %v4096 = vshrl.u32 %v4091, 16
        %vm4097 = vc.u32 %v4089, %v4093
        %v4098 = vsel %vm4097, 1, 0
        %v4099 = vadd.s32 %v4089, %v4093
        %v4100 = vadd.s32 %v4092, %v4098
        %vm4101 = vc.u32 %v4099, %v4095
        %v4102 = vsel %vm4101, 1, 0
        %v4103 = vadd.s32 %v4099, %v4095
        %v4104 = vadd.s32 %v4100, %v4102
        %v4105 = vadd.s32 %v4104, %v4094
        %v4106 = vadd.s32 %v4105, %v4096
        %v4107 = vand.u32 %v4084, 65535
        %v4108 = vshrl.u32 %v4084, 16
        %v4109 = vand.u32 %v4079, 65535
        %v4110 = vshrl.u32 %v4079, 16
        %v4111 = vmul.u32 %v4107, %v4109
        %v4112 = vmul.u32 %v4107, %v4110
        %v4113 = vmul.u32 %v4108, %v4109
        %v4114 = vmul.u32 %v4108, %v4110
        %v4115 = vshll.u32 %v4112, 16
        %v4116 = vshrl.u32 %v4112, 16
        %v4117 = vshll.u32 %v4113, 16
        %v4118 = vshrl.u32 %v4113, 16
        %vm4119 = vc.u32 %v4111, %v4115
        %v4120 = vsel %vm4119, 1, 0
        %v4121 = vadd.s32 %v4111, %v4115
        %v4122 = vadd.s32 %v4114, %v4120
        %vm4123 = vc.u32 %v4121, %v4117
        %v4124 = vsel %vm4123, 1, 0
        %v4125 = vadd.s32 %v4121, %v4117
        %v4126 = vadd.s32 %v4122, %v4124
        %v4127 = vadd.s32 %v4126, %v4116
        %v4128 = vadd.s32 %v4127, %v4118
        %v4129 = vmul.u32 %v4084, %v4075
        %v4130 = vadd.s32 %v4106, %v4125
        %vm4131 = vc.u32 %v4106, %v4125
        %v4132 = vadd.s32 %v4128, 1
        %v4133 = vsel %vm4131, %v4132, %v4128
        %v4134 = vadd.s32 %v4129, %v4133
        %v4135 = vadd.s32 %v4134, 536870912
        %v4136 = vshrl.u32 %v4135, 30
        %v4137 = vshll.u32 %v4136, 30
        %v4138 = vsub.s32 %v4134, %v4137
        %vm4139 = vcmp.lt.s32.totalorder %v4138, 0
        %v4140 = vsub.s32 0, %v4138
        %v4141 = vsel %vm4139, %v4140, %v4138
        %v4142 = vclz %v4141
        %v4143 = vsub.s32 %v4142, 2
        %vm4144 = vcmp.gt.s32.totalorder 0, %v4143
        %v4145 = vsel %vm4144, 0, %v4143
        %v4146 = vsub.s32 32, %v4145
        %v4147 = vshll.u32 %v4138, %v4145
        %v4148 = vshrl.u32 %v4130, %v4146
        %v4149 = vor.u32 %v4147, %v4148
        %v4150 = vsub.s32 4294967266, %v4145
        %v4151 = vadd.s32 %v4150, 127
        %v4152 = vshll.u32 %v4151, 23
        %v4153 = vor.u32 4788187, %v4152
        %v4154 = vand.u32 2147483647, %v4153
        %v4156 = vcvt.s32.f32 %v4149
        %v4157 = vmul.f32 %v4156, %v4154
        %v4158 = vxor.u32 %v4157, 2147483648
        %v4159 = vsel %vm4038, %v4158, %v4157
        %v4160 = vsub.s32 4, %v4136
        %v4161 = vsel %vm4038, %v4160, %v4136
        %v4162 = vsel %vm4037, %v799, %v4159
        %v4163 = vsel %vm4037, 0, %v4161
        %v4164 = vmul.f32 %v4162, %v4162
        %v4165 = vmul.f32 %v4164, -0.001358992
        %v4166 = vadd.f32 %v4165, 0.041655596
        %v4167 = vmul.f32 %v4164, %v4166
        %v4168 = vadd.f32 %v4167, -0.4999988
        %v4169 = vmul.f32 %v4164, %v4168
        %v4170 = vadd.f32 1.0, %v4169
        %v4171 = vmul.f32 %v4162, %v4162
        %v4172 = vmul.f32 %v4171, -0.00019511016
        %v4173 = vadd.f32 %v4172, 0.008332121
        %v4174 = vmul.f32 %v4171, %v4173
        %v4175 = vadd.f32 %v4174, -0.16666654
        %v4176 = vmul.f32 %v4171, %v4175
        %v4177 = vadd.f32 %v4176, 1.0
        %v4178 = vmul.f32 %v4177, %v4162
        %vm4179 = vweird.f32 %v799
        %v4180 = vand.u32 %v4163, 3
        %vm4181 = vcmp.lt.s32.totalorder %v4180, 2
        %vm4182 = vcmp.eq.s32.totalorder %v4180, 0
        %v4183 = vxor.u32 %v4178, 2147483648
        %v4184 = vsel %vm4182, %v4170, %v4183
        %vm4185 = vcmp.eq.s32.totalorder %v4180, 2
        %v4186 = vxor.u32 %v4170, 2147483648
        %v4187 = vsel %vm4185, %v4186, %v4178
        %v4188 = vsel %vm4181, %v4184, %v4187
        %v4189 = vsel %vm4179, nan, %v4188
        %v4190 = vand.u32 2147483647, %v800
        %vm4191 = vcmp.le.f32.partialorder %v4190, 0.7853982
        %vm4192 = vcmp.lt.s32.totalorder %v800, 0
        %v4193 = vand.u32 %v800, 2139095040
        %v4194 = vshrl.u32 %v4193, 23
        %v4195 = vsub.s32 %v4194, 127
        %v4196 = vand.u32 2147483647, %v800
        %v4197 = vand.u32 %v4196, 8388607
        %v4198 = vor.u32 %v4197, 8388608
        %v4199 = vsub.s32 0, %v4198
        %v4200 = vadd.s32 %v4195, 1
        %vm4201 = vcmp.gt.s32.totalorder %v4200, 0
        %v4202 = vsel %vm4201, %v4200, 0
        %v4203 = vshrl.u32 %v4202, 5
        %v4204 = vand.u32 %v4202, 31
        %v4205 = vsub.s32 32, %v4204
        %v4206 = vshrl.u32 683565275, %v4205
        %v4207 = vshll.u32 683565275, %v4204
        %v4208 = vshrl.u32 2475754826, %v4205
        %v4209 = vor.u32 %v4207, %v4208
        %v4210 = vshll.u32 2475754826, %v4204
        %v4211 = vshrl.u32 2131351028, %v4205
        %v4212 = vor.u32 %v4210, %v4211
        %v4213 = vshll.u32 2131351028, %v4204
        %v4214 = vshrl.u32 2102212464, %v4205
        %v4215 = vor.u32 %v4213, %v4214
        %v4216 = vshll.u32 2102212464, %v4204
        %v4217 = vshrl.u32 920167782, %v4205
        %v4218 = vor.u32 %v4216, %v4217
        %v4219 = vshll.u32 920167782, %v4204
        %v4220 = vshrl.u32 1326507024, %v4205
        %v4221 = vor.u32 %v4219, %v4220
        %vm4222 = vcmp.lt.s32.totalorder %v4203, 1
        %vm4223 = vcmp.lt.s32.totalorder %v4203, 2
        %vm4224 = vcmp.lt.s32.totalorder %v4203, 3
        %vm4225 = vcmp.lt.s32.totalorder %v4203, 4
        %v4226 = vsel %vm4222, %v4206, %v4209
        %v4227 = vsel %vm4225, %v4215, 2102212464
        %v4228 = vsel %vm4224, %v4212, %v4227
        %v4229 = vsel %vm4223, %v4226, %v4228
        %v4230 = vsel %vm4222, %v4209, %v4212
        %v4231 = vsel %vm4225, %v4218, 920167782
        %v4232 = vsel %vm4224, %v4215, %v4231
        %v4233 = vsel %vm4223, %v4230, %v4232
        %v4234 = vsel %vm4222, %v4212, %v4215
        %v4235 = vsel %vm4225, %v4221, 1326507024
        %v4236 = vsel %vm4224, %v4218, %v4235
        %v4237 = vsel %vm4223, %v4234, %v4236
        %v4238 = vshll.u32 %v4198, 8
        %v4239 = vand.u32 %v4238, 65535
        %v4240 = vshrl.u32 %v4238, 16
        %v4241 = vand.u32 %v4237, 65535
        %v4242 = vshrl.u32 %v4237, 16
        %v4243 = vmul.u32 %v4239, %v4241
        %v4244 = vmul.u32 %v4239, %v4242
        %v4245 = vmul.u32 %v4240, %v4241
        %v4246 = vmul.u32 %v4240, %v4242
        %v4247 = vshll.u32 %v4244, 16
        %v4248 = vshrl.u32 %v4244, 16
        %v4249 = vshll.u32 %v4245, 16
        %v4250 = vshrl.u32 %v4245, 16
        %vm4251 = vc.u32 %v4243, %v4247
        %v4252 = vsel %vm4251, 1, 0
        %v4253 = vadd.s32 %v4243, %v4247
        %v4254 = vadd.s32 %v4246, %v4252
        %vm4255 = vc.u32 %v4253, %v4249
        %v4256 = vsel %vm4255, 1, 0
        %v4257 = vadd.s32 %v4253, %v4249
        %v4258 = vadd.s32 %v4254, %v4256
        %v4259 = vadd.s32 %v4258, %v4248
        %v4260 = vadd.s32 %v4259, %v4250
        %v4261 = vand.u32 %v4238, 65535
        %v4262 = vshrl.u32 %v4238, 16
        %v4263 = vand.u32 %v4233, 65535
        %v4264 = vshrl.u32 %v4233, 16
        %v4265 = vmul.u32 %v4261, %v4263
        %v4266 = vmul.u32 %v4261, %v4264
        %v4267 = vmul.u32 %v4262, %v4263
        %v4268 = vmul.u32 %v4262, %v4264
        %v4269 = vshll.u32 %v4266, 16
        %v4270 = vshrl.u32 %v4266, 16
        %v4271 = vshll.u32 %v4267, 16
        %v4272 = vshrl.u32 %v4267, 16
        %vm4273 = vc.u32 %v4265, %v4269
        %v4274 = vsel %vm4273, 1, 0
        %v4275 = vadd.s32 %v4265, %v4269
        %v4276 = vadd.s32 %v4268, %v4274
        %vm4277 = vc.u32 %v4275, %v4271
        %v4278 = vsel %vm4277, 1, 0
        %v4279 = vadd.s32 %v4275, %v4271
        %v4280 = vadd.s32 %v4276, %v4278
        %v4281 = vadd.s32 %v4280, %v4270
        %v4282 = vadd.s32 %v4281, %v4272
        %v4283 = vmul.u32 %v4238, %v4229
        %v4284 = vadd.s32 %v4260, %v4279
        %vm4285 = vc.u32 %v4260, %v4279
        %v4286 = vadd.s32 %v4282, 1
        %v4287 = vsel %vm4285, %v4286, %v4282
        %v4288 = vadd.s32 %v4283, %v4287
        %v4289 = vadd.s32 %v4288, 536870912
        %v4290 = vshrl.u32 %v4289, 30
        %v4291 = vshll.u32 %v4290, 30
        %v4292 = vsub.s32 %v4288, %v4291
        %vm4293 = vcmp.lt.s32.totalorder %v4292, 0
        %v4294 = vsub.s32 0, %v4292
        %v4295 = vsel %vm4293, %v4294, %v4292
        %v4296 = vclz %v4295
        %v4297 = vsub.s32 %v4296, 2
        %vm4298 = vcmp.gt.s32.totalorder 0, %v4297
        %v4299 = vsel %vm4298, 0, %v4297
        %v4300 = vsub.s32 32, %v4299
        %v4301 = vshll.u32 %v4292, %v4299
        %v4302 = vshrl.u32 %v4284, %v4300
        %v4303 = vor.u32 %v4301, %v4302
        %v4304 = vsub.s32 4294967266, %v4299
        %v4305 = vadd.s32 %v4304, 127
        %v4306 = vshll.u32 %v4305, 23
        %v4307 = vor.u32 4788187, %v4306
        %v4308 = vand.u32 2147483647, %v4307
        %v4310 = vcvt.s32.f32 %v4303
        %v4311 = vmul.f32 %v4310, %v4308
        %v4312 = vxor.u32 %v4311, 2147483648
        %v4313 = vsel %vm4192, %v4312, %v4311
        %v4314 = vsub.s32 4, %v4290
        %v4315 = vsel %vm4192, %v4314, %v4290
        %v4316 = vsel %vm4191, %v800, %v4313
        %v4317 = vsel %vm4191, 0, %v4315
        %v4318 = vmul.f32 %v4316, %v4316
        %v4319 = vmul.f32 %v4318, -0.001358992
        %v4320 = vadd.f32 %v4319, 0.041655596
        %v4321 = vmul.f32 %v4318, %v4320
        %v4322 = vadd.f32 %v4321, -0.4999988
        %v4323 = vmul.f32 %v4318, %v4322
        %v4324 = vadd.f32 1.0, %v4323
        %v4325 = vmul.f32 %v4316, %v4316
        %v4326 = vmul.f32 %v4325, -0.00019511016
        %v4327 = vadd.f32 %v4326, 0.008332121
        %v4328 = vmul.f32 %v4325, %v4327
        %v4329 = vadd.f32 %v4328, -0.16666654
        %v4330 = vmul.f32 %v4325, %v4329
        %v4331 = vadd.f32 %v4330, 1.0
        %v4332 = vmul.f32 %v4331, %v4316
        %vm4333 = vweird.f32 %v800
        %v4334 = vand.u32 %v4317, 3
        %vm4335 = vcmp.lt.s32.totalorder %v4334, 2
        %vm4336 = vcmp.eq.s32.totalorder %v4334, 0
        %v4337 = vxor.u32 %v4332, 2147483648
        %v4338 = vsel %vm4336, %v4324, %v4337
        %vm4339 = vcmp.eq.s32.totalorder %v4334, 2
        %v4340 = vxor.u32 %v4324, 2147483648
        %v4341 = vsel %vm4339, %v4340, %v4332
        %v4342 = vsel %vm4335, %v4338, %v4341
        %v4343 = vsel %vm4333, nan, %v4342
        %v4344 = vand.u32 2147483647, %v801
        %vm4345 = vcmp.le.f32.partialorder %v4344, 0.7853982
        %vm4346 = vcmp.lt.s32.totalorder %v801, 0
        %v4347 = vand.u32 %v801, 2139095040
        %v4348 = vshrl.u32 %v4347, 23
        %v4349 = vsub.s32 %v4348, 127
        %v4350 = vand.u32 2147483647, %v801
        %v4351 = vand.u32 %v4350, 8388607
        %v4352 = vor.u32 %v4351, 8388608
        %v4353 = vsub.s32 0, %v4352
        %v4354 = vadd.s32 %v4349, 1
        %vm4355 = vcmp.gt.s32.totalorder %v4354, 0
        %v4356 = vsel %vm4355, %v4354, 0
        %v4357 = vshrl.u32 %v4356, 5
        %v4358 = vand.u32 %v4356, 31
        %v4359 = vsub.s32 32, %v4358
        %v4360 = vshrl.u32 683565275, %v4359
        %v4361 = vshll.u32 683565275, %v4358
        %v4362 = vshrl.u32 2475754826, %v4359
        %v4363 = vor.u32 %v4361, %v4362
        %v4364 = vshll.u32 2475754826, %v4358
        %v4365 = vshrl.u32 2131351028, %v4359
        %v4366 = vor.u32 %v4364, %v4365
        %v4367 = vshll.u32 2131351028, %v4358
        %v4368 = vshrl.u32 2102212464, %v4359
        %v4369 = vor.u32 %v4367, %v4368
        %v4370 = vshll.u32 2102212464, %v4358
        %v4371 = vshrl.u32 920167782, %v4359
        %v4372 = vor.u32 %v4370, %v4371
        %v4373 = vshll.u32 920167782, %v4358
        %v4374 = vshrl.u32 1326507024, %v4359
        %v4375 = vor.u32 %v4373, %v4374
        %vm4376 = vcmp.lt.s32.totalorder %v4357, 1
        %vm4377 = vcmp.lt.s32.totalorder %v4357, 2
        %vm4378 = vcmp.lt.s32.totalorder %v4357, 3
        %vm4379 = vcmp.lt.s32.totalorder %v4357, 4
        %v4380 = vsel %vm4376, %v4360, %v4363
        %v4381 = vsel %vm4379, %v4369, 2102212464
        %v4382 = vsel %vm4378, %v4366, %v4381
        %v4383 = vsel %vm4377, %v4380, %v4382
        %v4384 = vsel %vm4376, %v4363, %v4366
        %v4385 = vsel %vm4379, %v4372, 920167782
        %v4386 = vsel %vm4378, %v4369, %v4385
        %v4387 = vsel %vm4377, %v4384, %v4386
        %v4388 = vsel %vm4376, %v4366, %v4369
        %v4389 = vsel %vm4379, %v4375, 1326507024
        %v4390 = vsel %vm4378, %v4372, %v4389
        %v4391 = vsel %vm4377, %v4388, %v4390
        %v4392 = vshll.u32 %v4352, 8
        %v4393 = vand.u32 %v4392, 65535
        %v4394 = vshrl.u32 %v4392, 16
        %v4395 = vand.u32 %v4391, 65535
        %v4396 = vshrl.u32 %v4391, 16
        %v4397 = vmul.u32 %v4393, %v4395
        %v4398 = vmul.u32 %v4393, %v4396
        %v4399 = vmul.u32 %v4394, %v4395
        %v4400 = vmul.u32 %v4394, %v4396
        %v4401 = vshll.u32 %v4398, 16
        %v4402 = vshrl.u32 %v4398, 16
        %v4403 = vshll.u32 %v4399, 16
        %v4404 = vshrl.u32 %v4399, 16
        %vm4405 = vc.u32 %v4397, %v4401
        %v4406 = vsel %vm4405, 1, 0
        %v4407 = vadd.s32 %v4397, %v4401
        %v4408 = vadd.s32 %v4400, %v4406
        %vm4409 = vc.u32 %v4407, %v4403
        %v4410 = vsel %vm4409, 1, 0
        %v4411 = vadd.s32 %v4407, %v4403
        %v4412 = vadd.s32 %v4408, %v4410
        %v4413 = vadd.s32 %v4412, %v4402
        %v4414 = vadd.s32 %v4413, %v4404
        %v4415 = vand.u32 %v4392, 65535
        %v4416 = vshrl.u32 %v4392, 16
        %v4417 = vand.u32 %v4387, 65535
        %v4418 = vshrl.u32 %v4387, 16
        %v4419 = vmul.u32 %v4415, %v4417
        %v4420 = vmul.u32 %v4415, %v4418
        %v4421 = vmul.u32 %v4416, %v4417
        %v4422 = vmul.u32 %v4416, %v4418
        %v4423 = vshll.u32 %v4420, 16
        %v4424 = vshrl.u32 %v4420, 16
        %v4425 = vshll.u32 %v4421, 16
        %v4426 = vshrl.u32 %v4421, 16
        %vm4427 = vc.u32 %v4419, %v4423
        %v4428 = vsel %vm4427, 1, 0
        %v4429 = vadd.s32 %v4419, %v4423
        %v4430 = vadd.s32 %v4422, %v4428
        %vm4431 = vc.u32 %v4429, %v4425
        %v4432 = vsel %vm4431, 1, 0
        %v4433 = vadd.s32 %v4429, %v4425
        %v4434 = vadd.s32 %v4430, %v4432
        %v4435 = vadd.s32 %v4434, %v4424
        %v4436 = vadd.s32 %v4435, %v4426
        %v4437 = vmul.u32 %v4392, %v4383
        %v4438 = vadd.s32 %v4414, %v4433
        %vm4439 = vc.u32 %v4414, %v4433
        %v4440 = vadd.s32 %v4436, 1
        %v4441 = vsel %vm4439, %v4440, %v4436
        %v4442 = vadd.s32 %v4437, %v4441
        %v4443 = vadd.s32 %v4442, 536870912
        %v4444 = vshrl.u32 %v4443, 30
        %v4445 = vshll.u32 %v4444, 30
        %v4446 = vsub.s32 %v4442, %v4445
        %vm4447 = vcmp.lt.s32.totalorder %v4446, 0
        %v4448 = vsub.s32 0, %v4446
        %v4449 = vsel %vm4447, %v4448, %v4446
        %v4450 = vclz %v4449
        %v4451 = vsub.s32 %v4450, 2
        %vm4452 = vcmp.gt.s32.totalorder 0, %v4451
        %v4453 = vsel %vm4452, 0, %v4451
        %v4454 = vsub.s32 32, %v4453
        %v4455 = vshll.u32 %v4446, %v4453
        %v4456 = vshrl.u32 %v4438, %v4454
        %v4457 = vor.u32 %v4455, %v4456
        %v4458 = vsub.s32 4294967266, %v4453
        %v4459 = vadd.s32 %v4458, 127
        %v4460 = vshll.u32 %v4459, 23
        %v4461 = vor.u32 4788187, %v4460
        %v4462 = vand.u32 2147483647, %v4461
        %v4464 = vcvt.s32.f32 %v4457
        %v4465 = vmul.f32 %v4464, %v4462
        %v4466 = vxor.u32 %v4465, 2147483648
        %v4467 = vsel %vm4346, %v4466, %v4465
        %v4468 = vsub.s32 4, %v4444
        %v4469 = vsel %vm4346, %v4468, %v4444
        %v4470 = vsel %vm4345, %v801, %v4467
        %v4471 = vsel %vm4345, 0, %v4469
        %v4472 = vmul.f32 %v4470, %v4470
        %v4473 = vmul.f32 %v4472, -0.001358992
        %v4474 = vadd.f32 %v4473, 0.041655596
        %v4475 = vmul.f32 %v4472, %v4474
        %v4476 = vadd.f32 %v4475, -0.4999988
        %v4477 = vmul.f32 %v4472, %v4476
        %v4478 = vadd.f32 1.0, %v4477
        %v4479 = vmul.f32 %v4470, %v4470
        %v4480 = vmul.f32 %v4479, -0.00019511016
        %v4481 = vadd.f32 %v4480, 0.008332121
        %v4482 = vmul.f32 %v4479, %v4481
        %v4483 = vadd.f32 %v4482, -0.16666654
        %v4484 = vmul.f32 %v4479, %v4483
        %v4485 = vadd.f32 %v4484, 1.0
        %v4486 = vmul.f32 %v4485, %v4470
        %vm4487 = vweird.f32 %v801
        %v4488 = vand.u32 %v4471, 3
        %vm4489 = vcmp.lt.s32.totalorder %v4488, 2
        %vm4490 = vcmp.eq.s32.totalorder %v4488, 0
        %v4491 = vxor.u32 %v4486, 2147483648
        %v4492 = vsel %vm4490, %v4478, %v4491
        %vm4493 = vcmp.eq.s32.totalorder %v4488, 2
        %v4494 = vxor.u32 %v4478, 2147483648
        %v4495 = vsel %vm4493, %v4494, %v4486
        %v4496 = vsel %vm4489, %v4492, %v4495
        %v4497 = vsel %vm4487, nan, %v4496
        %v4498 = vadd.f32 %v955, 1.0
        %v4499 = vadd.f32 %v1109, 1.0
        %v4500 = vadd.f32 %v1263, 1.0
        %v4501 = vadd.f32 %v1417, 1.0
        %v4502 = vadd.f32 %v1571, 1.0
        %v4503 = vadd.f32 %v1725, 1.0
        %v4504 = vadd.f32 %v1879, 1.0
        %v4505 = vadd.f32 %v2033, 1.0
        %v4506 = vadd.f32 %v2187, 1.0
        %v4507 = vadd.f32 %v2341, 1.0
        %v4508 = vadd.f32 %v2495, 1.0
        %v4509 = vadd.f32 %v2649, 1.0
        %v4510 = vadd.f32 %v2803, 1.0
        %v4511 = vadd.f32 %v2957, 1.0
        %v4512 = vadd.f32 %v3111, 1.0
        %v4513 = vadd.f32 %v3265, 1.0
        %v4514 = vadd.f32 %v3419, 1.0
        %v4515 = vadd.f32 %v3573, 1.0
        %v4516 = vadd.f32 %v3727, 1.0
        %v4517 = vadd.f32 %v3881, 1.0
        %v4518 = vadd.f32 %v4035, 1.0
        %v4519 = vadd.f32 %v4189, 1.0
        %v4520 = vadd.f32 %v4343, 1.0
        %v4521 = vadd.f32 %v4497, 1.0
        %v4522 = vmul.f32 %v4498, 0.5
        %v4523 = vmul.f32 %v4499, 0.5
        %v4524 = vmul.f32 %v4500, 0.5
        %v4525 = vmul.f32 %v4501, 0.5
        %v4526 = vmul.f32 %v4502, 0.5
        %v4527 = vmul.f32 %v4503, 0.5
        %v4528 = vmul.f32 %v4504, 0.5
        %v4529 = vmul.f32 %v4505, 0.5
        %v4530 = vmul.f32 %v4506, 0.5
        %v4531 = vmul.f32 %v4507, 0.5
        %v4532 = vmul.f32 %v4508, 0.5
        %v4533 = vmul.f32 %v4509, 0.5
        %v4534 = vmul.f32 %v4510, 0.5
        %v4535 = vmul.f32 %v4511, 0.5
        %v4536 = vmul.f32 %v4512, 0.5
        %v4537 = vmul.f32 %v4513, 0.5
        %v4538 = vmul.f32 %v4514, 0.5
        %v4539 = vmul.f32 %v4515, 0.5
        %v4540 = vmul.f32 %v4516, 0.5
        %v4541 = vmul.f32 %v4517, 0.5
        %v4542 = vmul.f32 %v4518, 0.5
        %v4543 = vmul.f32 %v4519, 0.5
        %v4544 = vmul.f32 %v4520, 0.5
        %v4545 = vmul.f32 %v4521, 0.5
        %vm4546 = vcmp.lt.f32.partialorder %v510, 10.0
        %vm4547 = vcmp.lt.f32.partialorder %v511, 10.0
        %vm4548 = vcmp.lt.f32.partialorder %v512, 10.0
        %vm4549 = vcmp.lt.f32.partialorder %v513, 10.0
        %vm4550 = vcmp.lt.f32.partialorder %v514, 10.0
        %vm4551 = vcmp.lt.f32.partialorder %v515, 10.0
        %vm4552 = vcmp.lt.f32.partialorder %v516, 10.0
        %vm4553 = vcmp.lt.f32.partialorder %v517, 10.0
        %vm4554 = vcmp.lt.f32.partialorder %v518, 10.0
        %vm4555 = vcmp.lt.f32.partialorder %v519, 10.0
        %vm4556 = vcmp.lt.f32.partialorder %v520, 10.0
        %vm4557 = vcmp.lt.f32.partialorder %v521, 10.0
        %vm4558 = vcmp.lt.f32.partialorder %v522, 10.0
        %vm4559 = vcmp.lt.f32.partialorder %v523, 10.0
        %vm4560 = vcmp.lt.f32.partialorder %v524, 10.0
        %vm4561 = vcmp.lt.f32.partialorder %v525, 10.0
        %vm4562 = vcmp.lt.f32.partialorder %v526, 10.0
        %vm4563 = vcmp.lt.f32.partialorder %v527, 10.0
        %vm4564 = vcmp.lt.f32.partialorder %v528, 10.0
        %vm4565 = vcmp.lt.f32.partialorder %v529, 10.0
        %vm4566 = vcmp.lt.f32.partialorder %v530, 10.0
        %vm4567 = vcmp.lt.f32.partialorder %v531, 10.0
        %vm4568 = vcmp.lt.f32.partialorder %v532, 10.0
        %vm4569 = vcmp.lt.f32.partialorder %v533, 10.0
        %v4570 = vsel %vm4546, 1.0, 0.0
        %v4571 = vsel %vm4547, 1.0, 0.0
        %v4572 = vsel %vm4548, 1.0, 0.0
        %v4573 = vsel %vm4549, 1.0, 0.0
        %v4574 = vsel %vm4550, 1.0, 0.0
        %v4575 = vsel %vm4551, 1.0, 0.0
        %v4576 = vsel %vm4552, 1.0, 0.0
        %v4577 = vsel %vm4553, 1.0, 0.0
        %v4578 = vsel %vm4554, 1.0, 0.0
        %v4579 = vsel %vm4555, 1.0, 0.0
        %v4580 = vsel %vm4556, 1.0, 0.0
        %v4581 = vsel %vm4557, 1.0, 0.0
        %v4582 = vsel %vm4558, 1.0, 0.0
        %v4583 = vsel %vm4559, 1.0, 0.0
        %v4584 = vsel %vm4560, 1.0, 0.0
        %v4585 = vsel %vm4561, 1.0, 0.0
        %v4586 = vsel %vm4562, 1.0, 0.0
        %v4587 = vsel %vm4563, 1.0, 0.0
        %v4588 = vsel %vm4564, 1.0, 0.0
        %v4589 = vsel %vm4565, 1.0, 0.0
        %v4590 = vsel %vm4566, 1.0, 0.0
        %v4591 = vsel %vm4567, 1.0, 0.0
        %v4592 = vsel %vm4568, 1.0, 0.0
        %v4593 = vsel %vm4569, 1.0, 0.0
        %v4594 = vmul.f32 %v4522, %v4570
        %v4595 = vmul.f32 %v4523, %v4571
        %v4596 = vmul.f32 %v4524, %v4572
        %v4597 = vmul.f32 %v4525, %v4573
        %v4598 = vmul.f32 %v4526, %v4574
        %v4599 = vmul.f32 %v4527, %v4575
        %v4600 = vmul.f32 %v4528, %v4576
        %v4601 = vmul.f32 %v4529, %v4577
        %v4602 = vmul.f32 %v4530, %v4578
        %v4603 = vmul.f32 %v4531, %v4579
        %v4604 = vmul.f32 %v4532, %v4580
        %v4605 = vmul.f32 %v4533, %v4581
        %v4606 = vmul.f32 %v4534, %v4582
        %v4607 = vmul.f32 %v4535, %v4583
        %v4608 = vmul.f32 %v4536, %v4584
        %v4609 = vmul.f32 %v4537, %v4585
        %v4610 = vmul.f32 %v4538, %v4586
        %v4611 = vmul.f32 %v4539, %v4587
        %v4612 = vmul.f32 %v4540, %v4588
        %v4613 = vmul.f32 %v4541, %v4589
        %v4614 = vmul.f32 %v4542, %v4590
        %v4615 = vmul.f32 %v4543, %v4591
        %v4616 = vmul.f32 %v4544, %v4592
        %v4617 = vmul.f32 %v4545, %v4593
        %v4618 = vpack.c.bf16 %v733, %v731
        %v4619 = vpack.c.bf16 %v737, %v735
        %v4620 = vpack.c.bf16 %v741, %v739
        %v4621 = vpack.c.bf16 %v745, %v743
        %v4622 = vpack.c.bf16 %v749, %v747
        %v4623 = vpack.c.bf16 %v753, %v751
        %v4624 = vpack.c.bf16 %v757, %v755
        %v4625 = vpack.c.bf16 %v761, %v759
        %v4626 = vpack.c.bf16 %v765, %v763
        %v4627 = vpack.c.bf16 %v769, %v767
        %v4628 = vpack.c.bf16 %v773, %v771
        %v4629 = vpack.c.bf16 %v777, %v775
        %v4630 = vld [vmem:[%s4] sm:$0xf]
        %v4631 = vld [vmem:[%s4 + $0x4] sm:$0xf]
        %v4632 = vld [vmem:[%s5] sm:$0x1]
        %v4634 = vperm.slane %v4632, 0
        %v4638 = vunpack.c.l.b16 %v4630
        %v4639 = vunpack.c.l.b16 %v4631
        %v4640 = vpack.c.b16 %v4639, %v4638
        %vm4642 = vcmask 130048
        %v4644 = vsel %vm4642, %v4618, 0
        %v4647 = vsel %vm4642, %v4619, 0
        %v4650 = vsel %vm4642, %v4620, 0
        %v4653 = vsel %vm4642, %v4621, 0
        %v4656 = vsel %vm4642, %v4622, 0
        %v4659 = vsel %vm4642, %v4623, 0
        %v4662 = vsel %vm4642, %v4624, 0
        %v4665 = vsel %vm4642, %v4625, 0
        %v4668 = vsel %vm4642, %v4626, 0
        %v4671 = vsel %vm4642, %v4627, 0
        %v4674 = vsel %vm4642, %v4628, 0
        %v4677 = vsel %vm4642, %v4629, 0
        %4679 = vmatpush.bf16.msra.mxu0 0
        %4680 = vmatpush.bf16.msra.mxu0 0
        %4681 = vmatpush.bf16.msra.mxu0 0
        %4682 = vmatpush.bf16.msra.mxu0 0
        %4683 = vmatpush.bf16.msra.mxu0 0
        %4684 = vmatpush.bf16.msra.mxu0 0
        %4685 = vmatpush.bf16.msra.mxu0 0
        %4686 = vmatpush.bf16.msra.mxu0 %v4640
        %4687 = vmatmul.bf16.gmra.mxu0 %v4644
        %v4688 = vpop.f32.mrf.mxu0
        %v4689 = vadd.f32 %v4634, %v4688
        %v4690 = vpop.f32.mrf.mxu0
        %v4691 = vadd.f32 %v4634, %v4690
        %4692 = vmatmul.bf16.gmra.mxu0 %v4647
        %v4693 = vpop.f32.mrf.mxu0
        %v4694 = vadd.f32 %v4634, %v4693
        %v4695 = vpop.f32.mrf.mxu0
        %v4696 = vadd.f32 %v4634, %v4695
        %4697 = vmatmul.bf16.gmra.mxu0 %v4650
        %v4698 = vpop.f32.mrf.mxu0
        %v4699 = vadd.f32 %v4634, %v4698
        %v4700 = vpop.f32.mrf.mxu0
        %v4701 = vadd.f32 %v4634, %v4700
        %4702 = vmatmul.bf16.gmra.mxu0 %v4653
        %v4703 = vpop.f32.mrf.mxu0
        %v4704 = vadd.f32 %v4634, %v4703
        %v4705 = vpop.f32.mrf.mxu0
        %v4706 = vadd.f32 %v4634, %v4705
        %4707 = vmatmul.bf16.gmra.mxu0 %v4656
        %v4708 = vpop.f32.mrf.mxu0
        %v4709 = vadd.f32 %v4634, %v4708
        %v4710 = vpop.f32.mrf.mxu0
        %v4711 = vadd.f32 %v4634, %v4710
        %4712 = vmatmul.bf16.gmra.mxu0 %v4659
        %v4713 = vpop.f32.mrf.mxu0
        %v4714 = vadd.f32 %v4634, %v4713
        %v4715 = vpop.f32.mrf.mxu0
        %v4716 = vadd.f32 %v4634, %v4715
        %4717 = vmatmul.bf16.gmra.mxu0 %v4662
        %v4718 = vpop.f32.mrf.mxu0
        %v4719 = vadd.f32 %v4634, %v4718
        %v4720 = vpop.f32.mrf.mxu0
        %v4721 = vadd.f32 %v4634, %v4720
        %4722 = vmatmul.bf16.gmra.mxu0 %v4665
        %v4723 = vpop.f32.mrf.mxu0
        %v4724 = vadd.f32 %v4634, %v4723
        %v4725 = vpop.f32.mrf.mxu0
        %v4726 = vadd.f32 %v4634, %v4725
        %4727 = vmatmul.bf16.gmra.mxu0 %v4668
        %v4728 = vpop.f32.mrf.mxu0
        %v4729 = vadd.f32 %v4634, %v4728
        %v4730 = vpop.f32.mrf.mxu0
        %v4731 = vadd.f32 %v4634, %v4730
        %4732 = vmatmul.bf16.gmra.mxu0 %v4671
        %v4733 = vpop.f32.mrf.mxu0
        %v4734 = vadd.f32 %v4634, %v4733
        %v4735 = vpop.f32.mrf.mxu0
        %v4736 = vadd.f32 %v4634, %v4735
        %4737 = vmatmul.bf16.gmra.mxu0 %v4674
        %v4738 = vpop.f32.mrf.mxu0
        %v4739 = vadd.f32 %v4634, %v4738
        %v4740 = vpop.f32.mrf.mxu0
        %v4741 = vadd.f32 %v4634, %v4740
        %4742 = vmatmul.bf16.gmra.mxu0 %v4677
        %v4743 = vpop.f32.mrf.mxu0
        %v4744 = vadd.f32 %v4634, %v4743
        %v4745 = vpop.f32.mrf.mxu0
        %v4746 = vadd.f32 %v4634, %v4745
        %4747 = vdwg.mxu0
        %4749 = vset.pattern.permute.xlu0 0
        %4750 = vperm.xlu0 %4749, %v4594
        %v4751 = vpop.permute.xlu0 %4750
        %4754 = vset.pattern.permute.xlu0 0
        %4755 = vperm.xlu0 %4754, %v4595
        %v4756 = vpop.permute.xlu0 %4755
        %4759 = vset.pattern.permute.xlu0 0
        %4760 = vperm.xlu0 %4759, %v4596
        %v4761 = vpop.permute.xlu0 %4760
        %4764 = vset.pattern.permute.xlu0 0
        %4765 = vperm.xlu0 %4764, %v4597
        %v4766 = vpop.permute.xlu0 %4765
        %4769 = vset.pattern.permute.xlu0 0
        %4770 = vperm.xlu0 %4769, %v4598
        %v4771 = vpop.permute.xlu0 %4770
        %4774 = vset.pattern.permute.xlu0 0
        %4775 = vperm.xlu0 %4774, %v4599
        %v4776 = vpop.permute.xlu0 %4775
        %4779 = vset.pattern.permute.xlu0 0
        %4780 = vperm.xlu0 %4779, %v4600
        %v4781 = vpop.permute.xlu0 %4780
        %4784 = vset.pattern.permute.xlu0 0
        %4785 = vperm.xlu0 %4784, %v4601
        %v4786 = vpop.permute.xlu0 %4785
        %4789 = vset.pattern.permute.xlu0 0
        %4790 = vperm.xlu0 %4789, %v4602
        %v4791 = vpop.permute.xlu0 %4790
        %4794 = vset.pattern.permute.xlu0 0
        %4795 = vperm.xlu0 %4794, %v4603
        %v4796 = vpop.permute.xlu0 %4795
        %4799 = vset.pattern.permute.xlu0 0
        %4800 = vperm.xlu0 %4799, %v4604
        %v4801 = vpop.permute.xlu0 %4800
        %4804 = vset.pattern.permute.xlu0 0
        %4805 = vperm.xlu0 %4804, %v4605
        %v4806 = vpop.permute.xlu0 %4805
        %4809 = vset.pattern.permute.xlu0 0
        %4810 = vperm.xlu0 %4809, %v4606
        %v4811 = vpop.permute.xlu0 %4810
        %4814 = vset.pattern.permute.xlu0 0
        %4815 = vperm.xlu0 %4814, %v4607
        %v4816 = vpop.permute.xlu0 %4815
        %4819 = vset.pattern.permute.xlu0 0
        %4820 = vperm.xlu0 %4819, %v4608
        %v4821 = vpop.permute.xlu0 %4820
        %4824 = vset.pattern.permute.xlu0 0
        %4825 = vperm.xlu0 %4824, %v4609
        %v4826 = vpop.permute.xlu0 %4825
        %4829 = vset.pattern.permute.xlu0 0
        %4830 = vperm.xlu0 %4829, %v4610
        %v4831 = vpop.permute.xlu0 %4830
        %4834 = vset.pattern.permute.xlu0 0
        %4835 = vperm.xlu0 %4834, %v4611
        %v4836 = vpop.permute.xlu0 %4835
        %4839 = vset.pattern.permute.xlu0 0
        %4840 = vperm.xlu0 %4839, %v4612
        %v4841 = vpop.permute.xlu0 %4840
        %4844 = vset.pattern.permute.xlu0 0
        %4845 = vperm.xlu0 %4844, %v4613
        %v4846 = vpop.permute.xlu0 %4845
        %4849 = vset.pattern.permute.xlu0 0
        %4850 = vperm.xlu0 %4849, %v4614
        %v4851 = vpop.permute.xlu0 %4850
        %4854 = vset.pattern.permute.xlu0 0
        %4855 = vperm.xlu0 %4854, %v4615
        %v4856 = vpop.permute.xlu0 %4855
        %4859 = vset.pattern.permute.xlu0 0
        %4860 = vperm.xlu0 %4859, %v4616
        %v4861 = vpop.permute.xlu0 %4860
        %4864 = vset.pattern.permute.xlu0 0
        %4865 = vperm.xlu0 %4864, %v4617
        %v4866 = vpop.permute.xlu0 %4865
        %v4868 = vmul.f32 %v4689, %v4751
        %v4869 = vmul.f32 %v4691, %v4756
        %v4870 = vmul.f32 %v4694, %v4761
        %v4871 = vmul.f32 %v4696, %v4766
        %v4872 = vmul.f32 %v4699, %v4771
        %v4873 = vmul.f32 %v4701, %v4776
        %v4874 = vmul.f32 %v4704, %v4781
        %v4875 = vmul.f32 %v4706, %v4786
        %v4876 = vmul.f32 %v4709, %v4791
        %v4877 = vmul.f32 %v4711, %v4796
        %v4878 = vmul.f32 %v4714, %v4801
        %v4879 = vmul.f32 %v4716, %v4806
        %v4880 = vmul.f32 %v4719, %v4811
        %v4881 = vmul.f32 %v4721, %v4816
        %v4882 = vmul.f32 %v4724, %v4821
        %v4883 = vmul.f32 %v4726, %v4826
        %v4884 = vmul.f32 %v4729, %v4831
        %v4885 = vmul.f32 %v4731, %v4836
        %v4886 = vmul.f32 %v4734, %v4841
        %v4887 = vmul.f32 %v4736, %v4846
        %v4888 = vmul.f32 %v4739, %v4851
        %v4889 = vmul.f32 %v4741, %v4856
        %v4890 = vmul.f32 %v4744, %v4861
        %v4891 = vmul.f32 %v4746, %v4866
        %v4892 = vpack.c.bf16 %v4869, %v4868
        %v4893 = vpack.c.bf16 %v4871, %v4870
        %v4894 = vpack.c.bf16 %v4873, %v4872
        %v4895 = vpack.c.bf16 %v4875, %v4874
        %v4896 = vpack.c.bf16 %v4877, %v4876
        %v4897 = vpack.c.bf16 %v4879, %v4878
        %v4898 = vpack.c.bf16 %v4881, %v4880
        %v4899 = vpack.c.bf16 %v4883, %v4882
        %v4900 = vpack.c.bf16 %v4885, %v4884
        %v4901 = vpack.c.bf16 %v4887, %v4886
        %v4902 = vpack.c.bf16 %v4889, %v4888
        %v4903 = vpack.c.bf16 %v4891, %v4890
        %v4904 = vld [vmem:[%s6] sm:$0xf]
        %v4905 = vld [vmem:[%s6 + $0x4] sm:$0xf]
        %v4906 = vld [vmem:[%s6 + $0x8] sm:$0xf]
        %v4907 = vld [vmem:[%s6 + $0xc] sm:$0xf]
        %v4908 = vld [vmem:[%s7] sm:$0x1]
        %v4910 = vperm.slane %v4908, 0
        %v4916 = vunpack.c.l.b16 %v4904
        %v4917 = vunpack.c.l.b16 %v4905
        %v4918 = vunpack.c.l.b16 %v4906
        %v4919 = vunpack.c.l.b16 %v4907
        %v4920 = vpack.c.b16 %v4917, %v4916
        %v4921 = vpack.c.b16 %v4919, %v4918
        %vm4924 = vcmask 261120
        %v4926 = vsel %vm4924, %v4892, 0
        %v4929 = vsel %vm4924, %v4893, 0
        %v4932 = vsel %vm4924, %v4894, 0
        %v4935 = vsel %vm4924, %v4895, 0
        %v4938 = vsel %vm4924, %v4896, 0
        %v4941 = vsel %vm4924, %v4897, 0
        %v4944 = vsel %vm4924, %v4898, 0
        %v4947 = vsel %vm4924, %v4899, 0
        %v4950 = vsel %vm4924, %v4900, 0
        %v4953 = vsel %vm4924, %v4901, 0
        %v4956 = vsel %vm4924, %v4902, 0
        %v4959 = vsel %vm4924, %v4903, 0
        %4961 = vmatpush.bf16.msra.mxu0 0
        %4962 = vmatpush.bf16.msra.mxu0 0
        %4963 = vmatpush.bf16.msra.mxu0 0
        %4964 = vmatpush.bf16.msra.mxu0 0
        %4965 = vmatpush.bf16.msra.mxu0 0
        %4966 = vmatpush.bf16.msra.mxu0 0
        %4967 = vmatpush.bf16.msra.mxu0 %v4921
        %4968 = vmatpush.bf16.msra.mxu0 %v4920
        %4969 = vmatmul.bf16.gmra.mxu0 %v4926
        %v4970 = vpop.f32.mrf.mxu0
        %v4971 = vadd.f32 %v4910, %v4970
        %v4972 = vpop.f32.mrf.mxu0
        %v4973 = vadd.f32 %v4910, %v4972
        %4974 = vmatmul.bf16.gmra.mxu0 %v4929
        %v4975 = vpop.f32.mrf.mxu0
        %v4976 = vadd.f32 %v4910, %v4975
        %v4977 = vpop.f32.mrf.mxu0
        %v4978 = vadd.f32 %v4910, %v4977
        %4979 = vmatmul.bf16.gmra.mxu0 %v4932
        %v4980 = vpop.f32.mrf.mxu0
        %v4981 = vadd.f32 %v4910, %v4980
        %v4982 = vpop.f32.mrf.mxu0
        %v4983 = vadd.f32 %v4910, %v4982
        %4984 = vmatmul.bf16.gmra.mxu0 %v4935
        %v4985 = vpop.f32.mrf.mxu0
        %v4986 = vadd.f32 %v4910, %v4985
        %v4987 = vpop.f32.mrf.mxu0
        %v4988 = vadd.f32 %v4910, %v4987
        %4989 = vmatmul.bf16.gmra.mxu0 %v4938
        %v4990 = vpop.f32.mrf.mxu0
        %v4991 = vadd.f32 %v4910, %v4990
        %v4992 = vpop.f32.mrf.mxu0
        %v4993 = vadd.f32 %v4910, %v4992
        %4994 = vmatmul.bf16.gmra.mxu0 %v4941
        %v4995 = vpop.f32.mrf.mxu0
        %v4996 = vadd.f32 %v4910, %v4995
        %v4997 = vpop.f32.mrf.mxu0
        %v4998 = vadd.f32 %v4910, %v4997
        %4999 = vmatmul.bf16.gmra.mxu0 %v4944
        %v5000 = vpop.f32.mrf.mxu0
        %v5001 = vadd.f32 %v4910, %v5000
        %v5002 = vpop.f32.mrf.mxu0
        %v5003 = vadd.f32 %v4910, %v5002
        %5004 = vmatmul.bf16.gmra.mxu0 %v4947
        %v5005 = vpop.f32.mrf.mxu0
        %v5006 = vadd.f32 %v4910, %v5005
        %v5007 = vpop.f32.mrf.mxu0
        %v5008 = vadd.f32 %v4910, %v5007
        %5009 = vmatmul.bf16.gmra.mxu0 %v4950
        %v5010 = vpop.f32.mrf.mxu0
        %v5011 = vadd.f32 %v4910, %v5010
        %v5012 = vpop.f32.mrf.mxu0
        %v5013 = vadd.f32 %v4910, %v5012
        %5014 = vmatmul.bf16.gmra.mxu0 %v4953
        %v5015 = vpop.f32.mrf.mxu0
        %v5016 = vadd.f32 %v4910, %v5015
        %v5017 = vpop.f32.mrf.mxu0
        %v5018 = vadd.f32 %v4910, %v5017
        %5019 = vmatmul.bf16.gmra.mxu0 %v4956
        %v5020 = vpop.f32.mrf.mxu0
        %v5021 = vadd.f32 %v4910, %v5020
        %v5022 = vpop.f32.mrf.mxu0
        %v5023 = vadd.f32 %v4910, %v5022
        %5024 = vmatmul.bf16.gmra.mxu0 %v4959
        %v5025 = vpop.f32.mrf.mxu0
        %v5026 = vadd.f32 %v4910, %v5025
        %v5027 = vpop.f32.mrf.mxu0
        %v5028 = vadd.f32 %v4910, %v5027
        %5029 = vdwg.mxu0
        %v5030 = vpack.c.bf16 %v4973, %v4971
        %v5031 = vpack.c.bf16 %v4978, %v4976
        %v5032 = vpack.c.bf16 %v4983, %v4981
        %v5033 = vpack.c.bf16 %v4988, %v4986
        %v5034 = vpack.c.bf16 %v4993, %v4991
        %v5035 = vpack.c.bf16 %v4998, %v4996
        %v5036 = vpack.c.bf16 %v5003, %v5001
        %v5037 = vpack.c.bf16 %v5008, %v5006
        %v5038 = vpack.c.bf16 %v5013, %v5011
        %v5039 = vpack.c.bf16 %v5018, %v5016
        %v5040 = vpack.c.bf16 %v5023, %v5021
        %v5041 = vpack.c.bf16 %v5028, %v5026
        %v5042 = vld [vmem:[%s8] sm:$0xf]
        %v5043 = vld [vmem:[%s8 + $0x4] sm:$0xf]
        %v5044 = vld [vmem:[%s8 + $0x8] sm:$0xf]
        %v5045 = vld [vmem:[%s8 + $0xc] sm:$0xf]
        %v5046 = vld [vmem:[%s497] sm:$0xff]
        %v5048 = vrot.slane %v5046, 1
        %v5049 = vrot.slane %v5046, 2
        %v5050 = vrot.slane %v5046, 3
        %v5051 = vrot.slane %v5046, 4
        %v5052 = vrot.slane %v5046, 5
        %v5053 = vrot.slane %v5046, 6
        %v5054 = vrot.slane %v5046, 7
        %v5055 = vperm.slane %v5046, 0
        %v5056 = vperm.slane %v5048, 0
        %v5057 = vperm.slane %v5049, 0
        %v5058 = vperm.slane %v5050, 0
        %v5059 = vperm.slane %v5051, 0
        %v5060 = vperm.slane %v5052, 0
        %v5061 = vperm.slane %v5053, 0
        %v5062 = vperm.slane %v5054, 0
        %v5071 = vld [vmem:[%s502] sm:$0xff]
        %v5072 = vld [vmem:[%s502 + $0x8] sm:$0xff]
        %v5073 = vld [vmem:[%s502 + $0x10] sm:$0xff]
        %v5078 = vunpack.c.l.b16 %v5042
        %v5079 = vunpack.c.l.b16 %v5043
        %v5080 = vunpack.c.l.b16 %v5044
        %v5081 = vunpack.c.l.b16 %v5045
        %v5082 = vpack.c.b16 %v5079, %v5078
        %v5083 = vpack.c.b16 %v5081, %v5080
        %v5087 = vsel %vm4924, %v5030, 0
        %v5090 = vsel %vm4924, %v5031, 0
        %v5093 = vsel %vm4924, %v5032, 0
        %v5096 = vsel %vm4924, %v5033, 0
        %v5099 = vsel %vm4924, %v5034, 0
        %v5102 = vsel %vm4924, %v5035, 0
        %v5105 = vsel %vm4924, %v5036, 0
        %v5108 = vsel %vm4924, %v5037, 0
        %v5111 = vsel %vm4924, %v5038, 0
        %v5114 = vsel %vm4924, %v5039, 0
        %v5117 = vsel %vm4924, %v5040, 0
        %v5120 = vsel %vm4924, %v5041, 0
        %5122 = vmatpush.bf16.msra.mxu0 0
        %5123 = vmatpush.bf16.msra.mxu0 0
        %5124 = vmatpush.bf16.msra.mxu0 0
        %5125 = vmatpush.bf16.msra.mxu0 0
        %5126 = vmatpush.bf16.msra.mxu0 0
        %5127 = vmatpush.bf16.msra.mxu0 0
        %5128 = vmatpush.bf16.msra.mxu0 %v5083
        %5129 = vmatpush.bf16.msra.mxu0 %v5082
        %5130 = vmatmul.bf16.gmra.mxu0 %v5087
        %v5131 = vpop.f32.mrf.mxu0
        %v5132 = vadd.f32 %v5055, %v5131
        %v5133 = vpop.f32.mrf.mxu0
        %v5134 = vadd.f32 %v5055, %v5133
        %5135 = vmatmul.bf16.gmra.mxu0 %v5090
        %v5136 = vpop.f32.mrf.mxu0
        %v5137 = vadd.f32 %v5055, %v5136
        %v5138 = vpop.f32.mrf.mxu0
        %v5139 = vadd.f32 %v5056, %v5138
        %5140 = vmatmul.bf16.gmra.mxu0 %v5093
        %v5141 = vpop.f32.mrf.mxu0
        %v5142 = vadd.f32 %v5056, %v5141
        %v5143 = vpop.f32.mrf.mxu0
        %v5144 = vadd.f32 %v5056, %v5143
        %5145 = vmatmul.bf16.gmra.mxu0 %v5096
        %v5146 = vpop.f32.mrf.mxu0
        %v5147 = vadd.f32 %v5057, %v5146
        %v5148 = vpop.f32.mrf.mxu0
        %v5149 = vadd.f32 %v5057, %v5148
        %5150 = vmatmul.bf16.gmra.mxu0 %v5099
        %v5151 = vpop.f32.mrf.mxu0
        %v5152 = vadd.f32 %v5057, %v5151
        %v5153 = vpop.f32.mrf.mxu0
        %v5154 = vadd.f32 %v5058, %v5153
        %5155 = vmatmul.bf16.gmra.mxu0 %v5102
        %v5156 = vpop.f32.mrf.mxu0
        %v5157 = vadd.f32 %v5058, %v5156
        %v5158 = vpop.f32.mrf.mxu0
        %v5159 = vadd.f32 %v5058, %v5158
        %5160 = vmatmul.bf16.gmra.mxu0 %v5105
        %v5161 = vpop.f32.mrf.mxu0
        %v5162 = vadd.f32 %v5059, %v5161
        %v5163 = vpop.f32.mrf.mxu0
        %v5164 = vadd.f32 %v5059, %v5163
        %5165 = vmatmul.bf16.gmra.mxu0 %v5108
        %v5166 = vpop.f32.mrf.mxu0
        %v5167 = vadd.f32 %v5059, %v5166
        %v5168 = vpop.f32.mrf.mxu0
        %v5169 = vadd.f32 %v5060, %v5168
        %5170 = vmatmul.bf16.gmra.mxu0 %v5111
        %v5171 = vpop.f32.mrf.mxu0
        %v5172 = vadd.f32 %v5060, %v5171
        %v5173 = vpop.f32.mrf.mxu0
        %v5174 = vadd.f32 %v5060, %v5173
        %5175 = vmatmul.bf16.gmra.mxu0 %v5114
        %v5176 = vpop.f32.mrf.mxu0
        %v5177 = vadd.f32 %v5061, %v5176
        %v5178 = vpop.f32.mrf.mxu0
        %v5179 = vadd.f32 %v5061, %v5178
        %5180 = vmatmul.bf16.gmra.mxu0 %v5117
        %v5181 = vpop.f32.mrf.mxu0
        %v5182 = vadd.f32 %v5061, %v5181
        %v5183 = vpop.f32.mrf.mxu0
        %v5184 = vadd.f32 %v5062, %v5183
        %5185 = vmatmul.bf16.gmra.mxu0 %v5120
        %v5186 = vpop.f32.mrf.mxu0
        %v5187 = vadd.f32 %v5062, %v5186
        %v5188 = vpop.f32.mrf.mxu0
        %v5189 = vadd.f32 %v5062, %v5188
        %5190 = vdwg.mxu0
        %v5191 = vadd.f32 %v5132, %v5071
        %v5192 = vadd.f32 %v5134, %v5072
        %v5193 = vadd.f32 %v5137, %v5073
        %v5194 = vadd.f32 %v5139, %v5071
        %v5195 = vadd.f32 %v5142, %v5072
        %v5196 = vadd.f32 %v5144, %v5073
        %v5197 = vadd.f32 %v5147, %v5071
        %v5198 = vadd.f32 %v5149, %v5072
        %v5199 = vadd.f32 %v5152, %v5073
        %v5200 = vadd.f32 %v5154, %v5071
        %v5201 = vadd.f32 %v5157, %v5072
        %v5202 = vadd.f32 %v5159, %v5073
        %v5203 = vadd.f32 %v5162, %v5071
        %v5204 = vadd.f32 %v5164, %v5072
        %v5205 = vadd.f32 %v5167, %v5073
        %v5206 = vadd.f32 %v5169, %v5071
        %v5207 = vadd.f32 %v5172, %v5072
        %v5208 = vadd.f32 %v5174, %v5073
        %v5209 = vadd.f32 %v5177, %v5071
        %v5210 = vadd.f32 %v5179, %v5072
        %v5211 = vadd.f32 %v5182, %v5073
        %v5212 = vadd.f32 %v5184, %v5071
        %v5213 = vadd.f32 %v5187, %v5072
        %v5214 = vadd.f32 %v5189, %v5073
        %v5215 = vld [vmem:[%s9] sm:$0x1]
        %v5217 = vperm.slane %v5215, 0
        %v5219 = vadd.f32 %v5191, %v5217
        %v5220 = vadd.f32 %v5192, %v5217
        %v5221 = vadd.f32 %v5193, %v5217
        %v5222 = vadd.f32 %v5194, %v5217
        %v5223 = vadd.f32 %v5195, %v5217
        %v5224 = vadd.f32 %v5196, %v5217
        %v5225 = vadd.f32 %v5197, %v5217
        %v5226 = vadd.f32 %v5198, %v5217
        %v5227 = vadd.f32 %v5199, %v5217
        %v5228 = vadd.f32 %v5200, %v5217
        %v5229 = vadd.f32 %v5201, %v5217
        %v5230 = vadd.f32 %v5202, %v5217
        %v5231 = vadd.f32 %v5203, %v5217
        %v5232 = vadd.f32 %v5204, %v5217
        %v5233 = vadd.f32 %v5205, %v5217
        %v5234 = vadd.f32 %v5206, %v5217
        %v5235 = vadd.f32 %v5207, %v5217
        %v5236 = vadd.f32 %v5208, %v5217
        %v5237 = vadd.f32 %v5209, %v5217
        %v5238 = vadd.f32 %v5210, %v5217
        %v5239 = vadd.f32 %v5211, %v5217
        %v5240 = vadd.f32 %v5212, %v5217
        %v5241 = vadd.f32 %v5213, %v5217
        %v5242 = vadd.f32 %v5214, %v5217
        %v5243 = vpack.c.bf16 %v5220, %v5219
        %v5244 = vpack.c.bf16 %v5222, %v5221
        %v5245 = vpack.c.bf16 %v5224, %v5223
        %v5246 = vpack.c.bf16 %v5226, %v5225
        %v5247 = vpack.c.bf16 %v5228, %v5227
        %v5248 = vpack.c.bf16 %v5230, %v5229
        %v5249 = vpack.c.bf16 %v5232, %v5231
        %v5250 = vpack.c.bf16 %v5234, %v5233
        %v5251 = vpack.c.bf16 %v5236, %v5235
        %v5252 = vpack.c.bf16 %v5238, %v5237
        %v5253 = vpack.c.bf16 %v5240, %v5239
        %v5254 = vpack.c.bf16 %v5242, %v5241
        %v5255 = vld [vmem:[%s11] sm:$0xff]
        %v5256 = vld [vmem:[%s11 + $0x8] sm:$0xff]
        %v5257 = vld [vmem:[%s11 + $0x10] sm:$0xff]
        %v5258 = vld [vmem:[%s11 + $0x18] sm:$0xff]
        %v5259 = vld [vmem:[%s12] sm:$0x3]
        %v5261 = vperm.slane %v5259, 0
        %v5262 = vperm.slane %v5259, 1
        %v5269 = vunpack.c.l.b16 %v5255
        %v5270 = vunpack.c.h.b16 %v5255
        %v5271 = vunpack.c.l.b16 %v5256
        %v5272 = vunpack.c.h.b16 %v5256
        %v5273 = vunpack.c.l.b16 %v5257
        %v5274 = vunpack.c.h.b16 %v5257
        %v5275 = vunpack.c.l.b16 %v5258
        %v5276 = vunpack.c.h.b16 %v5258
        %v5277 = vpack.c.b16 %v5271, %v5269
        %v5278 = vpack.c.b16 %v5272, %v5270
        %v5279 = vpack.c.b16 %v5275, %v5273
        %v5280 = vpack.c.b16 %v5276, %v5274
        %v5286 = vsel %vm4924, %v5243, 0
        %v5289 = vsel %vm4924, %v5244, 0
        %v5292 = vsel %vm4924, %v5245, 0
        %v5295 = vsel %vm4924, %v5246, 0
        %v5298 = vsel %vm4924, %v5247, 0
        %v5301 = vsel %vm4924, %v5248, 0
        %v5304 = vsel %vm4924, %v5249, 0
        %v5307 = vsel %vm4924, %v5250, 0
        %v5310 = vsel %vm4924, %v5251, 0
        %v5313 = vsel %vm4924, %v5252, 0
        %v5316 = vsel %vm4924, %v5253, 0
        %v5319 = vsel %vm4924, %v5254, 0
        %5321 = vmatpush.bf16.msra.mxu0 0
        %5322 = vmatpush.bf16.msra.mxu0 0
        %5323 = vmatpush.bf16.msra.mxu0 0
        %5324 = vmatpush.bf16.msra.mxu0 0
        %5325 = vmatpush.bf16.msra.mxu0 0
        %5326 = vmatpush.bf16.msra.mxu0 0
        %5327 = vmatpush.bf16.msra.mxu0 %v5279
        %5328 = vmatpush.bf16.msra.mxu0 %v5277
        %5329 = vmatmul.bf16.gmra.mxu0 %v5286
        %v5330 = vpop.f32.mrf.mxu0
        %v5331 = vadd.f32 %v5261, %v5330
        %v5332 = vpop.f32.mrf.mxu0
        %v5333 = vadd.f32 %v5261, %v5332
        %5334 = vmatmul.bf16.gmra.mxu0 %v5289
        %v5335 = vpop.f32.mrf.mxu0
        %v5336 = vadd.f32 %v5261, %v5335
        %v5337 = vpop.f32.mrf.mxu0
        %v5338 = vadd.f32 %v5261, %v5337
        %5339 = vmatmul.bf16.gmra.mxu0 %v5292
        %v5340 = vpop.f32.mrf.mxu0
        %v5341 = vadd.f32 %v5261, %v5340
        %v5342 = vpop.f32.mrf.mxu0
        %v5343 = vadd.f32 %v5261, %v5342
        %5344 = vmatmul.bf16.gmra.mxu0 %v5295
        %v5345 = vpop.f32.mrf.mxu0
        %v5346 = vadd.f32 %v5261, %v5345
        %v5347 = vpop.f32.mrf.mxu0
        %v5348 = vadd.f32 %v5261, %v5347
        %5349 = vmatmul.bf16.gmra.mxu0 %v5298
        %v5350 = vpop.f32.mrf.mxu0
        %v5351 = vadd.f32 %v5261, %v5350
        %v5352 = vpop.f32.mrf.mxu0
        %v5353 = vadd.f32 %v5261, %v5352
        %5354 = vmatmul.bf16.gmra.mxu0 %v5301
        %v5355 = vpop.f32.mrf.mxu0
        %v5356 = vadd.f32 %v5261, %v5355
        %v5357 = vpop.f32.mrf.mxu0
        %v5358 = vadd.f32 %v5261, %v5357
        %5359 = vmatmul.bf16.gmra.mxu0 %v5304
        %v5360 = vpop.f32.mrf.mxu0
        %v5361 = vadd.f32 %v5261, %v5360
        %v5362 = vpop.f32.mrf.mxu0
        %v5363 = vadd.f32 %v5261, %v5362
        %5364 = vmatmul.bf16.gmra.mxu0 %v5307
        %v5365 = vpop.f32.mrf.mxu0
        %v5366 = vadd.f32 %v5261, %v5365
        %v5367 = vpop.f32.mrf.mxu0
        %v5368 = vadd.f32 %v5261, %v5367
        %5369 = vmatmul.bf16.gmra.mxu0 %v5310
        %v5370 = vpop.f32.mrf.mxu0
        %v5371 = vadd.f32 %v5261, %v5370
        %v5372 = vpop.f32.mrf.mxu0
        %v5373 = vadd.f32 %v5261, %v5372
        %5374 = vmatmul.bf16.gmra.mxu0 %v5313
        %v5375 = vpop.f32.mrf.mxu0
        %v5376 = vadd.f32 %v5261, %v5375
        %v5377 = vpop.f32.mrf.mxu0
        %v5378 = vadd.f32 %v5261, %v5377
        %5379 = vmatmul.bf16.gmra.mxu0 %v5316
        %v5380 = vpop.f32.mrf.mxu0
        %v5381 = vadd.f32 %v5261, %v5380
        %v5382 = vpop.f32.mrf.mxu0
        %v5383 = vadd.f32 %v5261, %v5382
        %5384 = vmatmul.bf16.gmra.mxu0 %v5319
        %v5385 = vpop.f32.mrf.mxu0
        %v5386 = vadd.f32 %v5261, %v5385
        %v5387 = vpop.f32.mrf.mxu0
        %v5388 = vadd.f32 %v5261, %v5387
        %5389 = vdwg.mxu0
        %5390 = vmatpush.bf16.msra.mxu0 0
        %5391 = vmatpush.bf16.msra.mxu0 0
        %5392 = vmatpush.bf16.msra.mxu0 0
        %5393 = vmatpush.bf16.msra.mxu0 0
        %5394 = vmatpush.bf16.msra.mxu0 0
        %5395 = vmatpush.bf16.msra.mxu0 0
        %5396 = vmatpush.bf16.msra.mxu0 %v5280
        %5397 = vmatpush.bf16.msra.mxu0 %v5278
        %5398 = vmatmul.bf16.gmra.mxu0 %v5286
        %v5399 = vpop.f32.mrf.mxu0
        %v5400 = vadd.f32 %v5262, %v5399
        %v5401 = vpop.f32.mrf.mxu0
        %v5402 = vadd.f32 %v5262, %v5401
        %5403 = vmatmul.bf16.gmra.mxu0 %v5289
        %v5404 = vpop.f32.mrf.mxu0
        %v5405 = vadd.f32 %v5262, %v5404
        %v5406 = vpop.f32.mrf.mxu0
        %v5407 = vadd.f32 %v5262, %v5406
        %5408 = vmatmul.bf16.gmra.mxu0 %v5292
        %v5409 = vpop.f32.mrf.mxu0
        %v5410 = vadd.f32 %v5262, %v5409
        %v5411 = vpop.f32.mrf.mxu0
        %v5412 = vadd.f32 %v5262, %v5411
        %5413 = vmatmul.bf16.gmra.mxu0 %v5295
        %v5414 = vpop.f32.mrf.mxu0
        %v5415 = vadd.f32 %v5262, %v5414
        %v5416 = vpop.f32.mrf.mxu0
        %v5417 = vadd.f32 %v5262, %v5416
        %5418 = vmatmul.bf16.gmra.mxu0 %v5298
        %v5419 = vpop.f32.mrf.mxu0
        %v5420 = vadd.f32 %v5262, %v5419
        %v5421 = vpop.f32.mrf.mxu0
        %v5422 = vadd.f32 %v5262, %v5421
        %5423 = vmatmul.bf16.gmra.mxu0 %v5301
        %v5424 = vpop.f32.mrf.mxu0
        %v5425 = vadd.f32 %v5262, %v5424
        %v5426 = vpop.f32.mrf.mxu0
        %v5427 = vadd.f32 %v5262, %v5426
        %5428 = vmatmul.bf16.gmra.mxu0 %v5304
        %v5429 = vpop.f32.mrf.mxu0
        %v5430 = vadd.f32 %v5262, %v5429
        %v5431 = vpop.f32.mrf.mxu0
        %v5432 = vadd.f32 %v5262, %v5431
        %5433 = vmatmul.bf16.gmra.mxu0 %v5307
        %v5434 = vpop.f32.mrf.mxu0
        %v5435 = vadd.f32 %v5262, %v5434
        %v5436 = vpop.f32.mrf.mxu0
        %v5437 = vadd.f32 %v5262, %v5436
        %5438 = vmatmul.bf16.gmra.mxu0 %v5310
        %v5439 = vpop.f32.mrf.mxu0
        %v5440 = vadd.f32 %v5262, %v5439
        %v5441 = vpop.f32.mrf.mxu0
        %v5442 = vadd.f32 %v5262, %v5441
        %5443 = vmatmul.bf16.gmra.mxu0 %v5313
        %v5444 = vpop.f32.mrf.mxu0
        %v5445 = vadd.f32 %v5262, %v5444
        %v5446 = vpop.f32.mrf.mxu0
        %v5447 = vadd.f32 %v5262, %v5446
        %5448 = vmatmul.bf16.gmra.mxu0 %v5316
        %v5449 = vpop.f32.mrf.mxu0
        %v5450 = vadd.f32 %v5262, %v5449
        %v5451 = vpop.f32.mrf.mxu0
        %v5452 = vadd.f32 %v5262, %v5451
        %5453 = vmatmul.bf16.gmra.mxu0 %v5319
        %v5454 = vpop.f32.mrf.mxu0
        %v5455 = vadd.f32 %v5262, %v5454
        %v5456 = vpop.f32.mrf.mxu0
        %v5457 = vadd.f32 %v5262, %v5456
        %5458 = vdwg.mxu0
        %v5459 = vld [vmem:[%s10] sm:$0x1]
        %v5461 = vperm.slane %v5459, 0
        %v5463 = vsub.f32 %v538, %v5461
        %v5464 = vsub.f32 %v543, %v5461
        %v5465 = vsub.f32 %v548, %v5461
        %v5466 = vsub.f32 %v553, %v5461
        %v5467 = vsub.f32 %v558, %v5461
        %v5468 = vsub.f32 %v563, %v5461
        %v5469 = vsub.f32 %v568, %v5461
        %v5470 = vsub.f32 %v573, %v5461
        %v5471 = vsub.f32 %v578, %v5461
        %v5472 = vsub.f32 %v583, %v5461
        %v5473 = vsub.f32 %v588, %v5461
        %v5474 = vsub.f32 %v593, %v5461
        %v5475 = vsub.f32 %v598, %v5461
        %v5476 = vsub.f32 %v603, %v5461
        %v5477 = vsub.f32 %v608, %v5461
        %v5478 = vsub.f32 %v613, %v5461
        %v5479 = vsub.f32 %v618, %v5461
        %v5480 = vsub.f32 %v623, %v5461
        %v5481 = vsub.f32 %v628, %v5461
        %v5482 = vsub.f32 %v633, %v5461
        %v5483 = vsub.f32 %v638, %v5461
        %v5484 = vsub.f32 %v643, %v5461
        %v5485 = vsub.f32 %v648, %v5461
        %v5486 = vsub.f32 %v653, %v5461
        %v5487 = vand.u32 2147483647, %v5463
        %v5488 = vand.u32 2147483647, %v5464
        %v5489 = vand.u32 2147483647, %v5465
        %v5490 = vand.u32 2147483647, %v5466
        %v5491 = vand.u32 2147483647, %v5467
        %v5492 = vand.u32 2147483647, %v5468
        %v5493 = vand.u32 2147483647, %v5469
        %v5494 = vand.u32 2147483647, %v5470
        %v5495 = vand.u32 2147483647, %v5471
        %v5496 = vand.u32 2147483647, %v5472
        %v5497 = vand.u32 2147483647, %v5473
        %v5498 = vand.u32 2147483647, %v5474
        %v5499 = vand.u32 2147483647, %v5475
        %v5500 = vand.u32 2147483647, %v5476
        %v5501 = vand.u32 2147483647, %v5477
        %v5502 = vand.u32 2147483647, %v5478
        %v5503 = vand.u32 2147483647, %v5479
        %v5504 = vand.u32 2147483647, %v5480
        %v5505 = vand.u32 2147483647, %v5481
        %v5506 = vand.u32 2147483647, %v5482
        %v5507 = vand.u32 2147483647, %v5483
        %v5508 = vand.u32 2147483647, %v5484
        %v5509 = vand.u32 2147483647, %v5485
        %v5510 = vand.u32 2147483647, %v5486
        %v5511 = vmax.f32 %v5487, 1e-08
        %v5512 = vmax.f32 %v5488, 1e-08
        %v5513 = vmax.f32 %v5489, 1e-08
        %v5514 = vmax.f32 %v5490, 1e-08
        %v5515 = vmax.f32 %v5491, 1e-08
        %v5516 = vmax.f32 %v5492, 1e-08
        %v5517 = vmax.f32 %v5493, 1e-08
        %v5518 = vmax.f32 %v5494, 1e-08
        %v5519 = vmax.f32 %v5495, 1e-08
        %v5520 = vmax.f32 %v5496, 1e-08
        %v5521 = vmax.f32 %v5497, 1e-08
        %v5522 = vmax.f32 %v5498, 1e-08
        %v5523 = vmax.f32 %v5499, 1e-08
        %v5524 = vmax.f32 %v5500, 1e-08
        %v5525 = vmax.f32 %v5501, 1e-08
        %v5526 = vmax.f32 %v5502, 1e-08
        %v5527 = vmax.f32 %v5503, 1e-08
        %v5528 = vmax.f32 %v5504, 1e-08
        %v5529 = vmax.f32 %v5505, 1e-08
        %v5530 = vmax.f32 %v5506, 1e-08
        %v5531 = vmax.f32 %v5507, 1e-08
        %v5532 = vmax.f32 %v5508, 1e-08
        %v5533 = vmax.f32 %v5509, 1e-08
        %v5534 = vmax.f32 %v5510, 1e-08
        %v5535 = vrcp.pop %v5511
        %v5536 = vmul.f32 %v5511, %v5535
        %v5537 = vsub.f32 1.0, %v5536
        %v5538 = vmul.f32 %v5535, %v5537
        %v5539 = vadd.f32 %v5535, %v5538
        %vm5540 = vweird.f32 %v5511
        %vm5541 = vweird.f32 %v5535
        %vm5542 = vmor %vm5540, %vm5541
        %v5543 = vsel %vm5542, %v5535, %v5539
        %v5544 = vand.u32 2147483647, %v5511
        %vm5545 = vcmp.eq.f32.partialorder %v5544, 8.507059e+37
        %v5546 = vand.u32 %v5511, 2147483648
        %v5547 = vor.u32 1.1754944e-38, %v5546
        %v5548 = vsel %vm5545, %v5547, %v5543
        %v5549 = vmul.f32 1.0, %v5548
        %v5550 = vrcp.pop %v5512
        %v5551 = vmul.f32 %v5512, %v5550
        %v5552 = vsub.f32 1.0, %v5551
        %v5553 = vmul.f32 %v5550, %v5552
        %v5554 = vadd.f32 %v5550, %v5553
        %vm5555 = vweird.f32 %v5512
        %vm5556 = vweird.f32 %v5550
        %vm5557 = vmor %vm5555, %vm5556
        %v5558 = vsel %vm5557, %v5550, %v5554
        %v5559 = vand.u32 2147483647, %v5512
        %vm5560 = vcmp.eq.f32.partialorder %v5559, 8.507059e+37
        %v5561 = vand.u32 %v5512, 2147483648
        %v5562 = vor.u32 1.1754944e-38, %v5561
        %v5563 = vsel %vm5560, %v5562, %v5558
        %v5564 = vmul.f32 1.0, %v5563
        %v5565 = vrcp.pop %v5513
        %v5566 = vmul.f32 %v5513, %v5565
        %v5567 = vsub.f32 1.0, %v5566
        %v5568 = vmul.f32 %v5565, %v5567
        %v5569 = vadd.f32 %v5565, %v5568
        %vm5570 = vweird.f32 %v5513
        %vm5571 = vweird.f32 %v5565
        %vm5572 = vmor %vm5570, %vm5571
        %v5573 = vsel %vm5572, %v5565, %v5569
        %v5574 = vand.u32 2147483647, %v5513
        %vm5575 = vcmp.eq.f32.partialorder %v5574, 8.507059e+37
        %v5576 = vand.u32 %v5513, 2147483648
        %v5577 = vor.u32 1.1754944e-38, %v5576
        %v5578 = vsel %vm5575, %v5577, %v5573
        %v5579 = vmul.f32 1.0, %v5578
        %v5580 = vrcp.pop %v5514
        %v5581 = vmul.f32 %v5514, %v5580
        %v5582 = vsub.f32 1.0, %v5581
        %v5583 = vmul.f32 %v5580, %v5582
        %v5584 = vadd.f32 %v5580, %v5583
        %vm5585 = vweird.f32 %v5514
        %vm5586 = vweird.f32 %v5580
        %vm5587 = vmor %vm5585, %vm5586
        %v5588 = vsel %vm5587, %v5580, %v5584
        %v5589 = vand.u32 2147483647, %v5514
        %vm5590 = vcmp.eq.f32.partialorder %v5589, 8.507059e+37
        %v5591 = vand.u32 %v5514, 2147483648
        %v5592 = vor.u32 1.1754944e-38, %v5591
        %v5593 = vsel %vm5590, %v5592, %v5588
        %v5594 = vmul.f32 1.0, %v5593
        %v5595 = vrcp.pop %v5515
        %v5596 = vmul.f32 %v5515, %v5595
        %v5597 = vsub.f32 1.0, %v5596
        %v5598 = vmul.f32 %v5595, %v5597
        %v5599 = vadd.f32 %v5595, %v5598
        %vm5600 = vweird.f32 %v5515
        %vm5601 = vweird.f32 %v5595
        %vm5602 = vmor %vm5600, %vm5601
        %v5603 = vsel %vm5602, %v5595, %v5599
        %v5604 = vand.u32 2147483647, %v5515
        %vm5605 = vcmp.eq.f32.partialorder %v5604, 8.507059e+37
        %v5606 = vand.u32 %v5515, 2147483648
        %v5607 = vor.u32 1.1754944e-38, %v5606
        %v5608 = vsel %vm5605, %v5607, %v5603
        %v5609 = vmul.f32 1.0, %v5608
        %v5610 = vrcp.pop %v5516
        %v5611 = vmul.f32 %v5516, %v5610
        %v5612 = vsub.f32 1.0, %v5611
        %v5613 = vmul.f32 %v5610, %v5612
        %v5614 = vadd.f32 %v5610, %v5613
        %vm5615 = vweird.f32 %v5516
        %vm5616 = vweird.f32 %v5610
        %vm5617 = vmor %vm5615, %vm5616
        %v5618 = vsel %vm5617, %v5610, %v5614
        %v5619 = vand.u32 2147483647, %v5516
        %vm5620 = vcmp.eq.f32.partialorder %v5619, 8.507059e+37
        %v5621 = vand.u32 %v5516, 2147483648
        %v5622 = vor.u32 1.1754944e-38, %v5621
        %v5623 = vsel %vm5620, %v5622, %v5618
        %v5624 = vmul.f32 1.0, %v5623
        %v5625 = vrcp.pop %v5517
        %v5626 = vmul.f32 %v5517, %v5625
        %v5627 = vsub.f32 1.0, %v5626
        %v5628 = vmul.f32 %v5625, %v5627
        %v5629 = vadd.f32 %v5625, %v5628
        %vm5630 = vweird.f32 %v5517
        %vm5631 = vweird.f32 %v5625
        %vm5632 = vmor %vm5630, %vm5631
        %v5633 = vsel %vm5632, %v5625, %v5629
        %v5634 = vand.u32 2147483647, %v5517
        %vm5635 = vcmp.eq.f32.partialorder %v5634, 8.507059e+37
        %v5636 = vand.u32 %v5517, 2147483648
        %v5637 = vor.u32 1.1754944e-38, %v5636
        %v5638 = vsel %vm5635, %v5637, %v5633
        %v5639 = vmul.f32 1.0, %v5638
        %v5640 = vrcp.pop %v5518
        %v5641 = vmul.f32 %v5518, %v5640
        %v5642 = vsub.f32 1.0, %v5641
        %v5643 = vmul.f32 %v5640, %v5642
        %v5644 = vadd.f32 %v5640, %v5643
        %vm5645 = vweird.f32 %v5518
        %vm5646 = vweird.f32 %v5640
        %vm5647 = vmor %vm5645, %vm5646
        %v5648 = vsel %vm5647, %v5640, %v5644
        %v5649 = vand.u32 2147483647, %v5518
        %vm5650 = vcmp.eq.f32.partialorder %v5649, 8.507059e+37
        %v5651 = vand.u32 %v5518, 2147483648
        %v5652 = vor.u32 1.1754944e-38, %v5651
        %v5653 = vsel %vm5650, %v5652, %v5648
        %v5654 = vmul.f32 1.0, %v5653
        %v5655 = vrcp.pop %v5519
        %v5656 = vmul.f32 %v5519, %v5655
        %v5657 = vsub.f32 1.0, %v5656
        %v5658 = vmul.f32 %v5655, %v5657
        %v5659 = vadd.f32 %v5655, %v5658
        %vm5660 = vweird.f32 %v5519
        %vm5661 = vweird.f32 %v5655
        %vm5662 = vmor %vm5660, %vm5661
        %v5663 = vsel %vm5662, %v5655, %v5659
        %v5664 = vand.u32 2147483647, %v5519
        %vm5665 = vcmp.eq.f32.partialorder %v5664, 8.507059e+37
        %v5666 = vand.u32 %v5519, 2147483648
        %v5667 = vor.u32 1.1754944e-38, %v5666
        %v5668 = vsel %vm5665, %v5667, %v5663
        %v5669 = vmul.f32 1.0, %v5668
        %v5670 = vrcp.pop %v5520
        %v5671 = vmul.f32 %v5520, %v5670
        %v5672 = vsub.f32 1.0, %v5671
        %v5673 = vmul.f32 %v5670, %v5672
        %v5674 = vadd.f32 %v5670, %v5673
        %vm5675 = vweird.f32 %v5520
        %vm5676 = vweird.f32 %v5670
        %vm5677 = vmor %vm5675, %vm5676
        %v5678 = vsel %vm5677, %v5670, %v5674
        %v5679 = vand.u32 2147483647, %v5520
        %vm5680 = vcmp.eq.f32.partialorder %v5679, 8.507059e+37
        %v5681 = vand.u32 %v5520, 2147483648
        %v5682 = vor.u32 1.1754944e-38, %v5681
        %v5683 = vsel %vm5680, %v5682, %v5678
        %v5684 = vmul.f32 1.0, %v5683
        %v5685 = vrcp.pop %v5521
        %v5686 = vmul.f32 %v5521, %v5685
        %v5687 = vsub.f32 1.0, %v5686
        %v5688 = vmul.f32 %v5685, %v5687
        %v5689 = vadd.f32 %v5685, %v5688
        %vm5690 = vweird.f32 %v5521
        %vm5691 = vweird.f32 %v5685
        %vm5692 = vmor %vm5690, %vm5691
        %v5693 = vsel %vm5692, %v5685, %v5689
        %v5694 = vand.u32 2147483647, %v5521
        %vm5695 = vcmp.eq.f32.partialorder %v5694, 8.507059e+37
        %v5696 = vand.u32 %v5521, 2147483648
        %v5697 = vor.u32 1.1754944e-38, %v5696
        %v5698 = vsel %vm5695, %v5697, %v5693
        %v5699 = vmul.f32 1.0, %v5698
        %v5700 = vrcp.pop %v5522
        %v5701 = vmul.f32 %v5522, %v5700
        %v5702 = vsub.f32 1.0, %v5701
        %v5703 = vmul.f32 %v5700, %v5702
        %v5704 = vadd.f32 %v5700, %v5703
        %vm5705 = vweird.f32 %v5522
        %vm5706 = vweird.f32 %v5700
        %vm5707 = vmor %vm5705, %vm5706
        %v5708 = vsel %vm5707, %v5700, %v5704
        %v5709 = vand.u32 2147483647, %v5522
        %vm5710 = vcmp.eq.f32.partialorder %v5709, 8.507059e+37
        %v5711 = vand.u32 %v5522, 2147483648
        %v5712 = vor.u32 1.1754944e-38, %v5711
        %v5713 = vsel %vm5710, %v5712, %v5708
        %v5714 = vmul.f32 1.0, %v5713
        %v5715 = vrcp.pop %v5523
        %v5716 = vmul.f32 %v5523, %v5715
        %v5717 = vsub.f32 1.0, %v5716
        %v5718 = vmul.f32 %v5715, %v5717
        %v5719 = vadd.f32 %v5715, %v5718
        %vm5720 = vweird.f32 %v5523
        %vm5721 = vweird.f32 %v5715
        %vm5722 = vmor %vm5720, %vm5721
        %v5723 = vsel %vm5722, %v5715, %v5719
        %v5724 = vand.u32 2147483647, %v5523
        %vm5725 = vcmp.eq.f32.partialorder %v5724, 8.507059e+37
        %v5726 = vand.u32 %v5523, 2147483648
        %v5727 = vor.u32 1.1754944e-38, %v5726
        %v5728 = vsel %vm5725, %v5727, %v5723
        %v5729 = vmul.f32 1.0, %v5728
        %v5730 = vrcp.pop %v5524
        %v5731 = vmul.f32 %v5524, %v5730
        %v5732 = vsub.f32 1.0, %v5731
        %v5733 = vmul.f32 %v5730, %v5732
        %v5734 = vadd.f32 %v5730, %v5733
        %vm5735 = vweird.f32 %v5524
        %vm5736 = vweird.f32 %v5730
        %vm5737 = vmor %vm5735, %vm5736
        %v5738 = vsel %vm5737, %v5730, %v5734
        %v5739 = vand.u32 2147483647, %v5524
        %vm5740 = vcmp.eq.f32.partialorder %v5739, 8.507059e+37
        %v5741 = vand.u32 %v5524, 2147483648
        %v5742 = vor.u32 1.1754944e-38, %v5741
        %v5743 = vsel %vm5740, %v5742, %v5738
        %v5744 = vmul.f32 1.0, %v5743
        %v5745 = vrcp.pop %v5525
        %v5746 = vmul.f32 %v5525, %v5745
        %v5747 = vsub.f32 1.0, %v5746
        %v5748 = vmul.f32 %v5745, %v5747
        %v5749 = vadd.f32 %v5745, %v5748
        %vm5750 = vweird.f32 %v5525
        %vm5751 = vweird.f32 %v5745
        %vm5752 = vmor %vm5750, %vm5751
        %v5753 = vsel %vm5752, %v5745, %v5749
        %v5754 = vand.u32 2147483647, %v5525
        %vm5755 = vcmp.eq.f32.partialorder %v5754, 8.507059e+37
        %v5756 = vand.u32 %v5525, 2147483648
        %v5757 = vor.u32 1.1754944e-38, %v5756
        %v5758 = vsel %vm5755, %v5757, %v5753
        %v5759 = vmul.f32 1.0, %v5758
        %v5760 = vrcp.pop %v5526
        %v5761 = vmul.f32 %v5526, %v5760
        %v5762 = vsub.f32 1.0, %v5761
        %v5763 = vmul.f32 %v5760, %v5762
        %v5764 = vadd.f32 %v5760, %v5763
        %vm5765 = vweird.f32 %v5526
        %vm5766 = vweird.f32 %v5760
        %vm5767 = vmor %vm5765, %vm5766
        %v5768 = vsel %vm5767, %v5760, %v5764
        %v5769 = vand.u32 2147483647, %v5526
        %vm5770 = vcmp.eq.f32.partialorder %v5769, 8.507059e+37
        %v5771 = vand.u32 %v5526, 2147483648
        %v5772 = vor.u32 1.1754944e-38, %v5771
        %v5773 = vsel %vm5770, %v5772, %v5768
        %v5774 = vmul.f32 1.0, %v5773
        %v5775 = vrcp.pop %v5527
        %v5776 = vmul.f32 %v5527, %v5775
        %v5777 = vsub.f32 1.0, %v5776
        %v5778 = vmul.f32 %v5775, %v5777
        %v5779 = vadd.f32 %v5775, %v5778
        %vm5780 = vweird.f32 %v5527
        %vm5781 = vweird.f32 %v5775
        %vm5782 = vmor %vm5780, %vm5781
        %v5783 = vsel %vm5782, %v5775, %v5779
        %v5784 = vand.u32 2147483647, %v5527
        %vm5785 = vcmp.eq.f32.partialorder %v5784, 8.507059e+37
        %v5786 = vand.u32 %v5527, 2147483648
        %v5787 = vor.u32 1.1754944e-38, %v5786
        %v5788 = vsel %vm5785, %v5787, %v5783
        %v5789 = vmul.f32 1.0, %v5788
        %v5790 = vrcp.pop %v5528
        %v5791 = vmul.f32 %v5528, %v5790
        %v5792 = vsub.f32 1.0, %v5791
        %v5793 = vmul.f32 %v5790, %v5792
        %v5794 = vadd.f32 %v5790, %v5793
        %vm5795 = vweird.f32 %v5528
        %vm5796 = vweird.f32 %v5790
        %vm5797 = vmor %vm5795, %vm5796
        %v5798 = vsel %vm5797, %v5790, %v5794
        %v5799 = vand.u32 2147483647, %v5528
        %vm5800 = vcmp.eq.f32.partialorder %v5799, 8.507059e+37
        %v5801 = vand.u32 %v5528, 2147483648
        %v5802 = vor.u32 1.1754944e-38, %v5801
        %v5803 = vsel %vm5800, %v5802, %v5798
        %v5804 = vmul.f32 1.0, %v5803
        %v5805 = vrcp.pop %v5529
        %v5806 = vmul.f32 %v5529, %v5805
        %v5807 = vsub.f32 1.0, %v5806
        %v5808 = vmul.f32 %v5805, %v5807
        %v5809 = vadd.f32 %v5805, %v5808
        %vm5810 = vweird.f32 %v5529
        %vm5811 = vweird.f32 %v5805
        %vm5812 = vmor %vm5810, %vm5811
        %v5813 = vsel %vm5812, %v5805, %v5809
        %v5814 = vand.u32 2147483647, %v5529
        %vm5815 = vcmp.eq.f32.partialorder %v5814, 8.507059e+37
        %v5816 = vand.u32 %v5529, 2147483648
        %v5817 = vor.u32 1.1754944e-38, %v5816
        %v5818 = vsel %vm5815, %v5817, %v5813
        %v5819 = vmul.f32 1.0, %v5818
        %v5820 = vrcp.pop %v5530
        %v5821 = vmul.f32 %v5530, %v5820
        %v5822 = vsub.f32 1.0, %v5821
        %v5823 = vmul.f32 %v5820, %v5822
        %v5824 = vadd.f32 %v5820, %v5823
        %vm5825 = vweird.f32 %v5530
        %vm5826 = vweird.f32 %v5820
        %vm5827 = vmor %vm5825, %vm5826
        %v5828 = vsel %vm5827, %v5820, %v5824
        %v5829 = vand.u32 2147483647, %v5530
        %vm5830 = vcmp.eq.f32.partialorder %v5829, 8.507059e+37
        %v5831 = vand.u32 %v5530, 2147483648
        %v5832 = vor.u32 1.1754944e-38, %v5831
        %v5833 = vsel %vm5830, %v5832, %v5828
        %v5834 = vmul.f32 1.0, %v5833
        %v5835 = vrcp.pop %v5531
        %v5836 = vmul.f32 %v5531, %v5835
        %v5837 = vsub.f32 1.0, %v5836
        %v5838 = vmul.f32 %v5835, %v5837
        %v5839 = vadd.f32 %v5835, %v5838
        %vm5840 = vweird.f32 %v5531
        %vm5841 = vweird.f32 %v5835
        %vm5842 = vmor %vm5840, %vm5841
        %v5843 = vsel %vm5842, %v5835, %v5839
        %v5844 = vand.u32 2147483647, %v5531
        %vm5845 = vcmp.eq.f32.partialorder %v5844, 8.507059e+37
        %v5846 = vand.u32 %v5531, 2147483648
        %v5847 = vor.u32 1.1754944e-38, %v5846
        %v5848 = vsel %vm5845, %v5847, %v5843
        %v5849 = vmul.f32 1.0, %v5848
        %v5850 = vrcp.pop %v5532
        %v5851 = vmul.f32 %v5532, %v5850
        %v5852 = vsub.f32 1.0, %v5851
        %v5853 = vmul.f32 %v5850, %v5852
        %v5854 = vadd.f32 %v5850, %v5853
        %vm5855 = vweird.f32 %v5532
        %vm5856 = vweird.f32 %v5850
        %vm5857 = vmor %vm5855, %vm5856
        %v5858 = vsel %vm5857, %v5850, %v5854
        %v5859 = vand.u32 2147483647, %v5532
        %vm5860 = vcmp.eq.f32.partialorder %v5859, 8.507059e+37
        %v5861 = vand.u32 %v5532, 2147483648
        %v5862 = vor.u32 1.1754944e-38, %v5861
        %v5863 = vsel %vm5860, %v5862, %v5858
        %v5864 = vmul.f32 1.0, %v5863
        %v5865 = vrcp.pop %v5533
        %v5866 = vmul.f32 %v5533, %v5865
        %v5867 = vsub.f32 1.0, %v5866
        %v5868 = vmul.f32 %v5865, %v5867
        %v5869 = vadd.f32 %v5865, %v5868
        %vm5870 = vweird.f32 %v5533
        %vm5871 = vweird.f32 %v5865
        %vm5872 = vmor %vm5870, %vm5871
        %v5873 = vsel %vm5872, %v5865, %v5869
        %v5874 = vand.u32 2147483647, %v5533
        %vm5875 = vcmp.eq.f32.partialorder %v5874, 8.507059e+37
        %v5876 = vand.u32 %v5533, 2147483648
        %v5877 = vor.u32 1.1754944e-38, %v5876
        %v5878 = vsel %vm5875, %v5877, %v5873
        %v5879 = vmul.f32 1.0, %v5878
        %v5880 = vrcp.pop %v5534
        %v5881 = vmul.f32 %v5534, %v5880
        %v5882 = vsub.f32 1.0, %v5881
        %v5883 = vmul.f32 %v5880, %v5882
        %v5884 = vadd.f32 %v5880, %v5883
        %vm5885 = vweird.f32 %v5534
        %vm5886 = vweird.f32 %v5880
        %vm5887 = vmor %vm5885, %vm5886
        %v5888 = vsel %vm5887, %v5880, %v5884
        %v5889 = vand.u32 2147483647, %v5534
        %vm5890 = vcmp.eq.f32.partialorder %v5889, 8.507059e+37
        %v5891 = vand.u32 %v5534, 2147483648
        %v5892 = vor.u32 1.1754944e-38, %v5891
        %v5893 = vsel %vm5890, %v5892, %v5888
        %v5894 = vmul.f32 1.0, %v5893
        %vm5895 = vcmask 64512
        %v5896 = vsel %vm5895, %v5549, -inf
        %5897 = vmax.xlane.f32.xlu0 %v5896
        %v5898 = vpop.xlane.xlu0 %5897
        %v5899 = vsel %vm5895, %v5564, -inf
        %5900 = vmax.xlane.f32.xlu0 %v5899
        %v5901 = vpop.xlane.xlu0 %5900
        %v5902 = vsel %vm5895, %v5579, -inf
        %5903 = vmax.xlane.f32.xlu0 %v5902
        %v5904 = vpop.xlane.xlu0 %5903
        %v5905 = vsel %vm5895, %v5594, -inf
        %5906 = vmax.xlane.f32.xlu0 %v5905
        %v5907 = vpop.xlane.xlu0 %5906
        %v5908 = vsel %vm5895, %v5609, -inf
        %5909 = vmax.xlane.f32.xlu0 %v5908
        %v5910 = vpop.xlane.xlu0 %5909
        %v5911 = vsel %vm5895, %v5624, -inf
        %5912 = vmax.xlane.f32.xlu0 %v5911
        %v5913 = vpop.xlane.xlu0 %5912
        %v5914 = vsel %vm5895, %v5639, -inf
        %5915 = vmax.xlane.f32.xlu0 %v5914
        %v5916 = vpop.xlane.xlu0 %5915
        %v5917 = vsel %vm5895, %v5654, -inf
        %5918 = vmax.xlane.f32.xlu0 %v5917
        %v5919 = vpop.xlane.xlu0 %5918
        %v5920 = vsel %vm5895, %v5669, -inf
        %5921 = vmax.xlane.f32.xlu0 %v5920
        %v5922 = vpop.xlane.xlu0 %5921
        %v5923 = vsel %vm5895, %v5684, -inf
        %5924 = vmax.xlane.f32.xlu0 %v5923
        %v5925 = vpop.xlane.xlu0 %5924
        %v5926 = vsel %vm5895, %v5699, -inf
        %5927 = vmax.xlane.f32.xlu0 %v5926
        %v5928 = vpop.xlane.xlu0 %5927
        %v5929 = vsel %vm5895, %v5714, -inf
        %5930 = vmax.xlane.f32.xlu0 %v5929
        %v5931 = vpop.xlane.xlu0 %5930
        %v5932 = vsel %vm5895, %v5729, -inf
        %5933 = vmax.xlane.f32.xlu0 %v5932
        %v5934 = vpop.xlane.xlu0 %5933
        %v5935 = vsel %vm5895, %v5744, -inf
        %5936 = vmax.xlane.f32.xlu0 %v5935
        %v5937 = vpop.xlane.xlu0 %5936
        %v5938 = vsel %vm5895, %v5759, -inf
        %5939 = vmax.xlane.f32.xlu0 %v5938
        %v5940 = vpop.xlane.xlu0 %5939
        %v5941 = vsel %vm5895, %v5774, -inf
        %5942 = vmax.xlane.f32.xlu0 %v5941
        %v5943 = vpop.xlane.xlu0 %5942
        %v5944 = vsel %vm5895, %v5789, -inf
        %5945 = vmax.xlane.f32.xlu0 %v5944
        %v5946 = vpop.xlane.xlu0 %5945
        %v5947 = vsel %vm5895, %v5804, -inf
        %5948 = vmax.xlane.f32.xlu0 %v5947
        %v5949 = vpop.xlane.xlu0 %5948
        %v5950 = vsel %vm5895, %v5819, -inf
        %5951 = vmax.xlane.f32.xlu0 %v5950
        %v5952 = vpop.xlane.xlu0 %5951
        %v5953 = vsel %vm5895, %v5834, -inf
        %5954 = vmax.xlane.f32.xlu0 %v5953
        %v5955 = vpop.xlane.xlu0 %5954
        %v5956 = vsel %vm5895, %v5849, -inf
        %5957 = vmax.xlane.f32.xlu0 %v5956
        %v5958 = vpop.xlane.xlu0 %5957
        %v5959 = vsel %vm5895, %v5864, -inf
        %5960 = vmax.xlane.f32.xlu0 %v5959
        %v5961 = vpop.xlane.xlu0 %5960
        %v5962 = vsel %vm5895, %v5879, -inf
        %5963 = vmax.xlane.f32.xlu0 %v5962
        %v5964 = vpop.xlane.xlu0 %5963
        %v5965 = vsel %vm5895, %v5894, -inf
        %5966 = vmax.xlane.f32.xlu0 %v5965
        %v5967 = vpop.xlane.xlu0 %5966
        %v5968 = vsub.f32 %v5549, %v5898
        %v5969 = vsub.f32 %v5564, %v5901
        %v5970 = vsub.f32 %v5579, %v5904
        %v5971 = vsub.f32 %v5594, %v5907
        %v5972 = vsub.f32 %v5609, %v5910
        %v5973 = vsub.f32 %v5624, %v5913
        %v5974 = vsub.f32 %v5639, %v5916
        %v5975 = vsub.f32 %v5654, %v5919
        %v5976 = vsub.f32 %v5669, %v5922
        %v5977 = vsub.f32 %v5684, %v5925
        %v5978 = vsub.f32 %v5699, %v5928
        %v5979 = vsub.f32 %v5714, %v5931
        %v5980 = vsub.f32 %v5729, %v5934
        %v5981 = vsub.f32 %v5744, %v5937
        %v5982 = vsub.f32 %v5759, %v5940
        %v5983 = vsub.f32 %v5774, %v5943
        %v5984 = vsub.f32 %v5789, %v5946
        %v5985 = vsub.f32 %v5804, %v5949
        %v5986 = vsub.f32 %v5819, %v5952
        %v5987 = vsub.f32 %v5834, %v5955
        %v5988 = vsub.f32 %v5849, %v5958
        %v5989 = vsub.f32 %v5864, %v5961
        %v5990 = vsub.f32 %v5879, %v5964
        %v5991 = vsub.f32 %v5894, %v5967
        %v5992 = vmul.f32 %v5968, 1.442695
        %v5993 = vpow.pop %v5992
        %v5994 = vmul.f32 %v5969, 1.442695
        %v5995 = vpow.pop %v5994
        %v5996 = vmul.f32 %v5970, 1.442695
        %v5997 = vpow.pop %v5996
        %v5998 = vmul.f32 %v5971, 1.442695
        %v5999 = vpow.pop %v5998
        %v6000 = vmul.f32 %v5972, 1.442695
        %v6001 = vpow.pop %v6000
        %v6002 = vmul.f32 %v5973, 1.442695
        %v6003 = vpow.pop %v6002
        %v6004 = vmul.f32 %v5974, 1.442695
        %v6005 = vpow.pop %v6004
        %v6006 = vmul.f32 %v5975, 1.442695
        %v6007 = vpow.pop %v6006
        %v6008 = vmul.f32 %v5976, 1.442695
        %v6009 = vpow.pop %v6008
        %v6010 = vmul.f32 %v5977, 1.442695
        %v6011 = vpow.pop %v6010
        %v6012 = vmul.f32 %v5978, 1.442695
        %v6013 = vpow.pop %v6012
        %v6014 = vmul.f32 %v5979, 1.442695
        %v6015 = vpow.pop %v6014
        %v6016 = vmul.f32 %v5980, 1.442695
        %v6017 = vpow.pop %v6016
        %v6018 = vmul.f32 %v5981, 1.442695
        %v6019 = vpow.pop %v6018
        %v6020 = vmul.f32 %v5982, 1.442695
        %v6021 = vpow.pop %v6020
        %v6022 = vmul.f32 %v5983, 1.442695
        %v6023 = vpow.pop %v6022
        %v6024 = vmul.f32 %v5984, 1.442695
        %v6025 = vpow.pop %v6024
        %v6026 = vmul.f32 %v5985, 1.442695
        %v6027 = vpow.pop %v6026
        %v6028 = vmul.f32 %v5986, 1.442695
        %v6029 = vpow.pop %v6028
        %v6030 = vmul.f32 %v5987, 1.442695
        %v6031 = vpow.pop %v6030
        %v6032 = vmul.f32 %v5988, 1.442695
        %v6033 = vpow.pop %v6032
        %v6034 = vmul.f32 %v5989, 1.442695
        %v6035 = vpow.pop %v6034
        %v6036 = vmul.f32 %v5990, 1.442695
        %v6037 = vpow.pop %v6036
        %v6038 = vmul.f32 %v5991, 1.442695
        %v6039 = vpow.pop %v6038
        %v6040 = vsel %vm5895, %v5993, 0.0
        %6041 = vadd.xlane.f32.xlu0 %v6040
        %v6042 = vpop.xlane.xlu0 %6041
        %v6043 = vsel %vm5895, %v5995, 0.0
        %6044 = vadd.xlane.f32.xlu0 %v6043
        %v6045 = vpop.xlane.xlu0 %6044
        %v6046 = vsel %vm5895, %v5997, 0.0
        %6047 = vadd.xlane.f32.xlu0 %v6046
        %v6048 = vpop.xlane.xlu0 %6047
        %v6049 = vsel %vm5895, %v5999, 0.0
        %6050 = vadd.xlane.f32.xlu0 %v6049
        %v6051 = vpop.xlane.xlu0 %6050
        %v6052 = vsel %vm5895, %v6001, 0.0
        %6053 = vadd.xlane.f32.xlu0 %v6052
        %v6054 = vpop.xlane.xlu0 %6053
        %v6055 = vsel %vm5895, %v6003, 0.0
        %6056 = vadd.xlane.f32.xlu0 %v6055
        %v6057 = vpop.xlane.xlu0 %6056
        %v6058 = vsel %vm5895, %v6005, 0.0
        %6059 = vadd.xlane.f32.xlu0 %v6058
        %v6060 = vpop.xlane.xlu0 %6059
        %v6061 = vsel %vm5895, %v6007, 0.0
        %6062 = vadd.xlane.f32.xlu0 %v6061
        %v6063 = vpop.xlane.xlu0 %6062
        %v6064 = vsel %vm5895, %v6009, 0.0
        %6065 = vadd.xlane.f32.xlu0 %v6064
        %v6066 = vpop.xlane.xlu0 %6065
        %v6067 = vsel %vm5895, %v6011, 0.0
        %6068 = vadd.xlane.f32.xlu0 %v6067
        %v6069 = vpop.xlane.xlu0 %6068
        %v6070 = vsel %vm5895, %v6013, 0.0
        %6071 = vadd.xlane.f32.xlu0 %v6070
        %v6072 = vpop.xlane.xlu0 %6071
        %v6073 = vsel %vm5895, %v6015, 0.0
        %6074 = vadd.xlane.f32.xlu0 %v6073
        %v6075 = vpop.xlane.xlu0 %6074
        %v6076 = vsel %vm5895, %v6017, 0.0
        %6077 = vadd.xlane.f32.xlu0 %v6076
        %v6078 = vpop.xlane.xlu0 %6077
        %v6079 = vsel %vm5895, %v6019, 0.0
        %6080 = vadd.xlane.f32.xlu0 %v6079
        %v6081 = vpop.xlane.xlu0 %6080
        %v6082 = vsel %vm5895, %v6021, 0.0
        %6083 = vadd.xlane.f32.xlu0 %v6082
        %v6084 = vpop.xlane.xlu0 %6083
        %v6085 = vsel %vm5895, %v6023, 0.0
        %6086 = vadd.xlane.f32.xlu0 %v6085
        %v6087 = vpop.xlane.xlu0 %6086
        %v6088 = vsel %vm5895, %v6025, 0.0
        %6089 = vadd.xlane.f32.xlu0 %v6088
        %v6090 = vpop.xlane.xlu0 %6089
        %v6091 = vsel %vm5895, %v6027, 0.0
        %6092 = vadd.xlane.f32.xlu0 %v6091
        %v6093 = vpop.xlane.xlu0 %6092
        %v6094 = vsel %vm5895, %v6029, 0.0
        %6095 = vadd.xlane.f32.xlu0 %v6094
        %v6096 = vpop.xlane.xlu0 %6095
        %v6097 = vsel %vm5895, %v6031, 0.0
        %6098 = vadd.xlane.f32.xlu0 %v6097
        %v6099 = vpop.xlane.xlu0 %6098
        %v6100 = vsel %vm5895, %v6033, 0.0
        %6101 = vadd.xlane.f32.xlu0 %v6100
        %v6102 = vpop.xlane.xlu0 %6101
        %v6103 = vsel %vm5895, %v6035, 0.0
        %6104 = vadd.xlane.f32.xlu0 %v6103
        %v6105 = vpop.xlane.xlu0 %6104
        %v6106 = vsel %vm5895, %v6037, 0.0
        %6107 = vadd.xlane.f32.xlu0 %v6106
        %v6108 = vpop.xlane.xlu0 %6107
        %v6109 = vsel %vm5895, %v6039, 0.0
        %6110 = vadd.xlane.f32.xlu0 %v6109
        %v6111 = vpop.xlane.xlu0 %6110
        %v6112 = vrcp.pop %v6042
        %v6113 = vrcp.pop %v6045
        %v6114 = vrcp.pop %v6048
        %v6115 = vrcp.pop %v6051
        %v6116 = vrcp.pop %v6054
        %v6117 = vrcp.pop %v6057
        %v6118 = vrcp.pop %v6060
        %v6119 = vrcp.pop %v6063
        %v6120 = vrcp.pop %v6066
        %v6121 = vrcp.pop %v6069
        %v6122 = vrcp.pop %v6072
        %v6123 = vrcp.pop %v6075
        %v6124 = vrcp.pop %v6078
        %v6125 = vrcp.pop %v6081
        %v6126 = vrcp.pop %v6084
        %v6127 = vrcp.pop %v6087
        %v6128 = vrcp.pop %v6090
        %v6129 = vrcp.pop %v6093
        %v6130 = vrcp.pop %v6096
        %v6131 = vrcp.pop %v6099
        %v6132 = vrcp.pop %v6102
        %v6133 = vrcp.pop %v6105
        %v6134 = vrcp.pop %v6108
        %v6135 = vrcp.pop %v6111
        %v6136 = vmul.f32 %v5993, %v6112
        %v6137 = vmul.f32 %v5995, %v6113
        %v6138 = vmul.f32 %v5997, %v6114
        %v6139 = vmul.f32 %v5999, %v6115
        %v6140 = vmul.f32 %v6001, %v6116
        %v6141 = vmul.f32 %v6003, %v6117
        %v6142 = vmul.f32 %v6005, %v6118
        %v6143 = vmul.f32 %v6007, %v6119
        %v6144 = vmul.f32 %v6009, %v6120
        %v6145 = vmul.f32 %v6011, %v6121
        %v6146 = vmul.f32 %v6013, %v6122
        %v6147 = vmul.f32 %v6015, %v6123
        %v6148 = vmul.f32 %v6017, %v6124
        %v6149 = vmul.f32 %v6019, %v6125
        %v6150 = vmul.f32 %v6021, %v6126
        %v6151 = vmul.f32 %v6023, %v6127
        %v6152 = vmul.f32 %v6025, %v6128
        %v6153 = vmul.f32 %v6027, %v6129
        %v6154 = vmul.f32 %v6029, %v6130
        %v6155 = vmul.f32 %v6031, %v6131
        %v6156 = vmul.f32 %v6033, %v6132
        %v6157 = vmul.f32 %v6035, %v6133
        %v6158 = vmul.f32 %v6037, %v6134
        %v6159 = vmul.f32 %v6039, %v6135
        %6161 = vset.pattern.permute.xlu0 0
        %6162 = vperm.xlu0 %6161, %v6136
        %v6163 = vpop.permute.xlu0 %6162
        %6166 = vset.pattern.permute.xlu0 0
        %6167 = vperm.xlu0 %6166, %v6137
        %v6168 = vpop.permute.xlu0 %6167
        %6171 = vset.pattern.permute.xlu0 0
        %6172 = vperm.xlu0 %6171, %v6138
        %v6173 = vpop.permute.xlu0 %6172
        %6176 = vset.pattern.permute.xlu0 0
        %6177 = vperm.xlu0 %6176, %v6139
        %v6178 = vpop.permute.xlu0 %6177
        %6181 = vset.pattern.permute.xlu0 0
        %6182 = vperm.xlu0 %6181, %v6140
        %v6183 = vpop.permute.xlu0 %6182
        %6186 = vset.pattern.permute.xlu0 0
        %6187 = vperm.xlu0 %6186, %v6141
        %v6188 = vpop.permute.xlu0 %6187
        %6191 = vset.pattern.permute.xlu0 0
        %6192 = vperm.xlu0 %6191, %v6142
        %v6193 = vpop.permute.xlu0 %6192
        %6196 = vset.pattern.permute.xlu0 0
        %6197 = vperm.xlu0 %6196, %v6143
        %v6198 = vpop.permute.xlu0 %6197
        %6201 = vset.pattern.permute.xlu0 0
        %6202 = vperm.xlu0 %6201, %v6144
        %v6203 = vpop.permute.xlu0 %6202
        %6206 = vset.pattern.permute.xlu0 0
        %6207 = vperm.xlu0 %6206, %v6145
        %v6208 = vpop.permute.xlu0 %6207
        %6211 = vset.pattern.permute.xlu0 0
        %6212 = vperm.xlu0 %6211, %v6146
        %v6213 = vpop.permute.xlu0 %6212
        %6216 = vset.pattern.permute.xlu0 0
        %6217 = vperm.xlu0 %6216, %v6147
        %v6218 = vpop.permute.xlu0 %6217
        %6221 = vset.pattern.permute.xlu0 0
        %6222 = vperm.xlu0 %6221, %v6148
        %v6223 = vpop.permute.xlu0 %6222
        %6226 = vset.pattern.permute.xlu0 0
        %6227 = vperm.xlu0 %6226, %v6149
        %v6228 = vpop.permute.xlu0 %6227
        %6231 = vset.pattern.permute.xlu0 0
        %6232 = vperm.xlu0 %6231, %v6150
        %v6233 = vpop.permute.xlu0 %6232
        %6236 = vset.pattern.permute.xlu0 0
        %6237 = vperm.xlu0 %6236, %v6151
        %v6238 = vpop.permute.xlu0 %6237
        %6241 = vset.pattern.permute.xlu0 0
        %6242 = vperm.xlu0 %6241, %v6152
        %v6243 = vpop.permute.xlu0 %6242
        %6246 = vset.pattern.permute.xlu0 0
        %6247 = vperm.xlu0 %6246, %v6153
        %v6248 = vpop.permute.xlu0 %6247
        %6251 = vset.pattern.permute.xlu0 0
        %6252 = vperm.xlu0 %6251, %v6154
        %v6253 = vpop.permute.xlu0 %6252
        %6256 = vset.pattern.permute.xlu0 0
        %6257 = vperm.xlu0 %6256, %v6155
        %v6258 = vpop.permute.xlu0 %6257
        %6261 = vset.pattern.permute.xlu0 0
        %6262 = vperm.xlu0 %6261, %v6156
        %v6263 = vpop.permute.xlu0 %6262
        %6266 = vset.pattern.permute.xlu0 0
        %6267 = vperm.xlu0 %6266, %v6157
        %v6268 = vpop.permute.xlu0 %6267
        %6271 = vset.pattern.permute.xlu0 0
        %6272 = vperm.xlu0 %6271, %v6158
        %v6273 = vpop.permute.xlu0 %6272
        %6276 = vset.pattern.permute.xlu0 0
        %6277 = vperm.xlu0 %6276, %v6159
        %v6278 = vpop.permute.xlu0 %6277
        %v6280 = vmul.f32 %v5331, %v6163
        %v6281 = vmul.f32 %v5333, %v6168
        %v6282 = vmul.f32 %v5336, %v6173
        %v6283 = vmul.f32 %v5338, %v6178
        %v6284 = vmul.f32 %v5341, %v6183
        %v6285 = vmul.f32 %v5343, %v6188
        %v6286 = vmul.f32 %v5346, %v6193
        %v6287 = vmul.f32 %v5348, %v6198
        %v6288 = vmul.f32 %v5351, %v6203
        %v6289 = vmul.f32 %v5353, %v6208
        %v6290 = vmul.f32 %v5356, %v6213
        %v6291 = vmul.f32 %v5358, %v6218
        %v6292 = vmul.f32 %v5361, %v6223
        %v6293 = vmul.f32 %v5363, %v6228
        %v6294 = vmul.f32 %v5366, %v6233
        %v6295 = vmul.f32 %v5368, %v6238
        %v6296 = vmul.f32 %v5371, %v6243
        %v6297 = vmul.f32 %v5373, %v6248
        %v6298 = vmul.f32 %v5376, %v6253
        %v6299 = vmul.f32 %v5378, %v6258
        %v6300 = vmul.f32 %v5381, %v6263
        %v6301 = vmul.f32 %v5383, %v6268
        %v6302 = vmul.f32 %v5386, %v6273
        %v6303 = vmul.f32 %v5388, %v6278
        %6304 = vset.pattern.permute.xlu0 1
        %6305 = vperm.xlu0 %6304, %v6136
        %v6306 = vpop.permute.xlu0 %6305
        %6308 = vset.pattern.permute.xlu0 1
        %6309 = vperm.xlu0 %6308, %v6137
        %v6310 = vpop.permute.xlu0 %6309
        %6312 = vset.pattern.permute.xlu0 1
        %6313 = vperm.xlu0 %6312, %v6138
        %v6314 = vpop.permute.xlu0 %6313
        %6316 = vset.pattern.permute.xlu0 1
        %6317 = vperm.xlu0 %6316, %v6139
        %v6318 = vpop.permute.xlu0 %6317
        %6320 = vset.pattern.permute.xlu0 1
        %6321 = vperm.xlu0 %6320, %v6140
        %v6322 = vpop.permute.xlu0 %6321
        %6324 = vset.pattern.permute.xlu0 1
        %6325 = vperm.xlu0 %6324, %v6141
        %v6326 = vpop.permute.xlu0 %6325
        %6328 = vset.pattern.permute.xlu0 1
        %6329 = vperm.xlu0 %6328, %v6142
        %v6330 = vpop.permute.xlu0 %6329
        %6332 = vset.pattern.permute.xlu0 1
        %6333 = vperm.xlu0 %6332, %v6143
        %v6334 = vpop.permute.xlu0 %6333
        %6336 = vset.pattern.permute.xlu0 1
        %6337 = vperm.xlu0 %6336, %v6144
        %v6338 = vpop.permute.xlu0 %6337
        %6340 = vset.pattern.permute.xlu0 1
        %6341 = vperm.xlu0 %6340, %v6145
        %v6342 = vpop.permute.xlu0 %6341
        %6344 = vset.pattern.permute.xlu0 1
        %6345 = vperm.xlu0 %6344, %v6146
        %v6346 = vpop.permute.xlu0 %6345
        %6348 = vset.pattern.permute.xlu0 1
        %6349 = vperm.xlu0 %6348, %v6147
        %v6350 = vpop.permute.xlu0 %6349
        %6352 = vset.pattern.permute.xlu0 1
        %6353 = vperm.xlu0 %6352, %v6148
        %v6354 = vpop.permute.xlu0 %6353
        %6356 = vset.pattern.permute.xlu0 1
        %6357 = vperm.xlu0 %6356, %v6149
        %v6358 = vpop.permute.xlu0 %6357
        %6360 = vset.pattern.permute.xlu0 1
        %6361 = vperm.xlu0 %6360, %v6150
        %v6362 = vpop.permute.xlu0 %6361
        %6364 = vset.pattern.permute.xlu0 1
        %6365 = vperm.xlu0 %6364, %v6151
        %v6366 = vpop.permute.xlu0 %6365
        %6368 = vset.pattern.permute.xlu0 1
        %6369 = vperm.xlu0 %6368, %v6152
        %v6370 = vpop.permute.xlu0 %6369
        %6372 = vset.pattern.permute.xlu0 1
        %6373 = vperm.xlu0 %6372, %v6153
        %v6374 = vpop.permute.xlu0 %6373
        %6376 = vset.pattern.permute.xlu0 1
        %6377 = vperm.xlu0 %6376, %v6154
        %v6378 = vpop.permute.xlu0 %6377
        %6380 = vset.pattern.permute.xlu0 1
        %6381 = vperm.xlu0 %6380, %v6155
        %v6382 = vpop.permute.xlu0 %6381
        %6384 = vset.pattern.permute.xlu0 1
        %6385 = vperm.xlu0 %6384, %v6156
        %v6386 = vpop.permute.xlu0 %6385
        %6388 = vset.pattern.permute.xlu0 1
        %6389 = vperm.xlu0 %6388, %v6157
        %v6390 = vpop.permute.xlu0 %6389
        %6392 = vset.pattern.permute.xlu0 1
        %6393 = vperm.xlu0 %6392, %v6158
        %v6394 = vpop.permute.xlu0 %6393
        %6396 = vset.pattern.permute.xlu0 1
        %6397 = vperm.xlu0 %6396, %v6159
        %v6398 = vpop.permute.xlu0 %6397
        %v6400 = vmul.f32 %v5331, %v6306
        %v6401 = vmul.f32 %v5333, %v6310
        %v6402 = vmul.f32 %v5336, %v6314
        %v6403 = vmul.f32 %v5338, %v6318
        %v6404 = vmul.f32 %v5341, %v6322
        %v6405 = vmul.f32 %v5343, %v6326
        %v6406 = vmul.f32 %v5346, %v6330
        %v6407 = vmul.f32 %v5348, %v6334
        %v6408 = vmul.f32 %v5351, %v6338
        %v6409 = vmul.f32 %v5353, %v6342
        %v6410 = vmul.f32 %v5356, %v6346
        %v6411 = vmul.f32 %v5358, %v6350
        %v6412 = vmul.f32 %v5361, %v6354
        %v6413 = vmul.f32 %v5363, %v6358
        %v6414 = vmul.f32 %v5366, %v6362
        %v6415 = vmul.f32 %v5368, %v6366
        %v6416 = vmul.f32 %v5371, %v6370
        %v6417 = vmul.f32 %v5373, %v6374
        %v6418 = vmul.f32 %v5376, %v6378
        %v6419 = vmul.f32 %v5378, %v6382
        %v6420 = vmul.f32 %v5381, %v6386
        %v6421 = vmul.f32 %v5383, %v6390
        %v6422 = vmul.f32 %v5386, %v6394
        %v6423 = vmul.f32 %v5388, %v6398
        %6448 = vrot.lane.b32.xlu0 %v6400, 96
        %v6449 = vpop.permute.xlu0 %6448
        %6450 = vrot.lane.b32.xlu0 %v6401, 96
        %v6451 = vpop.permute.xlu0 %6450
        %6452 = vrot.lane.b32.xlu0 %v6402, 96
        %v6453 = vpop.permute.xlu0 %6452
        %6454 = vrot.lane.b32.xlu0 %v6403, 96
        %v6455 = vpop.permute.xlu0 %6454
        %6456 = vrot.lane.b32.xlu0 %v6404, 96
        %v6457 = vpop.permute.xlu0 %6456
        %6458 = vrot.lane.b32.xlu0 %v6405, 96
        %v6459 = vpop.permute.xlu0 %6458
        %6460 = vrot.lane.b32.xlu0 %v6406, 96
        %v6461 = vpop.permute.xlu0 %6460
        %6462 = vrot.lane.b32.xlu0 %v6407, 96
        %v6463 = vpop.permute.xlu0 %6462
        %6464 = vrot.lane.b32.xlu0 %v6408, 96
        %v6465 = vpop.permute.xlu0 %6464
        %6466 = vrot.lane.b32.xlu0 %v6409, 96
        %v6467 = vpop.permute.xlu0 %6466
        %6468 = vrot.lane.b32.xlu0 %v6410, 96
        %v6469 = vpop.permute.xlu0 %6468
        %6470 = vrot.lane.b32.xlu0 %v6411, 96
        %v6471 = vpop.permute.xlu0 %6470
        %6472 = vrot.lane.b32.xlu0 %v6412, 96
        %v6473 = vpop.permute.xlu0 %6472
        %6474 = vrot.lane.b32.xlu0 %v6413, 96
        %v6475 = vpop.permute.xlu0 %6474
        %6476 = vrot.lane.b32.xlu0 %v6414, 96
        %v6477 = vpop.permute.xlu0 %6476
        %6478 = vrot.lane.b32.xlu0 %v6415, 96
        %v6479 = vpop.permute.xlu0 %6478
        %6480 = vrot.lane.b32.xlu0 %v6416, 96
        %v6481 = vpop.permute.xlu0 %6480
        %6482 = vrot.lane.b32.xlu0 %v6417, 96
        %v6483 = vpop.permute.xlu0 %6482
        %6484 = vrot.lane.b32.xlu0 %v6418, 96
        %v6485 = vpop.permute.xlu0 %6484
        %6486 = vrot.lane.b32.xlu0 %v6419, 96
        %v6487 = vpop.permute.xlu0 %6486
        %6488 = vrot.lane.b32.xlu0 %v6420, 96
        %v6489 = vpop.permute.xlu0 %6488
        %6490 = vrot.lane.b32.xlu0 %v6421, 96
        %v6491 = vpop.permute.xlu0 %6490
        %6492 = vrot.lane.b32.xlu0 %v6422, 96
        %v6493 = vpop.permute.xlu0 %6492
        %6494 = vrot.lane.b32.xlu0 %v6423, 96
        %v6495 = vpop.permute.xlu0 %6494
        %v6520 = vadd.f32 %v6280, %v6449
        %v6521 = vadd.f32 %v6281, %v6451
        %v6522 = vadd.f32 %v6282, %v6453
        %v6523 = vadd.f32 %v6283, %v6455
        %v6524 = vadd.f32 %v6284, %v6457
        %v6525 = vadd.f32 %v6285, %v6459
        %v6526 = vadd.f32 %v6286, %v6461
        %v6527 = vadd.f32 %v6287, %v6463
        %v6528 = vadd.f32 %v6288, %v6465
        %v6529 = vadd.f32 %v6289, %v6467
        %v6530 = vadd.f32 %v6290, %v6469
        %v6531 = vadd.f32 %v6291, %v6471
        %v6532 = vadd.f32 %v6292, %v6473
        %v6533 = vadd.f32 %v6293, %v6475
        %v6534 = vadd.f32 %v6294, %v6477
        %v6535 = vadd.f32 %v6295, %v6479
        %v6536 = vadd.f32 %v6296, %v6481
        %v6537 = vadd.f32 %v6297, %v6483
        %v6538 = vadd.f32 %v6298, %v6485
        %v6539 = vadd.f32 %v6299, %v6487
        %v6540 = vadd.f32 %v6300, %v6489
        %v6541 = vadd.f32 %v6301, %v6491
        %v6542 = vadd.f32 %v6302, %v6493
        %v6543 = vadd.f32 %v6303, %v6495
        %6544 = vset.pattern.permute.xlu0 2
        %6545 = vperm.xlu0 %6544, %v6136
        %v6546 = vpop.permute.xlu0 %6545
        %6548 = vset.pattern.permute.xlu0 2
        %6549 = vperm.xlu0 %6548, %v6137
        %v6550 = vpop.permute.xlu0 %6549
        %6552 = vset.pattern.permute.xlu0 2
        %6553 = vperm.xlu0 %6552, %v6138
        %v6554 = vpop.permute.xlu0 %6553
        %6556 = vset.pattern.permute.xlu0 2
        %6557 = vperm.xlu0 %6556, %v6139
        %v6558 = vpop.permute.xlu0 %6557
        %6560 = vset.pattern.permute.xlu0 2
        %6561 = vperm.xlu0 %6560, %v6140
        %v6562 = vpop.permute.xlu0 %6561
        %6564 = vset.pattern.permute.xlu0 2
        %6565 = vperm.xlu0 %6564, %v6141
        %v6566 = vpop.permute.xlu0 %6565
        %6568 = vset.pattern.permute.xlu0 2
        %6569 = vperm.xlu0 %6568, %v6142
        %v6570 = vpop.permute.xlu0 %6569
        %6572 = vset.pattern.permute.xlu0 2
        %6573 = vperm.xlu0 %6572, %v6143
        %v6574 = vpop.permute.xlu0 %6573
        %6576 = vset.pattern.permute.xlu0 2
        %6577 = vperm.xlu0 %6576, %v6144
        %v6578 = vpop.permute.xlu0 %6577
        %6580 = vset.pattern.permute.xlu0 2
        %6581 = vperm.xlu0 %6580, %v6145
        %v6582 = vpop.permute.xlu0 %6581
        %6584 = vset.pattern.permute.xlu0 2
        %6585 = vperm.xlu0 %6584, %v6146
        %v6586 = vpop.permute.xlu0 %6585
        %6588 = vset.pattern.permute.xlu0 2
        %6589 = vperm.xlu0 %6588, %v6147
        %v6590 = vpop.permute.xlu0 %6589
        %6592 = vset.pattern.permute.xlu0 2
        %6593 = vperm.xlu0 %6592, %v6148
        %v6594 = vpop.permute.xlu0 %6593
        %6596 = vset.pattern.permute.xlu0 2
        %6597 = vperm.xlu0 %6596, %v6149
        %v6598 = vpop.permute.xlu0 %6597
        %6600 = vset.pattern.permute.xlu0 2
        %6601 = vperm.xlu0 %6600, %v6150
        %v6602 = vpop.permute.xlu0 %6601
        %6604 = vset.pattern.permute.xlu0 2
        %6605 = vperm.xlu0 %6604, %v6151
        %v6606 = vpop.permute.xlu0 %6605
        %6608 = vset.pattern.permute.xlu0 2
        %6609 = vperm.xlu0 %6608, %v6152
        %v6610 = vpop.permute.xlu0 %6609
        %6612 = vset.pattern.permute.xlu0 2
        %6613 = vperm.xlu0 %6612, %v6153
        %v6614 = vpop.permute.xlu0 %6613
        %6616 = vset.pattern.permute.xlu0 2
        %6617 = vperm.xlu0 %6616, %v6154
        %v6618 = vpop.permute.xlu0 %6617
        %6620 = vset.pattern.permute.xlu0 2
        %6621 = vperm.xlu0 %6620, %v6155
        %v6622 = vpop.permute.xlu0 %6621
        %6624 = vset.pattern.permute.xlu0 2
        %6625 = vperm.xlu0 %6624, %v6156
        %v6626 = vpop.permute.xlu0 %6625
        %6628 = vset.pattern.permute.xlu0 2
        %6629 = vperm.xlu0 %6628, %v6157
        %v6630 = vpop.permute.xlu0 %6629
        %6632 = vset.pattern.permute.xlu0 2
        %6633 = vperm.xlu0 %6632, %v6158
        %v6634 = vpop.permute.xlu0 %6633
        %6636 = vset.pattern.permute.xlu0 2
        %6637 = vperm.xlu0 %6636, %v6159
        %v6638 = vpop.permute.xlu0 %6637
        %v6640 = vmul.f32 %v5331, %v6546
        %v6641 = vmul.f32 %v5333, %v6550
        %v6642 = vmul.f32 %v5336, %v6554
        %v6643 = vmul.f32 %v5338, %v6558
        %v6644 = vmul.f32 %v5341, %v6562
        %v6645 = vmul.f32 %v5343, %v6566
        %v6646 = vmul.f32 %v5346, %v6570
        %v6647 = vmul.f32 %v5348, %v6574
        %v6648 = vmul.f32 %v5351, %v6578
        %v6649 = vmul.f32 %v5353, %v6582
        %v6650 = vmul.f32 %v5356, %v6586
        %v6651 = vmul.f32 %v5358, %v6590
        %v6652 = vmul.f32 %v5361, %v6594
        %v6653 = vmul.f32 %v5363, %v6598
        %v6654 = vmul.f32 %v5366, %v6602
        %v6655 = vmul.f32 %v5368, %v6606
        %v6656 = vmul.f32 %v5371, %v6610
        %v6657 = vmul.f32 %v5373, %v6614
        %v6658 = vmul.f32 %v5376, %v6618
        %v6659 = vmul.f32 %v5378, %v6622
        %v6660 = vmul.f32 %v5381, %v6626
        %v6661 = vmul.f32 %v5383, %v6630
        %v6662 = vmul.f32 %v5386, %v6634
        %v6663 = vmul.f32 %v5388, %v6638
        %6688 = vrot.lane.b32.xlu0 %v6640, 64
        %v6689 = vpop.permute.xlu0 %6688
        %6690 = vrot.lane.b32.xlu0 %v6641, 64
        %v6691 = vpop.permute.xlu0 %6690
        %6692 = vrot.lane.b32.xlu0 %v6642, 64
        %v6693 = vpop.permute.xlu0 %6692
        %6694 = vrot.lane.b32.xlu0 %v6643, 64
        %v6695 = vpop.permute.xlu0 %6694
        %6696 = vrot.lane.b32.xlu0 %v6644, 64
        %v6697 = vpop.permute.xlu0 %6696
        %6698 = vrot.lane.b32.xlu0 %v6645, 64
        %v6699 = vpop.permute.xlu0 %6698
        %6700 = vrot.lane.b32.xlu0 %v6646, 64
        %v6701 = vpop.permute.xlu0 %6700
        %6702 = vrot.lane.b32.xlu0 %v6647, 64
        %v6703 = vpop.permute.xlu0 %6702
        %6704 = vrot.lane.b32.xlu0 %v6648, 64
        %v6705 = vpop.permute.xlu0 %6704
        %6706 = vrot.lane.b32.xlu0 %v6649, 64
        %v6707 = vpop.permute.xlu0 %6706
        %6708 = vrot.lane.b32.xlu0 %v6650, 64
        %v6709 = vpop.permute.xlu0 %6708
        %6710 = vrot.lane.b32.xlu0 %v6651, 64
        %v6711 = vpop.permute.xlu0 %6710
        %6712 = vrot.lane.b32.xlu0 %v6652, 64
        %v6713 = vpop.permute.xlu0 %6712
        %6714 = vrot.lane.b32.xlu0 %v6653, 64
        %v6715 = vpop.permute.xlu0 %6714
        %6716 = vrot.lane.b32.xlu0 %v6654, 64
        %v6717 = vpop.permute.xlu0 %6716
        %6718 = vrot.lane.b32.xlu0 %v6655, 64
        %v6719 = vpop.permute.xlu0 %6718
        %6720 = vrot.lane.b32.xlu0 %v6656, 64
        %v6721 = vpop.permute.xlu0 %6720
        %6722 = vrot.lane.b32.xlu0 %v6657, 64
        %v6723 = vpop.permute.xlu0 %6722
        %6724 = vrot.lane.b32.xlu0 %v6658, 64
        %v6725 = vpop.permute.xlu0 %6724
        %6726 = vrot.lane.b32.xlu0 %v6659, 64
        %v6727 = vpop.permute.xlu0 %6726
        %6728 = vrot.lane.b32.xlu0 %v6660, 64
        %v6729 = vpop.permute.xlu0 %6728
        %6730 = vrot.lane.b32.xlu0 %v6661, 64
        %v6731 = vpop.permute.xlu0 %6730
        %6732 = vrot.lane.b32.xlu0 %v6662, 64
        %v6733 = vpop.permute.xlu0 %6732
        %6734 = vrot.lane.b32.xlu0 %v6663, 64
        %v6735 = vpop.permute.xlu0 %6734
        %v6760 = vadd.f32 %v6520, %v6689
        %v6761 = vadd.f32 %v6521, %v6691
        %v6762 = vadd.f32 %v6522, %v6693
        %v6763 = vadd.f32 %v6523, %v6695
        %v6764 = vadd.f32 %v6524, %v6697
        %v6765 = vadd.f32 %v6525, %v6699
        %v6766 = vadd.f32 %v6526, %v6701
        %v6767 = vadd.f32 %v6527, %v6703
        %v6768 = vadd.f32 %v6528, %v6705
        %v6769 = vadd.f32 %v6529, %v6707
        %v6770 = vadd.f32 %v6530, %v6709
        %v6771 = vadd.f32 %v6531, %v6711
        %v6772 = vadd.f32 %v6532, %v6713
        %v6773 = vadd.f32 %v6533, %v6715
        %v6774 = vadd.f32 %v6534, %v6717
        %v6775 = vadd.f32 %v6535, %v6719
        %v6776 = vadd.f32 %v6536, %v6721
        %v6777 = vadd.f32 %v6537, %v6723
        %v6778 = vadd.f32 %v6538, %v6725
        %v6779 = vadd.f32 %v6539, %v6727
        %v6780 = vadd.f32 %v6540, %v6729
        %v6781 = vadd.f32 %v6541, %v6731
        %v6782 = vadd.f32 %v6542, %v6733
        %v6783 = vadd.f32 %v6543, %v6735
        %6784 = vset.pattern.permute.xlu0 3
        %6785 = vperm.xlu0 %6784, %v6136
        %v6786 = vpop.permute.xlu0 %6785
        %6788 = vset.pattern.permute.xlu0 3
        %6789 = vperm.xlu0 %6788, %v6137
        %v6790 = vpop.permute.xlu0 %6789
        %6792 = vset.pattern.permute.xlu0 3
        %6793 = vperm.xlu0 %6792, %v6138
        %v6794 = vpop.permute.xlu0 %6793
        %6796 = vset.pattern.permute.xlu0 3
        %6797 = vperm.xlu0 %6796, %v6139
        %v6798 = vpop.permute.xlu0 %6797
        %6800 = vset.pattern.permute.xlu0 3
        %6801 = vperm.xlu0 %6800, %v6140
        %v6802 = vpop.permute.xlu0 %6801
        %6804 = vset.pattern.permute.xlu0 3
        %6805 = vperm.xlu0 %6804, %v6141
        %v6806 = vpop.permute.xlu0 %6805
        %6808 = vset.pattern.permute.xlu0 3
        %6809 = vperm.xlu0 %6808, %v6142
        %v6810 = vpop.permute.xlu0 %6809
        %6812 = vset.pattern.permute.xlu0 3
        %6813 = vperm.xlu0 %6812, %v6143
        %v6814 = vpop.permute.xlu0 %6813
        %6816 = vset.pattern.permute.xlu0 3
        %6817 = vperm.xlu0 %6816, %v6144
        %v6818 = vpop.permute.xlu0 %6817
        %6820 = vset.pattern.permute.xlu0 3
        %6821 = vperm.xlu0 %6820, %v6145
        %v6822 = vpop.permute.xlu0 %6821
        %6824 = vset.pattern.permute.xlu0 3
        %6825 = vperm.xlu0 %6824, %v6146
        %v6826 = vpop.permute.xlu0 %6825
        %6828 = vset.pattern.permute.xlu0 3
        %6829 = vperm.xlu0 %6828, %v6147
        %v6830 = vpop.permute.xlu0 %6829
        %6832 = vset.pattern.permute.xlu0 3
        %6833 = vperm.xlu0 %6832, %v6148
        %v6834 = vpop.permute.xlu0 %6833
        %6836 = vset.pattern.permute.xlu0 3
        %6837 = vperm.xlu0 %6836, %v6149
        %v6838 = vpop.permute.xlu0 %6837
        %6840 = vset.pattern.permute.xlu0 3
        %6841 = vperm.xlu0 %6840, %v6150
        %v6842 = vpop.permute.xlu0 %6841
        %6844 = vset.pattern.permute.xlu0 3
        %6845 = vperm.xlu0 %6844, %v6151
        %v6846 = vpop.permute.xlu0 %6845
        %6848 = vset.pattern.permute.xlu0 3
        %6849 = vperm.xlu0 %6848, %v6152
        %v6850 = vpop.permute.xlu0 %6849
        %6852 = vset.pattern.permute.xlu0 3
        %6853 = vperm.xlu0 %6852, %v6153
        %v6854 = vpop.permute.xlu0 %6853
        %6856 = vset.pattern.permute.xlu0 3
        %6857 = vperm.xlu0 %6856, %v6154
        %v6858 = vpop.permute.xlu0 %6857
        %6860 = vset.pattern.permute.xlu0 3
        %6861 = vperm.xlu0 %6860, %v6155
        %v6862 = vpop.permute.xlu0 %6861
        %6864 = vset.pattern.permute.xlu0 3
        %6865 = vperm.xlu0 %6864, %v6156
        %v6866 = vpop.permute.xlu0 %6865
        %6868 = vset.pattern.permute.xlu0 3
        %6869 = vperm.xlu0 %6868, %v6157
        %v6870 = vpop.permute.xlu0 %6869
        %6872 = vset.pattern.permute.xlu0 3
        %6873 = vperm.xlu0 %6872, %v6158
        %v6874 = vpop.permute.xlu0 %6873
        %6876 = vset.pattern.permute.xlu0 3
        %6877 = vperm.xlu0 %6876, %v6159
        %v6878 = vpop.permute.xlu0 %6877
        %v6880 = vmul.f32 %v5331, %v6786
        %v6881 = vmul.f32 %v5333, %v6790
        %v6882 = vmul.f32 %v5336, %v6794
        %v6883 = vmul.f32 %v5338, %v6798
        %v6884 = vmul.f32 %v5341, %v6802
        %v6885 = vmul.f32 %v5343, %v6806
        %v6886 = vmul.f32 %v5346, %v6810
        %v6887 = vmul.f32 %v5348, %v6814
        %v6888 = vmul.f32 %v5351, %v6818
        %v6889 = vmul.f32 %v5353, %v6822
        %v6890 = vmul.f32 %v5356, %v6826
        %v6891 = vmul.f32 %v5358, %v6830
        %v6892 = vmul.f32 %v5361, %v6834
        %v6893 = vmul.f32 %v5363, %v6838
        %v6894 = vmul.f32 %v5366, %v6842
        %v6895 = vmul.f32 %v5368, %v6846
        %v6896 = vmul.f32 %v5371, %v6850
        %v6897 = vmul.f32 %v5373, %v6854
        %v6898 = vmul.f32 %v5376, %v6858
        %v6899 = vmul.f32 %v5378, %v6862
        %v6900 = vmul.f32 %v5381, %v6866
        %v6901 = vmul.f32 %v5383, %v6870
        %v6902 = vmul.f32 %v5386, %v6874
        %v6903 = vmul.f32 %v5388, %v6878
        %6928 = vrot.lane.b32.xlu0 %v6880, 32
        %v6929 = vpop.permute.xlu0 %6928
        %6930 = vrot.lane.b32.xlu0 %v6881, 32
        %v6931 = vpop.permute.xlu0 %6930
        %6932 = vrot.lane.b32.xlu0 %v6882, 32
        %v6933 = vpop.permute.xlu0 %6932
        %6934 = vrot.lane.b32.xlu0 %v6883, 32
        %v6935 = vpop.permute.xlu0 %6934
        %6936 = vrot.lane.b32.xlu0 %v6884, 32
        %v6937 = vpop.permute.xlu0 %6936
        %6938 = vrot.lane.b32.xlu0 %v6885, 32
        %v6939 = vpop.permute.xlu0 %6938
        %6940 = vrot.lane.b32.xlu0 %v6886, 32
        %v6941 = vpop.permute.xlu0 %6940
        %6942 = vrot.lane.b32.xlu0 %v6887, 32
        %v6943 = vpop.permute.xlu0 %6942
        %6944 = vrot.lane.b32.xlu0 %v6888, 32
        %v6945 = vpop.permute.xlu0 %6944
        %6946 = vrot.lane.b32.xlu0 %v6889, 32
        %v6947 = vpop.permute.xlu0 %6946
        %6948 = vrot.lane.b32.xlu0 %v6890, 32
        %v6949 = vpop.permute.xlu0 %6948
        %6950 = vrot.lane.b32.xlu0 %v6891, 32
        %v6951 = vpop.permute.xlu0 %6950
        %6952 = vrot.lane.b32.xlu0 %v6892, 32
        %v6953 = vpop.permute.xlu0 %6952
        %6954 = vrot.lane.b32.xlu0 %v6893, 32
        %v6955 = vpop.permute.xlu0 %6954
        %6956 = vrot.lane.b32.xlu0 %v6894, 32
        %v6957 = vpop.permute.xlu0 %6956
        %6958 = vrot.lane.b32.xlu0 %v6895, 32
        %v6959 = vpop.permute.xlu0 %6958
        %6960 = vrot.lane.b32.xlu0 %v6896, 32
        %v6961 = vpop.permute.xlu0 %6960
        %6962 = vrot.lane.b32.xlu0 %v6897, 32
        %v6963 = vpop.permute.xlu0 %6962
        %6964 = vrot.lane.b32.xlu0 %v6898, 32
        %v6965 = vpop.permute.xlu0 %6964
        %6966 = vrot.lane.b32.xlu0 %v6899, 32
        %v6967 = vpop.permute.xlu0 %6966
        %6968 = vrot.lane.b32.xlu0 %v6900, 32
        %v6969 = vpop.permute.xlu0 %6968
        %6970 = vrot.lane.b32.xlu0 %v6901, 32
        %v6971 = vpop.permute.xlu0 %6970
        %6972 = vrot.lane.b32.xlu0 %v6902, 32
        %v6973 = vpop.permute.xlu0 %6972
        %6974 = vrot.lane.b32.xlu0 %v6903, 32
        %v6975 = vpop.permute.xlu0 %6974
        %v7000 = vadd.f32 %v6760, %v6929
        %v7001 = vadd.f32 %v6761, %v6931
        %v7002 = vadd.f32 %v6762, %v6933
        %v7003 = vadd.f32 %v6763, %v6935
        %v7004 = vadd.f32 %v6764, %v6937
        %v7005 = vadd.f32 %v6765, %v6939
        %v7006 = vadd.f32 %v6766, %v6941
        %v7007 = vadd.f32 %v6767, %v6943
        %v7008 = vadd.f32 %v6768, %v6945
        %v7009 = vadd.f32 %v6769, %v6947
        %v7010 = vadd.f32 %v6770, %v6949
        %v7011 = vadd.f32 %v6771, %v6951
        %v7012 = vadd.f32 %v6772, %v6953
        %v7013 = vadd.f32 %v6773, %v6955
        %v7014 = vadd.f32 %v6774, %v6957
        %v7015 = vadd.f32 %v6775, %v6959
        %v7016 = vadd.f32 %v6776, %v6961
        %v7017 = vadd.f32 %v6777, %v6963
        %v7018 = vadd.f32 %v6778, %v6965
        %v7019 = vadd.f32 %v6779, %v6967
        %v7020 = vadd.f32 %v6780, %v6969
        %v7021 = vadd.f32 %v6781, %v6971
        %v7022 = vadd.f32 %v6782, %v6973
        %v7023 = vadd.f32 %v6783, %v6975
        %7024 = vset.pattern.permute.xlu0 4
        %7025 = vperm.xlu0 %7024, %v6136
        %v7026 = vpop.permute.xlu0 %7025
        %7028 = vset.pattern.permute.xlu0 4
        %7029 = vperm.xlu0 %7028, %v6137
        %v7030 = vpop.permute.xlu0 %7029
        %7032 = vset.pattern.permute.xlu0 4
        %7033 = vperm.xlu0 %7032, %v6138
        %v7034 = vpop.permute.xlu0 %7033
        %7036 = vset.pattern.permute.xlu0 4
        %7037 = vperm.xlu0 %7036, %v6139
        %v7038 = vpop.permute.xlu0 %7037
        %7040 = vset.pattern.permute.xlu0 4
        %7041 = vperm.xlu0 %7040, %v6140
        %v7042 = vpop.permute.xlu0 %7041
        %7044 = vset.pattern.permute.xlu0 4
        %7045 = vperm.xlu0 %7044, %v6141
        %v7046 = vpop.permute.xlu0 %7045
        %7048 = vset.pattern.permute.xlu0 4
        %7049 = vperm.xlu0 %7048, %v6142
        %v7050 = vpop.permute.xlu0 %7049
        %7052 = vset.pattern.permute.xlu0 4
        %7053 = vperm.xlu0 %7052, %v6143
        %v7054 = vpop.permute.xlu0 %7053
        %7056 = vset.pattern.permute.xlu0 4
        %7057 = vperm.xlu0 %7056, %v6144
        %v7058 = vpop.permute.xlu0 %7057
        %7060 = vset.pattern.permute.xlu0 4
        %7061 = vperm.xlu0 %7060, %v6145
        %v7062 = vpop.permute.xlu0 %7061
        %7064 = vset.pattern.permute.xlu0 4
        %7065 = vperm.xlu0 %7064, %v6146
        %v7066 = vpop.permute.xlu0 %7065
        %7068 = vset.pattern.permute.xlu0 4
        %7069 = vperm.xlu0 %7068, %v6147
        %v7070 = vpop.permute.xlu0 %7069
        %7072 = vset.pattern.permute.xlu0 4
        %7073 = vperm.xlu0 %7072, %v6148
        %v7074 = vpop.permute.xlu0 %7073
        %7076 = vset.pattern.permute.xlu0 4
        %7077 = vperm.xlu0 %7076, %v6149
        %v7078 = vpop.permute.xlu0 %7077
        %7080 = vset.pattern.permute.xlu0 4
        %7081 = vperm.xlu0 %7080, %v6150
        %v7082 = vpop.permute.xlu0 %7081
        %7084 = vset.pattern.permute.xlu0 4
        %7085 = vperm.xlu0 %7084, %v6151
        %v7086 = vpop.permute.xlu0 %7085
        %7088 = vset.pattern.permute.xlu0 4
        %7089 = vperm.xlu0 %7088, %v6152
        %v7090 = vpop.permute.xlu0 %7089
        %7092 = vset.pattern.permute.xlu0 4
        %7093 = vperm.xlu0 %7092, %v6153
        %v7094 = vpop.permute.xlu0 %7093
        %7096 = vset.pattern.permute.xlu0 4
        %7097 = vperm.xlu0 %7096, %v6154
        %v7098 = vpop.permute.xlu0 %7097
        %7100 = vset.pattern.permute.xlu0 4
        %7101 = vperm.xlu0 %7100, %v6155
        %v7102 = vpop.permute.xlu0 %7101
        %7104 = vset.pattern.permute.xlu0 4
        %7105 = vperm.xlu0 %7104, %v6156
        %v7106 = vpop.permute.xlu0 %7105
        %7108 = vset.pattern.permute.xlu0 4
        %7109 = vperm.xlu0 %7108, %v6157
        %v7110 = vpop.permute.xlu0 %7109
        %7112 = vset.pattern.permute.xlu0 4
        %7113 = vperm.xlu0 %7112, %v6158
        %v7114 = vpop.permute.xlu0 %7113
        %7116 = vset.pattern.permute.xlu0 4
        %7117 = vperm.xlu0 %7116, %v6159
        %v7118 = vpop.permute.xlu0 %7117
        %v7120 = vmul.f32 %v5400, %v7026
        %v7121 = vmul.f32 %v5402, %v7030
        %v7122 = vmul.f32 %v5405, %v7034
        %v7123 = vmul.f32 %v5407, %v7038
        %v7124 = vmul.f32 %v5410, %v7042
        %v7125 = vmul.f32 %v5412, %v7046
        %v7126 = vmul.f32 %v5415, %v7050
        %v7127 = vmul.f32 %v5417, %v7054
        %v7128 = vmul.f32 %v5420, %v7058
        %v7129 = vmul.f32 %v5422, %v7062
        %v7130 = vmul.f32 %v5425, %v7066
        %v7131 = vmul.f32 %v5427, %v7070
        %v7132 = vmul.f32 %v5430, %v7074
        %v7133 = vmul.f32 %v5432, %v7078
        %v7134 = vmul.f32 %v5435, %v7082
        %v7135 = vmul.f32 %v5437, %v7086
        %v7136 = vmul.f32 %v5440, %v7090
        %v7137 = vmul.f32 %v5442, %v7094
        %v7138 = vmul.f32 %v5445, %v7098
        %v7139 = vmul.f32 %v5447, %v7102
        %v7140 = vmul.f32 %v5450, %v7106
        %v7141 = vmul.f32 %v5452, %v7110
        %v7142 = vmul.f32 %v5455, %v7114
        %v7143 = vmul.f32 %v5457, %v7118
        %v7144 = vadd.f32 %v7000, %v7120
        %v7145 = vadd.f32 %v7001, %v7121
        %v7146 = vadd.f32 %v7002, %v7122
        %v7147 = vadd.f32 %v7003, %v7123
        %v7148 = vadd.f32 %v7004, %v7124
        %v7149 = vadd.f32 %v7005, %v7125
        %v7150 = vadd.f32 %v7006, %v7126
        %v7151 = vadd.f32 %v7007, %v7127
        %v7152 = vadd.f32 %v7008, %v7128
        %v7153 = vadd.f32 %v7009, %v7129
        %v7154 = vadd.f32 %v7010, %v7130
        %v7155 = vadd.f32 %v7011, %v7131
        %v7156 = vadd.f32 %v7012, %v7132
        %v7157 = vadd.f32 %v7013, %v7133
        %v7158 = vadd.f32 %v7014, %v7134
        %v7159 = vadd.f32 %v7015, %v7135
        %v7160 = vadd.f32 %v7016, %v7136
        %v7161 = vadd.f32 %v7017, %v7137
        %v7162 = vadd.f32 %v7018, %v7138
        %v7163 = vadd.f32 %v7019, %v7139
        %v7164 = vadd.f32 %v7020, %v7140
        %v7165 = vadd.f32 %v7021, %v7141
        %v7166 = vadd.f32 %v7022, %v7142
        %v7167 = vadd.f32 %v7023, %v7143
        %7168 = vset.pattern.permute.xlu0 5
        %7169 = vperm.xlu0 %7168, %v6136
        %v7170 = vpop.permute.xlu0 %7169
        %7172 = vset.pattern.permute.xlu0 5
        %7173 = vperm.xlu0 %7172, %v6137
        %v7174 = vpop.permute.xlu0 %7173
        %7176 = vset.pattern.permute.xlu0 5
        %7177 = vperm.xlu0 %7176, %v6138
        %v7178 = vpop.permute.xlu0 %7177
        %7180 = vset.pattern.permute.xlu0 5
        %7181 = vperm.xlu0 %7180, %v6139
        %v7182 = vpop.permute.xlu0 %7181
        %7184 = vset.pattern.permute.xlu0 5
        %7185 = vperm.xlu0 %7184, %v6140
        %v7186 = vpop.permute.xlu0 %7185
        %7188 = vset.pattern.permute.xlu0 5
        %7189 = vperm.xlu0 %7188, %v6141
        %v7190 = vpop.permute.xlu0 %7189
        %7192 = vset.pattern.permute.xlu0 5
        %7193 = vperm.xlu0 %7192, %v6142
        %v7194 = vpop.permute.xlu0 %7193
        %7196 = vset.pattern.permute.xlu0 5
        %7197 = vperm.xlu0 %7196, %v6143
        %v7198 = vpop.permute.xlu0 %7197
        %7200 = vset.pattern.permute.xlu0 5
        %7201 = vperm.xlu0 %7200, %v6144
        %v7202 = vpop.permute.xlu0 %7201
        %7204 = vset.pattern.permute.xlu0 5
        %7205 = vperm.xlu0 %7204, %v6145
        %v7206 = vpop.permute.xlu0 %7205
        %7208 = vset.pattern.permute.xlu0 5
        %7209 = vperm.xlu0 %7208, %v6146
        %v7210 = vpop.permute.xlu0 %7209
        %7212 = vset.pattern.permute.xlu0 5
        %7213 = vperm.xlu0 %7212, %v6147
        %v7214 = vpop.permute.xlu0 %7213
        %7216 = vset.pattern.permute.xlu0 5
        %7217 = vperm.xlu0 %7216, %v6148
        %v7218 = vpop.permute.xlu0 %7217
        %7220 = vset.pattern.permute.xlu0 5
        %7221 = vperm.xlu0 %7220, %v6149
        %v7222 = vpop.permute.xlu0 %7221
        %7224 = vset.pattern.permute.xlu0 5
        %7225 = vperm.xlu0 %7224, %v6150
        %v7226 = vpop.permute.xlu0 %7225
        %7228 = vset.pattern.permute.xlu0 5
        %7229 = vperm.xlu0 %7228, %v6151
        %v7230 = vpop.permute.xlu0 %7229
        %7232 = vset.pattern.permute.xlu0 5
        %7233 = vperm.xlu0 %7232, %v6152
        %v7234 = vpop.permute.xlu0 %7233
        %7236 = vset.pattern.permute.xlu0 5
        %7237 = vperm.xlu0 %7236, %v6153
        %v7238 = vpop.permute.xlu0 %7237
        %7240 = vset.pattern.permute.xlu0 5
        %7241 = vperm.xlu0 %7240, %v6154
        %v7242 = vpop.permute.xlu0 %7241
        %7244 = vset.pattern.permute.xlu0 5
        %7245 = vperm.xlu0 %7244, %v6155
        %v7246 = vpop.permute.xlu0 %7245
        %7248 = vset.pattern.permute.xlu0 5
        %7249 = vperm.xlu0 %7248, %v6156
        %v7250 = vpop.permute.xlu0 %7249
        %7252 = vset.pattern.permute.xlu0 5
        %7253 = vperm.xlu0 %7252, %v6157
        %v7254 = vpop.permute.xlu0 %7253
        %7256 = vset.pattern.permute.xlu0 5
        %7257 = vperm.xlu0 %7256, %v6158
        %v7258 = vpop.permute.xlu0 %7257
        %7260 = vset.pattern.permute.xlu0 5
        %7261 = vperm.xlu0 %7260, %v6159
        %v7262 = vpop.permute.xlu0 %7261
        %v7264 = vmul.f32 %v5400, %v7170
        %v7265 = vmul.f32 %v5402, %v7174
        %v7266 = vmul.f32 %v5405, %v7178
        %v7267 = vmul.f32 %v5407, %v7182
        %v7268 = vmul.f32 %v5410, %v7186
        %v7269 = vmul.f32 %v5412, %v7190
        %v7270 = vmul.f32 %v5415, %v7194
        %v7271 = vmul.f32 %v5417, %v7198
        %v7272 = vmul.f32 %v5420, %v7202
        %v7273 = vmul.f32 %v5422, %v7206
        %v7274 = vmul.f32 %v5425, %v7210
        %v7275 = vmul.f32 %v5427, %v7214
        %v7276 = vmul.f32 %v5430, %v7218
        %v7277 = vmul.f32 %v5432, %v7222
        %v7278 = vmul.f32 %v5435, %v7226
        %v7279 = vmul.f32 %v5437, %v7230
        %v7280 = vmul.f32 %v5440, %v7234
        %v7281 = vmul.f32 %v5442, %v7238
        %v7282 = vmul.f32 %v5445, %v7242
        %v7283 = vmul.f32 %v5447, %v7246
        %v7284 = vmul.f32 %v5450, %v7250
        %v7285 = vmul.f32 %v5452, %v7254
        %v7286 = vmul.f32 %v5455, %v7258
        %v7287 = vmul.f32 %v5457, %v7262
        %7312 = vrot.lane.b32.xlu0 %v7264, 96
        %v7313 = vpop.permute.xlu0 %7312
        %7314 = vrot.lane.b32.xlu0 %v7265, 96
        %v7315 = vpop.permute.xlu0 %7314
        %7316 = vrot.lane.b32.xlu0 %v7266, 96
        %v7317 = vpop.permute.xlu0 %7316
        %7318 = vrot.lane.b32.xlu0 %v7267, 96
        %v7319 = vpop.permute.xlu0 %7318
        %7320 = vrot.lane.b32.xlu0 %v7268, 96
        %v7321 = vpop.permute.xlu0 %7320
        %7322 = vrot.lane.b32.xlu0 %v7269, 96
        %v7323 = vpop.permute.xlu0 %7322
        %7324 = vrot.lane.b32.xlu0 %v7270, 96
        %v7325 = vpop.permute.xlu0 %7324
        %7326 = vrot.lane.b32.xlu0 %v7271, 96
        %v7327 = vpop.permute.xlu0 %7326
        %7328 = vrot.lane.b32.xlu0 %v7272, 96
        %v7329 = vpop.permute.xlu0 %7328
        %7330 = vrot.lane.b32.xlu0 %v7273, 96
        %v7331 = vpop.permute.xlu0 %7330
        %7332 = vrot.lane.b32.xlu0 %v7274, 96
        %v7333 = vpop.permute.xlu0 %7332
        %7334 = vrot.lane.b32.xlu0 %v7275, 96
        %v7335 = vpop.permute.xlu0 %7334
        %7336 = vrot.lane.b32.xlu0 %v7276, 96
        %v7337 = vpop.permute.xlu0 %7336
        %7338 = vrot.lane.b32.xlu0 %v7277, 96
        %v7339 = vpop.permute.xlu0 %7338
        %7340 = vrot.lane.b32.xlu0 %v7278, 96
        %v7341 = vpop.permute.xlu0 %7340
        %7342 = vrot.lane.b32.xlu0 %v7279, 96
        %v7343 = vpop.permute.xlu0 %7342
        %7344 = vrot.lane.b32.xlu0 %v7280, 96
        %v7345 = vpop.permute.xlu0 %7344
        %7346 = vrot.lane.b32.xlu0 %v7281, 96
        %v7347 = vpop.permute.xlu0 %7346
        %7348 = vrot.lane.b32.xlu0 %v7282, 96
        %v7349 = vpop.permute.xlu0 %7348
        %7350 = vrot.lane.b32.xlu0 %v7283, 96
        %v7351 = vpop.permute.xlu0 %7350
        %7352 = vrot.lane.b32.xlu0 %v7284, 96
        %v7353 = vpop.permute.xlu0 %7352
        %7354 = vrot.lane.b32.xlu0 %v7285, 96
        %v7355 = vpop.permute.xlu0 %7354
        %7356 = vrot.lane.b32.xlu0 %v7286, 96
        %v7357 = vpop.permute.xlu0 %7356
        %7358 = vrot.lane.b32.xlu0 %v7287, 96
        %v7359 = vpop.permute.xlu0 %7358
        %v7384 = vadd.f32 %v7144, %v7313
        %v7385 = vadd.f32 %v7145, %v7315
        %v7386 = vadd.f32 %v7146, %v7317
        %v7387 = vadd.f32 %v7147, %v7319
        %v7388 = vadd.f32 %v7148, %v7321
        %v7389 = vadd.f32 %v7149, %v7323
        %v7390 = vadd.f32 %v7150, %v7325
        %v7391 = vadd.f32 %v7151, %v7327
        %v7392 = vadd.f32 %v7152, %v7329
        %v7393 = vadd.f32 %v7153, %v7331
        %v7394 = vadd.f32 %v7154, %v7333
        %v7395 = vadd.f32 %v7155, %v7335
        %v7396 = vadd.f32 %v7156, %v7337
        %v7397 = vadd.f32 %v7157, %v7339
        %v7398 = vadd.f32 %v7158, %v7341
        %v7399 = vadd.f32 %v7159, %v7343
        %v7400 = vadd.f32 %v7160, %v7345
        %v7401 = vadd.f32 %v7161, %v7347
        %v7402 = vadd.f32 %v7162, %v7349
        %v7403 = vadd.f32 %v7163, %v7351
        %v7404 = vadd.f32 %v7164, %v7353
        %v7405 = vadd.f32 %v7165, %v7355
        %v7406 = vadd.f32 %v7166, %v7357
        %v7407 = vadd.f32 %v7167, %v7359
        %7408 = vset.pattern.permute.xlu0 6
        %7409 = vperm.xlu0 %7408, %v6136
        %v7410 = vpop.permute.xlu0 %7409
        %7412 = vset.pattern.permute.xlu0 6
        %7413 = vperm.xlu0 %7412, %v6137
        %v7414 = vpop.permute.xlu0 %7413
        %7416 = vset.pattern.permute.xlu0 6
        %7417 = vperm.xlu0 %7416, %v6138
        %v7418 = vpop.permute.xlu0 %7417
        %7420 = vset.pattern.permute.xlu0 6
        %7421 = vperm.xlu0 %7420, %v6139
        %v7422 = vpop.permute.xlu0 %7421
        %7424 = vset.pattern.permute.xlu0 6
        %7425 = vperm.xlu0 %7424, %v6140
        %v7426 = vpop.permute.xlu0 %7425
        %7428 = vset.pattern.permute.xlu0 6
        %7429 = vperm.xlu0 %7428, %v6141
        %v7430 = vpop.permute.xlu0 %7429
        %7432 = vset.pattern.permute.xlu0 6
        %7433 = vperm.xlu0 %7432, %v6142
        %v7434 = vpop.permute.xlu0 %7433
        %7436 = vset.pattern.permute.xlu0 6
        %7437 = vperm.xlu0 %7436, %v6143
        %v7438 = vpop.permute.xlu0 %7437
        %7440 = vset.pattern.permute.xlu0 6
        %7441 = vperm.xlu0 %7440, %v6144
        %v7442 = vpop.permute.xlu0 %7441
        %7444 = vset.pattern.permute.xlu0 6
        %7445 = vperm.xlu0 %7444, %v6145
        %v7446 = vpop.permute.xlu0 %7445
        %7448 = vset.pattern.permute.xlu0 6
        %7449 = vperm.xlu0 %7448, %v6146
        %v7450 = vpop.permute.xlu0 %7449
        %7452 = vset.pattern.permute.xlu0 6
        %7453 = vperm.xlu0 %7452, %v6147
        %v7454 = vpop.permute.xlu0 %7453
        %7456 = vset.pattern.permute.xlu0 6
        %7457 = vperm.xlu0 %7456, %v6148
        %v7458 = vpop.permute.xlu0 %7457
        %7460 = vset.pattern.permute.xlu0 6
        %7461 = vperm.xlu0 %7460, %v6149
        %v7462 = vpop.permute.xlu0 %7461
        %7464 = vset.pattern.permute.xlu0 6
        %7465 = vperm.xlu0 %7464, %v6150
        %v7466 = vpop.permute.xlu0 %7465
        %7468 = vset.pattern.permute.xlu0 6
        %7469 = vperm.xlu0 %7468, %v6151
        %v7470 = vpop.permute.xlu0 %7469
        %7472 = vset.pattern.permute.xlu0 6
        %7473 = vperm.xlu0 %7472, %v6152
        %v7474 = vpop.permute.xlu0 %7473
        %7476 = vset.pattern.permute.xlu0 6
        %7477 = vperm.xlu0 %7476, %v6153
        %v7478 = vpop.permute.xlu0 %7477
        %7480 = vset.pattern.permute.xlu0 6
        %7481 = vperm.xlu0 %7480, %v6154
        %v7482 = vpop.permute.xlu0 %7481
        %7484 = vset.pattern.permute.xlu0 6
        %7485 = vperm.xlu0 %7484, %v6155
        %v7486 = vpop.permute.xlu0 %7485
        %7488 = vset.pattern.permute.xlu0 6
        %7489 = vperm.xlu0 %7488, %v6156
        %v7490 = vpop.permute.xlu0 %7489
        %7492 = vset.pattern.permute.xlu0 6
        %7493 = vperm.xlu0 %7492, %v6157
        %v7494 = vpop.permute.xlu0 %7493
        %7496 = vset.pattern.permute.xlu0 6
        %7497 = vperm.xlu0 %7496, %v6158
        %v7498 = vpop.permute.xlu0 %7497
        %7500 = vset.pattern.permute.xlu0 6
        %7501 = vperm.xlu0 %7500, %v6159
        %v7502 = vpop.permute.xlu0 %7501
        %v7504 = vmul.f32 %v5400, %v7410
        %v7505 = vmul.f32 %v5402, %v7414
        %v7506 = vmul.f32 %v5405, %v7418
        %v7507 = vmul.f32 %v5407, %v7422
        %v7508 = vmul.f32 %v5410, %v7426
        %v7509 = vmul.f32 %v5412, %v7430
        %v7510 = vmul.f32 %v5415, %v7434
        %v7511 = vmul.f32 %v5417, %v7438
        %v7512 = vmul.f32 %v5420, %v7442
        %v7513 = vmul.f32 %v5422, %v7446
        %v7514 = vmul.f32 %v5425, %v7450
        %v7515 = vmul.f32 %v5427, %v7454
        %v7516 = vmul.f32 %v5430, %v7458
        %v7517 = vmul.f32 %v5432, %v7462
        %v7518 = vmul.f32 %v5435, %v7466
        %v7519 = vmul.f32 %v5437, %v7470
        %v7520 = vmul.f32 %v5440, %v7474
        %v7521 = vmul.f32 %v5442, %v7478
        %v7522 = vmul.f32 %v5445, %v7482
        %v7523 = vmul.f32 %v5447, %v7486
        %v7524 = vmul.f32 %v5450, %v7490
        %v7525 = vmul.f32 %v5452, %v7494
        %v7526 = vmul.f32 %v5455, %v7498
        %v7527 = vmul.f32 %v5457, %v7502
        %7552 = vrot.lane.b32.xlu0 %v7504, 64
        %v7553 = vpop.permute.xlu0 %7552
        %7554 = vrot.lane.b32.xlu0 %v7505, 64
        %v7555 = vpop.permute.xlu0 %7554
        %7556 = vrot.lane.b32.xlu0 %v7506, 64
        %v7557 = vpop.permute.xlu0 %7556
        %7558 = vrot.lane.b32.xlu0 %v7507, 64
        %v7559 = vpop.permute.xlu0 %7558
        %7560 = vrot.lane.b32.xlu0 %v7508, 64
        %v7561 = vpop.permute.xlu0 %7560
        %7562 = vrot.lane.b32.xlu0 %v7509, 64
        %v7563 = vpop.permute.xlu0 %7562
        %7564 = vrot.lane.b32.xlu0 %v7510, 64
        %v7565 = vpop.permute.xlu0 %7564
        %7566 = vrot.lane.b32.xlu0 %v7511, 64
        %v7567 = vpop.permute.xlu0 %7566
        %7568 = vrot.lane.b32.xlu0 %v7512, 64
        %v7569 = vpop.permute.xlu0 %7568
        %7570 = vrot.lane.b32.xlu0 %v7513, 64
        %v7571 = vpop.permute.xlu0 %7570
        %7572 = vrot.lane.b32.xlu0 %v7514, 64
        %v7573 = vpop.permute.xlu0 %7572
        %7574 = vrot.lane.b32.xlu0 %v7515, 64
        %v7575 = vpop.permute.xlu0 %7574
        %7576 = vrot.lane.b32.xlu0 %v7516, 64
        %v7577 = vpop.permute.xlu0 %7576
        %7578 = vrot.lane.b32.xlu0 %v7517, 64
        %v7579 = vpop.permute.xlu0 %7578
        %7580 = vrot.lane.b32.xlu0 %v7518, 64
        %v7581 = vpop.permute.xlu0 %7580
        %7582 = vrot.lane.b32.xlu0 %v7519, 64
        %v7583 = vpop.permute.xlu0 %7582
        %7584 = vrot.lane.b32.xlu0 %v7520, 64
        %v7585 = vpop.permute.xlu0 %7584
        %7586 = vrot.lane.b32.xlu0 %v7521, 64
        %v7587 = vpop.permute.xlu0 %7586
        %7588 = vrot.lane.b32.xlu0 %v7522, 64
        %v7589 = vpop.permute.xlu0 %7588
        %7590 = vrot.lane.b32.xlu0 %v7523, 64
        %v7591 = vpop.permute.xlu0 %7590
        %7592 = vrot.lane.b32.xlu0 %v7524, 64
        %v7593 = vpop.permute.xlu0 %7592
        %7594 = vrot.lane.b32.xlu0 %v7525, 64
        %v7595 = vpop.permute.xlu0 %7594
        %7596 = vrot.lane.b32.xlu0 %v7526, 64
        %v7597 = vpop.permute.xlu0 %7596
        %7598 = vrot.lane.b32.xlu0 %v7527, 64
        %v7599 = vpop.permute.xlu0 %7598
        %v7624 = vadd.f32 %v7384, %v7553
        %v7625 = vadd.f32 %v7385, %v7555
        %v7626 = vadd.f32 %v7386, %v7557
        %v7627 = vadd.f32 %v7387, %v7559
        %v7628 = vadd.f32 %v7388, %v7561
        %v7629 = vadd.f32 %v7389, %v7563
        %v7630 = vadd.f32 %v7390, %v7565
        %v7631 = vadd.f32 %v7391, %v7567
        %v7632 = vadd.f32 %v7392, %v7569
        %v7633 = vadd.f32 %v7393, %v7571
        %v7634 = vadd.f32 %v7394, %v7573
        %v7635 = vadd.f32 %v7395, %v7575
        %v7636 = vadd.f32 %v7396, %v7577
        %v7637 = vadd.f32 %v7397, %v7579
        %v7638 = vadd.f32 %v7398, %v7581
        %v7639 = vadd.f32 %v7399, %v7583
        %v7640 = vadd.f32 %v7400, %v7585
        %v7641 = vadd.f32 %v7401, %v7587
        %v7642 = vadd.f32 %v7402, %v7589
        %v7643 = vadd.f32 %v7403, %v7591
        %v7644 = vadd.f32 %v7404, %v7593
        %v7645 = vadd.f32 %v7405, %v7595
        %v7646 = vadd.f32 %v7406, %v7597
        %v7647 = vadd.f32 %v7407, %v7599
        %7648 = vset.pattern.permute.xlu0 7
        %7649 = vperm.xlu0 %7648, %v6136
        %v7650 = vpop.permute.xlu0 %7649
        %7652 = vset.pattern.permute.xlu0 7
        %7653 = vperm.xlu0 %7652, %v6137
        %v7654 = vpop.permute.xlu0 %7653
        %7656 = vset.pattern.permute.xlu0 7
        %7657 = vperm.xlu0 %7656, %v6138
        %v7658 = vpop.permute.xlu0 %7657
        %7660 = vset.pattern.permute.xlu0 7
        %7661 = vperm.xlu0 %7660, %v6139
        %v7662 = vpop.permute.xlu0 %7661
        %7664 = vset.pattern.permute.xlu0 7
        %7665 = vperm.xlu0 %7664, %v6140
        %v7666 = vpop.permute.xlu0 %7665
        %7668 = vset.pattern.permute.xlu0 7
        %7669 = vperm.xlu0 %7668, %v6141
        %v7670 = vpop.permute.xlu0 %7669
        %7672 = vset.pattern.permute.xlu0 7
        %7673 = vperm.xlu0 %7672, %v6142
        %v7674 = vpop.permute.xlu0 %7673
        %7676 = vset.pattern.permute.xlu0 7
        %7677 = vperm.xlu0 %7676, %v6143
        %v7678 = vpop.permute.xlu0 %7677
        %7680 = vset.pattern.permute.xlu0 7
        %7681 = vperm.xlu0 %7680, %v6144
        %v7682 = vpop.permute.xlu0 %7681
        %7684 = vset.pattern.permute.xlu0 7
        %7685 = vperm.xlu0 %7684, %v6145
        %v7686 = vpop.permute.xlu0 %7685
        %7688 = vset.pattern.permute.xlu0 7
        %7689 = vperm.xlu0 %7688, %v6146
        %v7690 = vpop.permute.xlu0 %7689
        %7692 = vset.pattern.permute.xlu0 7
        %7693 = vperm.xlu0 %7692, %v6147
        %v7694 = vpop.permute.xlu0 %7693
        %7696 = vset.pattern.permute.xlu0 7
        %7697 = vperm.xlu0 %7696, %v6148
        %v7698 = vpop.permute.xlu0 %7697
        %7700 = vset.pattern.permute.xlu0 7
        %7701 = vperm.xlu0 %7700, %v6149
        %v7702 = vpop.permute.xlu0 %7701
        %7704 = vset.pattern.permute.xlu0 7
        %7705 = vperm.xlu0 %7704, %v6150
        %v7706 = vpop.permute.xlu0 %7705
        %7708 = vset.pattern.permute.xlu0 7
        %7709 = vperm.xlu0 %7708, %v6151
        %v7710 = vpop.permute.xlu0 %7709
        %7712 = vset.pattern.permute.xlu0 7
        %7713 = vperm.xlu0 %7712, %v6152
        %v7714 = vpop.permute.xlu0 %7713
        %7716 = vset.pattern.permute.xlu0 7
        %7717 = vperm.xlu0 %7716, %v6153
        %v7718 = vpop.permute.xlu0 %7717
        %7720 = vset.pattern.permute.xlu0 7
        %7721 = vperm.xlu0 %7720, %v6154
        %v7722 = vpop.permute.xlu0 %7721
        %7724 = vset.pattern.permute.xlu0 7
        %7725 = vperm.xlu0 %7724, %v6155
        %v7726 = vpop.permute.xlu0 %7725
        %7728 = vset.pattern.permute.xlu0 7
        %7729 = vperm.xlu0 %7728, %v6156
        %v7730 = vpop.permute.xlu0 %7729
        %7732 = vset.pattern.permute.xlu0 7
        %7733 = vperm.xlu0 %7732, %v6157
        %v7734 = vpop.permute.xlu0 %7733
        %7736 = vset.pattern.permute.xlu0 7
        %7737 = vperm.xlu0 %7736, %v6158
        %v7738 = vpop.permute.xlu0 %7737
        %7740 = vset.pattern.permute.xlu0 7
        %7741 = vperm.xlu0 %7740, %v6159
        %v7742 = vpop.permute.xlu0 %7741
        %v7744 = vmul.f32 %v5400, %v7650
        %v7745 = vmul.f32 %v5402, %v7654
        %v7746 = vmul.f32 %v5405, %v7658
        %v7747 = vmul.f32 %v5407, %v7662
        %v7748 = vmul.f32 %v5410, %v7666
        %v7749 = vmul.f32 %v5412, %v7670
        %v7750 = vmul.f32 %v5415, %v7674
        %v7751 = vmul.f32 %v5417, %v7678
        %v7752 = vmul.f32 %v5420, %v7682
        %v7753 = vmul.f32 %v5422, %v7686
        %v7754 = vmul.f32 %v5425, %v7690
        %v7755 = vmul.f32 %v5427, %v7694
        %v7756 = vmul.f32 %v5430, %v7698
        %v7757 = vmul.f32 %v5432, %v7702
        %v7758 = vmul.f32 %v5435, %v7706
        %v7759 = vmul.f32 %v5437, %v7710
        %v7760 = vmul.f32 %v5440, %v7714
        %v7761 = vmul.f32 %v5442, %v7718
        %v7762 = vmul.f32 %v5445, %v7722
        %v7763 = vmul.f32 %v5447, %v7726
        %v7764 = vmul.f32 %v5450, %v7730
        %v7765 = vmul.f32 %v5452, %v7734
        %v7766 = vmul.f32 %v5455, %v7738
        %v7767 = vmul.f32 %v5457, %v7742
        %7792 = vrot.lane.b32.xlu0 %v7744, 32
        %v7793 = vpop.permute.xlu0 %7792
        %7794 = vrot.lane.b32.xlu0 %v7745, 32
        %v7795 = vpop.permute.xlu0 %7794
        %7796 = vrot.lane.b32.xlu0 %v7746, 32
        %v7797 = vpop.permute.xlu0 %7796
        %7798 = vrot.lane.b32.xlu0 %v7747, 32
        %v7799 = vpop.permute.xlu0 %7798
        %7800 = vrot.lane.b32.xlu0 %v7748, 32
        %v7801 = vpop.permute.xlu0 %7800
        %7802 = vrot.lane.b32.xlu0 %v7749, 32
        %v7803 = vpop.permute.xlu0 %7802
        %7804 = vrot.lane.b32.xlu0 %v7750, 32
        %v7805 = vpop.permute.xlu0 %7804
        %7806 = vrot.lane.b32.xlu0 %v7751, 32
        %v7807 = vpop.permute.xlu0 %7806
        %7808 = vrot.lane.b32.xlu0 %v7752, 32
        %v7809 = vpop.permute.xlu0 %7808
        %7810 = vrot.lane.b32.xlu0 %v7753, 32
        %v7811 = vpop.permute.xlu0 %7810
        %7812 = vrot.lane.b32.xlu0 %v7754, 32
        %v7813 = vpop.permute.xlu0 %7812
        %7814 = vrot.lane.b32.xlu0 %v7755, 32
        %v7815 = vpop.permute.xlu0 %7814
        %7816 = vrot.lane.b32.xlu0 %v7756, 32
        %v7817 = vpop.permute.xlu0 %7816
        %7818 = vrot.lane.b32.xlu0 %v7757, 32
        %v7819 = vpop.permute.xlu0 %7818
        %7820 = vrot.lane.b32.xlu0 %v7758, 32
        %v7821 = vpop.permute.xlu0 %7820
        %7822 = vrot.lane.b32.xlu0 %v7759, 32
        %v7823 = vpop.permute.xlu0 %7822
        %7824 = vrot.lane.b32.xlu0 %v7760, 32
        %v7825 = vpop.permute.xlu0 %7824
        %7826 = vrot.lane.b32.xlu0 %v7761, 32
        %v7827 = vpop.permute.xlu0 %7826
        %7828 = vrot.lane.b32.xlu0 %v7762, 32
        %v7829 = vpop.permute.xlu0 %7828
        %7830 = vrot.lane.b32.xlu0 %v7763, 32
        %v7831 = vpop.permute.xlu0 %7830
        %7832 = vrot.lane.b32.xlu0 %v7764, 32
        %v7833 = vpop.permute.xlu0 %7832
        %7834 = vrot.lane.b32.xlu0 %v7765, 32
        %v7835 = vpop.permute.xlu0 %7834
        %7836 = vrot.lane.b32.xlu0 %v7766, 32
        %v7837 = vpop.permute.xlu0 %7836
        %7838 = vrot.lane.b32.xlu0 %v7767, 32
        %v7839 = vpop.permute.xlu0 %7838
        %v7864 = vadd.f32 %v7624, %v7793
        %v7865 = vadd.f32 %v7625, %v7795
        %v7866 = vadd.f32 %v7626, %v7797
        %v7867 = vadd.f32 %v7627, %v7799
        %v7868 = vadd.f32 %v7628, %v7801
        %v7869 = vadd.f32 %v7629, %v7803
        %v7870 = vadd.f32 %v7630, %v7805
        %v7871 = vadd.f32 %v7631, %v7807
        %v7872 = vadd.f32 %v7632, %v7809
        %v7873 = vadd.f32 %v7633, %v7811
        %v7874 = vadd.f32 %v7634, %v7813
        %v7875 = vadd.f32 %v7635, %v7815
        %v7876 = vadd.f32 %v7636, %v7817
        %v7877 = vadd.f32 %v7637, %v7819
        %v7878 = vadd.f32 %v7638, %v7821
        %v7879 = vadd.f32 %v7639, %v7823
        %v7880 = vadd.f32 %v7640, %v7825
        %v7881 = vadd.f32 %v7641, %v7827
        %v7882 = vadd.f32 %v7642, %v7829
        %v7883 = vadd.f32 %v7643, %v7831
        %v7884 = vadd.f32 %v7644, %v7833
        %v7885 = vadd.f32 %v7645, %v7835
        %v7886 = vadd.f32 %v7646, %v7837
        %v7887 = vadd.f32 %v7647, %v7839
        %7888 = vset.pattern.permute.xlu0 1
        %7889 = vperm.xlu0 %7888, %v510
        %v7890 = vpop.permute.xlu0 %7889
        %7892 = vset.pattern.permute.xlu0 1
        %7893 = vperm.xlu0 %7892, %v511
        %v7894 = vpop.permute.xlu0 %7893
        %7896 = vset.pattern.permute.xlu0 1
        %7897 = vperm.xlu0 %7896, %v512
        %v7898 = vpop.permute.xlu0 %7897
        %7900 = vset.pattern.permute.xlu0 1
        %7901 = vperm.xlu0 %7900, %v513
        %v7902 = vpop.permute.xlu0 %7901
        %7904 = vset.pattern.permute.xlu0 1
        %7905 = vperm.xlu0 %7904, %v514
        %v7906 = vpop.permute.xlu0 %7905
        %7908 = vset.pattern.permute.xlu0 1
        %7909 = vperm.xlu0 %7908, %v515
        %v7910 = vpop.permute.xlu0 %7909
        %7912 = vset.pattern.permute.xlu0 1
        %7913 = vperm.xlu0 %7912, %v516
        %v7914 = vpop.permute.xlu0 %7913
        %7916 = vset.pattern.permute.xlu0 1
        %7917 = vperm.xlu0 %7916, %v517
        %v7918 = vpop.permute.xlu0 %7917
        %7920 = vset.pattern.permute.xlu0 1
        %7921 = vperm.xlu0 %7920, %v518
        %v7922 = vpop.permute.xlu0 %7921
        %7924 = vset.pattern.permute.xlu0 1
        %7925 = vperm.xlu0 %7924, %v519
        %v7926 = vpop.permute.xlu0 %7925
        %7928 = vset.pattern.permute.xlu0 1
        %7929 = vperm.xlu0 %7928, %v520
        %v7930 = vpop.permute.xlu0 %7929
        %7932 = vset.pattern.permute.xlu0 1
        %7933 = vperm.xlu0 %7932, %v521
        %v7934 = vpop.permute.xlu0 %7933
        %7936 = vset.pattern.permute.xlu0 1
        %7937 = vperm.xlu0 %7936, %v522
        %v7938 = vpop.permute.xlu0 %7937
        %7940 = vset.pattern.permute.xlu0 1
        %7941 = vperm.xlu0 %7940, %v523
        %v7942 = vpop.permute.xlu0 %7941
        %7944 = vset.pattern.permute.xlu0 1
        %7945 = vperm.xlu0 %7944, %v524
        %v7946 = vpop.permute.xlu0 %7945
        %7948 = vset.pattern.permute.xlu0 1
        %7949 = vperm.xlu0 %7948, %v525
        %v7950 = vpop.permute.xlu0 %7949
        %7952 = vset.pattern.permute.xlu0 1
        %7953 = vperm.xlu0 %7952, %v526
        %v7954 = vpop.permute.xlu0 %7953
        %7956 = vset.pattern.permute.xlu0 1
        %7957 = vperm.xlu0 %7956, %v527
        %v7958 = vpop.permute.xlu0 %7957
        %7960 = vset.pattern.permute.xlu0 1
        %7961 = vperm.xlu0 %7960, %v528
        %v7962 = vpop.permute.xlu0 %7961
        %7964 = vset.pattern.permute.xlu0 1
        %7965 = vperm.xlu0 %7964, %v529
        %v7966 = vpop.permute.xlu0 %7965
        %7968 = vset.pattern.permute.xlu0 1
        %7969 = vperm.xlu0 %7968, %v530
        %v7970 = vpop.permute.xlu0 %7969
        %7972 = vset.pattern.permute.xlu0 1
        %7973 = vperm.xlu0 %7972, %v531
        %v7974 = vpop.permute.xlu0 %7973
        %7976 = vset.pattern.permute.xlu0 1
        %7977 = vperm.xlu0 %7976, %v532
        %v7978 = vpop.permute.xlu0 %7977
        %7980 = vset.pattern.permute.xlu0 1
        %7981 = vperm.xlu0 %7980, %v533
        %v7982 = vpop.permute.xlu0 %7981
        %v7984 = vmul.f32 %v7864, %v7890
        %v7985 = vmul.f32 %v7865, %v7894
        %v7986 = vmul.f32 %v7866, %v7898
        %v7987 = vmul.f32 %v7867, %v7902
        %v7988 = vmul.f32 %v7868, %v7906
        %v7989 = vmul.f32 %v7869, %v7910
        %v7990 = vmul.f32 %v7870, %v7914
        %v7991 = vmul.f32 %v7871, %v7918
        %v7992 = vmul.f32 %v7872, %v7922
        %v7993 = vmul.f32 %v7873, %v7926
        %v7994 = vmul.f32 %v7874, %v7930
        %v7995 = vmul.f32 %v7875, %v7934
        %v7996 = vmul.f32 %v7876, %v7938
        %v7997 = vmul.f32 %v7877, %v7942
        %v7998 = vmul.f32 %v7878, %v7946
        %v7999 = vmul.f32 %v7879, %v7950
        %v8000 = vmul.f32 %v7880, %v7954
        %v8001 = vmul.f32 %v7881, %v7958
        %v8002 = vmul.f32 %v7882, %v7962
        %v8003 = vmul.f32 %v7883, %v7966
        %v8004 = vmul.f32 %v7884, %v7970
        %v8005 = vmul.f32 %v7885, %v7974
        %v8006 = vmul.f32 %v7886, %v7978
        %v8007 = vmul.f32 %v7887, %v7982
        %v8008 = vmax.f32 %v510, 1e-09
        %v8009 = vmax.f32 %v511, 1e-09
        %v8010 = vmax.f32 %v512, 1e-09
        %v8011 = vmax.f32 %v513, 1e-09
        %v8012 = vmax.f32 %v514, 1e-09
        %v8013 = vmax.f32 %v515, 1e-09
        %v8014 = vmax.f32 %v516, 1e-09
        %v8015 = vmax.f32 %v517, 1e-09
        %v8016 = vmax.f32 %v518, 1e-09
        %v8017 = vmax.f32 %v519, 1e-09
        %v8018 = vmax.f32 %v520, 1e-09
        %v8019 = vmax.f32 %v521, 1e-09
        %v8020 = vmax.f32 %v522, 1e-09
        %v8021 = vmax.f32 %v523, 1e-09
        %v8022 = vmax.f32 %v524, 1e-09
        %v8023 = vmax.f32 %v525, 1e-09
        %v8024 = vmax.f32 %v526, 1e-09
        %v8025 = vmax.f32 %v527, 1e-09
        %v8026 = vmax.f32 %v528, 1e-09
        %v8027 = vmax.f32 %v529, 1e-09
        %v8028 = vmax.f32 %v530, 1e-09
        %v8029 = vmax.f32 %v531, 1e-09
        %v8030 = vmax.f32 %v532, 1e-09
        %v8031 = vmax.f32 %v533, 1e-09
        %v8032 = vrcp.pop %v8008
        %v8033 = vrcp.pop %v8009
        %v8034 = vrcp.pop %v8010
        %v8035 = vrcp.pop %v8011
        %v8036 = vrcp.pop %v8012
        %v8037 = vrcp.pop %v8013
        %v8038 = vrcp.pop %v8014
        %v8039 = vrcp.pop %v8015
        %v8040 = vrcp.pop %v8016
        %v8041 = vrcp.pop %v8017
        %v8042 = vrcp.pop %v8018
        %v8043 = vrcp.pop %v8019
        %v8044 = vrcp.pop %v8020
        %v8045 = vrcp.pop %v8021
        %v8046 = vrcp.pop %v8022
        %v8047 = vrcp.pop %v8023
        %v8048 = vrcp.pop %v8024
        %v8049 = vrcp.pop %v8025
        %v8050 = vrcp.pop %v8026
        %v8051 = vrcp.pop %v8027
        %v8052 = vrcp.pop %v8028
        %v8053 = vrcp.pop %v8029
        %v8054 = vrcp.pop %v8030
        %v8055 = vrcp.pop %v8031
        %8080 = vrot.lane.b32.xlu0 %v8032, 2
        %v8081 = vpop.permute.xlu0 %8080
        %8082 = vrot.lane.b32.xlu0 %v8033, 2
        %v8083 = vpop.permute.xlu0 %8082
        %8084 = vrot.lane.b32.xlu0 %v8034, 2
        %v8085 = vpop.permute.xlu0 %8084
        %8086 = vrot.lane.b32.xlu0 %v8035, 2
        %v8087 = vpop.permute.xlu0 %8086
        %8088 = vrot.lane.b32.xlu0 %v8036, 2
        %v8089 = vpop.permute.xlu0 %8088
        %8090 = vrot.lane.b32.xlu0 %v8037, 2
        %v8091 = vpop.permute.xlu0 %8090
        %8092 = vrot.lane.b32.xlu0 %v8038, 2
        %v8093 = vpop.permute.xlu0 %8092
        %8094 = vrot.lane.b32.xlu0 %v8039, 2
        %v8095 = vpop.permute.xlu0 %8094
        %8096 = vrot.lane.b32.xlu0 %v8040, 2
        %v8097 = vpop.permute.xlu0 %8096
        %8098 = vrot.lane.b32.xlu0 %v8041, 2
        %v8099 = vpop.permute.xlu0 %8098
        %8100 = vrot.lane.b32.xlu0 %v8042, 2
        %v8101 = vpop.permute.xlu0 %8100
        %8102 = vrot.lane.b32.xlu0 %v8043, 2
        %v8103 = vpop.permute.xlu0 %8102
        %8104 = vrot.lane.b32.xlu0 %v8044, 2
        %v8105 = vpop.permute.xlu0 %8104
        %8106 = vrot.lane.b32.xlu0 %v8045, 2
        %v8107 = vpop.permute.xlu0 %8106
        %8108 = vrot.lane.b32.xlu0 %v8046, 2
        %v8109 = vpop.permute.xlu0 %8108
        %8110 = vrot.lane.b32.xlu0 %v8047, 2
        %v8111 = vpop.permute.xlu0 %8110
        %8112 = vrot.lane.b32.xlu0 %v8048, 2
        %v8113 = vpop.permute.xlu0 %8112
        %8114 = vrot.lane.b32.xlu0 %v8049, 2
        %v8115 = vpop.permute.xlu0 %8114
        %8116 = vrot.lane.b32.xlu0 %v8050, 2
        %v8117 = vpop.permute.xlu0 %8116
        %8118 = vrot.lane.b32.xlu0 %v8051, 2
        %v8119 = vpop.permute.xlu0 %8118
        %8120 = vrot.lane.b32.xlu0 %v8052, 2
        %v8121 = vpop.permute.xlu0 %8120
        %8122 = vrot.lane.b32.xlu0 %v8053, 2
        %v8123 = vpop.permute.xlu0 %8122
        %8124 = vrot.lane.b32.xlu0 %v8054, 2
        %v8125 = vpop.permute.xlu0 %8124
        %8126 = vrot.lane.b32.xlu0 %v8055, 2
        %v8127 = vpop.permute.xlu0 %8126
        %v8152 = vmul.f32 %v510, %v8081
        %v8153 = vmul.f32 %v511, %v8083
        %v8154 = vmul.f32 %v512, %v8085
        %v8155 = vmul.f32 %v513, %v8087
        %v8156 = vmul.f32 %v514, %v8089
        %v8157 = vmul.f32 %v515, %v8091
        %v8158 = vmul.f32 %v516, %v8093
        %v8159 = vmul.f32 %v517, %v8095
        %v8160 = vmul.f32 %v518, %v8097
        %v8161 = vmul.f32 %v519, %v8099
        %v8162 = vmul.f32 %v520, %v8101
        %v8163 = vmul.f32 %v521, %v8103
        %v8164 = vmul.f32 %v522, %v8105
        %v8165 = vmul.f32 %v523, %v8107
        %v8166 = vmul.f32 %v524, %v8109
        %v8167 = vmul.f32 %v525, %v8111
        %v8168 = vmul.f32 %v526, %v8113
        %v8169 = vmul.f32 %v527, %v8115
        %v8170 = vmul.f32 %v528, %v8117
        %v8171 = vmul.f32 %v529, %v8119
        %v8172 = vmul.f32 %v530, %v8121
        %v8173 = vmul.f32 %v531, %v8123
        %v8174 = vmul.f32 %v532, %v8125
        %v8175 = vmul.f32 %v533, %v8127
        %8176 = vrot.lane.b32.xlu0 %v8032, 3
        %v8177 = vpop.permute.xlu0 %8176
        %8178 = vrot.lane.b32.xlu0 %v8033, 3
        %v8179 = vpop.permute.xlu0 %8178
        %8180 = vrot.lane.b32.xlu0 %v8034, 3
        %v8181 = vpop.permute.xlu0 %8180
        %8182 = vrot.lane.b32.xlu0 %v8035, 3
        %v8183 = vpop.permute.xlu0 %8182
        %8184 = vrot.lane.b32.xlu0 %v8036, 3
        %v8185 = vpop.permute.xlu0 %8184
        %8186 = vrot.lane.b32.xlu0 %v8037, 3
        %v8187 = vpop.permute.xlu0 %8186
        %8188 = vrot.lane.b32.xlu0 %v8038, 3
        %v8189 = vpop.permute.xlu0 %8188
        %8190 = vrot.lane.b32.xlu0 %v8039, 3
        %v8191 = vpop.permute.xlu0 %8190
        %8192 = vrot.lane.b32.xlu0 %v8040, 3
        %v8193 = vpop.permute.xlu0 %8192
        %8194 = vrot.lane.b32.xlu0 %v8041, 3
        %v8195 = vpop.permute.xlu0 %8194
        %8196 = vrot.lane.b32.xlu0 %v8042, 3
        %v8197 = vpop.permute.xlu0 %8196
        %8198 = vrot.lane.b32.xlu0 %v8043, 3
        %v8199 = vpop.permute.xlu0 %8198
        %8200 = vrot.lane.b32.xlu0 %v8044, 3
        %v8201 = vpop.permute.xlu0 %8200
        %8202 = vrot.lane.b32.xlu0 %v8045, 3
        %v8203 = vpop.permute.xlu0 %8202
        %8204 = vrot.lane.b32.xlu0 %v8046, 3
        %v8205 = vpop.permute.xlu0 %8204
        %8206 = vrot.lane.b32.xlu0 %v8047, 3
        %v8207 = vpop.permute.xlu0 %8206
        %8208 = vrot.lane.b32.xlu0 %v8048, 3
        %v8209 = vpop.permute.xlu0 %8208
        %8210 = vrot.lane.b32.xlu0 %v8049, 3
        %v8211 = vpop.permute.xlu0 %8210
        %8212 = vrot.lane.b32.xlu0 %v8050, 3
        %v8213 = vpop.permute.xlu0 %8212
        %8214 = vrot.lane.b32.xlu0 %v8051, 3
        %v8215 = vpop.permute.xlu0 %8214
        %8216 = vrot.lane.b32.xlu0 %v8052, 3
        %v8217 = vpop.permute.xlu0 %8216
        %8218 = vrot.lane.b32.xlu0 %v8053, 3
        %v8219 = vpop.permute.xlu0 %8218
        %8220 = vrot.lane.b32.xlu0 %v8054, 3
        %v8221 = vpop.permute.xlu0 %8220
        %8222 = vrot.lane.b32.xlu0 %v8055, 3
        %v8223 = vpop.permute.xlu0 %8222
        %v8248 = vmul.f32 %v510, %v8177
        %v8249 = vmul.f32 %v511, %v8179
        %v8250 = vmul.f32 %v512, %v8181
        %v8251 = vmul.f32 %v513, %v8183
        %v8252 = vmul.f32 %v514, %v8185
        %v8253 = vmul.f32 %v515, %v8187
        %v8254 = vmul.f32 %v516, %v8189
        %v8255 = vmul.f32 %v517, %v8191
        %v8256 = vmul.f32 %v518, %v8193
        %v8257 = vmul.f32 %v519, %v8195
        %v8258 = vmul.f32 %v520, %v8197
        %v8259 = vmul.f32 %v521, %v8199
        %v8260 = vmul.f32 %v522, %v8201
        %v8261 = vmul.f32 %v523, %v8203
        %v8262 = vmul.f32 %v524, %v8205
        %v8263 = vmul.f32 %v525, %v8207
        %v8264 = vmul.f32 %v526, %v8209
        %v8265 = vmul.f32 %v527, %v8211
        %v8266 = vmul.f32 %v528, %v8213
        %v8267 = vmul.f32 %v529, %v8215
        %v8268 = vmul.f32 %v530, %v8217
        %v8269 = vmul.f32 %v531, %v8219
        %v8270 = vmul.f32 %v532, %v8221
        %v8271 = vmul.f32 %v533, %v8223
        %8272 = vrot.lane.b32.xlu0 %v8032, 4
        %v8273 = vpop.permute.xlu0 %8272
        %8274 = vrot.lane.b32.xlu0 %v8033, 4
        %v8275 = vpop.permute.xlu0 %8274
        %8276 = vrot.lane.b32.xlu0 %v8034, 4
        %v8277 = vpop.permute.xlu0 %8276
        %8278 = vrot.lane.b32.xlu0 %v8035, 4
        %v8279 = vpop.permute.xlu0 %8278
        %8280 = vrot.lane.b32.xlu0 %v8036, 4
        %v8281 = vpop.permute.xlu0 %8280
        %8282 = vrot.lane.b32.xlu0 %v8037, 4
        %v8283 = vpop.permute.xlu0 %8282
        %8284 = vrot.lane.b32.xlu0 %v8038, 4
        %v8285 = vpop.permute.xlu0 %8284
        %8286 = vrot.lane.b32.xlu0 %v8039, 4
        %v8287 = vpop.permute.xlu0 %8286
        %8288 = vrot.lane.b32.xlu0 %v8040, 4
        %v8289 = vpop.permute.xlu0 %8288
        %8290 = vrot.lane.b32.xlu0 %v8041, 4
        %v8291 = vpop.permute.xlu0 %8290
        %8292 = vrot.lane.b32.xlu0 %v8042, 4
        %v8293 = vpop.permute.xlu0 %8292
        %8294 = vrot.lane.b32.xlu0 %v8043, 4
        %v8295 = vpop.permute.xlu0 %8294
        %8296 = vrot.lane.b32.xlu0 %v8044, 4
        %v8297 = vpop.permute.xlu0 %8296
        %8298 = vrot.lane.b32.xlu0 %v8045, 4
        %v8299 = vpop.permute.xlu0 %8298
        %8300 = vrot.lane.b32.xlu0 %v8046, 4
        %v8301 = vpop.permute.xlu0 %8300
        %8302 = vrot.lane.b32.xlu0 %v8047, 4
        %v8303 = vpop.permute.xlu0 %8302
        %8304 = vrot.lane.b32.xlu0 %v8048, 4
        %v8305 = vpop.permute.xlu0 %8304
        %8306 = vrot.lane.b32.xlu0 %v8049, 4
        %v8307 = vpop.permute.xlu0 %8306
        %8308 = vrot.lane.b32.xlu0 %v8050, 4
        %v8309 = vpop.permute.xlu0 %8308
        %8310 = vrot.lane.b32.xlu0 %v8051, 4
        %v8311 = vpop.permute.xlu0 %8310
        %8312 = vrot.lane.b32.xlu0 %v8052, 4
        %v8313 = vpop.permute.xlu0 %8312
        %8314 = vrot.lane.b32.xlu0 %v8053, 4
        %v8315 = vpop.permute.xlu0 %8314
        %8316 = vrot.lane.b32.xlu0 %v8054, 4
        %v8317 = vpop.permute.xlu0 %8316
        %8318 = vrot.lane.b32.xlu0 %v8055, 4
        %v8319 = vpop.permute.xlu0 %8318
        %v8344 = vmul.f32 %v510, %v8273
        %v8345 = vmul.f32 %v511, %v8275
        %v8346 = vmul.f32 %v512, %v8277
        %v8347 = vmul.f32 %v513, %v8279
        %v8348 = vmul.f32 %v514, %v8281
        %v8349 = vmul.f32 %v515, %v8283
        %v8350 = vmul.f32 %v516, %v8285
        %v8351 = vmul.f32 %v517, %v8287
        %v8352 = vmul.f32 %v518, %v8289
        %v8353 = vmul.f32 %v519, %v8291
        %v8354 = vmul.f32 %v520, %v8293
        %v8355 = vmul.f32 %v521, %v8295
        %v8356 = vmul.f32 %v522, %v8297
        %v8357 = vmul.f32 %v523, %v8299
        %v8358 = vmul.f32 %v524, %v8301
        %v8359 = vmul.f32 %v525, %v8303
        %v8360 = vmul.f32 %v526, %v8305
        %v8361 = vmul.f32 %v527, %v8307
        %v8362 = vmul.f32 %v528, %v8309
        %v8363 = vmul.f32 %v529, %v8311
        %v8364 = vmul.f32 %v530, %v8313
        %v8365 = vmul.f32 %v531, %v8315
        %v8366 = vmul.f32 %v532, %v8317
        %v8367 = vmul.f32 %v533, %v8319
        %8369 = vset.pattern.permute.xlu0 2
        %8370 = vperm.xlu0 %8369, %v8152
        %v8371 = vpop.permute.xlu0 %8370
        %8374 = vset.pattern.permute.xlu0 2
        %8375 = vperm.xlu0 %8374, %v8153
        %v8376 = vpop.permute.xlu0 %8375
        %8379 = vset.pattern.permute.xlu0 2
        %8380 = vperm.xlu0 %8379, %v8154
        %v8381 = vpop.permute.xlu0 %8380
        %8384 = vset.pattern.permute.xlu0 2
        %8385 = vperm.xlu0 %8384, %v8155
        %v8386 = vpop.permute.xlu0 %8385
        %8389 = vset.pattern.permute.xlu0 2
        %8390 = vperm.xlu0 %8389, %v8156
        %v8391 = vpop.permute.xlu0 %8390
        %8394 = vset.pattern.permute.xlu0 2
        %8395 = vperm.xlu0 %8394, %v8157
        %v8396 = vpop.permute.xlu0 %8395
        %8399 = vset.pattern.permute.xlu0 2
        %8400 = vperm.xlu0 %8399, %v8158
        %v8401 = vpop.permute.xlu0 %8400
        %8404 = vset.pattern.permute.xlu0 2
        %8405 = vperm.xlu0 %8404, %v8159
        %v8406 = vpop.permute.xlu0 %8405
        %8409 = vset.pattern.permute.xlu0 2
        %8410 = vperm.xlu0 %8409, %v8160
        %v8411 = vpop.permute.xlu0 %8410
        %8414 = vset.pattern.permute.xlu0 2
        %8415 = vperm.xlu0 %8414, %v8161
        %v8416 = vpop.permute.xlu0 %8415
        %8419 = vset.pattern.permute.xlu0 2
        %8420 = vperm.xlu0 %8419, %v8162
        %v8421 = vpop.permute.xlu0 %8420
        %8424 = vset.pattern.permute.xlu0 2
        %8425 = vperm.xlu0 %8424, %v8163
        %v8426 = vpop.permute.xlu0 %8425
        %8429 = vset.pattern.permute.xlu0 2
        %8430 = vperm.xlu0 %8429, %v8164
        %v8431 = vpop.permute.xlu0 %8430
        %8434 = vset.pattern.permute.xlu0 2
        %8435 = vperm.xlu0 %8434, %v8165
        %v8436 = vpop.permute.xlu0 %8435
        %8439 = vset.pattern.permute.xlu0 2
        %8440 = vperm.xlu0 %8439, %v8166
        %v8441 = vpop.permute.xlu0 %8440
        %8444 = vset.pattern.permute.xlu0 2
        %8445 = vperm.xlu0 %8444, %v8167
        %v8446 = vpop.permute.xlu0 %8445
        %8449 = vset.pattern.permute.xlu0 2
        %8450 = vperm.xlu0 %8449, %v8168
        %v8451 = vpop.permute.xlu0 %8450
        %8454 = vset.pattern.permute.xlu0 2
        %8455 = vperm.xlu0 %8454, %v8169
        %v8456 = vpop.permute.xlu0 %8455
        %8459 = vset.pattern.permute.xlu0 2
        %8460 = vperm.xlu0 %8459, %v8170
        %v8461 = vpop.permute.xlu0 %8460
        %8464 = vset.pattern.permute.xlu0 2
        %8465 = vperm.xlu0 %8464, %v8171
        %v8466 = vpop.permute.xlu0 %8465
        %8469 = vset.pattern.permute.xlu0 2
        %8470 = vperm.xlu0 %8469, %v8172
        %v8471 = vpop.permute.xlu0 %8470
        %8474 = vset.pattern.permute.xlu0 2
        %8475 = vperm.xlu0 %8474, %v8173
        %v8476 = vpop.permute.xlu0 %8475
        %8479 = vset.pattern.permute.xlu0 2
        %8480 = vperm.xlu0 %8479, %v8174
        %v8481 = vpop.permute.xlu0 %8480
        %8484 = vset.pattern.permute.xlu0 2
        %8485 = vperm.xlu0 %8484, %v8175
        %v8486 = vpop.permute.xlu0 %8485
        %v8488 = vmul.f32 %v7984, %v8371
        %v8489 = vmul.f32 %v7985, %v8376
        %v8490 = vmul.f32 %v7986, %v8381
        %v8491 = vmul.f32 %v7987, %v8386
        %v8492 = vmul.f32 %v7988, %v8391
        %v8493 = vmul.f32 %v7989, %v8396
        %v8494 = vmul.f32 %v7990, %v8401
        %v8495 = vmul.f32 %v7991, %v8406
        %v8496 = vmul.f32 %v7992, %v8411
        %v8497 = vmul.f32 %v7993, %v8416
        %v8498 = vmul.f32 %v7994, %v8421
        %v8499 = vmul.f32 %v7995, %v8426
        %v8500 = vmul.f32 %v7996, %v8431
        %v8501 = vmul.f32 %v7997, %v8436
        %v8502 = vmul.f32 %v7998, %v8441
        %v8503 = vmul.f32 %v7999, %v8446
        %v8504 = vmul.f32 %v8000, %v8451
        %v8505 = vmul.f32 %v8001, %v8456
        %v8506 = vmul.f32 %v8002, %v8461
        %v8507 = vmul.f32 %v8003, %v8466
        %v8508 = vmul.f32 %v8004, %v8471
        %v8509 = vmul.f32 %v8005, %v8476
        %v8510 = vmul.f32 %v8006, %v8481
        %v8511 = vmul.f32 %v8007, %v8486
        %8513 = vset.pattern.permute.xlu0 3
        %8514 = vperm.xlu0 %8513, %v8248
        %v8515 = vpop.permute.xlu0 %8514
        %8518 = vset.pattern.permute.xlu0 3
        %8519 = vperm.xlu0 %8518, %v8249
        %v8520 = vpop.permute.xlu0 %8519
        %8523 = vset.pattern.permute.xlu0 3
        %8524 = vperm.xlu0 %8523, %v8250
        %v8525 = vpop.permute.xlu0 %8524
        %8528 = vset.pattern.permute.xlu0 3
        %8529 = vperm.xlu0 %8528, %v8251
        %v8530 = vpop.permute.xlu0 %8529
        %8533 = vset.pattern.permute.xlu0 3
        %8534 = vperm.xlu0 %8533, %v8252
        %v8535 = vpop.permute.xlu0 %8534
        %8538 = vset.pattern.permute.xlu0 3
        %8539 = vperm.xlu0 %8538, %v8253
        %v8540 = vpop.permute.xlu0 %8539
        %8543 = vset.pattern.permute.xlu0 3
        %8544 = vperm.xlu0 %8543, %v8254
        %v8545 = vpop.permute.xlu0 %8544
        %8548 = vset.pattern.permute.xlu0 3
        %8549 = vperm.xlu0 %8548, %v8255
        %v8550 = vpop.permute.xlu0 %8549
        %8553 = vset.pattern.permute.xlu0 3
        %8554 = vperm.xlu0 %8553, %v8256
        %v8555 = vpop.permute.xlu0 %8554
        %8558 = vset.pattern.permute.xlu0 3
        %8559 = vperm.xlu0 %8558, %v8257
        %v8560 = vpop.permute.xlu0 %8559
        %8563 = vset.pattern.permute.xlu0 3
        %8564 = vperm.xlu0 %8563, %v8258
        %v8565 = vpop.permute.xlu0 %8564
        %8568 = vset.pattern.permute.xlu0 3
        %8569 = vperm.xlu0 %8568, %v8259
        %v8570 = vpop.permute.xlu0 %8569
        %8573 = vset.pattern.permute.xlu0 3
        %8574 = vperm.xlu0 %8573, %v8260
        %v8575 = vpop.permute.xlu0 %8574
        %8578 = vset.pattern.permute.xlu0 3
        %8579 = vperm.xlu0 %8578, %v8261
        %v8580 = vpop.permute.xlu0 %8579
        %8583 = vset.pattern.permute.xlu0 3
        %8584 = vperm.xlu0 %8583, %v8262
        %v8585 = vpop.permute.xlu0 %8584
        %8588 = vset.pattern.permute.xlu0 3
        %8589 = vperm.xlu0 %8588, %v8263
        %v8590 = vpop.permute.xlu0 %8589
        %8593 = vset.pattern.permute.xlu0 3
        %8594 = vperm.xlu0 %8593, %v8264
        %v8595 = vpop.permute.xlu0 %8594
        %8598 = vset.pattern.permute.xlu0 3
        %8599 = vperm.xlu0 %8598, %v8265
        %v8600 = vpop.permute.xlu0 %8599
        %8603 = vset.pattern.permute.xlu0 3
        %8604 = vperm.xlu0 %8603, %v8266
        %v8605 = vpop.permute.xlu0 %8604
        %8608 = vset.pattern.permute.xlu0 3
        %8609 = vperm.xlu0 %8608, %v8267
        %v8610 = vpop.permute.xlu0 %8609
        %8613 = vset.pattern.permute.xlu0 3
        %8614 = vperm.xlu0 %8613, %v8268
        %v8615 = vpop.permute.xlu0 %8614
        %8618 = vset.pattern.permute.xlu0 3
        %8619 = vperm.xlu0 %8618, %v8269
        %v8620 = vpop.permute.xlu0 %8619
        %8623 = vset.pattern.permute.xlu0 3
        %8624 = vperm.xlu0 %8623, %v8270
        %v8625 = vpop.permute.xlu0 %8624
        %8628 = vset.pattern.permute.xlu0 3
        %8629 = vperm.xlu0 %8628, %v8271
        %v8630 = vpop.permute.xlu0 %8629
        %v8632 = vmul.f32 %v7984, %v8515
        %v8633 = vmul.f32 %v7985, %v8520
        %v8634 = vmul.f32 %v7986, %v8525
        %v8635 = vmul.f32 %v7987, %v8530
        %v8636 = vmul.f32 %v7988, %v8535
        %v8637 = vmul.f32 %v7989, %v8540
        %v8638 = vmul.f32 %v7990, %v8545
        %v8639 = vmul.f32 %v7991, %v8550
        %v8640 = vmul.f32 %v7992, %v8555
        %v8641 = vmul.f32 %v7993, %v8560
        %v8642 = vmul.f32 %v7994, %v8565
        %v8643 = vmul.f32 %v7995, %v8570
        %v8644 = vmul.f32 %v7996, %v8575
        %v8645 = vmul.f32 %v7997, %v8580
        %v8646 = vmul.f32 %v7998, %v8585
        %v8647 = vmul.f32 %v7999, %v8590
        %v8648 = vmul.f32 %v8000, %v8595
        %v8649 = vmul.f32 %v8001, %v8600
        %v8650 = vmul.f32 %v8002, %v8605
        %v8651 = vmul.f32 %v8003, %v8610
        %v8652 = vmul.f32 %v8004, %v8615
        %v8653 = vmul.f32 %v8005, %v8620
        %v8654 = vmul.f32 %v8006, %v8625
        %v8655 = vmul.f32 %v8007, %v8630
        %8657 = vset.pattern.permute.xlu0 4
        %8658 = vperm.xlu0 %8657, %v8344
        %v8659 = vpop.permute.xlu0 %8658
        %8662 = vset.pattern.permute.xlu0 4
        %8663 = vperm.xlu0 %8662, %v8345
        %v8664 = vpop.permute.xlu0 %8663
        %8667 = vset.pattern.permute.xlu0 4
        %8668 = vperm.xlu0 %8667, %v8346
        %v8669 = vpop.permute.xlu0 %8668
        %8672 = vset.pattern.permute.xlu0 4
        %8673 = vperm.xlu0 %8672, %v8347
        %v8674 = vpop.permute.xlu0 %8673
        %8677 = vset.pattern.permute.xlu0 4
        %8678 = vperm.xlu0 %8677, %v8348
        %v8679 = vpop.permute.xlu0 %8678
        %8682 = vset.pattern.permute.xlu0 4
        %8683 = vperm.xlu0 %8682, %v8349
        %v8684 = vpop.permute.xlu0 %8683
        %8687 = vset.pattern.permute.xlu0 4
        %8688 = vperm.xlu0 %8687, %v8350
        %v8689 = vpop.permute.xlu0 %8688
        %8692 = vset.pattern.permute.xlu0 4
        %8693 = vperm.xlu0 %8692, %v8351
        %v8694 = vpop.permute.xlu0 %8693
        %8697 = vset.pattern.permute.xlu0 4
        %8698 = vperm.xlu0 %8697, %v8352
        %v8699 = vpop.permute.xlu0 %8698
        %8702 = vset.pattern.permute.xlu0 4
        %8703 = vperm.xlu0 %8702, %v8353
        %v8704 = vpop.permute.xlu0 %8703
        %8707 = vset.pattern.permute.xlu0 4
        %8708 = vperm.xlu0 %8707, %v8354
        %v8709 = vpop.permute.xlu0 %8708
        %8712 = vset.pattern.permute.xlu0 4
        %8713 = vperm.xlu0 %8712, %v8355
        %v8714 = vpop.permute.xlu0 %8713
        %8717 = vset.pattern.permute.xlu0 4
        %8718 = vperm.xlu0 %8717, %v8356
        %v8719 = vpop.permute.xlu0 %8718
        %8722 = vset.pattern.permute.xlu0 4
        %8723 = vperm.xlu0 %8722, %v8357
        %v8724 = vpop.permute.xlu0 %8723
        %8727 = vset.pattern.permute.xlu0 4
        %8728 = vperm.xlu0 %8727, %v8358
        %v8729 = vpop.permute.xlu0 %8728
        %8732 = vset.pattern.permute.xlu0 4
        %8733 = vperm.xlu0 %8732, %v8359
        %v8734 = vpop.permute.xlu0 %8733
        %8737 = vset.pattern.permute.xlu0 4
        %8738 = vperm.xlu0 %8737, %v8360
        %v8739 = vpop.permute.xlu0 %8738
        %8742 = vset.pattern.permute.xlu0 4
        %8743 = vperm.xlu0 %8742, %v8361
        %v8744 = vpop.permute.xlu0 %8743
        %8747 = vset.pattern.permute.xlu0 4
        %8748 = vperm.xlu0 %8747, %v8362
        %v8749 = vpop.permute.xlu0 %8748
        %8752 = vset.pattern.permute.xlu0 4
        %8753 = vperm.xlu0 %8752, %v8363
        %v8754 = vpop.permute.xlu0 %8753
        %8757 = vset.pattern.permute.xlu0 4
        %8758 = vperm.xlu0 %8757, %v8364
        %v8759 = vpop.permute.xlu0 %8758
        %8762 = vset.pattern.permute.xlu0 4
        %8763 = vperm.xlu0 %8762, %v8365
        %v8764 = vpop.permute.xlu0 %8763
        %8767 = vset.pattern.permute.xlu0 4
        %8768 = vperm.xlu0 %8767, %v8366
        %v8769 = vpop.permute.xlu0 %8768
        %8772 = vset.pattern.permute.xlu0 4
        %8773 = vperm.xlu0 %8772, %v8367
        %v8774 = vpop.permute.xlu0 %8773
        %v8776 = vmul.f32 %v7984, %v8659
        %v8777 = vmul.f32 %v7985, %v8664
        %v8778 = vmul.f32 %v7986, %v8669
        %v8779 = vmul.f32 %v7987, %v8674
        %v8780 = vmul.f32 %v7988, %v8679
        %v8781 = vmul.f32 %v7989, %v8684
        %v8782 = vmul.f32 %v7990, %v8689
        %v8783 = vmul.f32 %v7991, %v8694
        %v8784 = vmul.f32 %v7992, %v8699
        %v8785 = vmul.f32 %v7993, %v8704
        %v8786 = vmul.f32 %v7994, %v8709
        %v8787 = vmul.f32 %v7995, %v8714
        %v8788 = vmul.f32 %v7996, %v8719
        %v8789 = vmul.f32 %v7997, %v8724
        %v8790 = vmul.f32 %v7998, %v8729
        %v8791 = vmul.f32 %v7999, %v8734
        %v8792 = vmul.f32 %v8000, %v8739
        %v8793 = vmul.f32 %v8001, %v8744
        %v8794 = vmul.f32 %v8002, %v8749
        %v8795 = vmul.f32 %v8003, %v8754
        %v8796 = vmul.f32 %v8004, %v8759
        %v8797 = vmul.f32 %v8005, %v8764
        %v8798 = vmul.f32 %v8006, %v8769
        %v8799 = vmul.f32 %v8007, %v8774
        %8824 = vrot.lane.b32.xlu0 %v8488, 32
        %v8825 = vpop.permute.xlu0 %8824
        %8826 = vrot.lane.b32.xlu0 %v8489, 32
        %v8827 = vpop.permute.xlu0 %8826
        %8828 = vrot.lane.b32.xlu0 %v8490, 32
        %v8829 = vpop.permute.xlu0 %8828
        %8830 = vrot.lane.b32.xlu0 %v8491, 32
        %v8831 = vpop.permute.xlu0 %8830
        %8832 = vrot.lane.b32.xlu0 %v8492, 32
        %v8833 = vpop.permute.xlu0 %8832
        %8834 = vrot.lane.b32.xlu0 %v8493, 32
        %v8835 = vpop.permute.xlu0 %8834
        %8836 = vrot.lane.b32.xlu0 %v8494, 32
        %v8837 = vpop.permute.xlu0 %8836
        %8838 = vrot.lane.b32.xlu0 %v8495, 32
        %v8839 = vpop.permute.xlu0 %8838
        %8840 = vrot.lane.b32.xlu0 %v8496, 32
        %v8841 = vpop.permute.xlu0 %8840
        %8842 = vrot.lane.b32.xlu0 %v8497, 32
        %v8843 = vpop.permute.xlu0 %8842
        %8844 = vrot.lane.b32.xlu0 %v8498, 32
        %v8845 = vpop.permute.xlu0 %8844
        %8846 = vrot.lane.b32.xlu0 %v8499, 32
        %v8847 = vpop.permute.xlu0 %8846
        %8848 = vrot.lane.b32.xlu0 %v8500, 32
        %v8849 = vpop.permute.xlu0 %8848
        %8850 = vrot.lane.b32.xlu0 %v8501, 32
        %v8851 = vpop.permute.xlu0 %8850
        %8852 = vrot.lane.b32.xlu0 %v8502, 32
        %v8853 = vpop.permute.xlu0 %8852
        %8854 = vrot.lane.b32.xlu0 %v8503, 32
        %v8855 = vpop.permute.xlu0 %8854
        %8856 = vrot.lane.b32.xlu0 %v8504, 32
        %v8857 = vpop.permute.xlu0 %8856
        %8858 = vrot.lane.b32.xlu0 %v8505, 32
        %v8859 = vpop.permute.xlu0 %8858
        %8860 = vrot.lane.b32.xlu0 %v8506, 32
        %v8861 = vpop.permute.xlu0 %8860
        %8862 = vrot.lane.b32.xlu0 %v8507, 32
        %v8863 = vpop.permute.xlu0 %8862
        %8864 = vrot.lane.b32.xlu0 %v8508, 32
        %v8865 = vpop.permute.xlu0 %8864
        %8866 = vrot.lane.b32.xlu0 %v8509, 32
        %v8867 = vpop.permute.xlu0 %8866
        %8868 = vrot.lane.b32.xlu0 %v8510, 32
        %v8869 = vpop.permute.xlu0 %8868
        %8870 = vrot.lane.b32.xlu0 %v8511, 32
        %v8871 = vpop.permute.xlu0 %8870
        %8920 = vrot.lane.b32.xlu0 %v8632, 64
        %v8921 = vpop.permute.xlu0 %8920
        %8922 = vrot.lane.b32.xlu0 %v8633, 64
        %v8923 = vpop.permute.xlu0 %8922
        %8924 = vrot.lane.b32.xlu0 %v8634, 64
        %v8925 = vpop.permute.xlu0 %8924
        %8926 = vrot.lane.b32.xlu0 %v8635, 64
        %v8927 = vpop.permute.xlu0 %8926
        %8928 = vrot.lane.b32.xlu0 %v8636, 64
        %v8929 = vpop.permute.xlu0 %8928
        %8930 = vrot.lane.b32.xlu0 %v8637, 64
        %v8931 = vpop.permute.xlu0 %8930
        %8932 = vrot.lane.b32.xlu0 %v8638, 64
        %v8933 = vpop.permute.xlu0 %8932
        %8934 = vrot.lane.b32.xlu0 %v8639, 64
        %v8935 = vpop.permute.xlu0 %8934
        %8936 = vrot.lane.b32.xlu0 %v8640, 64
        %v8937 = vpop.permute.xlu0 %8936
        %8938 = vrot.lane.b32.xlu0 %v8641, 64
        %v8939 = vpop.permute.xlu0 %8938
        %8940 = vrot.lane.b32.xlu0 %v8642, 64
        %v8941 = vpop.permute.xlu0 %8940
        %8942 = vrot.lane.b32.xlu0 %v8643, 64
        %v8943 = vpop.permute.xlu0 %8942
        %8944 = vrot.lane.b32.xlu0 %v8644, 64
        %v8945 = vpop.permute.xlu0 %8944
        %8946 = vrot.lane.b32.xlu0 %v8645, 64
        %v8947 = vpop.permute.xlu0 %8946
        %8948 = vrot.lane.b32.xlu0 %v8646, 64
        %v8949 = vpop.permute.xlu0 %8948
        %8950 = vrot.lane.b32.xlu0 %v8647, 64
        %v8951 = vpop.permute.xlu0 %8950
        %8952 = vrot.lane.b32.xlu0 %v8648, 64
        %v8953 = vpop.permute.xlu0 %8952
        %8954 = vrot.lane.b32.xlu0 %v8649, 64
        %v8955 = vpop.permute.xlu0 %8954
        %8956 = vrot.lane.b32.xlu0 %v8650, 64
        %v8957 = vpop.permute.xlu0 %8956
        %8958 = vrot.lane.b32.xlu0 %v8651, 64
        %v8959 = vpop.permute.xlu0 %8958
        %8960 = vrot.lane.b32.xlu0 %v8652, 64
        %v8961 = vpop.permute.xlu0 %8960
        %8962 = vrot.lane.b32.xlu0 %v8653, 64
        %v8963 = vpop.permute.xlu0 %8962
        %8964 = vrot.lane.b32.xlu0 %v8654, 64
        %v8965 = vpop.permute.xlu0 %8964
        %8966 = vrot.lane.b32.xlu0 %v8655, 64
        %v8967 = vpop.permute.xlu0 %8966
        %9016 = vrot.lane.b32.xlu0 %v8776, 96
        %v9017 = vpop.permute.xlu0 %9016
        %9018 = vrot.lane.b32.xlu0 %v8777, 96
        %v9019 = vpop.permute.xlu0 %9018
        %9020 = vrot.lane.b32.xlu0 %v8778, 96
        %v9021 = vpop.permute.xlu0 %9020
        %9022 = vrot.lane.b32.xlu0 %v8779, 96
        %v9023 = vpop.permute.xlu0 %9022
        %9024 = vrot.lane.b32.xlu0 %v8780, 96
        %v9025 = vpop.permute.xlu0 %9024
        %9026 = vrot.lane.b32.xlu0 %v8781, 96
        %v9027 = vpop.permute.xlu0 %9026
        %9028 = vrot.lane.b32.xlu0 %v8782, 96
        %v9029 = vpop.permute.xlu0 %9028
        %9030 = vrot.lane.b32.xlu0 %v8783, 96
        %v9031 = vpop.permute.xlu0 %9030
        %9032 = vrot.lane.b32.xlu0 %v8784, 96
        %v9033 = vpop.permute.xlu0 %9032
        %9034 = vrot.lane.b32.xlu0 %v8785, 96
        %v9035 = vpop.permute.xlu0 %9034
        %9036 = vrot.lane.b32.xlu0 %v8786, 96
        %v9037 = vpop.permute.xlu0 %9036
        %9038 = vrot.lane.b32.xlu0 %v8787, 96
        %v9039 = vpop.permute.xlu0 %9038
        %9040 = vrot.lane.b32.xlu0 %v8788, 96
        %v9041 = vpop.permute.xlu0 %9040
        %9042 = vrot.lane.b32.xlu0 %v8789, 96
        %v9043 = vpop.permute.xlu0 %9042
        %9044 = vrot.lane.b32.xlu0 %v8790, 96
        %v9045 = vpop.permute.xlu0 %9044
        %9046 = vrot.lane.b32.xlu0 %v8791, 96
        %v9047 = vpop.permute.xlu0 %9046
        %9048 = vrot.lane.b32.xlu0 %v8792, 96
        %v9049 = vpop.permute.xlu0 %9048
        %9050 = vrot.lane.b32.xlu0 %v8793, 96
        %v9051 = vpop.permute.xlu0 %9050
        %9052 = vrot.lane.b32.xlu0 %v8794, 96
        %v9053 = vpop.permute.xlu0 %9052
        %9054 = vrot.lane.b32.xlu0 %v8795, 96
        %v9055 = vpop.permute.xlu0 %9054
        %9056 = vrot.lane.b32.xlu0 %v8796, 96
        %v9057 = vpop.permute.xlu0 %9056
        %9058 = vrot.lane.b32.xlu0 %v8797, 96
        %v9059 = vpop.permute.xlu0 %9058
        %9060 = vrot.lane.b32.xlu0 %v8798, 96
        %v9061 = vpop.permute.xlu0 %9060
        %9062 = vrot.lane.b32.xlu0 %v8799, 96
        %v9063 = vpop.permute.xlu0 %9062
        %v9088 = vsel %vm4924, %v7984, %v8825
        %v9089 = vsel %vm4924, %v7985, %v8827
        %v9090 = vsel %vm4924, %v7986, %v8829
        %v9091 = vsel %vm4924, %v7987, %v8831
        %v9092 = vsel %vm4924, %v7988, %v8833
        %v9093 = vsel %vm4924, %v7989, %v8835
        %v9094 = vsel %vm4924, %v7990, %v8837
        %v9095 = vsel %vm4924, %v7991, %v8839
        %v9096 = vsel %vm4924, %v7992, %v8841
        %v9097 = vsel %vm4924, %v7993, %v8843
        %v9098 = vsel %vm4924, %v7994, %v8845
        %v9099 = vsel %vm4924, %v7995, %v8847
        %v9100 = vsel %vm4924, %v7996, %v8849
        %v9101 = vsel %vm4924, %v7997, %v8851
        %v9102 = vsel %vm4924, %v7998, %v8853
        %v9103 = vsel %vm4924, %v7999, %v8855
        %v9104 = vsel %vm4924, %v8000, %v8857
        %v9105 = vsel %vm4924, %v8001, %v8859
        %v9106 = vsel %vm4924, %v8002, %v8861
        %v9107 = vsel %vm4924, %v8003, %v8863
        %v9108 = vsel %vm4924, %v8004, %v8865
        %v9109 = vsel %vm4924, %v8005, %v8867
        %v9110 = vsel %vm4924, %v8006, %v8869
        %v9111 = vsel %vm4924, %v8007, %v8871
        %vm9112 = vcmask 523264
        %v9113 = vsel %vm9112, %v9088, %v8921
        %v9114 = vsel %vm9112, %v9089, %v8923
        %v9115 = vsel %vm9112, %v9090, %v8925
        %v9116 = vsel %vm9112, %v9091, %v8927
        %v9117 = vsel %vm9112, %v9092, %v8929
        %v9118 = vsel %vm9112, %v9093, %v8931
        %v9119 = vsel %vm9112, %v9094, %v8933
        %v9120 = vsel %vm9112, %v9095, %v8935
        %v9121 = vsel %vm9112, %v9096, %v8937
        %v9122 = vsel %vm9112, %v9097, %v8939
        %v9123 = vsel %vm9112, %v9098, %v8941
        %v9124 = vsel %vm9112, %v9099, %v8943
        %v9125 = vsel %vm9112, %v9100, %v8945
        %v9126 = vsel %vm9112, %v9101, %v8947
        %v9127 = vsel %vm9112, %v9102, %v8949
        %v9128 = vsel %vm9112, %v9103, %v8951
        %v9129 = vsel %vm9112, %v9104, %v8953
        %v9130 = vsel %vm9112, %v9105, %v8955
        %v9131 = vsel %vm9112, %v9106, %v8957
        %v9132 = vsel %vm9112, %v9107, %v8959
        %v9133 = vsel %vm9112, %v9108, %v8961
        %v9134 = vsel %vm9112, %v9109, %v8963
        %v9135 = vsel %vm9112, %v9110, %v8965
        %v9136 = vsel %vm9112, %v9111, %v8967
        %vm9137 = vcmask 785408
        %v9138 = vsel %vm9137, %v9113, %v9017
        %v9139 = vsel %vm9137, %v9114, %v9019
        %v9140 = vsel %vm9137, %v9115, %v9021
        %v9141 = vsel %vm9137, %v9116, %v9023
        %v9142 = vsel %vm9137, %v9117, %v9025
        %v9143 = vsel %vm9137, %v9118, %v9027
        %v9144 = vsel %vm9137, %v9119, %v9029
        %v9145 = vsel %vm9137, %v9120, %v9031
        %v9146 = vsel %vm9137, %v9121, %v9033
        %v9147 = vsel %vm9137, %v9122, %v9035
        %v9148 = vsel %vm9137, %v9123, %v9037
        %v9149 = vsel %vm9137, %v9124, %v9039
        %v9150 = vsel %vm9137, %v9125, %v9041
        %v9151 = vsel %vm9137, %v9126, %v9043
        %v9152 = vsel %vm9137, %v9127, %v9045
        %v9153 = vsel %vm9137, %v9128, %v9047
        %v9154 = vsel %vm9137, %v9129, %v9049
        %v9155 = vsel %vm9137, %v9130, %v9051
        %v9156 = vsel %vm9137, %v9131, %v9053
        %v9157 = vsel %vm9137, %v9132, %v9055
        %v9158 = vsel %vm9137, %v9133, %v9057
        %v9159 = vsel %vm9137, %v9134, %v9059
        %v9160 = vsel %vm9137, %v9135, %v9061
        %v9161 = vsel %vm9137, %v9136, %v9063
        %v9162 = vld [vmem:[%s484] sm:$0xff]
        %v9163 = vadd.f32 %v9138, %v9139
        %v9164 = vadd.f32 %v9163, %v9140
        %v9165 = vrot.slane %v9164, 4
        %v9166 = vadd.f32 %v9164, %v9165
        %v9167 = vrot.slane %v9166, 2
        %v9168 = vadd.f32 %v9166, %v9167
        %v9169 = vrot.slane %v9168, 1
        %v9170 = vadd.f32 %v9168, %v9169
        %v9171 = vadd.f32 %v9141, %v9142
        %v9172 = vadd.f32 %v9171, %v9143
        %v9173 = vrot.slane %v9172, 4
        %v9174 = vadd.f32 %v9172, %v9173
        %v9175 = vrot.slane %v9174, 2
        %v9176 = vadd.f32 %v9174, %v9175
        %v9177 = vrot.slane %v9176, 1
        %v9178 = vadd.f32 %v9176, %v9177
        %v9179 = vadd.f32 %v9144, %v9145
        %v9180 = vadd.f32 %v9179, %v9146
        %v9181 = vrot.slane %v9180, 4
        %v9182 = vadd.f32 %v9180, %v9181
        %v9183 = vrot.slane %v9182, 2
        %v9184 = vadd.f32 %v9182, %v9183
        %v9185 = vrot.slane %v9184, 1
        %v9186 = vadd.f32 %v9184, %v9185
        %v9187 = vadd.f32 %v9147, %v9148
        %v9188 = vadd.f32 %v9187, %v9149
        %v9189 = vrot.slane %v9188, 4
        %v9190 = vadd.f32 %v9188, %v9189
        %v9191 = vrot.slane %v9190, 2
        %v9192 = vadd.f32 %v9190, %v9191
        %v9193 = vrot.slane %v9192, 1
        %v9194 = vadd.f32 %v9192, %v9193
        %v9195 = vadd.f32 %v9150, %v9151
        %v9196 = vadd.f32 %v9195, %v9152
        %v9197 = vrot.slane %v9196, 4
        %v9198 = vadd.f32 %v9196, %v9197
        %v9199 = vrot.slane %v9198, 2
        %v9200 = vadd.f32 %v9198, %v9199
        %v9201 = vrot.slane %v9200, 1
        %v9202 = vadd.f32 %v9200, %v9201
        %v9203 = vadd.f32 %v9153, %v9154
        %v9204 = vadd.f32 %v9203, %v9155
        %v9205 = vrot.slane %v9204, 4
        %v9206 = vadd.f32 %v9204, %v9205
        %v9207 = vrot.slane %v9206, 2
        %v9208 = vadd.f32 %v9206, %v9207
        %v9209 = vrot.slane %v9208, 1
        %v9210 = vadd.f32 %v9208, %v9209
        %v9211 = vadd.f32 %v9156, %v9157
        %v9212 = vadd.f32 %v9211, %v9158
        %v9213 = vrot.slane %v9212, 4
        %v9214 = vadd.f32 %v9212, %v9213
        %v9215 = vrot.slane %v9214, 2
        %v9216 = vadd.f32 %v9214, %v9215
        %v9217 = vrot.slane %v9216, 1
        %v9218 = vadd.f32 %v9216, %v9217
        %v9219 = vadd.f32 %v9159, %v9160
        %v9220 = vadd.f32 %v9219, %v9161
        %v9221 = vrot.slane %v9220, 4
        %v9222 = vadd.f32 %v9220, %v9221
        %v9223 = vrot.slane %v9222, 2
        %v9224 = vadd.f32 %v9222, %v9223
        %v9225 = vrot.slane %v9224, 1
        %v9226 = vadd.f32 %v9224, %v9225
        %vm9235 = vcmask 1041409
        %v9236 = vsel %vm9235, %v9178, %v9170
        %vm9237 = vcmask 1042434
        %v9238 = vsel %vm9237, %v9186, %v9236
        %vm9239 = vcmask 1043459
        %v9240 = vsel %vm9239, %v9194, %v9238
        %vm9241 = vcmask 1044484
        %v9242 = vsel %vm9241, %v9202, %v9240
        %vm9243 = vcmask 1045509
        %v9244 = vsel %vm9243, %v9210, %v9242
        %vm9245 = vcmask 1046534
        %v9246 = vsel %vm9245, %v9218, %v9244
        %vm9247 = vcmask 1047559
        %v9248 = vsel %vm9247, %v9226, %v9246
        %v9250 = vadd.f32 %v9162, %v9248
        %9251 = vst [vmem:[%s484] sm:$0xff] %v9250
        %s9252 = sand.u32 %s337, 1
        %s9253 = scalar_lea.sflag [#allocation3], %s9252
        %s9254 = sand.u32 %s337, 1
        %s9255 = smul.addr %s9254, 8
        %s9256 = scalar_lea.vmem [#allocation2], %s9255
        // Predicated region
        $region77: #{tpu_custom_call.1} parent=71 // pred_check
          %p9257 = pneg %p347
        $region78: #{tpu_custom_call.1} parent=71 // pred_check_branch
          %9259 = sbr.rel (%p9257) target = $region80
        $region79: #{tpu_custom_call.1} parent=71 // pred_region
          %9261 = vsyncadd %s9253, 0
          %s9262 = smul.addr %s31, 8
          %s9263 = scalar_lea.hbm %s13, %s9262
          %s9265 = sshll.u32 %s9256, 4
          %s9266 = int_to_ptr.vmem [resolvable:$true] %s9265
          %s9267 = sshll.u32 %s9263, 4
          %s9268 = int_to_ptr.hbm [resolvable:$true] %s9267
          %9270 = dma.vmem_to_hbm [thread:$0]  %s9266, 128, %s9268, %s9253
        $region80: #{tpu_custom_call.1} parent=71 // pred_fallthru
          _
      $region72: #{tpu_custom_call.1} parent=5 // pred_fallthru
        _
      %p9271 = scmp.le.s32.totalorder 2, %s22
      // Predicated region
      $region81: #{tpu_custom_call.1} parent=5 // pred_check
        %p9272 = pneg %p9271
      $region82: #{tpu_custom_call.1} parent=5 // pred_check_branch
        %9274 = sbr.rel (%p9272) target = $region84
      $region83: #{tpu_custom_call.1} parent=5 // pred_region
        %s9275 = ssub.s32 %s22, 2
        // Predicated region
        $region85: #{tpu_custom_call.1} parent=83 // pred_check
          %p9276 = pneg %p353
        $region86: #{tpu_custom_call.1} parent=83 // pred_check_branch
          %9278 = sbr.rel (%p9276) target = $region88
        $region87: #{tpu_custom_call.1} parent=83 // pred_region
          %s9279 = sand.u32 %s338, 1
          %s9280 = scalar_lea.sflag [#allocation3], %s9279
          %s9281 = sand.u32 %s338, 1
          %s9282 = smul.addr %s9281, 8
          %s9283 = scalar_lea.vmem [#allocation2], %s9282
          %9285 = dma.done %s9280, 128
        $region88: #{tpu_custom_call.1} parent=83 // pred_fallthru
          _
      $region84: #{tpu_custom_call.1} parent=5 // pred_fallthru
        _
    $region6: #{tpu_custom_call.1} parent=1 // loop_footer
      %s26 = sadd.s32 1, %s22
    $region7: #{tpu_custom_call.1} parent=1 // loop_footer_branch
      %21 = sbr.rel target = $region3
    $region8: #{tpu_custom_call.1} parent=1 // loop_exit
      _
    %9286 = vsyncpa [#allocation3], 1
    %s9287 = scalar_lea.sflag [#allocation3], 1
    %9288 = vsyncpa %s9287, 1

</llo_original>
